<compile_context>
chip_gen: v7x
topology: tpu7x:2x2x1
jax: 0.10.0
libtpu: 0.0.40
codegen_flags: <defaults>
</compile_context>

<pallas_src>
import jax
import jax.numpy as jnp
from jax import lax
from jax.experimental import pallas as pl
from jax.experimental.pallas import tpu as pltpu


# ----------------------------------------------------------------------------
# Static layer geometry
# (k, Cin, Cout, side of (padded) input buffer, side of output buffer,
#  zero-padding baked into the output buffer, activation)
# ----------------------------------------------------------------------------
_LAYERS = (
    (2,  16,  32, 8, 7, 0, "relu"),     # encoder1: 8x8x16  -> 7x7x32
    (3,  32,  64, 7, 5, 0, "relu"),     # encoder2: 7x7x32  -> 5x5x64
    (3,  64, 128, 5, 3, 0, "relu"),     # encoder3: 5x5x64  -> 3x3x128
    (3, 128, 256, 3, 5, 2, "relu"),     # encoder4: 3x3x128 -> 1x1x256 (into 5x5 zero-padded buf)
    (3, 256, 128, 5, 7, 2, "relu"),     # decoder1: 1x1x256 -> 3x3x128 (into 7x7 zero-padded buf)
    (3, 128,  64, 7, 9, 2, "relu"),     # decoder2: 3x3x128 -> 5x5x64  (into 9x9 zero-padded buf)
    (3,  64,  32, 9, 9, 1, "relu"),     # decoder3: 5x5x64  -> 7x7x32  (into 9x9 zero-padded buf)
    (2,  32,  16, 9, 8, 0, "sigmoid"),  # decoder4: 7x7x32  -> 8x8x16
)

_MIN_ROWS = 8  # keep every MXU matmul at least one sublane tile deep


def _span(layer_idx):
    """#accumulator rows for layer `layer_idx` (flattened-conv trick)."""
    k, _, _, wp_in, _, _, _ = _LAYERS[layer_idx]
    ho = wp_in - k + 1
    return max((ho - 1) * wp_in + ho, _MIN_ROWS)


def _buf_rows(layer_idx):
    """#rows of the VMEM buffer holding layer `layer_idx`'s *input*."""
    k, _, _, wp_in, _, _, _ = _LAYERS[layer_idx]
    return (k - 1) * wp_in + (k - 1) + _span(layer_idx)


# ----------------------------------------------------------------------------
# The single fused kernel
# ----------------------------------------------------------------------------
def _ae_fused_kernel(x_ref, *refs):
    n_layers = len(_LAYERS)
    wb = refs[: 2 * n_layers]            # w1, b1, ..., w8, b8
    o_ref = refs[2 * n_layers]           # (64, 16) output block
    bufs = refs[2 * n_layers + 1:]       # 7 VMEM activation buffers

    layer_in = (x_ref,) + tuple(bufs)
    layer_out = tuple(bufs) + (o_ref,)

    # Zero the scratch buffers: their borders ARE the ConvTranspose zero
    # padding; interiors are overwritten by the producing layer below.
    for buf in bufs:
        buf[...] = jnp.zeros_like(buf)

    for idx, (k, _cin, cout, wp_in, wp_out, pad_out, act) in enumerate(_LAYERS):
        w_ref, b_ref = wb[2 * idx], wb[2 * idx + 1]
        in_ref, out_ref = layer_in[idx], layer_out[idx]

        ho = wo = wp_in - k + 1
        span = _span(idx)

        # Weight-stationary accumulation over the k*k taps (MXU matmuls).
        acc = jnp.zeros((span, cout), jnp.float32)
        for kh in range(k):
            for kw in range(k):
                d = kh * wp_in + kw
                acc = acc + jnp.dot(
                    in_ref[d:d + span, :], w_ref[kh * k + kw],
                    preferred_element_type=jnp.float32)
        acc = acc + b_ref[...]                      # (1, Cout) row broadcast

        if act == "relu":
            y = jnp.maximum(acc, 0.0)
        else:  # sigmoid: exp + approximate reciprocal both ride the EUP slot
            y = pl.reciprocal(1.0 + jnp.exp(-acc), approx=True)

        # Scatter the valid output rows into the (possibly zero-padded)
        # buffer of the next layer / the output block.
        for i in range(ho):
            dst = (i + pad_out) * wp_out + pad_out
            out_ref[dst:dst + wo, :] = y[i * wp_in:i * wp_in + wo, :]


# ----------------------------------------------------------------------------
# One-time parameter packing (hoisted out of the forward pass)
# ----------------------------------------------------------------------------
def pack_params(params):
    """Repack PyTorch-layout conv params into per-tap (k*k, Cin, Cout) matrices.

    Conv2d        (Cout, Cin, k, k) -> (k*k, Cin, Cout)
    ConvTranspose (Cin, Cout, k, k) -> spatial flip + in/out swap -> (k*k, Cin, Cout)
    Biases -> (1, Cout) rows.
    """
    packed = []
    for name in ("enc1", "enc2", "enc3", "enc4"):
        w, b = params[name]
        k = w.shape[2]
        wt = jnp.transpose(w, (2, 3, 1, 0)).reshape(k * k, w.shape[1], w.shape[0])
        packed.append((wt.astype(jnp.float32), b.reshape(1, -1).astype(jnp.float32)))
    for name in ("dec1", "dec2", "dec3", "dec4"):
        w, b = params[name]
        k = w.shape[2]
        wt = jnp.transpose(w[:, :, ::-1, ::-1], (2, 3, 0, 1)).reshape(
            k * k, w.shape[0], w.shape[1])
        packed.append((wt.astype(jnp.float32), b.reshape(1, -1).astype(jnp.float32)))
    return packed


# ----------------------------------------------------------------------------
# Forward pass (single pallas_call)
# ----------------------------------------------------------------------------
@jax.jit
def autoencoder_forward(packed, x_nchw):
    n = x_nchw.shape[0]
    x = jnp.transpose(x_nchw, (0, 2, 3, 1)).reshape(n, 64, 16)   # NCHW -> (N, H*W, C)

    flat_wb = []
    in_specs = [pl.BlockSpec((None, 64, 16), lambda b: (b, 0, 0))]
    for w, bias in packed:
        flat_wb += [w, bias]
        in_specs.append(pl.BlockSpec(w.shape, lambda b: (0, 0, 0)))     # VMEM-resident
        in_specs.append(pl.BlockSpec(bias.shape, lambda b: (0, 0)))

    scratch = [pltpu.VMEM((_buf_rows(j), _LAYERS[j][1]), jnp.float32)
               for j in range(1, len(_LAYERS))]

    out = pl.pallas_call(
        _ae_fused_kernel,
        out_shape=jax.ShapeDtypeStruct((n, 64, 16), jnp.float32),
        grid=(n,),
        in_specs=in_specs,
        out_specs=pl.BlockSpec((None, 64, 16), lambda b: (b, 0, 0)),
        scratch_shapes=scratch,
        compiler_params=pltpu.CompilerParams(
            dimension_semantics=("parallel",),
            vmem_limit_bytes=32 * 1024 * 1024),
    )(x, *flat_wb)

    return jnp.transpose(out.reshape(n, 8, 8, 16), (0, 3, 1, 2))    # -> NCHW


# ----------------------------------------------------------------------------
# Parameter construction (deterministic, PyTorch-style uniform bounds)
# ----------------------------------------------------------------------------
def _init_conv(key, cout, cin, k):
    kw, kb = jax.random.split(key)
    bound = 1.0 / jnp.sqrt(float(cin * k * k))
    w = jax.random.uniform(kw, (cout, cin, k, k), jnp.float32, -bound, bound)
    b = jax.random.uniform(kb, (cout,), jnp.float32, -bound, bound)
    return w, b


def _init_convT(key, cin, cout, k):
    kw, kb = jax.random.split(key)
    bound = 1.0 / jnp.sqrt(float(cout * k * k))
    w = jax.random.uniform(kw, (cin, cout, k, k), jnp.float32, -bound, bound)
    b = jax.random.uniform(kb, (cout,), jnp.float32, -bound, bound)
    return w, b


def init_params(key):
    ks = jax.random.split(key, 8)
    return {
        "enc1": _init_conv(ks[0], 32, 16, 2),
        "enc2": _init_conv(ks[1], 64, 32, 3),
        "enc3": _init_conv(ks[2], 128, 64, 3),
        "enc4": _init_conv(ks[3], 256, 128, 3),
        "dec1": _init_convT(ks[4], 256, 128, 3),
        "dec2": _init_convT(ks[5], 128, 64, 3),
        "dec3": _init_convT(ks[6], 64, 32, 3),
        "dec4": _init_convT(ks[7], 32, 16, 2),
    }


# ----------------------------------------------------------------------------
# Pure-lax reference (ground truth for the self-check)
# ----------------------------------------------------------------------------
def _ref_conv(x, w, b, pad):
    y = lax.conv_general_dilated(
        x, w, window_strides=(1, 1), padding=[(pad, pad), (pad, pad)],
        dimension_numbers=("NCHW", "OIHW", "NCHW"))
    return y + b[None, :, None, None]


def autoencoder_forward_ref(params, x):
    relu = lambda v: jnp.maximum(v, 0.0)
    for name in ("enc1", "enc2", "enc3", "enc4"):
        w, b = params[name]
        x = relu(_ref_conv(x, w, b, pad=0))
    for name, last in (("dec1", False), ("dec2", False), ("dec3", False), ("dec4", True)):
        w, b = params[name]                                        # (Cin, Cout, k, k)
        k = w.shape[2]
        w_conv = jnp.transpose(w[:, :, ::-1, ::-1], (1, 0, 2, 3))  # (Cout, Cin, k, k)
        x = _ref_conv(x, w_conv, b, pad=k - 1)
        x = jax.nn.sigmoid(x) if last else relu(x)
    return x


if __name__ == "__main__":
    key = jax.random.PRNGKey(0)
    k_params, k_x = jax.random.split(key)

    params = init_params(k_params)
    packed = pack_params(params)                         # one-time weight repack
    # 1024-bit input: (N, 16, 8, 8)
    x = jax.random.uniform(k_x, (2, 16, 8, 8), jnp.float32)

    out = jax.block_until_ready(autoencoder_forward(packed, x))
    ref = jax.block_until_ready(autoencoder_forward_ref(params, x))

    assert out.shape == (2, 16, 8, 8), out.shape
    # Slightly loose tolerance: the sigmoid epilogue uses the EUP approximate reciprocal.
    assert jnp.allclose(out, ref, atol=2e-3, rtol=2e-3), float(jnp.max(jnp.abs(out - ref)))
    print("KERNEL_OK")
</pallas_src>

<mosaic_0001>
module attributes {stable_mosaic.version = 11 : i64} {
  func.func @_ae_fused_kernel(%arg0: i32, %arg1: memref<1x64x16xf32, #tpu.memory_space<vmem>>, %arg2: memref<4x16x32xf32, #tpu.memory_space<vmem>>, %arg3: memref<1x32xf32, #tpu.memory_space<vmem>>, %arg4: memref<9x32x64xf32, #tpu.memory_space<vmem>>, %arg5: memref<1x64xf32, #tpu.memory_space<vmem>>, %arg6: memref<9x64x128xf32, #tpu.memory_space<vmem>>, %arg7: memref<1x128xf32, #tpu.memory_space<vmem>>, %arg8: memref<9x128x256xf32, #tpu.memory_space<vmem>>, %arg9: memref<1x256xf32, #tpu.memory_space<vmem>>, %arg10: memref<9x256x128xf32, #tpu.memory_space<vmem>>, %arg11: memref<1x128xf32, #tpu.memory_space<vmem>>, %arg12: memref<9x128x64xf32, #tpu.memory_space<vmem>>, %arg13: memref<1x64xf32, #tpu.memory_space<vmem>>, %arg14: memref<9x64x32xf32, #tpu.memory_space<vmem>>, %arg15: memref<1x32xf32, #tpu.memory_space<vmem>>, %arg16: memref<4x32x16xf32, #tpu.memory_space<vmem>>, %arg17: memref<1x16xf32, #tpu.memory_space<vmem>>, %arg18: memref<1x64x16xf32, #tpu.memory_space<vmem>>, %arg19: memref<49x32xf32, #tpu.memory_space<vmem>>, %arg20: memref<25x64xf32, #tpu.memory_space<vmem>>, %arg21: memref<16x128xf32, #tpu.memory_space<vmem>>, %arg22: memref<25x256xf32, #tpu.memory_space<vmem>>, %arg23: memref<49x128xf32, #tpu.memory_space<vmem>>, %arg24: memref<81x64xf32, #tpu.memory_space<vmem>>, %arg25: memref<81x32xf32, #tpu.memory_space<vmem>>) attributes {dimension_semantics = [#tpu.dimension_semantics<parallel>], iteration_bounds = array<i64: 2>, scalar_prefetch = 0 : i64, scratch_operands = 7 : i64, tpu.core_type = #tpu.core_type<tc>, window_params = [{transform_indices = @transform_0, window_bounds = array<i64: 1, 64, 16>}, {pipeline_mode = #tpu.pipeline_mode<synchronous>, transform_indices = @transform_1, window_bounds = array<i64: 4, 16, 32>}, {pipeline_mode = #tpu.pipeline_mode<synchronous>, transform_indices = @transform_2, window_bounds = array<i64: 1, 32>}, {pipeline_mode = #tpu.pipeline_mode<synchronous>, transform_indices = @transform_3, window_bounds = array<i64: 9, 32, 64>}, {pipeline_mode = #tpu.pipeline_mode<synchronous>, transform_indices = @transform_4, window_bounds = array<i64: 1, 64>}, {pipeline_mode = #tpu.pipeline_mode<synchronous>, transform_indices = @transform_5, window_bounds = array<i64: 9, 64, 128>}, {pipeline_mode = #tpu.pipeline_mode<synchronous>, transform_indices = @transform_6, window_bounds = array<i64: 1, 128>}, {pipeline_mode = #tpu.pipeline_mode<synchronous>, transform_indices = @transform_7, window_bounds = array<i64: 9, 128, 256>}, {pipeline_mode = #tpu.pipeline_mode<synchronous>, transform_indices = @transform_8, window_bounds = array<i64: 1, 256>}, {pipeline_mode = #tpu.pipeline_mode<synchronous>, transform_indices = @transform_9, window_bounds = array<i64: 9, 256, 128>}, {pipeline_mode = #tpu.pipeline_mode<synchronous>, transform_indices = @transform_10, window_bounds = array<i64: 1, 128>}, {pipeline_mode = #tpu.pipeline_mode<synchronous>, transform_indices = @transform_11, window_bounds = array<i64: 9, 128, 64>}, {pipeline_mode = #tpu.pipeline_mode<synchronous>, transform_indices = @transform_12, window_bounds = array<i64: 1, 64>}, {pipeline_mode = #tpu.pipeline_mode<synchronous>, transform_indices = @transform_13, window_bounds = array<i64: 9, 64, 32>}, {pipeline_mode = #tpu.pipeline_mode<synchronous>, transform_indices = @transform_14, window_bounds = array<i64: 1, 32>}, {pipeline_mode = #tpu.pipeline_mode<synchronous>, transform_indices = @transform_15, window_bounds = array<i64: 4, 32, 16>}, {pipeline_mode = #tpu.pipeline_mode<synchronous>, transform_indices = @transform_16, window_bounds = array<i64: 1, 16>}, {transform_indices = @transform_17, window_bounds = array<i64: 1, 64, 16>}]} {
    %cst = arith.constant 0.000000e+00 : f32
    %0 = vector.broadcast %cst : f32 to vector<49x32xf32>
    %c0 = arith.constant 0 : index
    %c0_0 = arith.constant 0 : index
    %1 = vector.load %arg19[%c0, %c0_0] : memref<49x32xf32, #tpu.memory_space<vmem>>, vector<49x32xf32>
    tpu.vector_store %arg19[%c0, %c0_0], %0 {strides = array<i32>} : memref<49x32xf32, #tpu.memory_space<vmem>>, vector<49x32xf32>,
    %cst_1 = arith.constant 0.000000e+00 : f32
    %2 = vector.broadcast %cst_1 : f32 to vector<25x64xf32>
    %c0_2 = arith.constant 0 : index
    %c0_3 = arith.constant 0 : index
    %3 = vector.load %arg20[%c0_2, %c0_3] : memref<25x64xf32, #tpu.memory_space<vmem>>, vector<25x64xf32>
    tpu.vector_store %arg20[%c0_2, %c0_3], %2 {strides = array<i32>} : memref<25x64xf32, #tpu.memory_space<vmem>>, vector<25x64xf32>,
    %cst_4 = arith.constant 0.000000e+00 : f32
    %4 = vector.broadcast %cst_4 : f32 to vector<16x128xf32>
    %c0_5 = arith.constant 0 : index
    %c0_6 = arith.constant 0 : index
    %5 = vector.load %arg21[%c0_5, %c0_6] : memref<16x128xf32, #tpu.memory_space<vmem>>, vector<16x128xf32>
    tpu.vector_store %arg21[%c0_5, %c0_6], %4 {strides = array<i32>} : memref<16x128xf32, #tpu.memory_space<vmem>>, vector<16x128xf32>,
    %cst_7 = arith.constant 0.000000e+00 : f32
    %6 = vector.broadcast %cst_7 : f32 to vector<25x256xf32>
    %c0_8 = arith.constant 0 : index
    %c0_9 = arith.constant 0 : index
    %7 = vector.load %arg22[%c0_8, %c0_9] : memref<25x256xf32, #tpu.memory_space<vmem>>, vector<25x256xf32>
    tpu.vector_store %arg22[%c0_8, %c0_9], %6 {strides = array<i32>} : memref<25x256xf32, #tpu.memory_space<vmem>>, vector<25x256xf32>,
    %cst_10 = arith.constant 0.000000e+00 : f32
    %8 = vector.broadcast %cst_10 : f32 to vector<49x128xf32>
    %c0_11 = arith.constant 0 : index
    %c0_12 = arith.constant 0 : index
    %9 = vector.load %arg23[%c0_11, %c0_12] : memref<49x128xf32, #tpu.memory_space<vmem>>, vector<49x128xf32>
    tpu.vector_store %arg23[%c0_11, %c0_12], %8 {strides = array<i32>} : memref<49x128xf32, #tpu.memory_space<vmem>>, vector<49x128xf32>,
    %cst_13 = arith.constant 0.000000e+00 : f32
    %10 = vector.broadcast %cst_13 : f32 to vector<81x64xf32>
    %c0_14 = arith.constant 0 : index
    %c0_15 = arith.constant 0 : index
    %11 = vector.load %arg24[%c0_14, %c0_15] : memref<81x64xf32, #tpu.memory_space<vmem>>, vector<81x64xf32>
    tpu.vector_store %arg24[%c0_14, %c0_15], %10 {strides = array<i32>} : memref<81x64xf32, #tpu.memory_space<vmem>>, vector<81x64xf32>,
    %cst_16 = arith.constant 0.000000e+00 : f32
    %12 = vector.broadcast %cst_16 : f32 to vector<81x32xf32>
    %c0_17 = arith.constant 0 : index
    %c0_18 = arith.constant 0 : index
    %13 = vector.load %arg25[%c0_17, %c0_18] : memref<81x32xf32, #tpu.memory_space<vmem>>, vector<81x32xf32>
    tpu.vector_store %arg25[%c0_17, %c0_18], %12 {strides = array<i32>} : memref<81x32xf32, #tpu.memory_space<vmem>>, vector<81x32xf32>,
    %cst_19 = arith.constant 0.000000e+00 : f32
    %14 = vector.broadcast %cst_19 : f32 to vector<55x32xf32>
    %c0_20 = arith.constant 0 : index
    %c0_21 = arith.constant 0 : index
    %c0_22 = arith.constant 0 : index
    %15 = vector.load %arg1[%c0_20, %c0_21, %c0_22] : memref<1x64x16xf32, #tpu.memory_space<vmem>>, vector<1x55x16xf32>
    %16 = vector.shape_cast %15 : vector<1x55x16xf32> to vector<55x16xf32>
    %c0_23 = arith.constant 0 : index
    %c0_24 = arith.constant 0 : index
    %c0_25 = arith.constant 0 : index
    %17 = vector.load %arg2[%c0_23, %c0_24, %c0_25] : memref<4x16x32xf32, #tpu.memory_space<vmem>>, vector<1x16x32xf32>
    %18 = vector.shape_cast %17 : vector<1x16x32xf32> to vector<16x32xf32>
    %cst_26 = arith.constant dense<0.000000e+00> : vector<55x32xf32>
    %19 = tpu.matmul %16, %18, %cst_26 {dimension_numbers = #tpu.dot_dimension_numbers<[1], [0], [0], [1], [0, 0, 1, 1], [], []>} : vector<55x16xf32>, vector<16x32xf32>, vector<55x32xf32> -> vector<55x32xf32>
    %20 = arith.addf %14, %19 : vector<55x32xf32>
    %c0_27 = arith.constant 0 : index
    %c1 = arith.constant 1 : index
    %c0_28 = arith.constant 0 : index
    %21 = vector.load %arg1[%c0_27, %c1, %c0_28] : memref<1x64x16xf32, #tpu.memory_space<vmem>>, vector<1x55x16xf32>
    %22 = vector.shape_cast %21 : vector<1x55x16xf32> to vector<55x16xf32>
    %c1_29 = arith.constant 1 : index
    %c0_30 = arith.constant 0 : index
    %c0_31 = arith.constant 0 : index
    %23 = vector.load %arg2[%c1_29, %c0_30, %c0_31] : memref<4x16x32xf32, #tpu.memory_space<vmem>>, vector<1x16x32xf32>
    %24 = vector.shape_cast %23 : vector<1x16x32xf32> to vector<16x32xf32>
    %cst_32 = arith.constant dense<0.000000e+00> : vector<55x32xf32>
    %25 = tpu.matmul %22, %24, %cst_32 {dimension_numbers = #tpu.dot_dimension_numbers<[1], [0], [0], [1], [0, 0, 1, 1], [], []>} : vector<55x16xf32>, vector<16x32xf32>, vector<55x32xf32> -> vector<55x32xf32>
    %26 = arith.addf %20, %25 : vector<55x32xf32>
    %c0_33 = arith.constant 0 : index
    %c8 = arith.constant 8 : index
    %c0_34 = arith.constant 0 : index
    %27 = vector.load %arg1[%c0_33, %c8, %c0_34] : memref<1x64x16xf32, #tpu.memory_space<vmem>>, vector<1x55x16xf32>
    %28 = vector.shape_cast %27 : vector<1x55x16xf32> to vector<55x16xf32>
    %c2 = arith.constant 2 : index
    %c0_35 = arith.constant 0 : index
    %c0_36 = arith.constant 0 : index
    %29 = vector.load %arg2[%c2, %c0_35, %c0_36] : memref<4x16x32xf32, #tpu.memory_space<vmem>>, vector<1x16x32xf32>
    %30 = vector.shape_cast %29 : vector<1x16x32xf32> to vector<16x32xf32>
    %cst_37 = arith.constant dense<0.000000e+00> : vector<55x32xf32>
    %31 = tpu.matmul %28, %30, %cst_37 {dimension_numbers = #tpu.dot_dimension_numbers<[1], [0], [0], [1], [0, 0, 1, 1], [], []>} : vector<55x16xf32>, vector<16x32xf32>, vector<55x32xf32> -> vector<55x32xf32>
    %32 = arith.addf %26, %31 : vector<55x32xf32>
    %c0_38 = arith.constant 0 : index
    %c9 = arith.constant 9 : index
    %c0_39 = arith.constant 0 : index
    %33 = vector.load %arg1[%c0_38, %c9, %c0_39] : memref<1x64x16xf32, #tpu.memory_space<vmem>>, vector<1x55x16xf32>
    %34 = vector.shape_cast %33 : vector<1x55x16xf32> to vector<55x16xf32>
    %c3 = arith.constant 3 : index
    %c0_40 = arith.constant 0 : index
    %c0_41 = arith.constant 0 : index
    %35 = vector.load %arg2[%c3, %c0_40, %c0_41] : memref<4x16x32xf32, #tpu.memory_space<vmem>>, vector<1x16x32xf32>
    %36 = vector.shape_cast %35 : vector<1x16x32xf32> to vector<16x32xf32>
    %cst_42 = arith.constant dense<0.000000e+00> : vector<55x32xf32>
    %37 = tpu.matmul %34, %36, %cst_42 {dimension_numbers = #tpu.dot_dimension_numbers<[1], [0], [0], [1], [0, 0, 1, 1], [], []>} : vector<55x16xf32>, vector<16x32xf32>, vector<55x32xf32> -> vector<55x32xf32>
    %38 = arith.addf %32, %37 : vector<55x32xf32>
    %c0_43 = arith.constant 0 : index
    %c0_44 = arith.constant 0 : index
    %39 = vector.load %arg3[%c0_43, %c0_44] : memref<1x32xf32, #tpu.memory_space<vmem>>, vector<1x32xf32>
    %40 = vector.broadcast %39 : vector<1x32xf32> to vector<55x32xf32>
    %41 = arith.addf %38, %40 : vector<55x32xf32>
    %cst_45 = arith.constant 0.000000e+00 : f32
    %42 = vector.broadcast %cst_45 : f32 to vector<55x32xf32>
    %43 = arith.maximumf %41, %42 : vector<55x32xf32>
    %44 = vector.extract_strided_slice %43 {offsets = [0, 0], sizes = [7, 32], strides = [1, 1]} : vector<55x32xf32> to vector<7x32xf32>
    %c0_46 = arith.constant 0 : index
    %c0_47 = arith.constant 0 : index
    %45 = vector.load %arg19[%c0_46, %c0_47] : memref<49x32xf32, #tpu.memory_space<vmem>>, vector<7x32xf32>
    tpu.vector_store %arg19[%c0_46, %c0_47], %44 {strides = array<i32>} : memref<49x32xf32, #tpu.memory_space<vmem>>, vector<7x32xf32>,
    %46 = vector.extract_strided_slice %43 {offsets = [8, 0], sizes = [7, 32], strides = [1, 1]} : vector<55x32xf32> to vector<7x32xf32>
    %c7 = arith.constant 7 : index
    %c0_48 = arith.constant 0 : index
    %47 = vector.load %arg19[%c7, %c0_48] : memref<49x32xf32, #tpu.memory_space<vmem>>, vector<7x32xf32>
    tpu.vector_store %arg19[%c7, %c0_48], %46 {strides = array<i32>} : memref<49x32xf32, #tpu.memory_space<vmem>>, vector<7x32xf32>,
    %48 = vector.extract_strided_slice %43 {offsets = [16, 0], sizes = [7, 32], strides = [1, 1]} : vector<55x32xf32> to vector<7x32xf32>
    %c14 = arith.constant 14 : index
    %c0_49 = arith.constant 0 : index
    %49 = vector.load %arg19[%c14, %c0_49] : memref<49x32xf32, #tpu.memory_space<vmem>>, vector<7x32xf32>
    tpu.vector_store %arg19[%c14, %c0_49], %48 {strides = array<i32>} : memref<49x32xf32, #tpu.memory_space<vmem>>, vector<7x32xf32>,
    %50 = vector.extract_strided_slice %43 {offsets = [24, 0], sizes = [7, 32], strides = [1, 1]} : vector<55x32xf32> to vector<7x32xf32>
    %c21 = arith.constant 21 : index
    %c0_50 = arith.constant 0 : index
    %51 = vector.load %arg19[%c21, %c0_50] : memref<49x32xf32, #tpu.memory_space<vmem>>, vector<7x32xf32>
    tpu.vector_store %arg19[%c21, %c0_50], %50 {strides = array<i32>} : memref<49x32xf32, #tpu.memory_space<vmem>>, vector<7x32xf32>,
    %52 = vector.extract_strided_slice %43 {offsets = [32, 0], sizes = [7, 32], strides = [1, 1]} : vector<55x32xf32> to vector<7x32xf32>
    %c28 = arith.constant 28 : index
    %c0_51 = arith.constant 0 : index
    %53 = vector.load %arg19[%c28, %c0_51] : memref<49x32xf32, #tpu.memory_space<vmem>>, vector<7x32xf32>
    tpu.vector_store %arg19[%c28, %c0_51], %52 {strides = array<i32>} : memref<49x32xf32, #tpu.memory_space<vmem>>, vector<7x32xf32>,
    %54 = vector.extract_strided_slice %43 {offsets = [40, 0], sizes = [7, 32], strides = [1, 1]} : vector<55x32xf32> to vector<7x32xf32>
    %c35 = arith.constant 35 : index
    %c0_52 = arith.constant 0 : index
    %55 = vector.load %arg19[%c35, %c0_52] : memref<49x32xf32, #tpu.memory_space<vmem>>, vector<7x32xf32>
    tpu.vector_store %arg19[%c35, %c0_52], %54 {strides = array<i32>} : memref<49x32xf32, #tpu.memory_space<vmem>>, vector<7x32xf32>,
    %56 = vector.extract_strided_slice %43 {offsets = [48, 0], sizes = [7, 32], strides = [1, 1]} : vector<55x32xf32> to vector<7x32xf32>
    %c42 = arith.constant 42 : index
    %c0_53 = arith.constant 0 : index
    %57 = vector.load %arg19[%c42, %c0_53] : memref<49x32xf32, #tpu.memory_space<vmem>>, vector<7x32xf32>
    tpu.vector_store %arg19[%c42, %c0_53], %56 {strides = array<i32>} : memref<49x32xf32, #tpu.memory_space<vmem>>, vector<7x32xf32>,
    %cst_54 = arith.constant 0.000000e+00 : f32
    %58 = vector.broadcast %cst_54 : f32 to vector<33x64xf32>
    %c0_55 = arith.constant 0 : index
    %c0_56 = arith.constant 0 : index
    %59 = vector.load %arg19[%c0_55, %c0_56] : memref<49x32xf32, #tpu.memory_space<vmem>>, vector<33x32xf32>
    %c0_57 = arith.constant 0 : index
    %c0_58 = arith.constant 0 : index
    %c0_59 = arith.constant 0 : index
    %60 = vector.load %arg4[%c0_57, %c0_58, %c0_59] : memref<9x32x64xf32, #tpu.memory_space<vmem>>, vector<1x32x64xf32>
    %61 = vector.shape_cast %60 : vector<1x32x64xf32> to vector<32x64xf32>
    %cst_60 = arith.constant dense<0.000000e+00> : vector<33x64xf32>
    %62 = tpu.matmul %59, %61, %cst_60 {dimension_numbers = #tpu.dot_dimension_numbers<[1], [0], [0], [1], [0, 0, 1, 1], [], []>} : vector<33x32xf32>, vector<32x64xf32>, vector<33x64xf32> -> vector<33x64xf32>
    %63 = arith.addf %58, %62 : vector<33x64xf32>
    %c1_61 = arith.constant 1 : index
    %c0_62 = arith.constant 0 : index
    %64 = vector.load %arg19[%c1_61, %c0_62] : memref<49x32xf32, #tpu.memory_space<vmem>>, vector<33x32xf32>
    %c1_63 = arith.constant 1 : index
    %c0_64 = arith.constant 0 : index
    %c0_65 = arith.constant 0 : index
    %65 = vector.load %arg4[%c1_63, %c0_64, %c0_65] : memref<9x32x64xf32, #tpu.memory_space<vmem>>, vector<1x32x64xf32>
    %66 = vector.shape_cast %65 : vector<1x32x64xf32> to vector<32x64xf32>
    %cst_66 = arith.constant dense<0.000000e+00> : vector<33x64xf32>
    %67 = tpu.matmul %64, %66, %cst_66 {dimension_numbers = #tpu.dot_dimension_numbers<[1], [0], [0], [1], [0, 0, 1, 1], [], []>} : vector<33x32xf32>, vector<32x64xf32>, vector<33x64xf32> -> vector<33x64xf32>
    %68 = arith.addf %63, %67 : vector<33x64xf32>
    %c2_67 = arith.constant 2 : index
    %c0_68 = arith.constant 0 : index
    %69 = vector.load %arg19[%c2_67, %c0_68] : memref<49x32xf32, #tpu.memory_space<vmem>>, vector<33x32xf32>
    %c2_69 = arith.constant 2 : index
    %c0_70 = arith.constant 0 : index
    %c0_71 = arith.constant 0 : index
    %70 = vector.load %arg4[%c2_69, %c0_70, %c0_71] : memref<9x32x64xf32, #tpu.memory_space<vmem>>, vector<1x32x64xf32>
    %71 = vector.shape_cast %70 : vector<1x32x64xf32> to vector<32x64xf32>
    %cst_72 = arith.constant dense<0.000000e+00> : vector<33x64xf32>
    %72 = tpu.matmul %69, %71, %cst_72 {dimension_numbers = #tpu.dot_dimension_numbers<[1], [0], [0], [1], [0, 0, 1, 1], [], []>} : vector<33x32xf32>, vector<32x64xf32>, vector<33x64xf32> -> vector<33x64xf32>
    %73 = arith.addf %68, %72 : vector<33x64xf32>
    %c7_73 = arith.constant 7 : index
    %c0_74 = arith.constant 0 : index
    %74 = vector.load %arg19[%c7_73, %c0_74] : memref<49x32xf32, #tpu.memory_space<vmem>>, vector<33x32xf32>
    %c3_75 = arith.constant 3 : index
    %c0_76 = arith.constant 0 : index
    %c0_77 = arith.constant 0 : index
    %75 = vector.load %arg4[%c3_75, %c0_76, %c0_77] : memref<9x32x64xf32, #tpu.memory_space<vmem>>, vector<1x32x64xf32>
    %76 = vector.shape_cast %75 : vector<1x32x64xf32> to vector<32x64xf32>
    %cst_78 = arith.constant dense<0.000000e+00> : vector<33x64xf32>
    %77 = tpu.matmul %74, %76, %cst_78 {dimension_numbers = #tpu.dot_dimension_numbers<[1], [0], [0], [1], [0, 0, 1, 1], [], []>} : vector<33x32xf32>, vector<32x64xf32>, vector<33x64xf32> -> vector<33x64xf32>
    %78 = arith.addf %73, %77 : vector<33x64xf32>
    %c8_79 = arith.constant 8 : index
    %c0_80 = arith.constant 0 : index
    %79 = vector.load %arg19[%c8_79, %c0_80] : memref<49x32xf32, #tpu.memory_space<vmem>>, vector<33x32xf32>
    %c4 = arith.constant 4 : index
    %c0_81 = arith.constant 0 : index
    %c0_82 = arith.constant 0 : index
    %80 = vector.load %arg4[%c4, %c0_81, %c0_82] : memref<9x32x64xf32, #tpu.memory_space<vmem>>, vector<1x32x64xf32>
    %81 = vector.shape_cast %80 : vector<1x32x64xf32> to vector<32x64xf32>
    %cst_83 = arith.constant dense<0.000000e+00> : vector<33x64xf32>
    %82 = tpu.matmul %79, %81, %cst_83 {dimension_numbers = #tpu.dot_dimension_numbers<[1], [0], [0], [1], [0, 0, 1, 1], [], []>} : vector<33x32xf32>, vector<32x64xf32>, vector<33x64xf32> -> vector<33x64xf32>
    %83 = arith.addf %78, %82 : vector<33x64xf32>
    %c9_84 = arith.constant 9 : index
    %c0_85 = arith.constant 0 : index
    %84 = vector.load %arg19[%c9_84, %c0_85] : memref<49x32xf32, #tpu.memory_space<vmem>>, vector<33x32xf32>
    %c5 = arith.constant 5 : index
    %c0_86 = arith.constant 0 : index
    %c0_87 = arith.constant 0 : index
    %85 = vector.load %arg4[%c5, %c0_86, %c0_87] : memref<9x32x64xf32, #tpu.memory_space<vmem>>, vector<1x32x64xf32>
    %86 = vector.shape_cast %85 : vector<1x32x64xf32> to vector<32x64xf32>
    %cst_88 = arith.constant dense<0.000000e+00> : vector<33x64xf32>
    %87 = tpu.matmul %84, %86, %cst_88 {dimension_numbers = #tpu.dot_dimension_numbers<[1], [0], [0], [1], [0, 0, 1, 1], [], []>} : vector<33x32xf32>, vector<32x64xf32>, vector<33x64xf32> -> vector<33x64xf32>
    %88 = arith.addf %83, %87 : vector<33x64xf32>
    %c14_89 = arith.constant 14 : index
    %c0_90 = arith.constant 0 : index
    %89 = vector.load %arg19[%c14_89, %c0_90] : memref<49x32xf32, #tpu.memory_space<vmem>>, vector<33x32xf32>
    %c6 = arith.constant 6 : index
    %c0_91 = arith.constant 0 : index
    %c0_92 = arith.constant 0 : index
    %90 = vector.load %arg4[%c6, %c0_91, %c0_92] : memref<9x32x64xf32, #tpu.memory_space<vmem>>, vector<1x32x64xf32>
    %91 = vector.shape_cast %90 : vector<1x32x64xf32> to vector<32x64xf32>
    %cst_93 = arith.constant dense<0.000000e+00> : vector<33x64xf32>
    %92 = tpu.matmul %89, %91, %cst_93 {dimension_numbers = #tpu.dot_dimension_numbers<[1], [0], [0], [1], [0, 0, 1, 1], [], []>} : vector<33x32xf32>, vector<32x64xf32>, vector<33x64xf32> -> vector<33x64xf32>
    %93 = arith.addf %88, %92 : vector<33x64xf32>
    %c15 = arith.constant 15 : index
    %c0_94 = arith.constant 0 : index
    %94 = vector.load %arg19[%c15, %c0_94] : memref<49x32xf32, #tpu.memory_space<vmem>>, vector<33x32xf32>
    %c7_95 = arith.constant 7 : index
    %c0_96 = arith.constant 0 : index
    %c0_97 = arith.constant 0 : index
    %95 = vector.load %arg4[%c7_95, %c0_96, %c0_97] : memref<9x32x64xf32, #tpu.memory_space<vmem>>, vector<1x32x64xf32>
    %96 = vector.shape_cast %95 : vector<1x32x64xf32> to vector<32x64xf32>
    %cst_98 = arith.constant dense<0.000000e+00> : vector<33x64xf32>
    %97 = tpu.matmul %94, %96, %cst_98 {dimension_numbers = #tpu.dot_dimension_numbers<[1], [0], [0], [1], [0, 0, 1, 1], [], []>} : vector<33x32xf32>, vector<32x64xf32>, vector<33x64xf32> -> vector<33x64xf32>
    %98 = arith.addf %93, %97 : vector<33x64xf32>
    %c16 = arith.constant 16 : index
    %c0_99 = arith.constant 0 : index
    %99 = vector.load %arg19[%c16, %c0_99] : memref<49x32xf32, #tpu.memory_space<vmem>>, vector<33x32xf32>
    %c8_100 = arith.constant 8 : index
    %c0_101 = arith.constant 0 : index
    %c0_102 = arith.constant 0 : index
    %100 = vector.load %arg4[%c8_100, %c0_101, %c0_102] : memref<9x32x64xf32, #tpu.memory_space<vmem>>, vector<1x32x64xf32>
    %101 = vector.shape_cast %100 : vector<1x32x64xf32> to vector<32x64xf32>
    %cst_103 = arith.constant dense<0.000000e+00> : vector<33x64xf32>
    %102 = tpu.matmul %99, %101, %cst_103 {dimension_numbers = #tpu.dot_dimension_numbers<[1], [0], [0], [1], [0, 0, 1, 1], [], []>} : vector<33x32xf32>, vector<32x64xf32>, vector<33x64xf32> -> vector<33x64xf32>
    %103 = arith.addf %98, %102 : vector<33x64xf32>
    %c0_104 = arith.constant 0 : index
    %c0_105 = arith.constant 0 : index
    %104 = vector.load %arg5[%c0_104, %c0_105] : memref<1x64xf32, #tpu.memory_space<vmem>>, vector<1x64xf32>
    %105 = vector.broadcast %104 : vector<1x64xf32> to vector<33x64xf32>
    %106 = arith.addf %103, %105 : vector<33x64xf32>
    %cst_106 = arith.constant 0.000000e+00 : f32
    %107 = vector.broadcast %cst_106 : f32 to vector<33x64xf32>
    %108 = arith.maximumf %106, %107 : vector<33x64xf32>
    %109 = vector.extract_strided_slice %108 {offsets = [0, 0], sizes = [5, 64], strides = [1, 1]} : vector<33x64xf32> to vector<5x64xf32>
    %c0_107 = arith.constant 0 : index
    %c0_108 = arith.constant 0 : index
    %110 = vector.load %arg20[%c0_107, %c0_108] : memref<25x64xf32, #tpu.memory_space<vmem>>, vector<5x64xf32>
    tpu.vector_store %arg20[%c0_107, %c0_108], %109 {strides = array<i32>} : memref<25x64xf32, #tpu.memory_space<vmem>>, vector<5x64xf32>,
    %111 = vector.extract_strided_slice %108 {offsets = [7, 0], sizes = [5, 64], strides = [1, 1]} : vector<33x64xf32> to vector<5x64xf32>
    %c5_109 = arith.constant 5 : index
    %c0_110 = arith.constant 0 : index
    %112 = vector.load %arg20[%c5_109, %c0_110] : memref<25x64xf32, #tpu.memory_space<vmem>>, vector<5x64xf32>
    tpu.vector_store %arg20[%c5_109, %c0_110], %111 {strides = array<i32>} : memref<25x64xf32, #tpu.memory_space<vmem>>, vector<5x64xf32>,
    %113 = vector.extract_strided_slice %108 {offsets = [14, 0], sizes = [5, 64], strides = [1, 1]} : vector<33x64xf32> to vector<5x64xf32>
    %c10 = arith.constant 10 : index
    %c0_111 = arith.constant 0 : index
    %114 = vector.load %arg20[%c10, %c0_111] : memref<25x64xf32, #tpu.memory_space<vmem>>, vector<5x64xf32>
    tpu.vector_store %arg20[%c10, %c0_111], %113 {strides = array<i32>} : memref<25x64xf32, #tpu.memory_space<vmem>>, vector<5x64xf32>,
    %115 = vector.extract_strided_slice %108 {offsets = [21, 0], sizes = [5, 64], strides = [1, 1]} : vector<33x64xf32> to vector<5x64xf32>
    %c15_112 = arith.constant 15 : index
    %c0_113 = arith.constant 0 : index
    %116 = vector.load %arg20[%c15_112, %c0_113] : memref<25x64xf32, #tpu.memory_space<vmem>>, vector<5x64xf32>
    tpu.vector_store %arg20[%c15_112, %c0_113], %115 {strides = array<i32>} : memref<25x64xf32, #tpu.memory_space<vmem>>, vector<5x64xf32>,
    %117 = vector.extract_strided_slice %108 {offsets = [28, 0], sizes = [5, 64], strides = [1, 1]} : vector<33x64xf32> to vector<5x64xf32>
    %c20 = arith.constant 20 : index
    %c0_114 = arith.constant 0 : index
    %118 = vector.load %arg20[%c20, %c0_114] : memref<25x64xf32, #tpu.memory_space<vmem>>, vector<5x64xf32>
    tpu.vector_store %arg20[%c20, %c0_114], %117 {strides = array<i32>} : memref<25x64xf32, #tpu.memory_space<vmem>>, vector<5x64xf32>,
    %cst_115 = arith.constant 0.000000e+00 : f32
    %119 = vector.broadcast %cst_115 : f32 to vector<13x128xf32>
    %c0_116 = arith.constant 0 : index
    %c0_117 = arith.constant 0 : index
    %120 = vector.load %arg20[%c0_116, %c0_117] : memref<25x64xf32, #tpu.memory_space<vmem>>, vector<13x64xf32>
    %c0_118 = arith.constant 0 : index
    %c0_119 = arith.constant 0 : index
    %c0_120 = arith.constant 0 : index
    %121 = vector.load %arg6[%c0_118, %c0_119, %c0_120] : memref<9x64x128xf32, #tpu.memory_space<vmem>>, vector<1x64x128xf32>
    %122 = vector.shape_cast %121 : vector<1x64x128xf32> to vector<64x128xf32>
    %cst_121 = arith.constant dense<0.000000e+00> : vector<13x128xf32>
    %123 = tpu.matmul %120, %122, %cst_121 {dimension_numbers = #tpu.dot_dimension_numbers<[1], [0], [0], [1], [0, 0, 1, 1], [], []>} : vector<13x64xf32>, vector<64x128xf32>, vector<13x128xf32> -> vector<13x128xf32>
    %124 = arith.addf %119, %123 : vector<13x128xf32>
    %c1_122 = arith.constant 1 : index
    %c0_123 = arith.constant 0 : index
    %125 = vector.load %arg20[%c1_122, %c0_123] : memref<25x64xf32, #tpu.memory_space<vmem>>, vector<13x64xf32>
    %c1_124 = arith.constant 1 : index
    %c0_125 = arith.constant 0 : index
    %c0_126 = arith.constant 0 : index
    %126 = vector.load %arg6[%c1_124, %c0_125, %c0_126] : memref<9x64x128xf32, #tpu.memory_space<vmem>>, vector<1x64x128xf32>
    %127 = vector.shape_cast %126 : vector<1x64x128xf32> to vector<64x128xf32>
    %cst_127 = arith.constant dense<0.000000e+00> : vector<13x128xf32>
    %128 = tpu.matmul %125, %127, %cst_127 {dimension_numbers = #tpu.dot_dimension_numbers<[1], [0], [0], [1], [0, 0, 1, 1], [], []>} : vector<13x64xf32>, vector<64x128xf32>, vector<13x128xf32> -> vector<13x128xf32>
    %129 = arith.addf %124, %128 : vector<13x128xf32>
    %c2_128 = arith.constant 2 : index
    %c0_129 = arith.constant 0 : index
    %130 = vector.load %arg20[%c2_128, %c0_129] : memref<25x64xf32, #tpu.memory_space<vmem>>, vector<13x64xf32>
    %c2_130 = arith.constant 2 : index
    %c0_131 = arith.constant 0 : index
    %c0_132 = arith.constant 0 : index
    %131 = vector.load %arg6[%c2_130, %c0_131, %c0_132] : memref<9x64x128xf32, #tpu.memory_space<vmem>>, vector<1x64x128xf32>
    %132 = vector.shape_cast %131 : vector<1x64x128xf32> to vector<64x128xf32>
    %cst_133 = arith.constant dense<0.000000e+00> : vector<13x128xf32>
    %133 = tpu.matmul %130, %132, %cst_133 {dimension_numbers = #tpu.dot_dimension_numbers<[1], [0], [0], [1], [0, 0, 1, 1], [], []>} : vector<13x64xf32>, vector<64x128xf32>, vector<13x128xf32> -> vector<13x128xf32>
    %134 = arith.addf %129, %133 : vector<13x128xf32>
    %c5_134 = arith.constant 5 : index
    %c0_135 = arith.constant 0 : index
    %135 = vector.load %arg20[%c5_134, %c0_135] : memref<25x64xf32, #tpu.memory_space<vmem>>, vector<13x64xf32>
    %c3_136 = arith.constant 3 : index
    %c0_137 = arith.constant 0 : index
    %c0_138 = arith.constant 0 : index
    %136 = vector.load %arg6[%c3_136, %c0_137, %c0_138] : memref<9x64x128xf32, #tpu.memory_space<vmem>>, vector<1x64x128xf32>
    %137 = vector.shape_cast %136 : vector<1x64x128xf32> to vector<64x128xf32>
    %cst_139 = arith.constant dense<0.000000e+00> : vector<13x128xf32>
    %138 = tpu.matmul %135, %137, %cst_139 {dimension_numbers = #tpu.dot_dimension_numbers<[1], [0], [0], [1], [0, 0, 1, 1], [], []>} : vector<13x64xf32>, vector<64x128xf32>, vector<13x128xf32> -> vector<13x128xf32>
    %139 = arith.addf %134, %138 : vector<13x128xf32>
    %c6_140 = arith.constant 6 : index
    %c0_141 = arith.constant 0 : index
    %140 = vector.load %arg20[%c6_140, %c0_141] : memref<25x64xf32, #tpu.memory_space<vmem>>, vector<13x64xf32>
    %c4_142 = arith.constant 4 : index
    %c0_143 = arith.constant 0 : index
    %c0_144 = arith.constant 0 : index
    %141 = vector.load %arg6[%c4_142, %c0_143, %c0_144] : memref<9x64x128xf32, #tpu.memory_space<vmem>>, vector<1x64x128xf32>
    %142 = vector.shape_cast %141 : vector<1x64x128xf32> to vector<64x128xf32>
    %cst_145 = arith.constant dense<0.000000e+00> : vector<13x128xf32>
    %143 = tpu.matmul %140, %142, %cst_145 {dimension_numbers = #tpu.dot_dimension_numbers<[1], [0], [0], [1], [0, 0, 1, 1], [], []>} : vector<13x64xf32>, vector<64x128xf32>, vector<13x128xf32> -> vector<13x128xf32>
    %144 = arith.addf %139, %143 : vector<13x128xf32>
    %c7_146 = arith.constant 7 : index
    %c0_147 = arith.constant 0 : index
    %145 = vector.load %arg20[%c7_146, %c0_147] : memref<25x64xf32, #tpu.memory_space<vmem>>, vector<13x64xf32>
    %c5_148 = arith.constant 5 : index
    %c0_149 = arith.constant 0 : index
    %c0_150 = arith.constant 0 : index
    %146 = vector.load %arg6[%c5_148, %c0_149, %c0_150] : memref<9x64x128xf32, #tpu.memory_space<vmem>>, vector<1x64x128xf32>
    %147 = vector.shape_cast %146 : vector<1x64x128xf32> to vector<64x128xf32>
    %cst_151 = arith.constant dense<0.000000e+00> : vector<13x128xf32>
    %148 = tpu.matmul %145, %147, %cst_151 {dimension_numbers = #tpu.dot_dimension_numbers<[1], [0], [0], [1], [0, 0, 1, 1], [], []>} : vector<13x64xf32>, vector<64x128xf32>, vector<13x128xf32> -> vector<13x128xf32>
    %149 = arith.addf %144, %148 : vector<13x128xf32>
    %c10_152 = arith.constant 10 : index
    %c0_153 = arith.constant 0 : index
    %150 = vector.load %arg20[%c10_152, %c0_153] : memref<25x64xf32, #tpu.memory_space<vmem>>, vector<13x64xf32>
    %c6_154 = arith.constant 6 : index
    %c0_155 = arith.constant 0 : index
    %c0_156 = arith.constant 0 : index
    %151 = vector.load %arg6[%c6_154, %c0_155, %c0_156] : memref<9x64x128xf32, #tpu.memory_space<vmem>>, vector<1x64x128xf32>
    %152 = vector.shape_cast %151 : vector<1x64x128xf32> to vector<64x128xf32>
    %cst_157 = arith.constant dense<0.000000e+00> : vector<13x128xf32>
    %153 = tpu.matmul %150, %152, %cst_157 {dimension_numbers = #tpu.dot_dimension_numbers<[1], [0], [0], [1], [0, 0, 1, 1], [], []>} : vector<13x64xf32>, vector<64x128xf32>, vector<13x128xf32> -> vector<13x128xf32>
    %154 = arith.addf %149, %153 : vector<13x128xf32>
    %c11 = arith.constant 11 : index
    %c0_158 = arith.constant 0 : index
    %155 = vector.load %arg20[%c11, %c0_158] : memref<25x64xf32, #tpu.memory_space<vmem>>, vector<13x64xf32>
    %c7_159 = arith.constant 7 : index
    %c0_160 = arith.constant 0 : index
    %c0_161 = arith.constant 0 : index
    %156 = vector.load %arg6[%c7_159, %c0_160, %c0_161] : memref<9x64x128xf32, #tpu.memory_space<vmem>>, vector<1x64x128xf32>
    %157 = vector.shape_cast %156 : vector<1x64x128xf32> to vector<64x128xf32>
    %cst_162 = arith.constant dense<0.000000e+00> : vector<13x128xf32>
    %158 = tpu.matmul %155, %157, %cst_162 {dimension_numbers = #tpu.dot_dimension_numbers<[1], [0], [0], [1], [0, 0, 1, 1], [], []>} : vector<13x64xf32>, vector<64x128xf32>, vector<13x128xf32> -> vector<13x128xf32>
    %159 = arith.addf %154, %158 : vector<13x128xf32>
    %c12 = arith.constant 12 : index
    %c0_163 = arith.constant 0 : index
    %160 = vector.load %arg20[%c12, %c0_163] : memref<25x64xf32, #tpu.memory_space<vmem>>, vector<13x64xf32>
    %c8_164 = arith.constant 8 : index
    %c0_165 = arith.constant 0 : index
    %c0_166 = arith.constant 0 : index
    %161 = vector.load %arg6[%c8_164, %c0_165, %c0_166] : memref<9x64x128xf32, #tpu.memory_space<vmem>>, vector<1x64x128xf32>
    %162 = vector.shape_cast %161 : vector<1x64x128xf32> to vector<64x128xf32>
    %cst_167 = arith.constant dense<0.000000e+00> : vector<13x128xf32>
    %163 = tpu.matmul %160, %162, %cst_167 {dimension_numbers = #tpu.dot_dimension_numbers<[1], [0], [0], [1], [0, 0, 1, 1], [], []>} : vector<13x64xf32>, vector<64x128xf32>, vector<13x128xf32> -> vector<13x128xf32>
    %164 = arith.addf %159, %163 : vector<13x128xf32>
    %c0_168 = arith.constant 0 : index
    %c0_169 = arith.constant 0 : index
    %165 = vector.load %arg7[%c0_168, %c0_169] : memref<1x128xf32, #tpu.memory_space<vmem>>, vector<1x128xf32>
    %166 = vector.broadcast %165 : vector<1x128xf32> to vector<13x128xf32>
    %167 = arith.addf %164, %166 : vector<13x128xf32>
    %cst_170 = arith.constant 0.000000e+00 : f32
    %168 = vector.broadcast %cst_170 : f32 to vector<13x128xf32>
    %169 = arith.maximumf %167, %168 : vector<13x128xf32>
    %170 = vector.extract_strided_slice %169 {offsets = [0, 0], sizes = [3, 128], strides = [1, 1]} : vector<13x128xf32> to vector<3x128xf32>
    %c0_171 = arith.constant 0 : index
    %c0_172 = arith.constant 0 : index
    %171 = vector.load %arg21[%c0_171, %c0_172] : memref<16x128xf32, #tpu.memory_space<vmem>>, vector<3x128xf32>
    tpu.vector_store %arg21[%c0_171, %c0_172], %170 {strides = array<i32>} : memref<16x128xf32, #tpu.memory_space<vmem>>, vector<3x128xf32>,
    %172 = vector.extract_strided_slice %169 {offsets = [5, 0], sizes = [3, 128], strides = [1, 1]} : vector<13x128xf32> to vector<3x128xf32>
    %c3_173 = arith.constant 3 : index
    %c0_174 = arith.constant 0 : index
    %173 = vector.load %arg21[%c3_173, %c0_174] : memref<16x128xf32, #tpu.memory_space<vmem>>, vector<3x128xf32>
    tpu.vector_store %arg21[%c3_173, %c0_174], %172 {strides = array<i32>} : memref<16x128xf32, #tpu.memory_space<vmem>>, vector<3x128xf32>,
    %174 = vector.extract_strided_slice %169 {offsets = [10, 0], sizes = [3, 128], strides = [1, 1]} : vector<13x128xf32> to vector<3x128xf32>
    %c6_175 = arith.constant 6 : index
    %c0_176 = arith.constant 0 : index
    %175 = vector.load %arg21[%c6_175, %c0_176] : memref<16x128xf32, #tpu.memory_space<vmem>>, vector<3x128xf32>
    tpu.vector_store %arg21[%c6_175, %c0_176], %174 {strides = array<i32>} : memref<16x128xf32, #tpu.memory_space<vmem>>, vector<3x128xf32>,
    %cst_177 = arith.constant 0.000000e+00 : f32
    %176 = vector.broadcast %cst_177 : f32 to vector<8x256xf32>
    %c0_178 = arith.constant 0 : index
    %c0_179 = arith.constant 0 : index
    %177 = vector.load %arg21[%c0_178, %c0_179] : memref<16x128xf32, #tpu.memory_space<vmem>>, vector<8x128xf32>
    %c0_180 = arith.constant 0 : index
    %c0_181 = arith.constant 0 : index
    %c0_182 = arith.constant 0 : index
    %178 = vector.load %arg8[%c0_180, %c0_181, %c0_182] : memref<9x128x256xf32, #tpu.memory_space<vmem>>, vector<1x128x256xf32>
    %179 = vector.shape_cast %178 : vector<1x128x256xf32> to vector<128x256xf32>
    %cst_183 = arith.constant dense<0.000000e+00> : vector<8x256xf32>
    %180 = tpu.matmul %177, %179, %cst_183 {dimension_numbers = #tpu.dot_dimension_numbers<[1], [0], [0], [1], [0, 0, 1, 1], [], []>} : vector<8x128xf32>, vector<128x256xf32>, vector<8x256xf32> -> vector<8x256xf32>
    %181 = arith.addf %176, %180 : vector<8x256xf32>
    %c1_184 = arith.constant 1 : index
    %c0_185 = arith.constant 0 : index
    %182 = vector.load %arg21[%c1_184, %c0_185] : memref<16x128xf32, #tpu.memory_space<vmem>>, vector<8x128xf32>
    %c1_186 = arith.constant 1 : index
    %c0_187 = arith.constant 0 : index
    %c0_188 = arith.constant 0 : index
    %183 = vector.load %arg8[%c1_186, %c0_187, %c0_188] : memref<9x128x256xf32, #tpu.memory_space<vmem>>, vector<1x128x256xf32>
    %184 = vector.shape_cast %183 : vector<1x128x256xf32> to vector<128x256xf32>
    %cst_189 = arith.constant dense<0.000000e+00> : vector<8x256xf32>
    %185 = tpu.matmul %182, %184, %cst_189 {dimension_numbers = #tpu.dot_dimension_numbers<[1], [0], [0], [1], [0, 0, 1, 1], [], []>} : vector<8x128xf32>, vector<128x256xf32>, vector<8x256xf32> -> vector<8x256xf32>
    %186 = arith.addf %181, %185 : vector<8x256xf32>
    %c2_190 = arith.constant 2 : index
    %c0_191 = arith.constant 0 : index
    %187 = vector.load %arg21[%c2_190, %c0_191] : memref<16x128xf32, #tpu.memory_space<vmem>>, vector<8x128xf32>
    %c2_192 = arith.constant 2 : index
    %c0_193 = arith.constant 0 : index
    %c0_194 = arith.constant 0 : index
    %188 = vector.load %arg8[%c2_192, %c0_193, %c0_194] : memref<9x128x256xf32, #tpu.memory_space<vmem>>, vector<1x128x256xf32>
    %189 = vector.shape_cast %188 : vector<1x128x256xf32> to vector<128x256xf32>
    %cst_195 = arith.constant dense<0.000000e+00> : vector<8x256xf32>
    %190 = tpu.matmul %187, %189, %cst_195 {dimension_numbers = #tpu.dot_dimension_numbers<[1], [0], [0], [1], [0, 0, 1, 1], [], []>} : vector<8x128xf32>, vector<128x256xf32>, vector<8x256xf32> -> vector<8x256xf32>
    %191 = arith.addf %186, %190 : vector<8x256xf32>
    %c3_196 = arith.constant 3 : index
    %c0_197 = arith.constant 0 : index
    %192 = vector.load %arg21[%c3_196, %c0_197] : memref<16x128xf32, #tpu.memory_space<vmem>>, vector<8x128xf32>
    %c3_198 = arith.constant 3 : index
    %c0_199 = arith.constant 0 : index
    %c0_200 = arith.constant 0 : index
    %193 = vector.load %arg8[%c3_198, %c0_199, %c0_200] : memref<9x128x256xf32, #tpu.memory_space<vmem>>, vector<1x128x256xf32>
    %194 = vector.shape_cast %193 : vector<1x128x256xf32> to vector<128x256xf32>
    %cst_201 = arith.constant dense<0.000000e+00> : vector<8x256xf32>
    %195 = tpu.matmul %192, %194, %cst_201 {dimension_numbers = #tpu.dot_dimension_numbers<[1], [0], [0], [1], [0, 0, 1, 1], [], []>} : vector<8x128xf32>, vector<128x256xf32>, vector<8x256xf32> -> vector<8x256xf32>
    %196 = arith.addf %191, %195 : vector<8x256xf32>
    %c4_202 = arith.constant 4 : index
    %c0_203 = arith.constant 0 : index
    %197 = vector.load %arg21[%c4_202, %c0_203] : memref<16x128xf32, #tpu.memory_space<vmem>>, vector<8x128xf32>
    %c4_204 = arith.constant 4 : index
    %c0_205 = arith.constant 0 : index
    %c0_206 = arith.constant 0 : index
    %198 = vector.load %arg8[%c4_204, %c0_205, %c0_206] : memref<9x128x256xf32, #tpu.memory_space<vmem>>, vector<1x128x256xf32>
    %199 = vector.shape_cast %198 : vector<1x128x256xf32> to vector<128x256xf32>
    %cst_207 = arith.constant dense<0.000000e+00> : vector<8x256xf32>
    %200 = tpu.matmul %197, %199, %cst_207 {dimension_numbers = #tpu.dot_dimension_numbers<[1], [0], [0], [1], [0, 0, 1, 1], [], []>} : vector<8x128xf32>, vector<128x256xf32>, vector<8x256xf32> -> vector<8x256xf32>
    %201 = arith.addf %196, %200 : vector<8x256xf32>
    %c5_208 = arith.constant 5 : index
    %c0_209 = arith.constant 0 : index
    %202 = vector.load %arg21[%c5_208, %c0_209] : memref<16x128xf32, #tpu.memory_space<vmem>>, vector<8x128xf32>
    %c5_210 = arith.constant 5 : index
    %c0_211 = arith.constant 0 : index
    %c0_212 = arith.constant 0 : index
    %203 = vector.load %arg8[%c5_210, %c0_211, %c0_212] : memref<9x128x256xf32, #tpu.memory_space<vmem>>, vector<1x128x256xf32>
    %204 = vector.shape_cast %203 : vector<1x128x256xf32> to vector<128x256xf32>
    %cst_213 = arith.constant dense<0.000000e+00> : vector<8x256xf32>
    %205 = tpu.matmul %202, %204, %cst_213 {dimension_numbers = #tpu.dot_dimension_numbers<[1], [0], [0], [1], [0, 0, 1, 1], [], []>} : vector<8x128xf32>, vector<128x256xf32>, vector<8x256xf32> -> vector<8x256xf32>
    %206 = arith.addf %201, %205 : vector<8x256xf32>
    %c6_214 = arith.constant 6 : index
    %c0_215 = arith.constant 0 : index
    %207 = vector.load %arg21[%c6_214, %c0_215] : memref<16x128xf32, #tpu.memory_space<vmem>>, vector<8x128xf32>
    %c6_216 = arith.constant 6 : index
    %c0_217 = arith.constant 0 : index
    %c0_218 = arith.constant 0 : index
    %208 = vector.load %arg8[%c6_216, %c0_217, %c0_218] : memref<9x128x256xf32, #tpu.memory_space<vmem>>, vector<1x128x256xf32>
    %209 = vector.shape_cast %208 : vector<1x128x256xf32> to vector<128x256xf32>
    %cst_219 = arith.constant dense<0.000000e+00> : vector<8x256xf32>
    %210 = tpu.matmul %207, %209, %cst_219 {dimension_numbers = #tpu.dot_dimension_numbers<[1], [0], [0], [1], [0, 0, 1, 1], [], []>} : vector<8x128xf32>, vector<128x256xf32>, vector<8x256xf32> -> vector<8x256xf32>
    %211 = arith.addf %206, %210 : vector<8x256xf32>
    %c7_220 = arith.constant 7 : index
    %c0_221 = arith.constant 0 : index
    %212 = vector.load %arg21[%c7_220, %c0_221] : memref<16x128xf32, #tpu.memory_space<vmem>>, vector<8x128xf32>
    %c7_222 = arith.constant 7 : index
    %c0_223 = arith.constant 0 : index
    %c0_224 = arith.constant 0 : index
    %213 = vector.load %arg8[%c7_222, %c0_223, %c0_224] : memref<9x128x256xf32, #tpu.memory_space<vmem>>, vector<1x128x256xf32>
    %214 = vector.shape_cast %213 : vector<1x128x256xf32> to vector<128x256xf32>
    %cst_225 = arith.constant dense<0.000000e+00> : vector<8x256xf32>
    %215 = tpu.matmul %212, %214, %cst_225 {dimension_numbers = #tpu.dot_dimension_numbers<[1], [0], [0], [1], [0, 0, 1, 1], [], []>} : vector<8x128xf32>, vector<128x256xf32>, vector<8x256xf32> -> vector<8x256xf32>
    %216 = arith.addf %211, %215 : vector<8x256xf32>
    %c8_226 = arith.constant 8 : index
    %c0_227 = arith.constant 0 : index
    %217 = vector.load %arg21[%c8_226, %c0_227] : memref<16x128xf32, #tpu.memory_space<vmem>>, vector<8x128xf32>
    %c8_228 = arith.constant 8 : index
    %c0_229 = arith.constant 0 : index
    %c0_230 = arith.constant 0 : index
    %218 = vector.load %arg8[%c8_228, %c0_229, %c0_230] : memref<9x128x256xf32, #tpu.memory_space<vmem>>, vector<1x128x256xf32>
    %219 = vector.shape_cast %218 : vector<1x128x256xf32> to vector<128x256xf32>
    %cst_231 = arith.constant dense<0.000000e+00> : vector<8x256xf32>
    %220 = tpu.matmul %217, %219, %cst_231 {dimension_numbers = #tpu.dot_dimension_numbers<[1], [0], [0], [1], [0, 0, 1, 1], [], []>} : vector<8x128xf32>, vector<128x256xf32>, vector<8x256xf32> -> vector<8x256xf32>
    %221 = arith.addf %216, %220 : vector<8x256xf32>
    %c0_232 = arith.constant 0 : index
    %c0_233 = arith.constant 0 : index
    %222 = vector.load %arg9[%c0_232, %c0_233] : memref<1x256xf32, #tpu.memory_space<vmem>>, vector<1x256xf32>
    %223 = vector.broadcast %222 : vector<1x256xf32> to vector<8x256xf32>
    %224 = arith.addf %221, %223 : vector<8x256xf32>
    %cst_234 = arith.constant 0.000000e+00 : f32
    %225 = vector.broadcast %cst_234 : f32 to vector<8x256xf32>
    %226 = arith.maximumf %224, %225 : vector<8x256xf32>
    %227 = vector.extract_strided_slice %226 {offsets = [0, 0], sizes = [1, 256], strides = [1, 1]} : vector<8x256xf32> to vector<1x256xf32>
    %c12_235 = arith.constant 12 : index
    %c0_236 = arith.constant 0 : index
    %228 = vector.load %arg22[%c12_235, %c0_236] : memref<25x256xf32, #tpu.memory_space<vmem>>, vector<1x256xf32>
    tpu.vector_store %arg22[%c12_235, %c0_236], %227 {strides = array<i32>} : memref<25x256xf32, #tpu.memory_space<vmem>>, vector<1x256xf32>,
    %cst_237 = arith.constant 0.000000e+00 : f32
    %229 = vector.broadcast %cst_237 : f32 to vector<13x128xf32>
    %c0_238 = arith.constant 0 : index
    %c0_239 = arith.constant 0 : index
    %230 = vector.load %arg22[%c0_238, %c0_239] : memref<25x256xf32, #tpu.memory_space<vmem>>, vector<13x256xf32>
    %c0_240 = arith.constant 0 : index
    %c0_241 = arith.constant 0 : index
    %c0_242 = arith.constant 0 : index
    %231 = vector.load %arg10[%c0_240, %c0_241, %c0_242] : memref<9x256x128xf32, #tpu.memory_space<vmem>>, vector<1x256x128xf32>
    %232 = vector.shape_cast %231 : vector<1x256x128xf32> to vector<256x128xf32>
    %cst_243 = arith.constant dense<0.000000e+00> : vector<13x128xf32>
    %233 = tpu.matmul %230, %232, %cst_243 {dimension_numbers = #tpu.dot_dimension_numbers<[1], [0], [0], [1], [0, 0, 1, 1], [], []>} : vector<13x256xf32>, vector<256x128xf32>, vector<13x128xf32> -> vector<13x128xf32>
    %234 = arith.addf %229, %233 : vector<13x128xf32>
    %c1_244 = arith.constant 1 : index
    %c0_245 = arith.constant 0 : index
    %235 = vector.load %arg22[%c1_244, %c0_245] : memref<25x256xf32, #tpu.memory_space<vmem>>, vector<13x256xf32>
    %c1_246 = arith.constant 1 : index
    %c0_247 = arith.constant 0 : index
    %c0_248 = arith.constant 0 : index
    %236 = vector.load %arg10[%c1_246, %c0_247, %c0_248] : memref<9x256x128xf32, #tpu.memory_space<vmem>>, vector<1x256x128xf32>
    %237 = vector.shape_cast %236 : vector<1x256x128xf32> to vector<256x128xf32>
    %cst_249 = arith.constant dense<0.000000e+00> : vector<13x128xf32>
    %238 = tpu.matmul %235, %237, %cst_249 {dimension_numbers = #tpu.dot_dimension_numbers<[1], [0], [0], [1], [0, 0, 1, 1], [], []>} : vector<13x256xf32>, vector<256x128xf32>, vector<13x128xf32> -> vector<13x128xf32>
    %239 = arith.addf %234, %238 : vector<13x128xf32>
    %c2_250 = arith.constant 2 : index
    %c0_251 = arith.constant 0 : index
    %240 = vector.load %arg22[%c2_250, %c0_251] : memref<25x256xf32, #tpu.memory_space<vmem>>, vector<13x256xf32>
    %c2_252 = arith.constant 2 : index
    %c0_253 = arith.constant 0 : index
    %c0_254 = arith.constant 0 : index
    %241 = vector.load %arg10[%c2_252, %c0_253, %c0_254] : memref<9x256x128xf32, #tpu.memory_space<vmem>>, vector<1x256x128xf32>
    %242 = vector.shape_cast %241 : vector<1x256x128xf32> to vector<256x128xf32>
    %cst_255 = arith.constant dense<0.000000e+00> : vector<13x128xf32>
    %243 = tpu.matmul %240, %242, %cst_255 {dimension_numbers = #tpu.dot_dimension_numbers<[1], [0], [0], [1], [0, 0, 1, 1], [], []>} : vector<13x256xf32>, vector<256x128xf32>, vector<13x128xf32> -> vector<13x128xf32>
    %244 = arith.addf %239, %243 : vector<13x128xf32>
    %c5_256 = arith.constant 5 : index
    %c0_257 = arith.constant 0 : index
    %245 = vector.load %arg22[%c5_256, %c0_257] : memref<25x256xf32, #tpu.memory_space<vmem>>, vector<13x256xf32>
    %c3_258 = arith.constant 3 : index
    %c0_259 = arith.constant 0 : index
    %c0_260 = arith.constant 0 : index
    %246 = vector.load %arg10[%c3_258, %c0_259, %c0_260] : memref<9x256x128xf32, #tpu.memory_space<vmem>>, vector<1x256x128xf32>
    %247 = vector.shape_cast %246 : vector<1x256x128xf32> to vector<256x128xf32>
    %cst_261 = arith.constant dense<0.000000e+00> : vector<13x128xf32>
    %248 = tpu.matmul %245, %247, %cst_261 {dimension_numbers = #tpu.dot_dimension_numbers<[1], [0], [0], [1], [0, 0, 1, 1], [], []>} : vector<13x256xf32>, vector<256x128xf32>, vector<13x128xf32> -> vector<13x128xf32>
    %249 = arith.addf %244, %248 : vector<13x128xf32>
    %c6_262 = arith.constant 6 : index
    %c0_263 = arith.constant 0 : index
    %250 = vector.load %arg22[%c6_262, %c0_263] : memref<25x256xf32, #tpu.memory_space<vmem>>, vector<13x256xf32>
    %c4_264 = arith.constant 4 : index
    %c0_265 = arith.constant 0 : index
    %c0_266 = arith.constant 0 : index
    %251 = vector.load %arg10[%c4_264, %c0_265, %c0_266] : memref<9x256x128xf32, #tpu.memory_space<vmem>>, vector<1x256x128xf32>
    %252 = vector.shape_cast %251 : vector<1x256x128xf32> to vector<256x128xf32>
    %cst_267 = arith.constant dense<0.000000e+00> : vector<13x128xf32>
    %253 = tpu.matmul %250, %252, %cst_267 {dimension_numbers = #tpu.dot_dimension_numbers<[1], [0], [0], [1], [0, 0, 1, 1], [], []>} : vector<13x256xf32>, vector<256x128xf32>, vector<13x128xf32> -> vector<13x128xf32>
    %254 = arith.addf %249, %253 : vector<13x128xf32>
    %c7_268 = arith.constant 7 : index
    %c0_269 = arith.constant 0 : index
    %255 = vector.load %arg22[%c7_268, %c0_269] : memref<25x256xf32, #tpu.memory_space<vmem>>, vector<13x256xf32>
    %c5_270 = arith.constant 5 : index
    %c0_271 = arith.constant 0 : index
    %c0_272 = arith.constant 0 : index
    %256 = vector.load %arg10[%c5_270, %c0_271, %c0_272] : memref<9x256x128xf32, #tpu.memory_space<vmem>>, vector<1x256x128xf32>
    %257 = vector.shape_cast %256 : vector<1x256x128xf32> to vector<256x128xf32>
    %cst_273 = arith.constant dense<0.000000e+00> : vector<13x128xf32>
    %258 = tpu.matmul %255, %257, %cst_273 {dimension_numbers = #tpu.dot_dimension_numbers<[1], [0], [0], [1], [0, 0, 1, 1], [], []>} : vector<13x256xf32>, vector<256x128xf32>, vector<13x128xf32> -> vector<13x128xf32>
    %259 = arith.addf %254, %258 : vector<13x128xf32>
    %c10_274 = arith.constant 10 : index
    %c0_275 = arith.constant 0 : index
    %260 = vector.load %arg22[%c10_274, %c0_275] : memref<25x256xf32, #tpu.memory_space<vmem>>, vector<13x256xf32>
    %c6_276 = arith.constant 6 : index
    %c0_277 = arith.constant 0 : index
    %c0_278 = arith.constant 0 : index
    %261 = vector.load %arg10[%c6_276, %c0_277, %c0_278] : memref<9x256x128xf32, #tpu.memory_space<vmem>>, vector<1x256x128xf32>
    %262 = vector.shape_cast %261 : vector<1x256x128xf32> to vector<256x128xf32>
    %cst_279 = arith.constant dense<0.000000e+00> : vector<13x128xf32>
    %263 = tpu.matmul %260, %262, %cst_279 {dimension_numbers = #tpu.dot_dimension_numbers<[1], [0], [0], [1], [0, 0, 1, 1], [], []>} : vector<13x256xf32>, vector<256x128xf32>, vector<13x128xf32> -> vector<13x128xf32>
    %264 = arith.addf %259, %263 : vector<13x128xf32>
    %c11_280 = arith.constant 11 : index
    %c0_281 = arith.constant 0 : index
    %265 = vector.load %arg22[%c11_280, %c0_281] : memref<25x256xf32, #tpu.memory_space<vmem>>, vector<13x256xf32>
    %c7_282 = arith.constant 7 : index
    %c0_283 = arith.constant 0 : index
    %c0_284 = arith.constant 0 : index
    %266 = vector.load %arg10[%c7_282, %c0_283, %c0_284] : memref<9x256x128xf32, #tpu.memory_space<vmem>>, vector<1x256x128xf32>
    %267 = vector.shape_cast %266 : vector<1x256x128xf32> to vector<256x128xf32>
    %cst_285 = arith.constant dense<0.000000e+00> : vector<13x128xf32>
    %268 = tpu.matmul %265, %267, %cst_285 {dimension_numbers = #tpu.dot_dimension_numbers<[1], [0], [0], [1], [0, 0, 1, 1], [], []>} : vector<13x256xf32>, vector<256x128xf32>, vector<13x128xf32> -> vector<13x128xf32>
    %269 = arith.addf %264, %268 : vector<13x128xf32>
    %c12_286 = arith.constant 12 : index
    %c0_287 = arith.constant 0 : index
    %270 = vector.load %arg22[%c12_286, %c0_287] : memref<25x256xf32, #tpu.memory_space<vmem>>, vector<13x256xf32>
    %c8_288 = arith.constant 8 : index
    %c0_289 = arith.constant 0 : index
    %c0_290 = arith.constant 0 : index
    %271 = vector.load %arg10[%c8_288, %c0_289, %c0_290] : memref<9x256x128xf32, #tpu.memory_space<vmem>>, vector<1x256x128xf32>
    %272 = vector.shape_cast %271 : vector<1x256x128xf32> to vector<256x128xf32>
    %cst_291 = arith.constant dense<0.000000e+00> : vector<13x128xf32>
    %273 = tpu.matmul %270, %272, %cst_291 {dimension_numbers = #tpu.dot_dimension_numbers<[1], [0], [0], [1], [0, 0, 1, 1], [], []>} : vector<13x256xf32>, vector<256x128xf32>, vector<13x128xf32> -> vector<13x128xf32>
    %274 = arith.addf %269, %273 : vector<13x128xf32>
    %c0_292 = arith.constant 0 : index
    %c0_293 = arith.constant 0 : index
    %275 = vector.load %arg11[%c0_292, %c0_293] : memref<1x128xf32, #tpu.memory_space<vmem>>, vector<1x128xf32>
    %276 = vector.broadcast %275 : vector<1x128xf32> to vector<13x128xf32>
    %277 = arith.addf %274, %276 : vector<13x128xf32>
    %cst_294 = arith.constant 0.000000e+00 : f32
    %278 = vector.broadcast %cst_294 : f32 to vector<13x128xf32>
    %279 = arith.maximumf %277, %278 : vector<13x128xf32>
    %280 = vector.extract_strided_slice %279 {offsets = [0, 0], sizes = [3, 128], strides = [1, 1]} : vector<13x128xf32> to vector<3x128xf32>
    %c16_295 = arith.constant 16 : index
    %c0_296 = arith.constant 0 : index
    %281 = vector.load %arg23[%c16_295, %c0_296] : memref<49x128xf32, #tpu.memory_space<vmem>>, vector<3x128xf32>
    tpu.vector_store %arg23[%c16_295, %c0_296], %280 {strides = array<i32>} : memref<49x128xf32, #tpu.memory_space<vmem>>, vector<3x128xf32>,
    %282 = vector.extract_strided_slice %279 {offsets = [5, 0], sizes = [3, 128], strides = [1, 1]} : vector<13x128xf32> to vector<3x128xf32>
    %c23 = arith.constant 23 : index
    %c0_297 = arith.constant 0 : index
    %283 = vector.load %arg23[%c23, %c0_297] : memref<49x128xf32, #tpu.memory_space<vmem>>, vector<3x128xf32>
    tpu.vector_store %arg23[%c23, %c0_297], %282 {strides = array<i32>} : memref<49x128xf32, #tpu.memory_space<vmem>>, vector<3x128xf32>,
    %284 = vector.extract_strided_slice %279 {offsets = [10, 0], sizes = [3, 128], strides = [1, 1]} : vector<13x128xf32> to vector<3x128xf32>
    %c30 = arith.constant 30 : index
    %c0_298 = arith.constant 0 : index
    %285 = vector.load %arg23[%c30, %c0_298] : memref<49x128xf32, #tpu.memory_space<vmem>>, vector<3x128xf32>
    tpu.vector_store %arg23[%c30, %c0_298], %284 {strides = array<i32>} : memref<49x128xf32, #tpu.memory_space<vmem>>, vector<3x128xf32>,
    %cst_299 = arith.constant 0.000000e+00 : f32
    %286 = vector.broadcast %cst_299 : f32 to vector<33x64xf32>
    %c0_300 = arith.constant 0 : index
    %c0_301 = arith.constant 0 : index
    %287 = vector.load %arg23[%c0_300, %c0_301] : memref<49x128xf32, #tpu.memory_space<vmem>>, vector<33x128xf32>
    %c0_302 = arith.constant 0 : index
    %c0_303 = arith.constant 0 : index
    %c0_304 = arith.constant 0 : index
    %288 = vector.load %arg12[%c0_302, %c0_303, %c0_304] : memref<9x128x64xf32, #tpu.memory_space<vmem>>, vector<1x128x64xf32>
    %289 = vector.shape_cast %288 : vector<1x128x64xf32> to vector<128x64xf32>
    %cst_305 = arith.constant dense<0.000000e+00> : vector<33x64xf32>
    %290 = tpu.matmul %287, %289, %cst_305 {dimension_numbers = #tpu.dot_dimension_numbers<[1], [0], [0], [1], [0, 0, 1, 1], [], []>} : vector<33x128xf32>, vector<128x64xf32>, vector<33x64xf32> -> vector<33x64xf32>
    %291 = arith.addf %286, %290 : vector<33x64xf32>
    %c1_306 = arith.constant 1 : index
    %c0_307 = arith.constant 0 : index
    %292 = vector.load %arg23[%c1_306, %c0_307] : memref<49x128xf32, #tpu.memory_space<vmem>>, vector<33x128xf32>
    %c1_308 = arith.constant 1 : index
    %c0_309 = arith.constant 0 : index
    %c0_310 = arith.constant 0 : index
    %293 = vector.load %arg12[%c1_308, %c0_309, %c0_310] : memref<9x128x64xf32, #tpu.memory_space<vmem>>, vector<1x128x64xf32>
    %294 = vector.shape_cast %293 : vector<1x128x64xf32> to vector<128x64xf32>
    %cst_311 = arith.constant dense<0.000000e+00> : vector<33x64xf32>
    %295 = tpu.matmul %292, %294, %cst_311 {dimension_numbers = #tpu.dot_dimension_numbers<[1], [0], [0], [1], [0, 0, 1, 1], [], []>} : vector<33x128xf32>, vector<128x64xf32>, vector<33x64xf32> -> vector<33x64xf32>
    %296 = arith.addf %291, %295 : vector<33x64xf32>
    %c2_312 = arith.constant 2 : index
    %c0_313 = arith.constant 0 : index
    %297 = vector.load %arg23[%c2_312, %c0_313] : memref<49x128xf32, #tpu.memory_space<vmem>>, vector<33x128xf32>
    %c2_314 = arith.constant 2 : index
    %c0_315 = arith.constant 0 : index
    %c0_316 = arith.constant 0 : index
    %298 = vector.load %arg12[%c2_314, %c0_315, %c0_316] : memref<9x128x64xf32, #tpu.memory_space<vmem>>, vector<1x128x64xf32>
    %299 = vector.shape_cast %298 : vector<1x128x64xf32> to vector<128x64xf32>
    %cst_317 = arith.constant dense<0.000000e+00> : vector<33x64xf32>
    %300 = tpu.matmul %297, %299, %cst_317 {dimension_numbers = #tpu.dot_dimension_numbers<[1], [0], [0], [1], [0, 0, 1, 1], [], []>} : vector<33x128xf32>, vector<128x64xf32>, vector<33x64xf32> -> vector<33x64xf32>
    %301 = arith.addf %296, %300 : vector<33x64xf32>
    %c7_318 = arith.constant 7 : index
    %c0_319 = arith.constant 0 : index
    %302 = vector.load %arg23[%c7_318, %c0_319] : memref<49x128xf32, #tpu.memory_space<vmem>>, vector<33x128xf32>
    %c3_320 = arith.constant 3 : index
    %c0_321 = arith.constant 0 : index
    %c0_322 = arith.constant 0 : index
    %303 = vector.load %arg12[%c3_320, %c0_321, %c0_322] : memref<9x128x64xf32, #tpu.memory_space<vmem>>, vector<1x128x64xf32>
    %304 = vector.shape_cast %303 : vector<1x128x64xf32> to vector<128x64xf32>
    %cst_323 = arith.constant dense<0.000000e+00> : vector<33x64xf32>
    %305 = tpu.matmul %302, %304, %cst_323 {dimension_numbers = #tpu.dot_dimension_numbers<[1], [0], [0], [1], [0, 0, 1, 1], [], []>} : vector<33x128xf32>, vector<128x64xf32>, vector<33x64xf32> -> vector<33x64xf32>
    %306 = arith.addf %301, %305 : vector<33x64xf32>
    %c8_324 = arith.constant 8 : index
    %c0_325 = arith.constant 0 : index
    %307 = vector.load %arg23[%c8_324, %c0_325] : memref<49x128xf32, #tpu.memory_space<vmem>>, vector<33x128xf32>
    %c4_326 = arith.constant 4 : index
    %c0_327 = arith.constant 0 : index
    %c0_328 = arith.constant 0 : index
    %308 = vector.load %arg12[%c4_326, %c0_327, %c0_328] : memref<9x128x64xf32, #tpu.memory_space<vmem>>, vector<1x128x64xf32>
    %309 = vector.shape_cast %308 : vector<1x128x64xf32> to vector<128x64xf32>
    %cst_329 = arith.constant dense<0.000000e+00> : vector<33x64xf32>
    %310 = tpu.matmul %307, %309, %cst_329 {dimension_numbers = #tpu.dot_dimension_numbers<[1], [0], [0], [1], [0, 0, 1, 1], [], []>} : vector<33x128xf32>, vector<128x64xf32>, vector<33x64xf32> -> vector<33x64xf32>
    %311 = arith.addf %306, %310 : vector<33x64xf32>
    %c9_330 = arith.constant 9 : index
    %c0_331 = arith.constant 0 : index
    %312 = vector.load %arg23[%c9_330, %c0_331] : memref<49x128xf32, #tpu.memory_space<vmem>>, vector<33x128xf32>
    %c5_332 = arith.constant 5 : index
    %c0_333 = arith.constant 0 : index
    %c0_334 = arith.constant 0 : index
    %313 = vector.load %arg12[%c5_332, %c0_333, %c0_334] : memref<9x128x64xf32, #tpu.memory_space<vmem>>, vector<1x128x64xf32>
    %314 = vector.shape_cast %313 : vector<1x128x64xf32> to vector<128x64xf32>
    %cst_335 = arith.constant dense<0.000000e+00> : vector<33x64xf32>
    %315 = tpu.matmul %312, %314, %cst_335 {dimension_numbers = #tpu.dot_dimension_numbers<[1], [0], [0], [1], [0, 0, 1, 1], [], []>} : vector<33x128xf32>, vector<128x64xf32>, vector<33x64xf32> -> vector<33x64xf32>
    %316 = arith.addf %311, %315 : vector<33x64xf32>
    %c14_336 = arith.constant 14 : index
    %c0_337 = arith.constant 0 : index
    %317 = vector.load %arg23[%c14_336, %c0_337] : memref<49x128xf32, #tpu.memory_space<vmem>>, vector<33x128xf32>
    %c6_338 = arith.constant 6 : index
    %c0_339 = arith.constant 0 : index
    %c0_340 = arith.constant 0 : index
    %318 = vector.load %arg12[%c6_338, %c0_339, %c0_340] : memref<9x128x64xf32, #tpu.memory_space<vmem>>, vector<1x128x64xf32>
    %319 = vector.shape_cast %318 : vector<1x128x64xf32> to vector<128x64xf32>
    %cst_341 = arith.constant dense<0.000000e+00> : vector<33x64xf32>
    %320 = tpu.matmul %317, %319, %cst_341 {dimension_numbers = #tpu.dot_dimension_numbers<[1], [0], [0], [1], [0, 0, 1, 1], [], []>} : vector<33x128xf32>, vector<128x64xf32>, vector<33x64xf32> -> vector<33x64xf32>
    %321 = arith.addf %316, %320 : vector<33x64xf32>
    %c15_342 = arith.constant 15 : index
    %c0_343 = arith.constant 0 : index
    %322 = vector.load %arg23[%c15_342, %c0_343] : memref<49x128xf32, #tpu.memory_space<vmem>>, vector<33x128xf32>
    %c7_344 = arith.constant 7 : index
    %c0_345 = arith.constant 0 : index
    %c0_346 = arith.constant 0 : index
    %323 = vector.load %arg12[%c7_344, %c0_345, %c0_346] : memref<9x128x64xf32, #tpu.memory_space<vmem>>, vector<1x128x64xf32>
    %324 = vector.shape_cast %323 : vector<1x128x64xf32> to vector<128x64xf32>
    %cst_347 = arith.constant dense<0.000000e+00> : vector<33x64xf32>
    %325 = tpu.matmul %322, %324, %cst_347 {dimension_numbers = #tpu.dot_dimension_numbers<[1], [0], [0], [1], [0, 0, 1, 1], [], []>} : vector<33x128xf32>, vector<128x64xf32>, vector<33x64xf32> -> vector<33x64xf32>
    %326 = arith.addf %321, %325 : vector<33x64xf32>
    %c16_348 = arith.constant 16 : index
    %c0_349 = arith.constant 0 : index
    %327 = vector.load %arg23[%c16_348, %c0_349] : memref<49x128xf32, #tpu.memory_space<vmem>>, vector<33x128xf32>
    %c8_350 = arith.constant 8 : index
    %c0_351 = arith.constant 0 : index
    %c0_352 = arith.constant 0 : index
    %328 = vector.load %arg12[%c8_350, %c0_351, %c0_352] : memref<9x128x64xf32, #tpu.memory_space<vmem>>, vector<1x128x64xf32>
    %329 = vector.shape_cast %328 : vector<1x128x64xf32> to vector<128x64xf32>
    %cst_353 = arith.constant dense<0.000000e+00> : vector<33x64xf32>
    %330 = tpu.matmul %327, %329, %cst_353 {dimension_numbers = #tpu.dot_dimension_numbers<[1], [0], [0], [1], [0, 0, 1, 1], [], []>} : vector<33x128xf32>, vector<128x64xf32>, vector<33x64xf32> -> vector<33x64xf32>
    %331 = arith.addf %326, %330 : vector<33x64xf32>
    %c0_354 = arith.constant 0 : index
    %c0_355 = arith.constant 0 : index
    %332 = vector.load %arg13[%c0_354, %c0_355] : memref<1x64xf32, #tpu.memory_space<vmem>>, vector<1x64xf32>
    %333 = vector.broadcast %332 : vector<1x64xf32> to vector<33x64xf32>
    %334 = arith.addf %331, %333 : vector<33x64xf32>
    %cst_356 = arith.constant 0.000000e+00 : f32
    %335 = vector.broadcast %cst_356 : f32 to vector<33x64xf32>
    %336 = arith.maximumf %334, %335 : vector<33x64xf32>
    %337 = vector.extract_strided_slice %336 {offsets = [0, 0], sizes = [5, 64], strides = [1, 1]} : vector<33x64xf32> to vector<5x64xf32>
    %c20_357 = arith.constant 20 : index
    %c0_358 = arith.constant 0 : index
    %338 = vector.load %arg24[%c20_357, %c0_358] : memref<81x64xf32, #tpu.memory_space<vmem>>, vector<5x64xf32>
    tpu.vector_store %arg24[%c20_357, %c0_358], %337 {strides = array<i32>} : memref<81x64xf32, #tpu.memory_space<vmem>>, vector<5x64xf32>,
    %339 = vector.extract_strided_slice %336 {offsets = [7, 0], sizes = [5, 64], strides = [1, 1]} : vector<33x64xf32> to vector<5x64xf32>
    %c29 = arith.constant 29 : index
    %c0_359 = arith.constant 0 : index
    %340 = vector.load %arg24[%c29, %c0_359] : memref<81x64xf32, #tpu.memory_space<vmem>>, vector<5x64xf32>
    tpu.vector_store %arg24[%c29, %c0_359], %339 {strides = array<i32>} : memref<81x64xf32, #tpu.memory_space<vmem>>, vector<5x64xf32>,
    %341 = vector.extract_strided_slice %336 {offsets = [14, 0], sizes = [5, 64], strides = [1, 1]} : vector<33x64xf32> to vector<5x64xf32>
    %c38 = arith.constant 38 : index
    %c0_360 = arith.constant 0 : index
    %342 = vector.load %arg24[%c38, %c0_360] : memref<81x64xf32, #tpu.memory_space<vmem>>, vector<5x64xf32>
    tpu.vector_store %arg24[%c38, %c0_360], %341 {strides = array<i32>} : memref<81x64xf32, #tpu.memory_space<vmem>>, vector<5x64xf32>,
    %343 = vector.extract_strided_slice %336 {offsets = [21, 0], sizes = [5, 64], strides = [1, 1]} : vector<33x64xf32> to vector<5x64xf32>
    %c47 = arith.constant 47 : index
    %c0_361 = arith.constant 0 : index
    %344 = vector.load %arg24[%c47, %c0_361] : memref<81x64xf32, #tpu.memory_space<vmem>>, vector<5x64xf32>
    tpu.vector_store %arg24[%c47, %c0_361], %343 {strides = array<i32>} : memref<81x64xf32, #tpu.memory_space<vmem>>, vector<5x64xf32>,
    %345 = vector.extract_strided_slice %336 {offsets = [28, 0], sizes = [5, 64], strides = [1, 1]} : vector<33x64xf32> to vector<5x64xf32>
    %c56 = arith.constant 56 : index
    %c0_362 = arith.constant 0 : index
    %346 = vector.load %arg24[%c56, %c0_362] : memref<81x64xf32, #tpu.memory_space<vmem>>, vector<5x64xf32>
    tpu.vector_store %arg24[%c56, %c0_362], %345 {strides = array<i32>} : memref<81x64xf32, #tpu.memory_space<vmem>>, vector<5x64xf32>,
    %cst_363 = arith.constant 0.000000e+00 : f32
    %347 = vector.broadcast %cst_363 : f32 to vector<61x32xf32>
    %c0_364 = arith.constant 0 : index
    %c0_365 = arith.constant 0 : index
    %348 = vector.load %arg24[%c0_364, %c0_365] : memref<81x64xf32, #tpu.memory_space<vmem>>, vector<61x64xf32>
    %c0_366 = arith.constant 0 : index
    %c0_367 = arith.constant 0 : index
    %c0_368 = arith.constant 0 : index
    %349 = vector.load %arg14[%c0_366, %c0_367, %c0_368] : memref<9x64x32xf32, #tpu.memory_space<vmem>>, vector<1x64x32xf32>
    %350 = vector.shape_cast %349 : vector<1x64x32xf32> to vector<64x32xf32>
    %cst_369 = arith.constant dense<0.000000e+00> : vector<61x32xf32>
    %351 = tpu.matmul %348, %350, %cst_369 {dimension_numbers = #tpu.dot_dimension_numbers<[1], [0], [0], [1], [0, 0, 1, 1], [], []>} : vector<61x64xf32>, vector<64x32xf32>, vector<61x32xf32> -> vector<61x32xf32>
    %352 = arith.addf %347, %351 : vector<61x32xf32>
    %c1_370 = arith.constant 1 : index
    %c0_371 = arith.constant 0 : index
    %353 = vector.load %arg24[%c1_370, %c0_371] : memref<81x64xf32, #tpu.memory_space<vmem>>, vector<61x64xf32>
    %c1_372 = arith.constant 1 : index
    %c0_373 = arith.constant 0 : index
    %c0_374 = arith.constant 0 : index
    %354 = vector.load %arg14[%c1_372, %c0_373, %c0_374] : memref<9x64x32xf32, #tpu.memory_space<vmem>>, vector<1x64x32xf32>
    %355 = vector.shape_cast %354 : vector<1x64x32xf32> to vector<64x32xf32>
    %cst_375 = arith.constant dense<0.000000e+00> : vector<61x32xf32>
    %356 = tpu.matmul %353, %355, %cst_375 {dimension_numbers = #tpu.dot_dimension_numbers<[1], [0], [0], [1], [0, 0, 1, 1], [], []>} : vector<61x64xf32>, vector<64x32xf32>, vector<61x32xf32> -> vector<61x32xf32>
    %357 = arith.addf %352, %356 : vector<61x32xf32>
    %c2_376 = arith.constant 2 : index
    %c0_377 = arith.constant 0 : index
    %358 = vector.load %arg24[%c2_376, %c0_377] : memref<81x64xf32, #tpu.memory_space<vmem>>, vector<61x64xf32>
    %c2_378 = arith.constant 2 : index
    %c0_379 = arith.constant 0 : index
    %c0_380 = arith.constant 0 : index
    %359 = vector.load %arg14[%c2_378, %c0_379, %c0_380] : memref<9x64x32xf32, #tpu.memory_space<vmem>>, vector<1x64x32xf32>
    %360 = vector.shape_cast %359 : vector<1x64x32xf32> to vector<64x32xf32>
    %cst_381 = arith.constant dense<0.000000e+00> : vector<61x32xf32>
    %361 = tpu.matmul %358, %360, %cst_381 {dimension_numbers = #tpu.dot_dimension_numbers<[1], [0], [0], [1], [0, 0, 1, 1], [], []>} : vector<61x64xf32>, vector<64x32xf32>, vector<61x32xf32> -> vector<61x32xf32>
    %362 = arith.addf %357, %361 : vector<61x32xf32>
    %c9_382 = arith.constant 9 : index
    %c0_383 = arith.constant 0 : index
    %363 = vector.load %arg24[%c9_382, %c0_383] : memref<81x64xf32, #tpu.memory_space<vmem>>, vector<61x64xf32>
    %c3_384 = arith.constant 3 : index
    %c0_385 = arith.constant 0 : index
    %c0_386 = arith.constant 0 : index
    %364 = vector.load %arg14[%c3_384, %c0_385, %c0_386] : memref<9x64x32xf32, #tpu.memory_space<vmem>>, vector<1x64x32xf32>
    %365 = vector.shape_cast %364 : vector<1x64x32xf32> to vector<64x32xf32>
    %cst_387 = arith.constant dense<0.000000e+00> : vector<61x32xf32>
    %366 = tpu.matmul %363, %365, %cst_387 {dimension_numbers = #tpu.dot_dimension_numbers<[1], [0], [0], [1], [0, 0, 1, 1], [], []>} : vector<61x64xf32>, vector<64x32xf32>, vector<61x32xf32> -> vector<61x32xf32>
    %367 = arith.addf %362, %366 : vector<61x32xf32>
    %c10_388 = arith.constant 10 : index
    %c0_389 = arith.constant 0 : index
    %368 = vector.load %arg24[%c10_388, %c0_389] : memref<81x64xf32, #tpu.memory_space<vmem>>, vector<61x64xf32>
    %c4_390 = arith.constant 4 : index
    %c0_391 = arith.constant 0 : index
    %c0_392 = arith.constant 0 : index
    %369 = vector.load %arg14[%c4_390, %c0_391, %c0_392] : memref<9x64x32xf32, #tpu.memory_space<vmem>>, vector<1x64x32xf32>
    %370 = vector.shape_cast %369 : vector<1x64x32xf32> to vector<64x32xf32>
    %cst_393 = arith.constant dense<0.000000e+00> : vector<61x32xf32>
    %371 = tpu.matmul %368, %370, %cst_393 {dimension_numbers = #tpu.dot_dimension_numbers<[1], [0], [0], [1], [0, 0, 1, 1], [], []>} : vector<61x64xf32>, vector<64x32xf32>, vector<61x32xf32> -> vector<61x32xf32>
    %372 = arith.addf %367, %371 : vector<61x32xf32>
    %c11_394 = arith.constant 11 : index
    %c0_395 = arith.constant 0 : index
    %373 = vector.load %arg24[%c11_394, %c0_395] : memref<81x64xf32, #tpu.memory_space<vmem>>, vector<61x64xf32>
    %c5_396 = arith.constant 5 : index
    %c0_397 = arith.constant 0 : index
    %c0_398 = arith.constant 0 : index
    %374 = vector.load %arg14[%c5_396, %c0_397, %c0_398] : memref<9x64x32xf32, #tpu.memory_space<vmem>>, vector<1x64x32xf32>
    %375 = vector.shape_cast %374 : vector<1x64x32xf32> to vector<64x32xf32>
    %cst_399 = arith.constant dense<0.000000e+00> : vector<61x32xf32>
    %376 = tpu.matmul %373, %375, %cst_399 {dimension_numbers = #tpu.dot_dimension_numbers<[1], [0], [0], [1], [0, 0, 1, 1], [], []>} : vector<61x64xf32>, vector<64x32xf32>, vector<61x32xf32> -> vector<61x32xf32>
    %377 = arith.addf %372, %376 : vector<61x32xf32>
    %c18 = arith.constant 18 : index
    %c0_400 = arith.constant 0 : index
    %378 = vector.load %arg24[%c18, %c0_400] : memref<81x64xf32, #tpu.memory_space<vmem>>, vector<61x64xf32>
    %c6_401 = arith.constant 6 : index
    %c0_402 = arith.constant 0 : index
    %c0_403 = arith.constant 0 : index
    %379 = vector.load %arg14[%c6_401, %c0_402, %c0_403] : memref<9x64x32xf32, #tpu.memory_space<vmem>>, vector<1x64x32xf32>
    %380 = vector.shape_cast %379 : vector<1x64x32xf32> to vector<64x32xf32>
    %cst_404 = arith.constant dense<0.000000e+00> : vector<61x32xf32>
    %381 = tpu.matmul %378, %380, %cst_404 {dimension_numbers = #tpu.dot_dimension_numbers<[1], [0], [0], [1], [0, 0, 1, 1], [], []>} : vector<61x64xf32>, vector<64x32xf32>, vector<61x32xf32> -> vector<61x32xf32>
    %382 = arith.addf %377, %381 : vector<61x32xf32>
    %c19 = arith.constant 19 : index
    %c0_405 = arith.constant 0 : index
    %383 = vector.load %arg24[%c19, %c0_405] : memref<81x64xf32, #tpu.memory_space<vmem>>, vector<61x64xf32>
    %c7_406 = arith.constant 7 : index
    %c0_407 = arith.constant 0 : index
    %c0_408 = arith.constant 0 : index
    %384 = vector.load %arg14[%c7_406, %c0_407, %c0_408] : memref<9x64x32xf32, #tpu.memory_space<vmem>>, vector<1x64x32xf32>
    %385 = vector.shape_cast %384 : vector<1x64x32xf32> to vector<64x32xf32>
    %cst_409 = arith.constant dense<0.000000e+00> : vector<61x32xf32>
    %386 = tpu.matmul %383, %385, %cst_409 {dimension_numbers = #tpu.dot_dimension_numbers<[1], [0], [0], [1], [0, 0, 1, 1], [], []>} : vector<61x64xf32>, vector<64x32xf32>, vector<61x32xf32> -> vector<61x32xf32>
    %387 = arith.addf %382, %386 : vector<61x32xf32>
    %c20_410 = arith.constant 20 : index
    %c0_411 = arith.constant 0 : index
    %388 = vector.load %arg24[%c20_410, %c0_411] : memref<81x64xf32, #tpu.memory_space<vmem>>, vector<61x64xf32>
    %c8_412 = arith.constant 8 : index
    %c0_413 = arith.constant 0 : index
    %c0_414 = arith.constant 0 : index
    %389 = vector.load %arg14[%c8_412, %c0_413, %c0_414] : memref<9x64x32xf32, #tpu.memory_space<vmem>>, vector<1x64x32xf32>
    %390 = vector.shape_cast %389 : vector<1x64x32xf32> to vector<64x32xf32>
    %cst_415 = arith.constant dense<0.000000e+00> : vector<61x32xf32>
    %391 = tpu.matmul %388, %390, %cst_415 {dimension_numbers = #tpu.dot_dimension_numbers<[1], [0], [0], [1], [0, 0, 1, 1], [], []>} : vector<61x64xf32>, vector<64x32xf32>, vector<61x32xf32> -> vector<61x32xf32>
    %392 = arith.addf %387, %391 : vector<61x32xf32>
    %c0_416 = arith.constant 0 : index
    %c0_417 = arith.constant 0 : index
    %393 = vector.load %arg15[%c0_416, %c0_417] : memref<1x32xf32, #tpu.memory_space<vmem>>, vector<1x32xf32>
    %394 = vector.broadcast %393 : vector<1x32xf32> to vector<61x32xf32>
    %395 = arith.addf %392, %394 : vector<61x32xf32>
    %cst_418 = arith.constant 0.000000e+00 : f32
    %396 = vector.broadcast %cst_418 : f32 to vector<61x32xf32>
    %397 = arith.maximumf %395, %396 : vector<61x32xf32>
    %398 = vector.extract_strided_slice %397 {offsets = [0, 0], sizes = [7, 32], strides = [1, 1]} : vector<61x32xf32> to vector<7x32xf32>
    %c10_419 = arith.constant 10 : index
    %c0_420 = arith.constant 0 : index
    %399 = vector.load %arg25[%c10_419, %c0_420] : memref<81x32xf32, #tpu.memory_space<vmem>>, vector<7x32xf32>
    tpu.vector_store %arg25[%c10_419, %c0_420], %398 {strides = array<i32>} : memref<81x32xf32, #tpu.memory_space<vmem>>, vector<7x32xf32>,
    %400 = vector.extract_strided_slice %397 {offsets = [9, 0], sizes = [7, 32], strides = [1, 1]} : vector<61x32xf32> to vector<7x32xf32>
    %c19_421 = arith.constant 19 : index
    %c0_422 = arith.constant 0 : index
    %401 = vector.load %arg25[%c19_421, %c0_422] : memref<81x32xf32, #tpu.memory_space<vmem>>, vector<7x32xf32>
    tpu.vector_store %arg25[%c19_421, %c0_422], %400 {strides = array<i32>} : memref<81x32xf32, #tpu.memory_space<vmem>>, vector<7x32xf32>,
    %402 = vector.extract_strided_slice %397 {offsets = [18, 0], sizes = [7, 32], strides = [1, 1]} : vector<61x32xf32> to vector<7x32xf32>
    %c28_423 = arith.constant 28 : index
    %c0_424 = arith.constant 0 : index
    %403 = vector.load %arg25[%c28_423, %c0_424] : memref<81x32xf32, #tpu.memory_space<vmem>>, vector<7x32xf32>
    tpu.vector_store %arg25[%c28_423, %c0_424], %402 {strides = array<i32>} : memref<81x32xf32, #tpu.memory_space<vmem>>, vector<7x32xf32>,
    %404 = vector.extract_strided_slice %397 {offsets = [27, 0], sizes = [7, 32], strides = [1, 1]} : vector<61x32xf32> to vector<7x32xf32>
    %c37 = arith.constant 37 : index
    %c0_425 = arith.constant 0 : index
    %405 = vector.load %arg25[%c37, %c0_425] : memref<81x32xf32, #tpu.memory_space<vmem>>, vector<7x32xf32>
    tpu.vector_store %arg25[%c37, %c0_425], %404 {strides = array<i32>} : memref<81x32xf32, #tpu.memory_space<vmem>>, vector<7x32xf32>,
    %406 = vector.extract_strided_slice %397 {offsets = [36, 0], sizes = [7, 32], strides = [1, 1]} : vector<61x32xf32> to vector<7x32xf32>
    %c46 = arith.constant 46 : index
    %c0_426 = arith.constant 0 : index
    %407 = vector.load %arg25[%c46, %c0_426] : memref<81x32xf32, #tpu.memory_space<vmem>>, vector<7x32xf32>
    tpu.vector_store %arg25[%c46, %c0_426], %406 {strides = array<i32>} : memref<81x32xf32, #tpu.memory_space<vmem>>, vector<7x32xf32>,
    %408 = vector.extract_strided_slice %397 {offsets = [45, 0], sizes = [7, 32], strides = [1, 1]} : vector<61x32xf32> to vector<7x32xf32>
    %c55 = arith.constant 55 : index
    %c0_427 = arith.constant 0 : index
    %409 = vector.load %arg25[%c55, %c0_427] : memref<81x32xf32, #tpu.memory_space<vmem>>, vector<7x32xf32>
    tpu.vector_store %arg25[%c55, %c0_427], %408 {strides = array<i32>} : memref<81x32xf32, #tpu.memory_space<vmem>>, vector<7x32xf32>,
    %410 = vector.extract_strided_slice %397 {offsets = [54, 0], sizes = [7, 32], strides = [1, 1]} : vector<61x32xf32> to vector<7x32xf32>
    %c64 = arith.constant 64 : index
    %c0_428 = arith.constant 0 : index
    %411 = vector.load %arg25[%c64, %c0_428] : memref<81x32xf32, #tpu.memory_space<vmem>>, vector<7x32xf32>
    tpu.vector_store %arg25[%c64, %c0_428], %410 {strides = array<i32>} : memref<81x32xf32, #tpu.memory_space<vmem>>, vector<7x32xf32>,
    %cst_429 = arith.constant 0.000000e+00 : f32
    %412 = vector.broadcast %cst_429 : f32 to vector<71x16xf32>
    %c0_430 = arith.constant 0 : index
    %c0_431 = arith.constant 0 : index
    %413 = vector.load %arg25[%c0_430, %c0_431] : memref<81x32xf32, #tpu.memory_space<vmem>>, vector<71x32xf32>
    %c0_432 = arith.constant 0 : index
    %c0_433 = arith.constant 0 : index
    %c0_434 = arith.constant 0 : index
    %414 = vector.load %arg16[%c0_432, %c0_433, %c0_434] : memref<4x32x16xf32, #tpu.memory_space<vmem>>, vector<1x32x16xf32>
    %415 = vector.shape_cast %414 : vector<1x32x16xf32> to vector<32x16xf32>
    %cst_435 = arith.constant dense<0.000000e+00> : vector<71x16xf32>
    %416 = tpu.matmul %413, %415, %cst_435 {dimension_numbers = #tpu.dot_dimension_numbers<[1], [0], [0], [1], [0, 0, 1, 1], [], []>} : vector<71x32xf32>, vector<32x16xf32>, vector<71x16xf32> -> vector<71x16xf32>
    %417 = arith.addf %412, %416 : vector<71x16xf32>
    %c1_436 = arith.constant 1 : index
    %c0_437 = arith.constant 0 : index
    %418 = vector.load %arg25[%c1_436, %c0_437] : memref<81x32xf32, #tpu.memory_space<vmem>>, vector<71x32xf32>
    %c1_438 = arith.constant 1 : index
    %c0_439 = arith.constant 0 : index
    %c0_440 = arith.constant 0 : index
    %419 = vector.load %arg16[%c1_438, %c0_439, %c0_440] : memref<4x32x16xf32, #tpu.memory_space<vmem>>, vector<1x32x16xf32>
    %420 = vector.shape_cast %419 : vector<1x32x16xf32> to vector<32x16xf32>
    %cst_441 = arith.constant dense<0.000000e+00> : vector<71x16xf32>
    %421 = tpu.matmul %418, %420, %cst_441 {dimension_numbers = #tpu.dot_dimension_numbers<[1], [0], [0], [1], [0, 0, 1, 1], [], []>} : vector<71x32xf32>, vector<32x16xf32>, vector<71x16xf32> -> vector<71x16xf32>
    %422 = arith.addf %417, %421 : vector<71x16xf32>
    %c9_442 = arith.constant 9 : index
    %c0_443 = arith.constant 0 : index
    %423 = vector.load %arg25[%c9_442, %c0_443] : memref<81x32xf32, #tpu.memory_space<vmem>>, vector<71x32xf32>
    %c2_444 = arith.constant 2 : index
    %c0_445 = arith.constant 0 : index
    %c0_446 = arith.constant 0 : index
    %424 = vector.load %arg16[%c2_444, %c0_445, %c0_446] : memref<4x32x16xf32, #tpu.memory_space<vmem>>, vector<1x32x16xf32>
    %425 = vector.shape_cast %424 : vector<1x32x16xf32> to vector<32x16xf32>
    %cst_447 = arith.constant dense<0.000000e+00> : vector<71x16xf32>
    %426 = tpu.matmul %423, %425, %cst_447 {dimension_numbers = #tpu.dot_dimension_numbers<[1], [0], [0], [1], [0, 0, 1, 1], [], []>} : vector<71x32xf32>, vector<32x16xf32>, vector<71x16xf32> -> vector<71x16xf32>
    %427 = arith.addf %422, %426 : vector<71x16xf32>
    %c10_448 = arith.constant 10 : index
    %c0_449 = arith.constant 0 : index
    %428 = vector.load %arg25[%c10_448, %c0_449] : memref<81x32xf32, #tpu.memory_space<vmem>>, vector<71x32xf32>
    %c3_450 = arith.constant 3 : index
    %c0_451 = arith.constant 0 : index
    %c0_452 = arith.constant 0 : index
    %429 = vector.load %arg16[%c3_450, %c0_451, %c0_452] : memref<4x32x16xf32, #tpu.memory_space<vmem>>, vector<1x32x16xf32>
    %430 = vector.shape_cast %429 : vector<1x32x16xf32> to vector<32x16xf32>
    %cst_453 = arith.constant dense<0.000000e+00> : vector<71x16xf32>
    %431 = tpu.matmul %428, %430, %cst_453 {dimension_numbers = #tpu.dot_dimension_numbers<[1], [0], [0], [1], [0, 0, 1, 1], [], []>} : vector<71x32xf32>, vector<32x16xf32>, vector<71x16xf32> -> vector<71x16xf32>
    %432 = arith.addf %427, %431 : vector<71x16xf32>
    %c0_454 = arith.constant 0 : index
    %c0_455 = arith.constant 0 : index
    %433 = vector.load %arg17[%c0_454, %c0_455] : memref<1x16xf32, #tpu.memory_space<vmem>>, vector<1x16xf32>
    %434 = vector.broadcast %433 : vector<1x16xf32> to vector<71x16xf32>
    %435 = arith.addf %432, %434 : vector<71x16xf32>
    %cst_456 = arith.constant 0.000000e+00 : f32
    %436 = vector.broadcast %cst_456 : f32 to vector<71x16xf32>
    %437 = arith.subf %436, %435 : vector<71x16xf32>
    %438 = math.exp %437 : vector<71x16xf32>
    %cst_457 = arith.constant 1.000000e+00 : f32
    %439 = vector.broadcast %cst_457 : f32 to vector<71x16xf32>
    %440 = arith.addf %439, %438 : vector<71x16xf32>
    %441 = tpu.reciprocal %440 {approx = true} : vector<71x16xf32> -> vector<71x16xf32>
    %442 = vector.extract_strided_slice %441 {offsets = [0, 0], sizes = [8, 16], strides = [1, 1]} : vector<71x16xf32> to vector<8x16xf32>
    %c0_458 = arith.constant 0 : index
    %c0_459 = arith.constant 0 : index
    %c0_460 = arith.constant 0 : index
    %443 = vector.load %arg18[%c0_458, %c0_459, %c0_460] : memref<1x64x16xf32, #tpu.memory_space<vmem>>, vector<1x8x16xf32>
    %444 = vector.shape_cast %443 : vector<1x8x16xf32> to vector<8x16xf32>
    %445 = vector.shape_cast %442 : vector<8x16xf32> to vector<1x8x16xf32>
    tpu.vector_store %arg18[%c0_458, %c0_459, %c0_460], %445 {strides = array<i32>} : memref<1x64x16xf32, #tpu.memory_space<vmem>>, vector<1x8x16xf32>,
    %446 = vector.extract_strided_slice %441 {offsets = [9, 0], sizes = [8, 16], strides = [1, 1]} : vector<71x16xf32> to vector<8x16xf32>
    %c0_461 = arith.constant 0 : index
    %c8_462 = arith.constant 8 : index
    %c0_463 = arith.constant 0 : index
    %447 = vector.load %arg18[%c0_461, %c8_462, %c0_463] : memref<1x64x16xf32, #tpu.memory_space<vmem>>, vector<1x8x16xf32>
    %448 = vector.shape_cast %447 : vector<1x8x16xf32> to vector<8x16xf32>
    %449 = vector.shape_cast %446 : vector<8x16xf32> to vector<1x8x16xf32>
    tpu.vector_store %arg18[%c0_461, %c8_462, %c0_463], %449 {strides = array<i32>} : memref<1x64x16xf32, #tpu.memory_space<vmem>>, vector<1x8x16xf32>,
    %450 = vector.extract_strided_slice %441 {offsets = [18, 0], sizes = [8, 16], strides = [1, 1]} : vector<71x16xf32> to vector<8x16xf32>
    %c0_464 = arith.constant 0 : index
    %c16_465 = arith.constant 16 : index
    %c0_466 = arith.constant 0 : index
    %451 = vector.load %arg18[%c0_464, %c16_465, %c0_466] : memref<1x64x16xf32, #tpu.memory_space<vmem>>, vector<1x8x16xf32>
    %452 = vector.shape_cast %451 : vector<1x8x16xf32> to vector<8x16xf32>
    %453 = vector.shape_cast %450 : vector<8x16xf32> to vector<1x8x16xf32>
    tpu.vector_store %arg18[%c0_464, %c16_465, %c0_466], %453 {strides = array<i32>} : memref<1x64x16xf32, #tpu.memory_space<vmem>>, vector<1x8x16xf32>,
    %454 = vector.extract_strided_slice %441 {offsets = [27, 0], sizes = [8, 16], strides = [1, 1]} : vector<71x16xf32> to vector<8x16xf32>
    %c0_467 = arith.constant 0 : index
    %c24 = arith.constant 24 : index
    %c0_468 = arith.constant 0 : index
    %455 = vector.load %arg18[%c0_467, %c24, %c0_468] : memref<1x64x16xf32, #tpu.memory_space<vmem>>, vector<1x8x16xf32>
    %456 = vector.shape_cast %455 : vector<1x8x16xf32> to vector<8x16xf32>
    %457 = vector.shape_cast %454 : vector<8x16xf32> to vector<1x8x16xf32>
    tpu.vector_store %arg18[%c0_467, %c24, %c0_468], %457 {strides = array<i32>} : memref<1x64x16xf32, #tpu.memory_space<vmem>>, vector<1x8x16xf32>,
    %458 = vector.extract_strided_slice %441 {offsets = [36, 0], sizes = [8, 16], strides = [1, 1]} : vector<71x16xf32> to vector<8x16xf32>
    %c0_469 = arith.constant 0 : index
    %c32 = arith.constant 32 : index
    %c0_470 = arith.constant 0 : index
    %459 = vector.load %arg18[%c0_469, %c32, %c0_470] : memref<1x64x16xf32, #tpu.memory_space<vmem>>, vector<1x8x16xf32>
    %460 = vector.shape_cast %459 : vector<1x8x16xf32> to vector<8x16xf32>
    %461 = vector.shape_cast %458 : vector<8x16xf32> to vector<1x8x16xf32>
    tpu.vector_store %arg18[%c0_469, %c32, %c0_470], %461 {strides = array<i32>} : memref<1x64x16xf32, #tpu.memory_space<vmem>>, vector<1x8x16xf32>,
    %462 = vector.extract_strided_slice %441 {offsets = [45, 0], sizes = [8, 16], strides = [1, 1]} : vector<71x16xf32> to vector<8x16xf32>
    %c0_471 = arith.constant 0 : index
    %c40 = arith.constant 40 : index
    %c0_472 = arith.constant 0 : index
    %463 = vector.load %arg18[%c0_471, %c40, %c0_472] : memref<1x64x16xf32, #tpu.memory_space<vmem>>, vector<1x8x16xf32>
    %464 = vector.shape_cast %463 : vector<1x8x16xf32> to vector<8x16xf32>
    %465 = vector.shape_cast %462 : vector<8x16xf32> to vector<1x8x16xf32>
    tpu.vector_store %arg18[%c0_471, %c40, %c0_472], %465 {strides = array<i32>} : memref<1x64x16xf32, #tpu.memory_space<vmem>>, vector<1x8x16xf32>,
    %466 = vector.extract_strided_slice %441 {offsets = [54, 0], sizes = [8, 16], strides = [1, 1]} : vector<71x16xf32> to vector<8x16xf32>
    %c0_473 = arith.constant 0 : index
    %c48 = arith.constant 48 : index
    %c0_474 = arith.constant 0 : index
    %467 = vector.load %arg18[%c0_473, %c48, %c0_474] : memref<1x64x16xf32, #tpu.memory_space<vmem>>, vector<1x8x16xf32>
    %468 = vector.shape_cast %467 : vector<1x8x16xf32> to vector<8x16xf32>
    %469 = vector.shape_cast %466 : vector<8x16xf32> to vector<1x8x16xf32>
    tpu.vector_store %arg18[%c0_473, %c48, %c0_474], %469 {strides = array<i32>} : memref<1x64x16xf32, #tpu.memory_space<vmem>>, vector<1x8x16xf32>,
    %470 = vector.extract_strided_slice %441 {offsets = [63, 0], sizes = [8, 16], strides = [1, 1]} : vector<71x16xf32> to vector<8x16xf32>
    %c0_475 = arith.constant 0 : index
    %c56_476 = arith.constant 56 : index
    %c0_477 = arith.constant 0 : index
    %471 = vector.load %arg18[%c0_475, %c56_476, %c0_477] : memref<1x64x16xf32, #tpu.memory_space<vmem>>, vector<1x8x16xf32>
    %472 = vector.shape_cast %471 : vector<1x8x16xf32> to vector<8x16xf32>
    %473 = vector.shape_cast %470 : vector<8x16xf32> to vector<1x8x16xf32>
    tpu.vector_store %arg18[%c0_475, %c56_476, %c0_477], %473 {strides = array<i32>} : memref<1x64x16xf32, #tpu.memory_space<vmem>>, vector<1x8x16xf32>,
    return
  }
  func.func @transform_0(%arg0: i32) -> (i32, i32, i32) {
    %c0_i32 = arith.constant 0 : i32
    %c0_i32_0 = arith.constant 0 : i32
    %c0_i32_1 = arith.constant 0 : i32
    return %arg0, %c0_i32, %c0_i32_0 : i32, i32, i32
  }
  func.func @transform_1(%arg0: i32) -> (i32, i32, i32) {
    %c0_i32 = arith.constant 0 : i32
    %c0_i32_0 = arith.constant 0 : i32
    %c0_i32_1 = arith.constant 0 : i32
    %c0_i32_2 = arith.constant 0 : i32
    return %c0_i32, %c0_i32_0, %c0_i32_1 : i32, i32, i32
  }
  func.func @transform_2(%arg0: i32) -> (i32, i32) {
    %c0_i32 = arith.constant 0 : i32
    %c0_i32_0 = arith.constant 0 : i32
    %c0_i32_1 = arith.constant 0 : i32
    return %c0_i32, %c0_i32_0 : i32, i32
  }
  func.func @transform_3(%arg0: i32) -> (i32, i32, i32) {
    %c0_i32 = arith.constant 0 : i32
    %c0_i32_0 = arith.constant 0 : i32
    %c0_i32_1 = arith.constant 0 : i32
    %c0_i32_2 = arith.constant 0 : i32
    return %c0_i32, %c0_i32_0, %c0_i32_1 : i32, i32, i32
  }
  func.func @transform_4(%arg0: i32) -> (i32, i32) {
    %c0_i32 = arith.constant 0 : i32
    %c0_i32_0 = arith.constant 0 : i32
    %c0_i32_1 = arith.constant 0 : i32
    return %c0_i32, %c0_i32_0 : i32, i32
  }
  func.func @transform_5(%arg0: i32) -> (i32, i32, i32) {
    %c0_i32 = arith.constant 0 : i32
    %c0_i32_0 = arith.constant 0 : i32
    %c0_i32_1 = arith.constant 0 : i32
    %c0_i32_2 = arith.constant 0 : i32
    return %c0_i32, %c0_i32_0, %c0_i32_1 : i32, i32, i32
  }
  func.func @transform_6(%arg0: i32) -> (i32, i32) {
    %c0_i32 = arith.constant 0 : i32
    %c0_i32_0 = arith.constant 0 : i32
    %c0_i32_1 = arith.constant 0 : i32
    return %c0_i32, %c0_i32_0 : i32, i32
  }
  func.func @transform_7(%arg0: i32) -> (i32, i32, i32) {
    %c0_i32 = arith.constant 0 : i32
    %c0_i32_0 = arith.constant 0 : i32
    %c0_i32_1 = arith.constant 0 : i32
    %c0_i32_2 = arith.constant 0 : i32
    return %c0_i32, %c0_i32_0, %c0_i32_1 : i32, i32, i32
  }
  func.func @transform_8(%arg0: i32) -> (i32, i32) {
    %c0_i32 = arith.constant 0 : i32
    %c0_i32_0 = arith.constant 0 : i32
    %c0_i32_1 = arith.constant 0 : i32
    return %c0_i32, %c0_i32_0 : i32, i32
  }
  func.func @transform_9(%arg0: i32) -> (i32, i32, i32) {
    %c0_i32 = arith.constant 0 : i32
    %c0_i32_0 = arith.constant 0 : i32
    %c0_i32_1 = arith.constant 0 : i32
    %c0_i32_2 = arith.constant 0 : i32
    return %c0_i32, %c0_i32_0, %c0_i32_1 : i32, i32, i32
  }
  func.func @transform_10(%arg0: i32) -> (i32, i32) {
    %c0_i32 = arith.constant 0 : i32
    %c0_i32_0 = arith.constant 0 : i32
    %c0_i32_1 = arith.constant 0 : i32
    return %c0_i32, %c0_i32_0 : i32, i32
  }
  func.func @transform_11(%arg0: i32) -> (i32, i32, i32) {
    %c0_i32 = arith.constant 0 : i32
    %c0_i32_0 = arith.constant 0 : i32
    %c0_i32_1 = arith.constant 0 : i32
    %c0_i32_2 = arith.constant 0 : i32
    return %c0_i32, %c0_i32_0, %c0_i32_1 : i32, i32, i32
  }
  func.func @transform_12(%arg0: i32) -> (i32, i32) {
    %c0_i32 = arith.constant 0 : i32
    %c0_i32_0 = arith.constant 0 : i32
    %c0_i32_1 = arith.constant 0 : i32
    return %c0_i32, %c0_i32_0 : i32, i32
  }
  func.func @transform_13(%arg0: i32) -> (i32, i32, i32) {
    %c0_i32 = arith.constant 0 : i32
    %c0_i32_0 = arith.constant 0 : i32
    %c0_i32_1 = arith.constant 0 : i32
    %c0_i32_2 = arith.constant 0 : i32
    return %c0_i32, %c0_i32_0, %c0_i32_1 : i32, i32, i32
  }
  func.func @transform_14(%arg0: i32) -> (i32, i32) {
    %c0_i32 = arith.constant 0 : i32
    %c0_i32_0 = arith.constant 0 : i32
    %c0_i32_1 = arith.constant 0 : i32
    return %c0_i32, %c0_i32_0 : i32, i32
  }
  func.func @transform_15(%arg0: i32) -> (i32, i32, i32) {
    %c0_i32 = arith.constant 0 : i32
    %c0_i32_0 = arith.constant 0 : i32
    %c0_i32_1 = arith.constant 0 : i32
    %c0_i32_2 = arith.constant 0 : i32
    return %c0_i32, %c0_i32_0, %c0_i32_1 : i32, i32, i32
  }
  func.func @transform_16(%arg0: i32) -> (i32, i32) {
    %c0_i32 = arith.constant 0 : i32
    %c0_i32_0 = arith.constant 0 : i32
    %c0_i32_1 = arith.constant 0 : i32
    return %c0_i32, %c0_i32_0 : i32, i32
  }
  func.func @transform_17(%arg0: i32) -> (i32, i32, i32) {
    %c0_i32 = arith.constant 0 : i32
    %c0_i32_0 = arith.constant 0 : i32
    %c0_i32_1 = arith.constant 0 : i32
    return %arg0, %c0_i32, %c0_i32_0 : i32, i32, i32
  }
}

</mosaic_0001>

<llo_original>
// kernel: autoencoder_forward.1
$region0: #{autoencoder_forward.1}
  #allocation0 [shape = 'u32[]', space=smem, size = 0x4, offset = 0x4, fixed_abs, tag = 'smem constant byte address 0x4 - core index']
  #allocation1 [shape = 'u32[144,128]{1,0:T(1,128)}', space=vmem, size = 0x12000, scoped, tag = 'internal scratch']
  #allocation2 [shape = 'f32[49,32]{1,0:T(8,128)}', space=vmem, size = 0x7000, scoped, tag = 'scratch operand']
  #allocation3 [shape = 'f32[25,64]{1,0:T(8,128)}', space=vmem, size = 0x4000, scoped, tag = 'scratch operand']
  #allocation4 [shape = 'f32[16,128]{1,0:T(8,128)}', space=vmem, size = 0x2000, scoped, tag = 'scratch operand']
  #allocation5 [shape = 'f32[25,256]{1,0:T(8,128)}', space=vmem, size = 0x8000, scoped, tag = 'scratch operand']
  #allocation6 [shape = 'f32[49,128]{1,0:T(8,128)}', space=vmem, size = 0x7000, scoped, tag = 'scratch operand']
  #allocation7 [shape = 'f32[81,64]{1,0:T(8,128)}', space=vmem, size = 0xb000, scoped, tag = 'scratch operand']
  #allocation8 [shape = 'f32[81,32]{1,0:T(8,128)}', space=vmem, size = 0xb000, scoped, tag = 'scratch operand']
  %s0 = inlined_call_operand.vmem [shape: f32[2,64,16], index: 0, kind: input, shape index: {}]
  %s1 = inlined_call_operand.vmem [shape: f32[4,16,32], index: 1, kind: input, shape index: {}]
  %s2 = inlined_call_operand.vmem [shape: f32[1,32], index: 2, kind: input, shape index: {}]
  %s3 = inlined_call_operand.vmem [shape: f32[9,32,64], index: 3, kind: input, shape index: {}]
  %s4 = inlined_call_operand.vmem [shape: f32[1,64], index: 4, kind: input, shape index: {}]
  %s5 = inlined_call_operand.hbm [shape: f32[9,64,128], index: 5, kind: input, shape index: {}]
  %s6 = inlined_call_operand.vmem [shape: f32[1,128], index: 6, kind: input, shape index: {}]
  %s7 = inlined_call_operand.vmem [shape: f32[9,128,256], index: 7, kind: input, shape index: {}]
  %s8 = inlined_call_operand.vmem [shape: f32[1,256], index: 8, kind: input, shape index: {}]
  %s9 = inlined_call_operand.hbm [shape: f32[9,256,128], index: 9, kind: input, shape index: {}]
  %s10 = inlined_call_operand.vmem [shape: f32[1,128], index: 10, kind: input, shape index: {}]
  %s11 = inlined_call_operand.vmem [shape: f32[9,128,64], index: 11, kind: input, shape index: {}]
  %s12 = inlined_call_operand.vmem [shape: f32[1,64], index: 12, kind: input, shape index: {}]
  %s13 = inlined_call_operand.vmem [shape: f32[9,64,32], index: 13, kind: input, shape index: {}]
  %s14 = inlined_call_operand.vmem [shape: f32[1,32], index: 14, kind: input, shape index: {}]
  %s15 = inlined_call_operand.vmem [shape: f32[4,32,16], index: 15, kind: input, shape index: {}]
  %s16 = inlined_call_operand.vmem [shape: f32[1,16], index: 16, kind: input, shape index: {}]
  %s17 = inlined_call_operand.hbm [shape: f32[2,64,16], index: 17, kind: output, shape index: {}]
  %s18 = sld [smem:[#allocation0]]
  $region109: #{autoencoder_forward.1} parent=0
    _
  %s20 = ssub.s32 1, %s18
  %s21 = scalar_select 0, %s20, %s18
  $region1: #{autoencoder_forward.1} parent=0
    #allocation9 [shape = 'u8[294912]{0}', space=vmem, size = 0x48000, scoped, tag = 'input window, operand 5, single buffered']
    #allocation10 [shape = 's32[2]{0}', space=sflag, size = 0x8, scoped, tag = 'scoped memory for autoencoder_forward.1']
    #allocation11 [shape = 's32[2]{0}', space=sflag, size = 0x8, scoped, tag = 'scoped memory for autoencoder_forward.1']
    #allocation12 [shape = 'u8[1179648]{0}', space=vmem, size = 0x120000, scoped, tag = 'input window, operand 9, single buffered']
    #allocation13 [shape = 's32[1]{0}', space=sflag, size = 0x4, scoped, tag = 'scoped memory for autoencoder_forward.1']
    #allocation14 [shape = 'u8[65536]{0}', space=vmem, size = 0x10000, scoped, tag = 'output window, operand 0']
    %22 = vsyncpa [#allocation10], 0
    %23 = vsyncpa [#allocation13], 0
    %24 = vsyncpa [#allocation11], 0
    %s25 = scalar_lea.sflag [#allocation11], 1
    %26 = vsyncpa %s25, 0
    loop: start=0, step=1, limit=4
    $region2: #{autoencoder_forward.1} parent=1 // loop_pre_header
      _
    $region3: #{autoencoder_forward.1} parent=1 // loop_header
      %s28 = sphi 0, %s32
      %p29 = scmp.ge.s32.totalorder %s28, 4
      %s38 = sphi 0, %s40
      %s41 = sphi 0, %s38
      %s42 = sphi 0, %s41
      %s58 = sphi 0, %s42
      %s62 = sphi 0, %s62
      %s64 = sphi 0, %s62
      %s65 = sphi 0, %s64
      %s79 = sphi 0, %s65
      %s83 = sphi 0, %s83
      %s85 = sphi 0, %s83
      %s86 = sphi 0, %s85
      %s100 = sphi 0, %s86
      %s104 = sphi 0, %s104
      %s106 = sphi 0, %s104
      %s107 = sphi 0, %s106
      %s121 = sphi 0, %s107
      %s125 = sphi 0, %s125
      %s127 = sphi 0, %s125
      %s128 = sphi 0, %s127
      %s142 = sphi 0, %s128
      %s146 = sphi 0, %s146
      %s148 = sphi 0, %s146
      %s149 = sphi 0, %s148
      %s163 = sphi 0, %s149
      %s167 = sphi 0, %s167
      %s169 = sphi 0, %s167
      %s170 = sphi 0, %s169
      %s184 = sphi 0, %s170
      %s188 = sphi 0, %s188
      %s190 = sphi 0, %s188
      %s191 = sphi 0, %s190
      %s205 = sphi 0, %s191
      %s209 = sphi 0, %s209
      %s211 = sphi 0, %s209
      %s212 = sphi 0, %s211
      %s226 = sphi 0, %s212
      %s230 = sphi 0, %s230
      %s232 = sphi 0, %s230
      %s233 = sphi 0, %s232
      %s247 = sphi 0, %s233
      %s251 = sphi 0, %s251
      %s253 = sphi 0, %s251
      %s254 = sphi 0, %s253
      %s268 = sphi 0, %s254
      %s272 = sphi 0, %s272
      %s274 = sphi 0, %s272
      %s275 = sphi 0, %s274
      %s289 = sphi 0, %s275
      %s293 = sphi 0, %s293
      %s295 = sphi 0, %s293
      %s296 = sphi 0, %s295
      %s310 = sphi 0, %s296
      %s314 = sphi 0, %s314
      %s316 = sphi 0, %s314
      %s317 = sphi 0, %s316
      %s331 = sphi 0, %s317
      %s335 = sphi 0, %s335
      %s337 = sphi 0, %s335
      %s338 = sphi 0, %s337
      %s352 = sphi 0, %s338
      %s356 = sphi 0, %s356
      %s358 = sphi 0, %s356
      %s359 = sphi 0, %s358
      %s373 = sphi 0, %s359
      %s377 = sphi 0, %s377
      %s379 = sphi 0, %s377
      %s380 = sphi 0, %s379
      %s394 = sphi 0, %s380
      %s400 = sphi 0, %s402
      %s403 = sphi 0, %s400
      %s404 = sphi 0, %s403
      %s420 = sphi 0, %s404
    $region4: #{autoencoder_forward.1} parent=1 // loop_header_branch
      %31 = sbr.rel (%p29) target = $region8
    $region5: #{autoencoder_forward.1} parent=1 // loop_body
      %s33 = ssub.s32 %s28, 1
      %s34 = ssub.s32 %s28, 2
      %s35 = sadd.s32 %s28, 1
      %s36 = ssub.s32 %s28, %s35
      %p37 = scmp.eq.s32.totalorder %s36, 0
      %s39 = sadd.s32 %s38, 1
      %s40 = scalar_select %p37, %s38, %s39
      %p43 = pneg %p37
      %p44 = scmp.eq.s32.totalorder %s28, 1
      %p45 = por %p43, %p44
      %p46 = scmp.ne.s32.totalorder %s38, %s41
      %p47 = scmp.eq.s32.totalorder %s28, 0
      %p48 = por %p46, %p47
      %p49 = scmp.ne.s32.totalorder %s38, %s41
      %p50 = scmp.eq.s32.totalorder %s33, 1
      %p51 = por %p49, %p50
      %p52 = scmp.ne.s32.totalorder %s41, %s42
      %p53 = scmp.eq.s32.totalorder %s33, 0
      %p54 = por %p52, %p53
      %p55 = scmp.ne.s32.totalorder %s41, %s42
      %p56 = scmp.eq.s32.totalorder %s34, 1
      %p57 = por %p55, %p56
      %p59 = scmp.ne.s32.totalorder %s42, %s58
      %p60 = scmp.eq.s32.totalorder %s34, 0
      %p61 = por %p59, %p60
      %s63 = sadd.s32 %s62, 1
      %p66 = scmp.eq.s32.totalorder %s28, 1
      %p67 = scmp.ne.s32.totalorder %s62, %s64
      %p68 = scmp.eq.s32.totalorder %s28, 0
      %p69 = por %p67, %p68
      %p70 = scmp.ne.s32.totalorder %s62, %s64
      %p71 = scmp.eq.s32.totalorder %s33, 1
      %p72 = por %p70, %p71
      %p73 = scmp.ne.s32.totalorder %s64, %s65
      %p74 = scmp.eq.s32.totalorder %s33, 0
      %p75 = por %p73, %p74
      %p76 = scmp.ne.s32.totalorder %s64, %s65
      %p77 = scmp.eq.s32.totalorder %s34, 1
      %p78 = por %p76, %p77
      %p80 = scmp.ne.s32.totalorder %s65, %s79
      %p81 = scmp.eq.s32.totalorder %s34, 0
      %p82 = por %p80, %p81
      %s84 = sadd.s32 %s83, 1
      %p87 = scmp.eq.s32.totalorder %s28, 1
      %p88 = scmp.ne.s32.totalorder %s83, %s85
      %p89 = scmp.eq.s32.totalorder %s28, 0
      %p90 = por %p88, %p89
      %p91 = scmp.ne.s32.totalorder %s83, %s85
      %p92 = scmp.eq.s32.totalorder %s33, 1
      %p93 = por %p91, %p92
      %p94 = scmp.ne.s32.totalorder %s85, %s86
      %p95 = scmp.eq.s32.totalorder %s33, 0
      %p96 = por %p94, %p95
      %p97 = scmp.ne.s32.totalorder %s85, %s86
      %p98 = scmp.eq.s32.totalorder %s34, 1
      %p99 = por %p97, %p98
      %p101 = scmp.ne.s32.totalorder %s86, %s100
      %p102 = scmp.eq.s32.totalorder %s34, 0
      %p103 = por %p101, %p102
      %s105 = sadd.s32 %s104, 1
      %p108 = scmp.eq.s32.totalorder %s28, 1
      %p109 = scmp.ne.s32.totalorder %s104, %s106
      %p110 = scmp.eq.s32.totalorder %s28, 0
      %p111 = por %p109, %p110
      %p112 = scmp.ne.s32.totalorder %s104, %s106
      %p113 = scmp.eq.s32.totalorder %s33, 1
      %p114 = por %p112, %p113
      %p115 = scmp.ne.s32.totalorder %s106, %s107
      %p116 = scmp.eq.s32.totalorder %s33, 0
      %p117 = por %p115, %p116
      %p118 = scmp.ne.s32.totalorder %s106, %s107
      %p119 = scmp.eq.s32.totalorder %s34, 1
      %p120 = por %p118, %p119
      %p122 = scmp.ne.s32.totalorder %s107, %s121
      %p123 = scmp.eq.s32.totalorder %s34, 0
      %p124 = por %p122, %p123
      %s126 = sadd.s32 %s125, 1
      %p129 = scmp.eq.s32.totalorder %s28, 1
      %p130 = scmp.ne.s32.totalorder %s125, %s127
      %p131 = scmp.eq.s32.totalorder %s28, 0
      %p132 = por %p130, %p131
      %p133 = scmp.ne.s32.totalorder %s125, %s127
      %p134 = scmp.eq.s32.totalorder %s33, 1
      %p135 = por %p133, %p134
      %p136 = scmp.ne.s32.totalorder %s127, %s128
      %p137 = scmp.eq.s32.totalorder %s33, 0
      %p138 = por %p136, %p137
      %p139 = scmp.ne.s32.totalorder %s127, %s128
      %p140 = scmp.eq.s32.totalorder %s34, 1
      %p141 = por %p139, %p140
      %p143 = scmp.ne.s32.totalorder %s128, %s142
      %p144 = scmp.eq.s32.totalorder %s34, 0
      %p145 = por %p143, %p144
      %s147 = sadd.s32 %s146, 1
      %p150 = scmp.eq.s32.totalorder %s28, 1
      %p151 = scmp.ne.s32.totalorder %s146, %s148
      %p152 = scmp.eq.s32.totalorder %s28, 0
      %p153 = por %p151, %p152
      %p154 = scmp.ne.s32.totalorder %s146, %s148
      %p155 = scmp.eq.s32.totalorder %s33, 1
      %p156 = por %p154, %p155
      %p157 = scmp.ne.s32.totalorder %s148, %s149
      %p158 = scmp.eq.s32.totalorder %s33, 0
      %p159 = por %p157, %p158
      %p160 = scmp.ne.s32.totalorder %s148, %s149
      %p161 = scmp.eq.s32.totalorder %s34, 1
      %p162 = por %p160, %p161
      %p164 = scmp.ne.s32.totalorder %s149, %s163
      %p165 = scmp.eq.s32.totalorder %s34, 0
      %p166 = por %p164, %p165
      %s168 = sadd.s32 %s167, 1
      %p171 = scmp.eq.s32.totalorder %s28, 1
      %p172 = scmp.ne.s32.totalorder %s167, %s169
      %p173 = scmp.eq.s32.totalorder %s28, 0
      %p174 = por %p172, %p173
      %p175 = scmp.ne.s32.totalorder %s167, %s169
      %p176 = scmp.eq.s32.totalorder %s33, 1
      %p177 = por %p175, %p176
      %p178 = scmp.ne.s32.totalorder %s169, %s170
      %p179 = scmp.eq.s32.totalorder %s33, 0
      %p180 = por %p178, %p179
      %p181 = scmp.ne.s32.totalorder %s169, %s170
      %p182 = scmp.eq.s32.totalorder %s34, 1
      %p183 = por %p181, %p182
      %p185 = scmp.ne.s32.totalorder %s170, %s184
      %p186 = scmp.eq.s32.totalorder %s34, 0
      %p187 = por %p185, %p186
      %s189 = sadd.s32 %s188, 1
      %p192 = scmp.eq.s32.totalorder %s28, 1
      %p193 = scmp.ne.s32.totalorder %s188, %s190
      %p194 = scmp.eq.s32.totalorder %s28, 0
      %p195 = por %p193, %p194
      %p196 = scmp.ne.s32.totalorder %s188, %s190
      %p197 = scmp.eq.s32.totalorder %s33, 1
      %p198 = por %p196, %p197
      %p199 = scmp.ne.s32.totalorder %s190, %s191
      %p200 = scmp.eq.s32.totalorder %s33, 0
      %p201 = por %p199, %p200
      %p202 = scmp.ne.s32.totalorder %s190, %s191
      %p203 = scmp.eq.s32.totalorder %s34, 1
      %p204 = por %p202, %p203
      %p206 = scmp.ne.s32.totalorder %s191, %s205
      %p207 = scmp.eq.s32.totalorder %s34, 0
      %p208 = por %p206, %p207
      %s210 = sadd.s32 %s209, 1
      %p213 = scmp.eq.s32.totalorder %s28, 1
      %p214 = scmp.ne.s32.totalorder %s209, %s211
      %p215 = scmp.eq.s32.totalorder %s28, 0
      %p216 = por %p214, %p215
      %p217 = scmp.ne.s32.totalorder %s209, %s211
      %p218 = scmp.eq.s32.totalorder %s33, 1
      %p219 = por %p217, %p218
      %p220 = scmp.ne.s32.totalorder %s211, %s212
      %p221 = scmp.eq.s32.totalorder %s33, 0
      %p222 = por %p220, %p221
      %p223 = scmp.ne.s32.totalorder %s211, %s212
      %p224 = scmp.eq.s32.totalorder %s34, 1
      %p225 = por %p223, %p224
      %p227 = scmp.ne.s32.totalorder %s212, %s226
      %p228 = scmp.eq.s32.totalorder %s34, 0
      %p229 = por %p227, %p228
      %s231 = sadd.s32 %s230, 1
      %p234 = scmp.eq.s32.totalorder %s28, 1
      %p235 = scmp.ne.s32.totalorder %s230, %s232
      %p236 = scmp.eq.s32.totalorder %s28, 0
      %p237 = por %p235, %p236
      %p238 = scmp.ne.s32.totalorder %s230, %s232
      %p239 = scmp.eq.s32.totalorder %s33, 1
      %p240 = por %p238, %p239
      %p241 = scmp.ne.s32.totalorder %s232, %s233
      %p242 = scmp.eq.s32.totalorder %s33, 0
      %p243 = por %p241, %p242
      %p244 = scmp.ne.s32.totalorder %s232, %s233
      %p245 = scmp.eq.s32.totalorder %s34, 1
      %p246 = por %p244, %p245
      %p248 = scmp.ne.s32.totalorder %s233, %s247
      %p249 = scmp.eq.s32.totalorder %s34, 0
      %p250 = por %p248, %p249
      %s252 = sadd.s32 %s251, 1
      %p255 = scmp.eq.s32.totalorder %s28, 1
      %p256 = scmp.ne.s32.totalorder %s251, %s253
      %p257 = scmp.eq.s32.totalorder %s28, 0
      %p258 = por %p256, %p257
      %p259 = scmp.ne.s32.totalorder %s251, %s253
      %p260 = scmp.eq.s32.totalorder %s33, 1
      %p261 = por %p259, %p260
      %p262 = scmp.ne.s32.totalorder %s253, %s254
      %p263 = scmp.eq.s32.totalorder %s33, 0
      %p264 = por %p262, %p263
      %p265 = scmp.ne.s32.totalorder %s253, %s254
      %p266 = scmp.eq.s32.totalorder %s34, 1
      %p267 = por %p265, %p266
      %p269 = scmp.ne.s32.totalorder %s254, %s268
      %p270 = scmp.eq.s32.totalorder %s34, 0
      %p271 = por %p269, %p270
      %s273 = sadd.s32 %s272, 1
      %p276 = scmp.eq.s32.totalorder %s28, 1
      %p277 = scmp.ne.s32.totalorder %s272, %s274
      %p278 = scmp.eq.s32.totalorder %s28, 0
      %p279 = por %p277, %p278
      %p280 = scmp.ne.s32.totalorder %s272, %s274
      %p281 = scmp.eq.s32.totalorder %s33, 1
      %p282 = por %p280, %p281
      %p283 = scmp.ne.s32.totalorder %s274, %s275
      %p284 = scmp.eq.s32.totalorder %s33, 0
      %p285 = por %p283, %p284
      %p286 = scmp.ne.s32.totalorder %s274, %s275
      %p287 = scmp.eq.s32.totalorder %s34, 1
      %p288 = por %p286, %p287
      %p290 = scmp.ne.s32.totalorder %s275, %s289
      %p291 = scmp.eq.s32.totalorder %s34, 0
      %p292 = por %p290, %p291
      %s294 = sadd.s32 %s293, 1
      %p297 = scmp.eq.s32.totalorder %s28, 1
      %p298 = scmp.ne.s32.totalorder %s293, %s295
      %p299 = scmp.eq.s32.totalorder %s28, 0
      %p300 = por %p298, %p299
      %p301 = scmp.ne.s32.totalorder %s293, %s295
      %p302 = scmp.eq.s32.totalorder %s33, 1
      %p303 = por %p301, %p302
      %p304 = scmp.ne.s32.totalorder %s295, %s296
      %p305 = scmp.eq.s32.totalorder %s33, 0
      %p306 = por %p304, %p305
      %p307 = scmp.ne.s32.totalorder %s295, %s296
      %p308 = scmp.eq.s32.totalorder %s34, 1
      %p309 = por %p307, %p308
      %p311 = scmp.ne.s32.totalorder %s296, %s310
      %p312 = scmp.eq.s32.totalorder %s34, 0
      %p313 = por %p311, %p312
      %s315 = sadd.s32 %s314, 1
      %p318 = scmp.eq.s32.totalorder %s28, 1
      %p319 = scmp.ne.s32.totalorder %s314, %s316
      %p320 = scmp.eq.s32.totalorder %s28, 0
      %p321 = por %p319, %p320
      %p322 = scmp.ne.s32.totalorder %s314, %s316
      %p323 = scmp.eq.s32.totalorder %s33, 1
      %p324 = por %p322, %p323
      %p325 = scmp.ne.s32.totalorder %s316, %s317
      %p326 = scmp.eq.s32.totalorder %s33, 0
      %p327 = por %p325, %p326
      %p328 = scmp.ne.s32.totalorder %s316, %s317
      %p329 = scmp.eq.s32.totalorder %s34, 1
      %p330 = por %p328, %p329
      %p332 = scmp.ne.s32.totalorder %s317, %s331
      %p333 = scmp.eq.s32.totalorder %s34, 0
      %p334 = por %p332, %p333
      %s336 = sadd.s32 %s335, 1
      %p339 = scmp.eq.s32.totalorder %s28, 1
      %p340 = scmp.ne.s32.totalorder %s335, %s337
      %p341 = scmp.eq.s32.totalorder %s28, 0
      %p342 = por %p340, %p341
      %p343 = scmp.ne.s32.totalorder %s335, %s337
      %p344 = scmp.eq.s32.totalorder %s33, 1
      %p345 = por %p343, %p344
      %p346 = scmp.ne.s32.totalorder %s337, %s338
      %p347 = scmp.eq.s32.totalorder %s33, 0
      %p348 = por %p346, %p347
      %p349 = scmp.ne.s32.totalorder %s337, %s338
      %p350 = scmp.eq.s32.totalorder %s34, 1
      %p351 = por %p349, %p350
      %p353 = scmp.ne.s32.totalorder %s338, %s352
      %p354 = scmp.eq.s32.totalorder %s34, 0
      %p355 = por %p353, %p354
      %s357 = sadd.s32 %s356, 1
      %p360 = scmp.eq.s32.totalorder %s28, 1
      %p361 = scmp.ne.s32.totalorder %s356, %s358
      %p362 = scmp.eq.s32.totalorder %s28, 0
      %p363 = por %p361, %p362
      %p364 = scmp.ne.s32.totalorder %s356, %s358
      %p365 = scmp.eq.s32.totalorder %s33, 1
      %p366 = por %p364, %p365
      %p367 = scmp.ne.s32.totalorder %s358, %s359
      %p368 = scmp.eq.s32.totalorder %s33, 0
      %p369 = por %p367, %p368
      %p370 = scmp.ne.s32.totalorder %s358, %s359
      %p371 = scmp.eq.s32.totalorder %s34, 1
      %p372 = por %p370, %p371
      %p374 = scmp.ne.s32.totalorder %s359, %s373
      %p375 = scmp.eq.s32.totalorder %s34, 0
      %p376 = por %p374, %p375
      %s378 = sadd.s32 %s377, 1
      %p381 = scmp.eq.s32.totalorder %s28, 1
      %p382 = scmp.ne.s32.totalorder %s377, %s379
      %p383 = scmp.eq.s32.totalorder %s28, 0
      %p384 = por %p382, %p383
      %p385 = scmp.ne.s32.totalorder %s377, %s379
      %p386 = scmp.eq.s32.totalorder %s33, 1
      %p387 = por %p385, %p386
      %p388 = scmp.ne.s32.totalorder %s379, %s380
      %p389 = scmp.eq.s32.totalorder %s33, 0
      %p390 = por %p388, %p389
      %p391 = scmp.ne.s32.totalorder %s379, %s380
      %p392 = scmp.eq.s32.totalorder %s34, 1
      %p393 = por %p391, %p392
      %p395 = scmp.ne.s32.totalorder %s380, %s394
      %p396 = scmp.eq.s32.totalorder %s34, 0
      %p397 = por %p395, %p396
      %s398 = ssub.s32 %s28, %s35
      %p399 = scmp.eq.s32.totalorder %s398, 0
      %s401 = sadd.s32 %s400, 1
      %s402 = scalar_select %p399, %s400, %s401
      %p405 = pneg %p399
      %p406 = scmp.eq.s32.totalorder %s28, 1
      %p407 = por %p405, %p406
      %p408 = scmp.ne.s32.totalorder %s400, %s403
      %p409 = scmp.eq.s32.totalorder %s28, 0
      %p410 = por %p408, %p409
      %p411 = scmp.ne.s32.totalorder %s400, %s403
      %p412 = scmp.eq.s32.totalorder %s33, 1
      %p413 = por %p411, %p412
      %p414 = scmp.ne.s32.totalorder %s403, %s404
      %p415 = scmp.eq.s32.totalorder %s33, 0
      %p416 = por %p414, %p415
      %p417 = scmp.ne.s32.totalorder %s403, %s404
      %p418 = scmp.eq.s32.totalorder %s34, 1
      %p419 = por %p417, %p418
      %p421 = scmp.ne.s32.totalorder %s404, %s420
      %p422 = scmp.eq.s32.totalorder %s34, 0
      %p423 = por %p421, %p422
      %p424 = scmp.le.s32.totalorder 1, %s28
      %p425 = scmp.lt.s32.totalorder %s28, 3
      %p426 = pnand %p424, %p425
      %p427 = pneg %p426
      // Predicated region
      $region9: #{autoencoder_forward.1} parent=5 // pred_check
        _
      $region10: #{autoencoder_forward.1} parent=5 // pred_check_branch
        %429 = sbr.rel (%p426) target = $region12
      $region11: #{autoencoder_forward.1} parent=5 // pred_region
        %s430 = ssub.s32 %s28, 1
        // Predicated region
        $region13: #{autoencoder_forward.1} parent=11 // pred_check
          %p431 = pneg %p75
        $region14: #{autoencoder_forward.1} parent=11 // pred_check_branch
          %433 = sbr.rel (%p431) target = $region16
        $region15: #{autoencoder_forward.1} parent=11 // pred_region
          _
        $region16: #{autoencoder_forward.1} parent=11 // pred_fallthru
          _
        // Predicated region
        $region17: #{autoencoder_forward.1} parent=11 // pred_check
          %p434 = pneg %p96
        $region18: #{autoencoder_forward.1} parent=11 // pred_check_branch
          %436 = sbr.rel (%p434) target = $region20
        $region19: #{autoencoder_forward.1} parent=11 // pred_region
          _
        $region20: #{autoencoder_forward.1} parent=11 // pred_fallthru
          _
        // Predicated region
        $region21: #{autoencoder_forward.1} parent=11 // pred_check
          %p437 = pneg %p117
        $region22: #{autoencoder_forward.1} parent=11 // pred_check_branch
          %439 = sbr.rel (%p437) target = $region24
        $region23: #{autoencoder_forward.1} parent=11 // pred_region
          _
        $region24: #{autoencoder_forward.1} parent=11 // pred_fallthru
          _
        // Predicated region
        $region25: #{autoencoder_forward.1} parent=11 // pred_check
          %p440 = pneg %p138
        $region26: #{autoencoder_forward.1} parent=11 // pred_check_branch
          %442 = sbr.rel (%p440) target = $region28
        $region27: #{autoencoder_forward.1} parent=11 // pred_region
          _
        $region28: #{autoencoder_forward.1} parent=11 // pred_fallthru
          _
        // Predicated region
        $region29: #{autoencoder_forward.1} parent=11 // pred_check
          %p443 = pneg %p159
        $region30: #{autoencoder_forward.1} parent=11 // pred_check_branch
          %445 = sbr.rel (%p443) target = $region32
        $region31: #{autoencoder_forward.1} parent=11 // pred_region
          %s447 = ssub.s32 9216, 9216
          %448 = vsyncadd [#allocation10], %s447
          %s449 = sshll.u32 [#allocation9], 4
          %s450 = int_to_ptr.vmem [resolvable:$true] %s449
          %455 = dma.hbm_to_vmem [thread:$0]  %s5, 9216, %s450, [#allocation10], 128, 128, 8
        $region32: #{autoencoder_forward.1} parent=11 // pred_fallthru
          _
        // Predicated region
        $region33: #{autoencoder_forward.1} parent=11 // pred_check
          %p456 = pneg %p180
        $region34: #{autoencoder_forward.1} parent=11 // pred_check_branch
          %458 = sbr.rel (%p456) target = $region36
        $region35: #{autoencoder_forward.1} parent=11 // pred_region
          _
        $region36: #{autoencoder_forward.1} parent=11 // pred_fallthru
          _
        // Predicated region
        $region37: #{autoencoder_forward.1} parent=11 // pred_check
          %p459 = pneg %p201
        $region38: #{autoencoder_forward.1} parent=11 // pred_check_branch
          %461 = sbr.rel (%p459) target = $region40
        $region39: #{autoencoder_forward.1} parent=11 // pred_region
          _
        $region40: #{autoencoder_forward.1} parent=11 // pred_fallthru
          _
        // Predicated region
        $region41: #{autoencoder_forward.1} parent=11 // pred_check
          %p462 = pneg %p222
        $region42: #{autoencoder_forward.1} parent=11 // pred_check_branch
          %464 = sbr.rel (%p462) target = $region44
        $region43: #{autoencoder_forward.1} parent=11 // pred_region
          _
        $region44: #{autoencoder_forward.1} parent=11 // pred_fallthru
          _
        // Predicated region
        $region45: #{autoencoder_forward.1} parent=11 // pred_check
          %p465 = pneg %p243
        $region46: #{autoencoder_forward.1} parent=11 // pred_check_branch
          %467 = sbr.rel (%p465) target = $region48
        $region47: #{autoencoder_forward.1} parent=11 // pred_region
          %s469 = ssub.s32 36864, 36864
          %470 = vsyncadd [#allocation13], %s469
          %s471 = sshll.u32 [#allocation12], 4
          %s472 = int_to_ptr.vmem [resolvable:$true] %s471
          %477 = dma.hbm_to_vmem [thread:$0]  %s9, 36864, %s472, [#allocation13], 128, 128, 8
        $region48: #{autoencoder_forward.1} parent=11 // pred_fallthru
          _
        // Predicated region
        $region49: #{autoencoder_forward.1} parent=11 // pred_check
          %p478 = pneg %p264
        $region50: #{autoencoder_forward.1} parent=11 // pred_check_branch
          %480 = sbr.rel (%p478) target = $region52
        $region51: #{autoencoder_forward.1} parent=11 // pred_region
          _
        $region52: #{autoencoder_forward.1} parent=11 // pred_fallthru
          _
        // Predicated region
        $region53: #{autoencoder_forward.1} parent=11 // pred_check
          %p481 = pneg %p285
        $region54: #{autoencoder_forward.1} parent=11 // pred_check_branch
          %483 = sbr.rel (%p481) target = $region56
        $region55: #{autoencoder_forward.1} parent=11 // pred_region
          _
        $region56: #{autoencoder_forward.1} parent=11 // pred_fallthru
          _
        // Predicated region
        $region57: #{autoencoder_forward.1} parent=11 // pred_check
          %p484 = pneg %p306
        $region58: #{autoencoder_forward.1} parent=11 // pred_check_branch
          %486 = sbr.rel (%p484) target = $region60
        $region59: #{autoencoder_forward.1} parent=11 // pred_region
          _
        $region60: #{autoencoder_forward.1} parent=11 // pred_fallthru
          _
        // Predicated region
        $region61: #{autoencoder_forward.1} parent=11 // pred_check
          %p487 = pneg %p327
        $region62: #{autoencoder_forward.1} parent=11 // pred_check_branch
          %489 = sbr.rel (%p487) target = $region64
        $region63: #{autoencoder_forward.1} parent=11 // pred_region
          _
        $region64: #{autoencoder_forward.1} parent=11 // pred_fallthru
          _
        // Predicated region
        $region65: #{autoencoder_forward.1} parent=11 // pred_check
          %p490 = pneg %p348
        $region66: #{autoencoder_forward.1} parent=11 // pred_check_branch
          %492 = sbr.rel (%p490) target = $region68
        $region67: #{autoencoder_forward.1} parent=11 // pred_region
          _
        $region68: #{autoencoder_forward.1} parent=11 // pred_fallthru
          _
        // Predicated region
        $region69: #{autoencoder_forward.1} parent=11 // pred_check
          %p493 = pneg %p369
        $region70: #{autoencoder_forward.1} parent=11 // pred_check_branch
          %495 = sbr.rel (%p493) target = $region72
        $region71: #{autoencoder_forward.1} parent=11 // pred_region
          _
        $region72: #{autoencoder_forward.1} parent=11 // pred_fallthru
          _
        // Predicated region
        $region73: #{autoencoder_forward.1} parent=11 // pred_check
          %p496 = pneg %p390
        $region74: #{autoencoder_forward.1} parent=11 // pred_check_branch
          %498 = sbr.rel (%p496) target = $region76
        $region75: #{autoencoder_forward.1} parent=11 // pred_region
          _
        $region76: #{autoencoder_forward.1} parent=11 // pred_fallthru
          _
      $region12: #{autoencoder_forward.1} parent=5 // pred_fallthru
        _
      %p499 = scmp.lt.s32.totalorder %s28, 2
      // Predicated region
      $region77: #{autoencoder_forward.1} parent=5 // pred_check
        %p500 = pneg %p499
      $region78: #{autoencoder_forward.1} parent=5 // pred_check_branch
        %502 = sbr.rel (%p500) target = $region80
      $region79: #{autoencoder_forward.1} parent=5 // pred_region
        // Predicated region
        $region81: #{autoencoder_forward.1} parent=79 // pred_check
          %p503 = pneg %p48
        $region82: #{autoencoder_forward.1} parent=79 // pred_check_branch
          %505 = sbr.rel (%p503) target = $region84
        $region83: #{autoencoder_forward.1} parent=79 // pred_region
          %p506 = scmp.lt.s32.totalorder %s28, 1
          %s507 = scalar_select %p506, %s28, 1
          %s508 = smul.addr %s507, 8
          %s509 = smul.addr %s508, 8
          %s510 = scalar_lea.vmem %s0, %s509
        $region84: #{autoencoder_forward.1} parent=79 // pred_fallthru
          _
      $region80: #{autoencoder_forward.1} parent=5 // pred_fallthru
        _
      %p511 = scmp.le.s32.totalorder 1, %s28
      %p512 = scmp.lt.s32.totalorder %s28, 3
      %p513 = pnand %p511, %p512
      %p514 = pneg %p513
      // Predicated region
      $region85: #{autoencoder_forward.1} parent=5 // pred_check
        _
      $region86: #{autoencoder_forward.1} parent=5 // pred_check_branch
        %516 = sbr.rel (%p513) target = $region88
      $region87: #{autoencoder_forward.1} parent=5 // pred_region
        %s517 = ssub.s32 %s28, 1
        // Predicated region
        $region89: #{autoencoder_forward.1} parent=87 // pred_check
          %p518 = pneg %p159
        $region90: #{autoencoder_forward.1} parent=87 // pred_check_branch
          %520 = sbr.rel (%p518) target = $region92
        $region91: #{autoencoder_forward.1} parent=87 // pred_region
          %521 = dma.done [#allocation10], 9216
        $region92: #{autoencoder_forward.1} parent=87 // pred_fallthru
          _
        // Predicated region
        $region93: #{autoencoder_forward.1} parent=87 // pred_check
          %p522 = pneg %p243
        $region94: #{autoencoder_forward.1} parent=87 // pred_check_branch
          %524 = sbr.rel (%p522) target = $region96
        $region95: #{autoencoder_forward.1} parent=87 // pred_region
          %525 = dma.done [#allocation13], 36864
        $region96: #{autoencoder_forward.1} parent=87 // pred_fallthru
          _
        %p526 = scmp.lt.s32.totalorder %s33, 1
        %s527 = scalar_select %p526, %s33, 1
        %s528 = smul.addr %s527, 8
        %s529 = smul.addr %s528, 8
        %s530 = scalar_lea.vmem %s0, %s529
        %p531 = pneg %p54
        %p532 = pneg %p51
        %p533 = pneg %p75
        %p534 = pneg %p72
        %p535 = pneg %p96
        %p536 = pneg %p93
        %p537 = pneg %p117
        %p538 = pneg %p114
        %p539 = pneg %p138
        %p540 = pneg %p135
        %p541 = pneg %p159
        %p542 = pneg %p156
        %p543 = pneg %p180
        %p544 = pneg %p177
        %p545 = pneg %p201
        %p546 = pneg %p198
        %p547 = pneg %p222
        %p548 = pneg %p219
        %p549 = pneg %p243
        %p550 = pneg %p240
        %p551 = pneg %p264
        %p552 = pneg %p261
        %p553 = pneg %p285
        %p554 = pneg %p282
        %p555 = pneg %p306
        %p556 = pneg %p303
        %p557 = pneg %p327
        %p558 = pneg %p324
        %p559 = pneg %p348
        %p560 = pneg %p345
        %p561 = pneg %p369
        %p562 = pneg %p366
        %p563 = pneg %p390
        %p564 = pneg %p387
        %p565 = pneg %p416
        %p566 = pneg %p413
        %s567 = sand.u32 %s403, 1
        %s568 = scalar_lea.sflag [#allocation11], %s567
        %s569 = sand.u32 %s403, 1
        %s570 = smul.addr %s569, 64
        %s571 = scalar_lea.vmem [#allocation14], %s570
        %p572 = scmp.lt.s32.totalorder %s33, 1
        %s573 = scalar_select %p572, %s33, 1
        %s574 = smul.addr %s573, 8
        %s575 = smul.addr %s574, 8
        %s576 = scalar_lea.vmem %s0, %s575
        %vm577 = vcmask 261120
        %578 = vst.msk [vmem:[#allocation2] sm:$0xff] %vm577, 0.0
        %579 = vst.msk [vmem:[#allocation2 + $0x8] sm:$0xff] %vm577, 0.0
        %580 = vst.msk [vmem:[#allocation2 + $0x10] sm:$0xff] %vm577, 0.0
        %581 = vst.msk [vmem:[#allocation2 + $0x18] sm:$0xff] %vm577, 0.0
        %582 = vst.msk [vmem:[#allocation2 + $0x20] sm:$0xff] %vm577, 0.0
        %583 = vst.msk [vmem:[#allocation2 + $0x28] sm:$0xff] %vm577, 0.0
        %vm584 = vcmask 253952
        %585 = vst.msk [vmem:[#allocation2 + $0x30] sm:$0x1] %vm584, 0.0
        %vm586 = vcmask 523264
        %587 = vst.msk [vmem:[#allocation3] sm:$0xff] %vm586, 0.0
        %588 = vst.msk [vmem:[#allocation3 + $0x8] sm:$0xff] %vm586, 0.0
        %589 = vst.msk [vmem:[#allocation3 + $0x10] sm:$0xff] %vm586, 0.0
        %vm590 = vcmask 516096
        %591 = vst.msk [vmem:[#allocation3 + $0x18] sm:$0x1] %vm590, 0.0
        %592 = vst [vmem:[#allocation4] sm:$0xff] 0.0
        %593 = vst [vmem:[#allocation4 + $0x8] sm:$0xff] 0.0
        %594 = vst [vmem:[#allocation5] sm:$0xff] 0.0
        %595 = vst [vmem:[#allocation5 + $0x8] sm:$0xff] 0.0
        %596 = vst [vmem:[#allocation5 + $0x10] sm:$0xff] 0.0
        %597 = vst [vmem:[#allocation5 + $0x18] sm:$0xff] 0.0
        %598 = vst [vmem:[#allocation5 + $0x20] sm:$0xff] 0.0
        %599 = vst [vmem:[#allocation5 + $0x28] sm:$0xff] 0.0
        %600 = vst [vmem:[#allocation5 + $0x30] sm:$0x1] 0.0
        %601 = vst [vmem:[#allocation5 + $0x38] sm:$0x1] 0.0
        %602 = vst [vmem:[#allocation6] sm:$0xff] 0.0
        %603 = vst [vmem:[#allocation6 + $0x8] sm:$0xff] 0.0
        %604 = vst [vmem:[#allocation6 + $0x10] sm:$0xff] 0.0
        %605 = vst [vmem:[#allocation6 + $0x18] sm:$0xff] 0.0
        %606 = vst [vmem:[#allocation6 + $0x20] sm:$0xff] 0.0
        %607 = vst [vmem:[#allocation6 + $0x28] sm:$0xff] 0.0
        %608 = vst [vmem:[#allocation6 + $0x30] sm:$0x1] 0.0
        %609 = vst.msk [vmem:[#allocation7] sm:$0xff] %vm586, 0.0
        %610 = vst.msk [vmem:[#allocation7 + $0x8] sm:$0xff] %vm586, 0.0
        %611 = vst.msk [vmem:[#allocation7 + $0x10] sm:$0xff] %vm586, 0.0
        %612 = vst.msk [vmem:[#allocation7 + $0x18] sm:$0xff] %vm586, 0.0
        %613 = vst.msk [vmem:[#allocation7 + $0x20] sm:$0xff] %vm586, 0.0
        %614 = vst.msk [vmem:[#allocation7 + $0x28] sm:$0xff] %vm586, 0.0
        %615 = vst.msk [vmem:[#allocation7 + $0x30] sm:$0xff] %vm586, 0.0
        %616 = vst.msk [vmem:[#allocation7 + $0x38] sm:$0xff] %vm586, 0.0
        %617 = vst.msk [vmem:[#allocation7 + $0x40] sm:$0xff] %vm586, 0.0
        %618 = vst.msk [vmem:[#allocation7 + $0x48] sm:$0xff] %vm586, 0.0
        %619 = vst.msk [vmem:[#allocation7 + $0x50] sm:$0x1] %vm590, 0.0
        %620 = vst.msk [vmem:[#allocation8] sm:$0xff] %vm577, 0.0
        %621 = vst.msk [vmem:[#allocation8 + $0x8] sm:$0xff] %vm577, 0.0
        %622 = vst.msk [vmem:[#allocation8 + $0x10] sm:$0xff] %vm577, 0.0
        %623 = vst.msk [vmem:[#allocation8 + $0x18] sm:$0xff] %vm577, 0.0
        %624 = vst.msk [vmem:[#allocation8 + $0x20] sm:$0xff] %vm577, 0.0
        %625 = vst.msk [vmem:[#allocation8 + $0x28] sm:$0xff] %vm577, 0.0
        %626 = vst.msk [vmem:[#allocation8 + $0x30] sm:$0xff] %vm577, 0.0
        %627 = vst.msk [vmem:[#allocation8 + $0x38] sm:$0xff] %vm577, 0.0
        %628 = vst.msk [vmem:[#allocation8 + $0x40] sm:$0xff] %vm577, 0.0
        %629 = vst.msk [vmem:[#allocation8 + $0x48] sm:$0xff] %vm577, 0.0
        %630 = vst.msk [vmem:[#allocation8 + $0x50] sm:$0x1] %vm584, 0.0
        %v631 = vld [vmem:[%s576] sm:$0xff]
        %v632 = vld [vmem:[%s576 + $0x8] sm:$0xff]
        %v633 = vld [vmem:[%s576 + $0x10] sm:$0xff]
        %v634 = vld [vmem:[%s576 + $0x18] sm:$0xff]
        %v635 = vld [vmem:[%s576 + $0x20] sm:$0xff]
        %v636 = vld [vmem:[%s576 + $0x28] sm:$0xff]
        %v637 = vld [vmem:[%s576 + $0x30] sm:$0x7f]
        %v638 = vld [vmem:[%s1] sm:$0xff]
        %v639 = vld [vmem:[%s1 + $0x8] sm:$0xff]
        %v640 = vld [vmem:[%s576 + $0x1] sm:$0xff]
        %v641 = vld [vmem:[%s576 + $0x9] sm:$0xff]
        %v642 = vld [vmem:[%s576 + $0x11] sm:$0xff]
        %v643 = vld [vmem:[%s576 + $0x19] sm:$0xff]
        %v644 = vld [vmem:[%s576 + $0x21] sm:$0xff]
        %v645 = vld [vmem:[%s576 + $0x29] sm:$0xff]
        %v646 = vld [vmem:[%s576 + $0x31] sm:$0x7f]
        %s647 = scalar_lea.vmem %s1, 16
        %v648 = vld [vmem:[%s647] sm:$0xff]
        %v649 = vld [vmem:[%s647 + $0x8] sm:$0xff]
        %vm650 = vcmask 130048
        %v652 = vsel %vm650, %v640, 0
        %v655 = vsel %vm650, %v641, 0
        %v658 = vsel %vm650, %v642, 0
        %v661 = vsel %vm650, %v643, 0
        %v664 = vsel %vm650, %v644, 0
        %v667 = vsel %vm650, %v645, 0
        %v670 = vsel %vm650, %v646, 0
        %672 = vmatprep.subr.mxu0 0.0
        %673 = vmatpush1.msra.mxu0 %v648
        %674 = vmatprep.subr.mxu0 0.0
        %675 = vmatpush1.msra.mxu0 %v649
        %676 = vmatprep.subr.mxu0 0.0
        %677 = vmatpush1.msra.mxu0 0.0
        %678 = vmatprep.subr.mxu0 0.0
        %679 = vmatpush1.msra.mxu0 0.0
        %680 = vmatprep.subr.mxu0 0.0
        %681 = vmatpush1.msra.mxu0 0.0
        %682 = vmatprep.subr.mxu0 0.0
        %683 = vmatpush1.msra.mxu0 0.0
        %684 = vmatprep.subr.mxu0 0.0
        %685 = vmatpush1.msra.mxu0 0.0
        %686 = vmatprep.subr.mxu0 0.0
        %687 = vmatpush1.msra.mxu0 0.0
        %688 = vmatprep.subr.mxu0 0.0
        %689 = vmatpush1.msra.mxu0 0.0
        %690 = vmatprep.subr.mxu0 0.0
        %691 = vmatpush1.msra.mxu0 0.0
        %692 = vmatprep.subr.mxu0 0.0
        %693 = vmatpush1.msra.mxu0 0.0
        %694 = vmatprep.subr.mxu0 0.0
        %695 = vmatpush1.msra.mxu0 0.0
        %696 = vmatprep.subr.mxu0 0.0
        %697 = vmatpush1.msra.mxu0 0.0
        %698 = vmatprep.subr.mxu0 0.0
        %699 = vmatpush1.msra.mxu0 0.0
        %700 = vmatprep.subr.mxu0 0.0
        %701 = vmatpush1.msra.mxu0 0.0
        %702 = vmatprep.subr.mxu0 0.0
        %703 = vmatpush1.msra.mxu0 0.0
        %704 = vmatprep.subr.mxu0 0.0
        %705 = vmatpush1.msra.mxu0 0.0
        %706 = vmatprep.subr.mxu0 0.0
        %707 = vmatpush1.msra.mxu0 0.0
        %708 = vmatprep.subr.mxu0 0.0
        %709 = vmatpush1.msra.mxu0 0.0
        %710 = vmatprep.subr.mxu0 0.0
        %711 = vmatpush1.msra.mxu0 0.0
        %712 = vmatprep.subr.mxu0 0.0
        %713 = vmatpush1.msra.mxu0 0.0
        %714 = vmatprep.subr.mxu0 0.0
        %715 = vmatpush1.msra.mxu0 0.0
        %716 = vmatprep.subr.mxu0 0.0
        %717 = vmatpush1.msra.mxu0 0.0
        %718 = vmatprep.subr.mxu0 0.0
        %719 = vmatpush1.msra.mxu0 0.0
        %720 = vmatprep.subr.mxu0 0.0
        %721 = vmatpush1.msra.mxu0 0.0
        %722 = vmatprep.subr.mxu0 0.0
        %723 = vmatpush1.msra.mxu0 0.0
        %724 = vmatprep.subr.mxu0 0.0
        %725 = vmatpush1.msra.mxu0 0.0
        %726 = vmatprep.subr.mxu0 0.0
        %727 = vmatpush1.msra.mxu0 0.0
        %728 = vmatprep.subr.mxu0 0.0
        %729 = vmatpush1.msra.mxu0 0.0
        %730 = vmatprep.subr.mxu0 0.0
        %731 = vmatpush1.msra.mxu0 0.0
        %732 = vmatprep.subr.mxu0 0.0
        %733 = vmatpush1.msra.mxu0 0.0
        %734 = vmatprep.subr.mxu0 0.0
        %735 = vmatpush1.msra.mxu0 0.0
        %736 = vmatprep.mubr.f32.mxu0 0.0
        %737 = vmatmul.mubr.f32.gmra.mrb[0].mxu0 %v652
        %v738 = vpop.f32.mrb[0].mxu0
        %v739 = vadd.f32 0.0, %v738
        %v740 = vpop.f32.mrb[0].mxu0
        %741 = vmatprep.mubr.f32.mxu0 0.0
        %742 = vmatmul.mubr.f32.gmra.mrb[0].mxu0 %v655
        %v743 = vpop.f32.mrb[0].mxu0
        %v744 = vadd.f32 0.0, %v743
        %v745 = vpop.f32.mrb[0].mxu0
        %746 = vmatprep.mubr.f32.mxu0 0.0
        %747 = vmatmul.mubr.f32.gmra.mrb[0].mxu0 %v658
        %v748 = vpop.f32.mrb[0].mxu0
        %v749 = vadd.f32 0.0, %v748
        %v750 = vpop.f32.mrb[0].mxu0
        %751 = vmatprep.mubr.f32.mxu0 0.0
        %752 = vmatmul.mubr.f32.gmra.mrb[0].mxu0 %v661
        %v753 = vpop.f32.mrb[0].mxu0
        %v754 = vadd.f32 0.0, %v753
        %v755 = vpop.f32.mrb[0].mxu0
        %756 = vmatprep.mubr.f32.mxu0 0.0
        %757 = vmatmul.mubr.f32.gmra.mrb[0].mxu0 %v664
        %v758 = vpop.f32.mrb[0].mxu0
        %v759 = vadd.f32 0.0, %v758
        %v760 = vpop.f32.mrb[0].mxu0
        %761 = vmatprep.mubr.f32.mxu0 0.0
        %762 = vmatmul.mubr.f32.gmra.mrb[0].mxu0 %v667
        %v763 = vpop.f32.mrb[0].mxu0
        %v764 = vadd.f32 0.0, %v763
        %v765 = vpop.f32.mrb[0].mxu0
        %766 = vmatprep.mubr.f32.mxu0 0.0
        %767 = vmatmul.mubr.f32.gmra.mrb[0].mxu0 %v670
        %v768 = vpop.f32.mrb[0].mxu0
        %v769 = vadd.f32 0.0, %v768
        %v770 = vpop.f32.mrb[0].mxu0
        %771 = vdwg.mxu0
        %v773 = vsel %vm650, %v631, 0
        %v776 = vsel %vm650, %v632, 0
        %v779 = vsel %vm650, %v633, 0
        %v782 = vsel %vm650, %v634, 0
        %v785 = vsel %vm650, %v635, 0
        %v788 = vsel %vm650, %v636, 0
        %v791 = vsel %vm650, %v637, 0
        %793 = vmatprep.subr.mxu0 0.0
        %794 = vmatpush1.msra.mxu0 %v638
        %795 = vmatprep.subr.mxu0 0.0
        %796 = vmatpush1.msra.mxu0 %v639
        %797 = vmatprep.subr.mxu0 0.0
        %798 = vmatpush1.msra.mxu0 0.0
        %799 = vmatprep.subr.mxu0 0.0
        %800 = vmatpush1.msra.mxu0 0.0
        %801 = vmatprep.subr.mxu0 0.0
        %802 = vmatpush1.msra.mxu0 0.0
        %803 = vmatprep.subr.mxu0 0.0
        %804 = vmatpush1.msra.mxu0 0.0
        %805 = vmatprep.subr.mxu0 0.0
        %806 = vmatpush1.msra.mxu0 0.0
        %807 = vmatprep.subr.mxu0 0.0
        %808 = vmatpush1.msra.mxu0 0.0
        %809 = vmatprep.subr.mxu0 0.0
        %810 = vmatpush1.msra.mxu0 0.0
        %811 = vmatprep.subr.mxu0 0.0
        %812 = vmatpush1.msra.mxu0 0.0
        %813 = vmatprep.subr.mxu0 0.0
        %814 = vmatpush1.msra.mxu0 0.0
        %815 = vmatprep.subr.mxu0 0.0
        %816 = vmatpush1.msra.mxu0 0.0
        %817 = vmatprep.subr.mxu0 0.0
        %818 = vmatpush1.msra.mxu0 0.0
        %819 = vmatprep.subr.mxu0 0.0
        %820 = vmatpush1.msra.mxu0 0.0
        %821 = vmatprep.subr.mxu0 0.0
        %822 = vmatpush1.msra.mxu0 0.0
        %823 = vmatprep.subr.mxu0 0.0
        %824 = vmatpush1.msra.mxu0 0.0
        %825 = vmatprep.subr.mxu0 0.0
        %826 = vmatpush1.msra.mxu0 0.0
        %827 = vmatprep.subr.mxu0 0.0
        %828 = vmatpush1.msra.mxu0 0.0
        %829 = vmatprep.subr.mxu0 0.0
        %830 = vmatpush1.msra.mxu0 0.0
        %831 = vmatprep.subr.mxu0 0.0
        %832 = vmatpush1.msra.mxu0 0.0
        %833 = vmatprep.subr.mxu0 0.0
        %834 = vmatpush1.msra.mxu0 0.0
        %835 = vmatprep.subr.mxu0 0.0
        %836 = vmatpush1.msra.mxu0 0.0
        %837 = vmatprep.subr.mxu0 0.0
        %838 = vmatpush1.msra.mxu0 0.0
        %839 = vmatprep.subr.mxu0 0.0
        %840 = vmatpush1.msra.mxu0 0.0
        %841 = vmatprep.subr.mxu0 0.0
        %842 = vmatpush1.msra.mxu0 0.0
        %843 = vmatprep.subr.mxu0 0.0
        %844 = vmatpush1.msra.mxu0 0.0
        %845 = vmatprep.subr.mxu0 0.0
        %846 = vmatpush1.msra.mxu0 0.0
        %847 = vmatprep.subr.mxu0 0.0
        %848 = vmatpush1.msra.mxu0 0.0
        %849 = vmatprep.subr.mxu0 0.0
        %850 = vmatpush1.msra.mxu0 0.0
        %851 = vmatprep.subr.mxu0 0.0
        %852 = vmatpush1.msra.mxu0 0.0
        %853 = vmatprep.subr.mxu0 0.0
        %854 = vmatpush1.msra.mxu0 0.0
        %855 = vmatprep.subr.mxu0 0.0
        %856 = vmatpush1.msra.mxu0 0.0
        %857 = vmatprep.mubr.f32.mxu0 0.0
        %858 = vmatmul.mubr.f32.gmra.mrb[0].mxu0 %v773
        %v859 = vpop.f32.mrb[0].mxu0
        %v860 = vadd.f32 %v739, %v859
        %v861 = vpop.f32.mrb[0].mxu0
        %862 = vmatprep.mubr.f32.mxu0 0.0
        %863 = vmatmul.mubr.f32.gmra.mrb[0].mxu0 %v776
        %v864 = vpop.f32.mrb[0].mxu0
        %v865 = vadd.f32 %v744, %v864
        %v866 = vpop.f32.mrb[0].mxu0
        %867 = vmatprep.mubr.f32.mxu0 0.0
        %868 = vmatmul.mubr.f32.gmra.mrb[0].mxu0 %v779
        %v869 = vpop.f32.mrb[0].mxu0
        %v870 = vadd.f32 %v749, %v869
        %v871 = vpop.f32.mrb[0].mxu0
        %872 = vmatprep.mubr.f32.mxu0 0.0
        %873 = vmatmul.mubr.f32.gmra.mrb[0].mxu0 %v782
        %v874 = vpop.f32.mrb[0].mxu0
        %v875 = vadd.f32 %v754, %v874
        %v876 = vpop.f32.mrb[0].mxu0
        %877 = vmatprep.mubr.f32.mxu0 0.0
        %878 = vmatmul.mubr.f32.gmra.mrb[0].mxu0 %v785
        %v879 = vpop.f32.mrb[0].mxu0
        %v880 = vadd.f32 %v759, %v879
        %v881 = vpop.f32.mrb[0].mxu0
        %882 = vmatprep.mubr.f32.mxu0 0.0
        %883 = vmatmul.mubr.f32.gmra.mrb[0].mxu0 %v788
        %v884 = vpop.f32.mrb[0].mxu0
        %v885 = vadd.f32 %v764, %v884
        %v886 = vpop.f32.mrb[0].mxu0
        %887 = vmatprep.mubr.f32.mxu0 0.0
        %888 = vmatmul.mubr.f32.gmra.mrb[0].mxu0 %v791
        %v889 = vpop.f32.mrb[0].mxu0
        %v890 = vadd.f32 %v769, %v889
        %v891 = vpop.f32.mrb[0].mxu0
        %892 = vdwg.mxu0
        %v893 = vld [vmem:[%s576 + $0x8] sm:$0xff]
        %v894 = vld [vmem:[%s576 + $0x10] sm:$0xff]
        %v895 = vld [vmem:[%s576 + $0x18] sm:$0xff]
        %v896 = vld [vmem:[%s576 + $0x20] sm:$0xff]
        %v897 = vld [vmem:[%s576 + $0x28] sm:$0xff]
        %v898 = vld [vmem:[%s576 + $0x30] sm:$0xff]
        %v899 = vld [vmem:[%s576 + $0x38] sm:$0x7f]
        %s900 = scalar_lea.vmem %s1, 32
        %v901 = vld [vmem:[%s900] sm:$0xff]
        %v902 = vld [vmem:[%s900 + $0x8] sm:$0xff]
        %v904 = vsel %vm650, %v893, 0
        %v907 = vsel %vm650, %v894, 0
        %v910 = vsel %vm650, %v895, 0
        %v913 = vsel %vm650, %v896, 0
        %v916 = vsel %vm650, %v897, 0
        %v919 = vsel %vm650, %v898, 0
        %v922 = vsel %vm650, %v899, 0
        %924 = vmatprep.subr.mxu0 0.0
        %925 = vmatpush1.msra.mxu0 %v901
        %926 = vmatprep.subr.mxu0 0.0
        %927 = vmatpush1.msra.mxu0 %v902
        %928 = vmatprep.subr.mxu0 0.0
        %929 = vmatpush1.msra.mxu0 0.0
        %930 = vmatprep.subr.mxu0 0.0
        %931 = vmatpush1.msra.mxu0 0.0
        %932 = vmatprep.subr.mxu0 0.0
        %933 = vmatpush1.msra.mxu0 0.0
        %934 = vmatprep.subr.mxu0 0.0
        %935 = vmatpush1.msra.mxu0 0.0
        %936 = vmatprep.subr.mxu0 0.0
        %937 = vmatpush1.msra.mxu0 0.0
        %938 = vmatprep.subr.mxu0 0.0
        %939 = vmatpush1.msra.mxu0 0.0
        %940 = vmatprep.subr.mxu0 0.0
        %941 = vmatpush1.msra.mxu0 0.0
        %942 = vmatprep.subr.mxu0 0.0
        %943 = vmatpush1.msra.mxu0 0.0
        %944 = vmatprep.subr.mxu0 0.0
        %945 = vmatpush1.msra.mxu0 0.0
        %946 = vmatprep.subr.mxu0 0.0
        %947 = vmatpush1.msra.mxu0 0.0
        %948 = vmatprep.subr.mxu0 0.0
        %949 = vmatpush1.msra.mxu0 0.0
        %950 = vmatprep.subr.mxu0 0.0
        %951 = vmatpush1.msra.mxu0 0.0
        %952 = vmatprep.subr.mxu0 0.0
        %953 = vmatpush1.msra.mxu0 0.0
        %954 = vmatprep.subr.mxu0 0.0
        %955 = vmatpush1.msra.mxu0 0.0
        %956 = vmatprep.subr.mxu0 0.0
        %957 = vmatpush1.msra.mxu0 0.0
        %958 = vmatprep.subr.mxu0 0.0
        %959 = vmatpush1.msra.mxu0 0.0
        %960 = vmatprep.subr.mxu0 0.0
        %961 = vmatpush1.msra.mxu0 0.0
        %962 = vmatprep.subr.mxu0 0.0
        %963 = vmatpush1.msra.mxu0 0.0
        %964 = vmatprep.subr.mxu0 0.0
        %965 = vmatpush1.msra.mxu0 0.0
        %966 = vmatprep.subr.mxu0 0.0
        %967 = vmatpush1.msra.mxu0 0.0
        %968 = vmatprep.subr.mxu0 0.0
        %969 = vmatpush1.msra.mxu0 0.0
        %970 = vmatprep.subr.mxu0 0.0
        %971 = vmatpush1.msra.mxu0 0.0
        %972 = vmatprep.subr.mxu0 0.0
        %973 = vmatpush1.msra.mxu0 0.0
        %974 = vmatprep.subr.mxu0 0.0
        %975 = vmatpush1.msra.mxu0 0.0
        %976 = vmatprep.subr.mxu0 0.0
        %977 = vmatpush1.msra.mxu0 0.0
        %978 = vmatprep.subr.mxu0 0.0
        %979 = vmatpush1.msra.mxu0 0.0
        %980 = vmatprep.subr.mxu0 0.0
        %981 = vmatpush1.msra.mxu0 0.0
        %982 = vmatprep.subr.mxu0 0.0
        %983 = vmatpush1.msra.mxu0 0.0
        %984 = vmatprep.subr.mxu0 0.0
        %985 = vmatpush1.msra.mxu0 0.0
        %986 = vmatprep.subr.mxu0 0.0
        %987 = vmatpush1.msra.mxu0 0.0
        %988 = vmatprep.mubr.f32.mxu0 0.0
        %989 = vmatmul.mubr.f32.gmra.mrb[0].mxu0 %v904
        %v990 = vpop.f32.mrb[0].mxu0
        %v991 = vadd.f32 0.0, %v990
        %v992 = vpop.f32.mrb[0].mxu0
        %993 = vmatprep.mubr.f32.mxu0 0.0
        %994 = vmatmul.mubr.f32.gmra.mrb[0].mxu0 %v907
        %v995 = vpop.f32.mrb[0].mxu0
        %v996 = vadd.f32 0.0, %v995
        %v997 = vpop.f32.mrb[0].mxu0
        %998 = vmatprep.mubr.f32.mxu0 0.0
        %999 = vmatmul.mubr.f32.gmra.mrb[0].mxu0 %v910
        %v1000 = vpop.f32.mrb[0].mxu0
        %v1001 = vadd.f32 0.0, %v1000
        %v1002 = vpop.f32.mrb[0].mxu0
        %1003 = vmatprep.mubr.f32.mxu0 0.0
        %1004 = vmatmul.mubr.f32.gmra.mrb[0].mxu0 %v913
        %v1005 = vpop.f32.mrb[0].mxu0
        %v1006 = vadd.f32 0.0, %v1005
        %v1007 = vpop.f32.mrb[0].mxu0
        %1008 = vmatprep.mubr.f32.mxu0 0.0
        %1009 = vmatmul.mubr.f32.gmra.mrb[0].mxu0 %v916
        %v1010 = vpop.f32.mrb[0].mxu0
        %v1011 = vadd.f32 0.0, %v1010
        %v1012 = vpop.f32.mrb[0].mxu0
        %1013 = vmatprep.mubr.f32.mxu0 0.0
        %1014 = vmatmul.mubr.f32.gmra.mrb[0].mxu0 %v919
        %v1015 = vpop.f32.mrb[0].mxu0
        %v1016 = vadd.f32 0.0, %v1015
        %v1017 = vpop.f32.mrb[0].mxu0
        %1018 = vmatprep.mubr.f32.mxu0 0.0
        %1019 = vmatmul.mubr.f32.gmra.mrb[0].mxu0 %v922
        %v1020 = vpop.f32.mrb[0].mxu0
        %v1021 = vadd.f32 0.0, %v1020
        %v1022 = vpop.f32.mrb[0].mxu0
        %1023 = vdwg.mxu0
        %v1024 = vadd.f32 %v860, %v991
        %v1025 = vadd.f32 %v865, %v996
        %v1026 = vadd.f32 %v870, %v1001
        %v1027 = vadd.f32 %v875, %v1006
        %v1028 = vadd.f32 %v880, %v1011
        %v1029 = vadd.f32 %v885, %v1016
        %v1030 = vadd.f32 %v890, %v1021
        %v1031 = vld [vmem:[%s576 + $0x9] sm:$0xff]
        %v1032 = vld [vmem:[%s576 + $0x11] sm:$0xff]
        %v1033 = vld [vmem:[%s576 + $0x19] sm:$0xff]
        %v1034 = vld [vmem:[%s576 + $0x21] sm:$0xff]
        %v1035 = vld [vmem:[%s576 + $0x29] sm:$0xff]
        %v1036 = vld [vmem:[%s576 + $0x31] sm:$0xff]
        %v1037 = vld [vmem:[%s576 + $0x39] sm:$0x7f]
        %s1038 = scalar_lea.vmem %s1, 48
        %v1039 = vld [vmem:[%s1038] sm:$0xff]
        %v1040 = vld [vmem:[%s1038 + $0x8] sm:$0xff]
        %v1042 = vsel %vm650, %v1031, 0
        %v1045 = vsel %vm650, %v1032, 0
        %v1048 = vsel %vm650, %v1033, 0
        %v1051 = vsel %vm650, %v1034, 0
        %v1054 = vsel %vm650, %v1035, 0
        %v1057 = vsel %vm650, %v1036, 0
        %v1060 = vsel %vm650, %v1037, 0
        %1062 = vmatprep.subr.mxu0 0.0
        %1063 = vmatpush1.msra.mxu0 %v1039
        %1064 = vmatprep.subr.mxu0 0.0
        %1065 = vmatpush1.msra.mxu0 %v1040
        %1066 = vmatprep.subr.mxu0 0.0
        %1067 = vmatpush1.msra.mxu0 0.0
        %1068 = vmatprep.subr.mxu0 0.0
        %1069 = vmatpush1.msra.mxu0 0.0
        %1070 = vmatprep.subr.mxu0 0.0
        %1071 = vmatpush1.msra.mxu0 0.0
        %1072 = vmatprep.subr.mxu0 0.0
        %1073 = vmatpush1.msra.mxu0 0.0
        %1074 = vmatprep.subr.mxu0 0.0
        %1075 = vmatpush1.msra.mxu0 0.0
        %1076 = vmatprep.subr.mxu0 0.0
        %1077 = vmatpush1.msra.mxu0 0.0
        %1078 = vmatprep.subr.mxu0 0.0
        %1079 = vmatpush1.msra.mxu0 0.0
        %1080 = vmatprep.subr.mxu0 0.0
        %1081 = vmatpush1.msra.mxu0 0.0
        %1082 = vmatprep.subr.mxu0 0.0
        %1083 = vmatpush1.msra.mxu0 0.0
        %1084 = vmatprep.subr.mxu0 0.0
        %1085 = vmatpush1.msra.mxu0 0.0
        %1086 = vmatprep.subr.mxu0 0.0
        %1087 = vmatpush1.msra.mxu0 0.0
        %1088 = vmatprep.subr.mxu0 0.0
        %1089 = vmatpush1.msra.mxu0 0.0
        %1090 = vmatprep.subr.mxu0 0.0
        %1091 = vmatpush1.msra.mxu0 0.0
        %1092 = vmatprep.subr.mxu0 0.0
        %1093 = vmatpush1.msra.mxu0 0.0
        %1094 = vmatprep.subr.mxu0 0.0
        %1095 = vmatpush1.msra.mxu0 0.0
        %1096 = vmatprep.subr.mxu0 0.0
        %1097 = vmatpush1.msra.mxu0 0.0
        %1098 = vmatprep.subr.mxu0 0.0
        %1099 = vmatpush1.msra.mxu0 0.0
        %1100 = vmatprep.subr.mxu0 0.0
        %1101 = vmatpush1.msra.mxu0 0.0
        %1102 = vmatprep.subr.mxu0 0.0
        %1103 = vmatpush1.msra.mxu0 0.0
        %1104 = vmatprep.subr.mxu0 0.0
        %1105 = vmatpush1.msra.mxu0 0.0
        %1106 = vmatprep.subr.mxu0 0.0
        %1107 = vmatpush1.msra.mxu0 0.0
        %1108 = vmatprep.subr.mxu0 0.0
        %1109 = vmatpush1.msra.mxu0 0.0
        %1110 = vmatprep.subr.mxu0 0.0
        %1111 = vmatpush1.msra.mxu0 0.0
        %1112 = vmatprep.subr.mxu0 0.0
        %1113 = vmatpush1.msra.mxu0 0.0
        %1114 = vmatprep.subr.mxu0 0.0
        %1115 = vmatpush1.msra.mxu0 0.0
        %1116 = vmatprep.subr.mxu0 0.0
        %1117 = vmatpush1.msra.mxu0 0.0
        %1118 = vmatprep.subr.mxu0 0.0
        %1119 = vmatpush1.msra.mxu0 0.0
        %1120 = vmatprep.subr.mxu0 0.0
        %1121 = vmatpush1.msra.mxu0 0.0
        %1122 = vmatprep.subr.mxu0 0.0
        %1123 = vmatpush1.msra.mxu0 0.0
        %1124 = vmatprep.subr.mxu0 0.0
        %1125 = vmatpush1.msra.mxu0 0.0
        %1126 = vmatprep.mubr.f32.mxu0 0.0
        %1127 = vmatmul.mubr.f32.gmra.mrb[0].mxu0 %v1042
        %v1128 = vpop.f32.mrb[0].mxu0
        %v1129 = vadd.f32 0.0, %v1128
        %v1130 = vpop.f32.mrb[0].mxu0
        %1131 = vmatprep.mubr.f32.mxu0 0.0
        %1132 = vmatmul.mubr.f32.gmra.mrb[0].mxu0 %v1045
        %v1133 = vpop.f32.mrb[0].mxu0
        %v1134 = vadd.f32 0.0, %v1133
        %v1135 = vpop.f32.mrb[0].mxu0
        %1136 = vmatprep.mubr.f32.mxu0 0.0
        %1137 = vmatmul.mubr.f32.gmra.mrb[0].mxu0 %v1048
        %v1138 = vpop.f32.mrb[0].mxu0
        %v1139 = vadd.f32 0.0, %v1138
        %v1140 = vpop.f32.mrb[0].mxu0
        %1141 = vmatprep.mubr.f32.mxu0 0.0
        %1142 = vmatmul.mubr.f32.gmra.mrb[0].mxu0 %v1051
        %v1143 = vpop.f32.mrb[0].mxu0
        %v1144 = vadd.f32 0.0, %v1143
        %v1145 = vpop.f32.mrb[0].mxu0
        %1146 = vmatprep.mubr.f32.mxu0 0.0
        %1147 = vmatmul.mubr.f32.gmra.mrb[0].mxu0 %v1054
        %v1148 = vpop.f32.mrb[0].mxu0
        %v1149 = vadd.f32 0.0, %v1148
        %v1150 = vpop.f32.mrb[0].mxu0
        %1151 = vmatprep.mubr.f32.mxu0 0.0
        %1152 = vmatmul.mubr.f32.gmra.mrb[0].mxu0 %v1057
        %v1153 = vpop.f32.mrb[0].mxu0
        %v1154 = vadd.f32 0.0, %v1153
        %v1155 = vpop.f32.mrb[0].mxu0
        %1156 = vmatprep.mubr.f32.mxu0 0.0
        %1157 = vmatmul.mubr.f32.gmra.mrb[0].mxu0 %v1060
        %v1158 = vpop.f32.mrb[0].mxu0
        %v1159 = vadd.f32 0.0, %v1158
        %v1160 = vpop.f32.mrb[0].mxu0
        %1161 = vdwg.mxu0
        %v1162 = vadd.f32 %v1024, %v1129
        %v1163 = vadd.f32 %v1025, %v1134
        %v1164 = vadd.f32 %v1026, %v1139
        %v1165 = vadd.f32 %v1027, %v1144
        %v1166 = vadd.f32 %v1028, %v1149
        %v1167 = vadd.f32 %v1029, %v1154
        %v1168 = vadd.f32 %v1030, %v1159
        %v1169 = vld [vmem:[%s2] sm:$0x1]
        %v1171 = vlaneseq
        %v1172 = vshrl.u32 %v1171, 7
        %v1173 = vsub.s32 0, %v1172
        %v1174 = vrot.slane %v1169, %v1173
        %v1176 = vadd.f32 %v1162, %v1174
        %v1177 = vadd.f32 %v1163, %v1174
        %v1178 = vadd.f32 %v1164, %v1174
        %v1179 = vadd.f32 %v1165, %v1174
        %v1180 = vadd.f32 %v1166, %v1174
        %v1181 = vadd.f32 %v1167, %v1174
        %v1182 = vadd.f32 %v1168, %v1174
        %v1183 = vmax.f32 %v1176, 0.0
        %v1184 = vmax.f32 %v1177, 0.0
        %v1185 = vmax.f32 %v1178, 0.0
        %v1186 = vmax.f32 %v1179, 0.0
        %v1187 = vmax.f32 %v1180, 0.0
        %v1188 = vmax.f32 %v1181, 0.0
        %v1189 = vmax.f32 %v1182, 0.0
        %vm1190 = vcmask 260096
        %1191 = vst.msk [vmem:[#allocation2] sm:$0x7f] %vm1190, %v1183
        %1192 = vst.msk [vmem:[#allocation2 + $0x7] sm:$0x7f] %vm1190, %v1184
        %1193 = vst.msk [vmem:[#allocation2 + $0xe] sm:$0x7f] %vm1190, %v1185
        %1194 = vst.msk [vmem:[#allocation2 + $0x15] sm:$0x7f] %vm1190, %v1186
        %1195 = vst.msk [vmem:[#allocation2 + $0x1c] sm:$0x7f] %vm1190, %v1187
        %1196 = vst.msk [vmem:[#allocation2 + $0x23] sm:$0x7f] %vm1190, %v1188
        %1197 = vst.msk [vmem:[#allocation2 + $0x2a] sm:$0x7f] %vm1190, %v1189
        %v1198 = vld [vmem:[#allocation2] sm:$0xff]
        %v1199 = vld [vmem:[#allocation2 + $0x8] sm:$0xff]
        %v1200 = vld [vmem:[#allocation2 + $0x10] sm:$0xff]
        %v1201 = vld [vmem:[#allocation2 + $0x18] sm:$0xff]
        %v1202 = vld [vmem:[#allocation2 + $0x20] sm:$0x1]
        %v1203 = vld [vmem:[%s3] sm:$0xff]
        %v1204 = vld [vmem:[%s3 + $0x8] sm:$0xff]
        %v1205 = vld [vmem:[%s3 + $0x10] sm:$0xff]
        %v1206 = vld [vmem:[%s3 + $0x18] sm:$0xff]
        %v1207 = vld [vmem:[#allocation2 + $0x1] sm:$0xff]
        %v1208 = vld [vmem:[#allocation2 + $0x9] sm:$0xff]
        %v1209 = vld [vmem:[#allocation2 + $0x11] sm:$0xff]
        %v1210 = vld [vmem:[#allocation2 + $0x19] sm:$0xff]
        %v1211 = vld [vmem:[#allocation2 + $0x21] sm:$0x1]
        %s1212 = scalar_lea.vmem %s3, 32
        %v1213 = vld [vmem:[%s1212] sm:$0xff]
        %v1214 = vld [vmem:[%s1212 + $0x8] sm:$0xff]
        %v1215 = vld [vmem:[%s1212 + $0x10] sm:$0xff]
        %v1216 = vld [vmem:[%s1212 + $0x18] sm:$0xff]
        %v1218 = vsel %vm577, %v1207, 0
        %v1221 = vsel %vm577, %v1208, 0
        %v1224 = vsel %vm577, %v1209, 0
        %v1227 = vsel %vm577, %v1210, 0
        %v1230 = vsel %vm577, %v1211, 0
        %1232 = vmatprep.subr.mxu0 0.0
        %1233 = vmatpush1.msra.mxu0 %v1213
        %1234 = vmatprep.subr.mxu0 0.0
        %1235 = vmatpush1.msra.mxu0 %v1214
        %1236 = vmatprep.subr.mxu0 0.0
        %1237 = vmatpush1.msra.mxu0 %v1215
        %1238 = vmatprep.subr.mxu0 0.0
        %1239 = vmatpush1.msra.mxu0 %v1216
        %1240 = vmatprep.subr.mxu0 0.0
        %1241 = vmatpush1.msra.mxu0 0.0
        %1242 = vmatprep.subr.mxu0 0.0
        %1243 = vmatpush1.msra.mxu0 0.0
        %1244 = vmatprep.subr.mxu0 0.0
        %1245 = vmatpush1.msra.mxu0 0.0
        %1246 = vmatprep.subr.mxu0 0.0
        %1247 = vmatpush1.msra.mxu0 0.0
        %1248 = vmatprep.subr.mxu0 0.0
        %1249 = vmatpush1.msra.mxu0 0.0
        %1250 = vmatprep.subr.mxu0 0.0
        %1251 = vmatpush1.msra.mxu0 0.0
        %1252 = vmatprep.subr.mxu0 0.0
        %1253 = vmatpush1.msra.mxu0 0.0
        %1254 = vmatprep.subr.mxu0 0.0
        %1255 = vmatpush1.msra.mxu0 0.0
        %1256 = vmatprep.subr.mxu0 0.0
        %1257 = vmatpush1.msra.mxu0 0.0
        %1258 = vmatprep.subr.mxu0 0.0
        %1259 = vmatpush1.msra.mxu0 0.0
        %1260 = vmatprep.subr.mxu0 0.0
        %1261 = vmatpush1.msra.mxu0 0.0
        %1262 = vmatprep.subr.mxu0 0.0
        %1263 = vmatpush1.msra.mxu0 0.0
        %1264 = vmatprep.subr.mxu0 0.0
        %1265 = vmatpush1.msra.mxu0 0.0
        %1266 = vmatprep.subr.mxu0 0.0
        %1267 = vmatpush1.msra.mxu0 0.0
        %1268 = vmatprep.subr.mxu0 0.0
        %1269 = vmatpush1.msra.mxu0 0.0
        %1270 = vmatprep.subr.mxu0 0.0
        %1271 = vmatpush1.msra.mxu0 0.0
        %1272 = vmatprep.subr.mxu0 0.0
        %1273 = vmatpush1.msra.mxu0 0.0
        %1274 = vmatprep.subr.mxu0 0.0
        %1275 = vmatpush1.msra.mxu0 0.0
        %1276 = vmatprep.subr.mxu0 0.0
        %1277 = vmatpush1.msra.mxu0 0.0
        %1278 = vmatprep.subr.mxu0 0.0
        %1279 = vmatpush1.msra.mxu0 0.0
        %1280 = vmatprep.subr.mxu0 0.0
        %1281 = vmatpush1.msra.mxu0 0.0
        %1282 = vmatprep.subr.mxu0 0.0
        %1283 = vmatpush1.msra.mxu0 0.0
        %1284 = vmatprep.subr.mxu0 0.0
        %1285 = vmatpush1.msra.mxu0 0.0
        %1286 = vmatprep.subr.mxu0 0.0
        %1287 = vmatpush1.msra.mxu0 0.0
        %1288 = vmatprep.subr.mxu0 0.0
        %1289 = vmatpush1.msra.mxu0 0.0
        %1290 = vmatprep.subr.mxu0 0.0
        %1291 = vmatpush1.msra.mxu0 0.0
        %1292 = vmatprep.subr.mxu0 0.0
        %1293 = vmatpush1.msra.mxu0 0.0
        %1294 = vmatprep.subr.mxu0 0.0
        %1295 = vmatpush1.msra.mxu0 0.0
        %1296 = vmatprep.mubr.f32.mxu0 0.0
        %1297 = vmatmul.mubr.f32.gmra.mrb[0].mxu0 %v1218
        %v1298 = vpop.f32.mrb[0].mxu0
        %v1299 = vadd.f32 0.0, %v1298
        %v1300 = vpop.f32.mrb[0].mxu0
        %1301 = vmatprep.mubr.f32.mxu0 0.0
        %1302 = vmatmul.mubr.f32.gmra.mrb[0].mxu0 %v1221
        %v1303 = vpop.f32.mrb[0].mxu0
        %v1304 = vadd.f32 0.0, %v1303
        %v1305 = vpop.f32.mrb[0].mxu0
        %1306 = vmatprep.mubr.f32.mxu0 0.0
        %1307 = vmatmul.mubr.f32.gmra.mrb[0].mxu0 %v1224
        %v1308 = vpop.f32.mrb[0].mxu0
        %v1309 = vadd.f32 0.0, %v1308
        %v1310 = vpop.f32.mrb[0].mxu0
        %1311 = vmatprep.mubr.f32.mxu0 0.0
        %1312 = vmatmul.mubr.f32.gmra.mrb[0].mxu0 %v1227
        %v1313 = vpop.f32.mrb[0].mxu0
        %v1314 = vadd.f32 0.0, %v1313
        %v1315 = vpop.f32.mrb[0].mxu0
        %1316 = vmatprep.mubr.f32.mxu0 0.0
        %1317 = vmatmul.mubr.f32.gmra.mrb[0].mxu0 %v1230
        %v1318 = vpop.f32.mrb[0].mxu0
        %v1319 = vadd.f32 0.0, %v1318
        %v1320 = vpop.f32.mrb[0].mxu0
        %1321 = vdwg.mxu0
        %v1323 = vsel %vm577, %v1198, 0
        %v1326 = vsel %vm577, %v1199, 0
        %v1329 = vsel %vm577, %v1200, 0
        %v1332 = vsel %vm577, %v1201, 0
        %v1335 = vsel %vm577, %v1202, 0
        %1337 = vmatprep.subr.mxu0 0.0
        %1338 = vmatpush1.msra.mxu0 %v1203
        %1339 = vmatprep.subr.mxu0 0.0
        %1340 = vmatpush1.msra.mxu0 %v1204
        %1341 = vmatprep.subr.mxu0 0.0
        %1342 = vmatpush1.msra.mxu0 %v1205
        %1343 = vmatprep.subr.mxu0 0.0
        %1344 = vmatpush1.msra.mxu0 %v1206
        %1345 = vmatprep.subr.mxu0 0.0
        %1346 = vmatpush1.msra.mxu0 0.0
        %1347 = vmatprep.subr.mxu0 0.0
        %1348 = vmatpush1.msra.mxu0 0.0
        %1349 = vmatprep.subr.mxu0 0.0
        %1350 = vmatpush1.msra.mxu0 0.0
        %1351 = vmatprep.subr.mxu0 0.0
        %1352 = vmatpush1.msra.mxu0 0.0
        %1353 = vmatprep.subr.mxu0 0.0
        %1354 = vmatpush1.msra.mxu0 0.0
        %1355 = vmatprep.subr.mxu0 0.0
        %1356 = vmatpush1.msra.mxu0 0.0
        %1357 = vmatprep.subr.mxu0 0.0
        %1358 = vmatpush1.msra.mxu0 0.0
        %1359 = vmatprep.subr.mxu0 0.0
        %1360 = vmatpush1.msra.mxu0 0.0
        %1361 = vmatprep.subr.mxu0 0.0
        %1362 = vmatpush1.msra.mxu0 0.0
        %1363 = vmatprep.subr.mxu0 0.0
        %1364 = vmatpush1.msra.mxu0 0.0
        %1365 = vmatprep.subr.mxu0 0.0
        %1366 = vmatpush1.msra.mxu0 0.0
        %1367 = vmatprep.subr.mxu0 0.0
        %1368 = vmatpush1.msra.mxu0 0.0
        %1369 = vmatprep.subr.mxu0 0.0
        %1370 = vmatpush1.msra.mxu0 0.0
        %1371 = vmatprep.subr.mxu0 0.0
        %1372 = vmatpush1.msra.mxu0 0.0
        %1373 = vmatprep.subr.mxu0 0.0
        %1374 = vmatpush1.msra.mxu0 0.0
        %1375 = vmatprep.subr.mxu0 0.0
        %1376 = vmatpush1.msra.mxu0 0.0
        %1377 = vmatprep.subr.mxu0 0.0
        %1378 = vmatpush1.msra.mxu0 0.0
        %1379 = vmatprep.subr.mxu0 0.0
        %1380 = vmatpush1.msra.mxu0 0.0
        %1381 = vmatprep.subr.mxu0 0.0
        %1382 = vmatpush1.msra.mxu0 0.0
        %1383 = vmatprep.subr.mxu0 0.0
        %1384 = vmatpush1.msra.mxu0 0.0
        %1385 = vmatprep.subr.mxu0 0.0
        %1386 = vmatpush1.msra.mxu0 0.0
        %1387 = vmatprep.subr.mxu0 0.0
        %1388 = vmatpush1.msra.mxu0 0.0
        %1389 = vmatprep.subr.mxu0 0.0
        %1390 = vmatpush1.msra.mxu0 0.0
        %1391 = vmatprep.subr.mxu0 0.0
        %1392 = vmatpush1.msra.mxu0 0.0
        %1393 = vmatprep.subr.mxu0 0.0
        %1394 = vmatpush1.msra.mxu0 0.0
        %1395 = vmatprep.subr.mxu0 0.0
        %1396 = vmatpush1.msra.mxu0 0.0
        %1397 = vmatprep.subr.mxu0 0.0
        %1398 = vmatpush1.msra.mxu0 0.0
        %1399 = vmatprep.subr.mxu0 0.0
        %1400 = vmatpush1.msra.mxu0 0.0
        %1401 = vmatprep.mubr.f32.mxu0 0.0
        %1402 = vmatmul.mubr.f32.gmra.mrb[0].mxu0 %v1323
        %v1403 = vpop.f32.mrb[0].mxu0
        %v1404 = vadd.f32 %v1299, %v1403
        %v1405 = vpop.f32.mrb[0].mxu0
        %1406 = vmatprep.mubr.f32.mxu0 0.0
        %1407 = vmatmul.mubr.f32.gmra.mrb[0].mxu0 %v1326
        %v1408 = vpop.f32.mrb[0].mxu0
        %v1409 = vadd.f32 %v1304, %v1408
        %v1410 = vpop.f32.mrb[0].mxu0
        %1411 = vmatprep.mubr.f32.mxu0 0.0
        %1412 = vmatmul.mubr.f32.gmra.mrb[0].mxu0 %v1329
        %v1413 = vpop.f32.mrb[0].mxu0
        %v1414 = vadd.f32 %v1309, %v1413
        %v1415 = vpop.f32.mrb[0].mxu0
        %1416 = vmatprep.mubr.f32.mxu0 0.0
        %1417 = vmatmul.mubr.f32.gmra.mrb[0].mxu0 %v1332
        %v1418 = vpop.f32.mrb[0].mxu0
        %v1419 = vadd.f32 %v1314, %v1418
        %v1420 = vpop.f32.mrb[0].mxu0
        %1421 = vmatprep.mubr.f32.mxu0 0.0
        %1422 = vmatmul.mubr.f32.gmra.mrb[0].mxu0 %v1335
        %v1423 = vpop.f32.mrb[0].mxu0
        %v1424 = vadd.f32 %v1319, %v1423
        %v1425 = vpop.f32.mrb[0].mxu0
        %1426 = vdwg.mxu0
        %v1427 = vld [vmem:[#allocation2 + $0x2] sm:$0xff]
        %v1428 = vld [vmem:[#allocation2 + $0xa] sm:$0xff]
        %v1429 = vld [vmem:[#allocation2 + $0x12] sm:$0xff]
        %v1430 = vld [vmem:[#allocation2 + $0x1a] sm:$0xff]
        %v1431 = vld [vmem:[#allocation2 + $0x22] sm:$0x1]
        %s1432 = scalar_lea.vmem %s3, 64
        %v1433 = vld [vmem:[%s1432] sm:$0xff]
        %v1434 = vld [vmem:[%s1432 + $0x8] sm:$0xff]
        %v1435 = vld [vmem:[%s1432 + $0x10] sm:$0xff]
        %v1436 = vld [vmem:[%s1432 + $0x18] sm:$0xff]
        %v1438 = vsel %vm577, %v1427, 0
        %v1441 = vsel %vm577, %v1428, 0
        %v1444 = vsel %vm577, %v1429, 0
        %v1447 = vsel %vm577, %v1430, 0
        %v1450 = vsel %vm577, %v1431, 0
        %1452 = vmatprep.subr.mxu0 0.0
        %1453 = vmatpush1.msra.mxu0 %v1433
        %1454 = vmatprep.subr.mxu0 0.0
        %1455 = vmatpush1.msra.mxu0 %v1434
        %1456 = vmatprep.subr.mxu0 0.0
        %1457 = vmatpush1.msra.mxu0 %v1435
        %1458 = vmatprep.subr.mxu0 0.0
        %1459 = vmatpush1.msra.mxu0 %v1436
        %1460 = vmatprep.subr.mxu0 0.0
        %1461 = vmatpush1.msra.mxu0 0.0
        %1462 = vmatprep.subr.mxu0 0.0
        %1463 = vmatpush1.msra.mxu0 0.0
        %1464 = vmatprep.subr.mxu0 0.0
        %1465 = vmatpush1.msra.mxu0 0.0
        %1466 = vmatprep.subr.mxu0 0.0
        %1467 = vmatpush1.msra.mxu0 0.0
        %1468 = vmatprep.subr.mxu0 0.0
        %1469 = vmatpush1.msra.mxu0 0.0
        %1470 = vmatprep.subr.mxu0 0.0
        %1471 = vmatpush1.msra.mxu0 0.0
        %1472 = vmatprep.subr.mxu0 0.0
        %1473 = vmatpush1.msra.mxu0 0.0
        %1474 = vmatprep.subr.mxu0 0.0
        %1475 = vmatpush1.msra.mxu0 0.0
        %1476 = vmatprep.subr.mxu0 0.0
        %1477 = vmatpush1.msra.mxu0 0.0
        %1478 = vmatprep.subr.mxu0 0.0
        %1479 = vmatpush1.msra.mxu0 0.0
        %1480 = vmatprep.subr.mxu0 0.0
        %1481 = vmatpush1.msra.mxu0 0.0
        %1482 = vmatprep.subr.mxu0 0.0
        %1483 = vmatpush1.msra.mxu0 0.0
        %1484 = vmatprep.subr.mxu0 0.0
        %1485 = vmatpush1.msra.mxu0 0.0
        %1486 = vmatprep.subr.mxu0 0.0
        %1487 = vmatpush1.msra.mxu0 0.0
        %1488 = vmatprep.subr.mxu0 0.0
        %1489 = vmatpush1.msra.mxu0 0.0
        %1490 = vmatprep.subr.mxu0 0.0
        %1491 = vmatpush1.msra.mxu0 0.0
        %1492 = vmatprep.subr.mxu0 0.0
        %1493 = vmatpush1.msra.mxu0 0.0
        %1494 = vmatprep.subr.mxu0 0.0
        %1495 = vmatpush1.msra.mxu0 0.0
        %1496 = vmatprep.subr.mxu0 0.0
        %1497 = vmatpush1.msra.mxu0 0.0
        %1498 = vmatprep.subr.mxu0 0.0
        %1499 = vmatpush1.msra.mxu0 0.0
        %1500 = vmatprep.subr.mxu0 0.0
        %1501 = vmatpush1.msra.mxu0 0.0
        %1502 = vmatprep.subr.mxu0 0.0
        %1503 = vmatpush1.msra.mxu0 0.0
        %1504 = vmatprep.subr.mxu0 0.0
        %1505 = vmatpush1.msra.mxu0 0.0
        %1506 = vmatprep.subr.mxu0 0.0
        %1507 = vmatpush1.msra.mxu0 0.0
        %1508 = vmatprep.subr.mxu0 0.0
        %1509 = vmatpush1.msra.mxu0 0.0
        %1510 = vmatprep.subr.mxu0 0.0
        %1511 = vmatpush1.msra.mxu0 0.0
        %1512 = vmatprep.subr.mxu0 0.0
        %1513 = vmatpush1.msra.mxu0 0.0
        %1514 = vmatprep.subr.mxu0 0.0
        %1515 = vmatpush1.msra.mxu0 0.0
        %1516 = vmatprep.mubr.f32.mxu0 0.0
        %1517 = vmatmul.mubr.f32.gmra.mrb[0].mxu0 %v1438
        %v1518 = vpop.f32.mrb[0].mxu0
        %v1519 = vadd.f32 0.0, %v1518
        %v1520 = vpop.f32.mrb[0].mxu0
        %1521 = vmatprep.mubr.f32.mxu0 0.0
        %1522 = vmatmul.mubr.f32.gmra.mrb[0].mxu0 %v1441
        %v1523 = vpop.f32.mrb[0].mxu0
        %v1524 = vadd.f32 0.0, %v1523
        %v1525 = vpop.f32.mrb[0].mxu0
        %1526 = vmatprep.mubr.f32.mxu0 0.0
        %1527 = vmatmul.mubr.f32.gmra.mrb[0].mxu0 %v1444
        %v1528 = vpop.f32.mrb[0].mxu0
        %v1529 = vadd.f32 0.0, %v1528
        %v1530 = vpop.f32.mrb[0].mxu0
        %1531 = vmatprep.mubr.f32.mxu0 0.0
        %1532 = vmatmul.mubr.f32.gmra.mrb[0].mxu0 %v1447
        %v1533 = vpop.f32.mrb[0].mxu0
        %v1534 = vadd.f32 0.0, %v1533
        %v1535 = vpop.f32.mrb[0].mxu0
        %1536 = vmatprep.mubr.f32.mxu0 0.0
        %1537 = vmatmul.mubr.f32.gmra.mrb[0].mxu0 %v1450
        %v1538 = vpop.f32.mrb[0].mxu0
        %v1539 = vadd.f32 0.0, %v1538
        %v1540 = vpop.f32.mrb[0].mxu0
        %1541 = vdwg.mxu0
        %v1542 = vadd.f32 %v1404, %v1519
        %v1543 = vadd.f32 %v1409, %v1524
        %v1544 = vadd.f32 %v1414, %v1529
        %v1545 = vadd.f32 %v1419, %v1534
        %v1546 = vadd.f32 %v1424, %v1539
        %v1547 = vld [vmem:[#allocation2 + $0x7] sm:$0xff]
        %v1548 = vld [vmem:[#allocation2 + $0xf] sm:$0xff]
        %v1549 = vld [vmem:[#allocation2 + $0x17] sm:$0xff]
        %v1550 = vld [vmem:[#allocation2 + $0x1f] sm:$0xff]
        %v1551 = vld [vmem:[#allocation2 + $0x27] sm:$0x1]
        %s1552 = scalar_lea.vmem %s3, 96
        %v1553 = vld [vmem:[%s1552] sm:$0xff]
        %v1554 = vld [vmem:[%s1552 + $0x8] sm:$0xff]
        %v1555 = vld [vmem:[%s1552 + $0x10] sm:$0xff]
        %v1556 = vld [vmem:[%s1552 + $0x18] sm:$0xff]
        %v1558 = vsel %vm577, %v1547, 0
        %v1561 = vsel %vm577, %v1548, 0
        %v1564 = vsel %vm577, %v1549, 0
        %v1567 = vsel %vm577, %v1550, 0
        %v1570 = vsel %vm577, %v1551, 0
        %1572 = vmatprep.subr.mxu0 0.0
        %1573 = vmatpush1.msra.mxu0 %v1553
        %1574 = vmatprep.subr.mxu0 0.0
        %1575 = vmatpush1.msra.mxu0 %v1554
        %1576 = vmatprep.subr.mxu0 0.0
        %1577 = vmatpush1.msra.mxu0 %v1555
        %1578 = vmatprep.subr.mxu0 0.0
        %1579 = vmatpush1.msra.mxu0 %v1556
        %1580 = vmatprep.subr.mxu0 0.0
        %1581 = vmatpush1.msra.mxu0 0.0
        %1582 = vmatprep.subr.mxu0 0.0
        %1583 = vmatpush1.msra.mxu0 0.0
        %1584 = vmatprep.subr.mxu0 0.0
        %1585 = vmatpush1.msra.mxu0 0.0
        %1586 = vmatprep.subr.mxu0 0.0
        %1587 = vmatpush1.msra.mxu0 0.0
        %1588 = vmatprep.subr.mxu0 0.0
        %1589 = vmatpush1.msra.mxu0 0.0
        %1590 = vmatprep.subr.mxu0 0.0
        %1591 = vmatpush1.msra.mxu0 0.0
        %1592 = vmatprep.subr.mxu0 0.0
        %1593 = vmatpush1.msra.mxu0 0.0
        %1594 = vmatprep.subr.mxu0 0.0
        %1595 = vmatpush1.msra.mxu0 0.0
        %1596 = vmatprep.subr.mxu0 0.0
        %1597 = vmatpush1.msra.mxu0 0.0
        %1598 = vmatprep.subr.mxu0 0.0
        %1599 = vmatpush1.msra.mxu0 0.0
        %1600 = vmatprep.subr.mxu0 0.0
        %1601 = vmatpush1.msra.mxu0 0.0
        %1602 = vmatprep.subr.mxu0 0.0
        %1603 = vmatpush1.msra.mxu0 0.0
        %1604 = vmatprep.subr.mxu0 0.0
        %1605 = vmatpush1.msra.mxu0 0.0
        %1606 = vmatprep.subr.mxu0 0.0
        %1607 = vmatpush1.msra.mxu0 0.0
        %1608 = vmatprep.subr.mxu0 0.0
        %1609 = vmatpush1.msra.mxu0 0.0
        %1610 = vmatprep.subr.mxu0 0.0
        %1611 = vmatpush1.msra.mxu0 0.0
        %1612 = vmatprep.subr.mxu0 0.0
        %1613 = vmatpush1.msra.mxu0 0.0
        %1614 = vmatprep.subr.mxu0 0.0
        %1615 = vmatpush1.msra.mxu0 0.0
        %1616 = vmatprep.subr.mxu0 0.0
        %1617 = vmatpush1.msra.mxu0 0.0
        %1618 = vmatprep.subr.mxu0 0.0
        %1619 = vmatpush1.msra.mxu0 0.0
        %1620 = vmatprep.subr.mxu0 0.0
        %1621 = vmatpush1.msra.mxu0 0.0
        %1622 = vmatprep.subr.mxu0 0.0
        %1623 = vmatpush1.msra.mxu0 0.0
        %1624 = vmatprep.subr.mxu0 0.0
        %1625 = vmatpush1.msra.mxu0 0.0
        %1626 = vmatprep.subr.mxu0 0.0
        %1627 = vmatpush1.msra.mxu0 0.0
        %1628 = vmatprep.subr.mxu0 0.0
        %1629 = vmatpush1.msra.mxu0 0.0
        %1630 = vmatprep.subr.mxu0 0.0
        %1631 = vmatpush1.msra.mxu0 0.0
        %1632 = vmatprep.subr.mxu0 0.0
        %1633 = vmatpush1.msra.mxu0 0.0
        %1634 = vmatprep.subr.mxu0 0.0
        %1635 = vmatpush1.msra.mxu0 0.0
        %1636 = vmatprep.mubr.f32.mxu0 0.0
        %1637 = vmatmul.mubr.f32.gmra.mrb[0].mxu0 %v1558
        %v1638 = vpop.f32.mrb[0].mxu0
        %v1639 = vadd.f32 0.0, %v1638
        %v1640 = vpop.f32.mrb[0].mxu0
        %1641 = vmatprep.mubr.f32.mxu0 0.0
        %1642 = vmatmul.mubr.f32.gmra.mrb[0].mxu0 %v1561
        %v1643 = vpop.f32.mrb[0].mxu0
        %v1644 = vadd.f32 0.0, %v1643
        %v1645 = vpop.f32.mrb[0].mxu0
        %1646 = vmatprep.mubr.f32.mxu0 0.0
        %1647 = vmatmul.mubr.f32.gmra.mrb[0].mxu0 %v1564
        %v1648 = vpop.f32.mrb[0].mxu0
        %v1649 = vadd.f32 0.0, %v1648
        %v1650 = vpop.f32.mrb[0].mxu0
        %1651 = vmatprep.mubr.f32.mxu0 0.0
        %1652 = vmatmul.mubr.f32.gmra.mrb[0].mxu0 %v1567
        %v1653 = vpop.f32.mrb[0].mxu0
        %v1654 = vadd.f32 0.0, %v1653
        %v1655 = vpop.f32.mrb[0].mxu0
        %1656 = vmatprep.mubr.f32.mxu0 0.0
        %1657 = vmatmul.mubr.f32.gmra.mrb[0].mxu0 %v1570
        %v1658 = vpop.f32.mrb[0].mxu0
        %v1659 = vadd.f32 0.0, %v1658
        %v1660 = vpop.f32.mrb[0].mxu0
        %1661 = vdwg.mxu0
        %v1662 = vadd.f32 %v1542, %v1639
        %v1663 = vadd.f32 %v1543, %v1644
        %v1664 = vadd.f32 %v1544, %v1649
        %v1665 = vadd.f32 %v1545, %v1654
        %v1666 = vadd.f32 %v1546, %v1659
        %v1667 = vld [vmem:[#allocation2 + $0x8] sm:$0xff]
        %v1668 = vld [vmem:[#allocation2 + $0x10] sm:$0xff]
        %v1669 = vld [vmem:[#allocation2 + $0x18] sm:$0xff]
        %v1670 = vld [vmem:[#allocation2 + $0x20] sm:$0xff]
        %v1671 = vld [vmem:[#allocation2 + $0x28] sm:$0x1]
        %s1672 = scalar_lea.vmem %s3, 128
        %v1673 = vld [vmem:[%s1672] sm:$0xff]
        %v1674 = vld [vmem:[%s1672 + $0x8] sm:$0xff]
        %v1675 = vld [vmem:[%s1672 + $0x10] sm:$0xff]
        %v1676 = vld [vmem:[%s1672 + $0x18] sm:$0xff]
        %v1678 = vsel %vm577, %v1667, 0
        %v1681 = vsel %vm577, %v1668, 0
        %v1684 = vsel %vm577, %v1669, 0
        %v1687 = vsel %vm577, %v1670, 0
        %v1690 = vsel %vm577, %v1671, 0
        %1692 = vmatprep.subr.mxu0 0.0
        %1693 = vmatpush1.msra.mxu0 %v1673
        %1694 = vmatprep.subr.mxu0 0.0
        %1695 = vmatpush1.msra.mxu0 %v1674
        %1696 = vmatprep.subr.mxu0 0.0
        %1697 = vmatpush1.msra.mxu0 %v1675
        %1698 = vmatprep.subr.mxu0 0.0
        %1699 = vmatpush1.msra.mxu0 %v1676
        %1700 = vmatprep.subr.mxu0 0.0
        %1701 = vmatpush1.msra.mxu0 0.0
        %1702 = vmatprep.subr.mxu0 0.0
        %1703 = vmatpush1.msra.mxu0 0.0
        %1704 = vmatprep.subr.mxu0 0.0
        %1705 = vmatpush1.msra.mxu0 0.0
        %1706 = vmatprep.subr.mxu0 0.0
        %1707 = vmatpush1.msra.mxu0 0.0
        %1708 = vmatprep.subr.mxu0 0.0
        %1709 = vmatpush1.msra.mxu0 0.0
        %1710 = vmatprep.subr.mxu0 0.0
        %1711 = vmatpush1.msra.mxu0 0.0
        %1712 = vmatprep.subr.mxu0 0.0
        %1713 = vmatpush1.msra.mxu0 0.0
        %1714 = vmatprep.subr.mxu0 0.0
        %1715 = vmatpush1.msra.mxu0 0.0
        %1716 = vmatprep.subr.mxu0 0.0
        %1717 = vmatpush1.msra.mxu0 0.0
        %1718 = vmatprep.subr.mxu0 0.0
        %1719 = vmatpush1.msra.mxu0 0.0
        %1720 = vmatprep.subr.mxu0 0.0
        %1721 = vmatpush1.msra.mxu0 0.0
        %1722 = vmatprep.subr.mxu0 0.0
        %1723 = vmatpush1.msra.mxu0 0.0
        %1724 = vmatprep.subr.mxu0 0.0
        %1725 = vmatpush1.msra.mxu0 0.0
        %1726 = vmatprep.subr.mxu0 0.0
        %1727 = vmatpush1.msra.mxu0 0.0
        %1728 = vmatprep.subr.mxu0 0.0
        %1729 = vmatpush1.msra.mxu0 0.0
        %1730 = vmatprep.subr.mxu0 0.0
        %1731 = vmatpush1.msra.mxu0 0.0
        %1732 = vmatprep.subr.mxu0 0.0
        %1733 = vmatpush1.msra.mxu0 0.0
        %1734 = vmatprep.subr.mxu0 0.0
        %1735 = vmatpush1.msra.mxu0 0.0
        %1736 = vmatprep.subr.mxu0 0.0
        %1737 = vmatpush1.msra.mxu0 0.0
        %1738 = vmatprep.subr.mxu0 0.0
        %1739 = vmatpush1.msra.mxu0 0.0
        %1740 = vmatprep.subr.mxu0 0.0
        %1741 = vmatpush1.msra.mxu0 0.0
        %1742 = vmatprep.subr.mxu0 0.0
        %1743 = vmatpush1.msra.mxu0 0.0
        %1744 = vmatprep.subr.mxu0 0.0
        %1745 = vmatpush1.msra.mxu0 0.0
        %1746 = vmatprep.subr.mxu0 0.0
        %1747 = vmatpush1.msra.mxu0 0.0
        %1748 = vmatprep.subr.mxu0 0.0
        %1749 = vmatpush1.msra.mxu0 0.0
        %1750 = vmatprep.subr.mxu0 0.0
        %1751 = vmatpush1.msra.mxu0 0.0
        %1752 = vmatprep.subr.mxu0 0.0
        %1753 = vmatpush1.msra.mxu0 0.0
        %1754 = vmatprep.subr.mxu0 0.0
        %1755 = vmatpush1.msra.mxu0 0.0
        %1756 = vmatprep.mubr.f32.mxu0 0.0
        %1757 = vmatmul.mubr.f32.gmra.mrb[0].mxu0 %v1678
        %v1758 = vpop.f32.mrb[0].mxu0
        %v1759 = vadd.f32 0.0, %v1758
        %v1760 = vpop.f32.mrb[0].mxu0
        %1761 = vmatprep.mubr.f32.mxu0 0.0
        %1762 = vmatmul.mubr.f32.gmra.mrb[0].mxu0 %v1681
        %v1763 = vpop.f32.mrb[0].mxu0
        %v1764 = vadd.f32 0.0, %v1763
        %v1765 = vpop.f32.mrb[0].mxu0
        %1766 = vmatprep.mubr.f32.mxu0 0.0
        %1767 = vmatmul.mubr.f32.gmra.mrb[0].mxu0 %v1684
        %v1768 = vpop.f32.mrb[0].mxu0
        %v1769 = vadd.f32 0.0, %v1768
        %v1770 = vpop.f32.mrb[0].mxu0
        %1771 = vmatprep.mubr.f32.mxu0 0.0
        %1772 = vmatmul.mubr.f32.gmra.mrb[0].mxu0 %v1687
        %v1773 = vpop.f32.mrb[0].mxu0
        %v1774 = vadd.f32 0.0, %v1773
        %v1775 = vpop.f32.mrb[0].mxu0
        %1776 = vmatprep.mubr.f32.mxu0 0.0
        %1777 = vmatmul.mubr.f32.gmra.mrb[0].mxu0 %v1690
        %v1778 = vpop.f32.mrb[0].mxu0
        %v1779 = vadd.f32 0.0, %v1778
        %v1780 = vpop.f32.mrb[0].mxu0
        %1781 = vdwg.mxu0
        %v1782 = vadd.f32 %v1662, %v1759
        %v1783 = vadd.f32 %v1663, %v1764
        %v1784 = vadd.f32 %v1664, %v1769
        %v1785 = vadd.f32 %v1665, %v1774
        %v1786 = vadd.f32 %v1666, %v1779
        %v1787 = vld [vmem:[#allocation2 + $0x9] sm:$0xff]
        %v1788 = vld [vmem:[#allocation2 + $0x11] sm:$0xff]
        %v1789 = vld [vmem:[#allocation2 + $0x19] sm:$0xff]
        %v1790 = vld [vmem:[#allocation2 + $0x21] sm:$0xff]
        %v1791 = vld [vmem:[#allocation2 + $0x29] sm:$0x1]
        %s1792 = scalar_lea.vmem %s3, 160
        %v1793 = vld [vmem:[%s1792] sm:$0xff]
        %v1794 = vld [vmem:[%s1792 + $0x8] sm:$0xff]
        %v1795 = vld [vmem:[%s1792 + $0x10] sm:$0xff]
        %v1796 = vld [vmem:[%s1792 + $0x18] sm:$0xff]
        %v1798 = vsel %vm577, %v1787, 0
        %v1801 = vsel %vm577, %v1788, 0
        %v1804 = vsel %vm577, %v1789, 0
        %v1807 = vsel %vm577, %v1790, 0
        %v1810 = vsel %vm577, %v1791, 0
        %1812 = vmatprep.subr.mxu0 0.0
        %1813 = vmatpush1.msra.mxu0 %v1793
        %1814 = vmatprep.subr.mxu0 0.0
        %1815 = vmatpush1.msra.mxu0 %v1794
        %1816 = vmatprep.subr.mxu0 0.0
        %1817 = vmatpush1.msra.mxu0 %v1795
        %1818 = vmatprep.subr.mxu0 0.0
        %1819 = vmatpush1.msra.mxu0 %v1796
        %1820 = vmatprep.subr.mxu0 0.0
        %1821 = vmatpush1.msra.mxu0 0.0
        %1822 = vmatprep.subr.mxu0 0.0
        %1823 = vmatpush1.msra.mxu0 0.0
        %1824 = vmatprep.subr.mxu0 0.0
        %1825 = vmatpush1.msra.mxu0 0.0
        %1826 = vmatprep.subr.mxu0 0.0
        %1827 = vmatpush1.msra.mxu0 0.0
        %1828 = vmatprep.subr.mxu0 0.0
        %1829 = vmatpush1.msra.mxu0 0.0
        %1830 = vmatprep.subr.mxu0 0.0
        %1831 = vmatpush1.msra.mxu0 0.0
        %1832 = vmatprep.subr.mxu0 0.0
        %1833 = vmatpush1.msra.mxu0 0.0
        %1834 = vmatprep.subr.mxu0 0.0
        %1835 = vmatpush1.msra.mxu0 0.0
        %1836 = vmatprep.subr.mxu0 0.0
        %1837 = vmatpush1.msra.mxu0 0.0
        %1838 = vmatprep.subr.mxu0 0.0
        %1839 = vmatpush1.msra.mxu0 0.0
        %1840 = vmatprep.subr.mxu0 0.0
        %1841 = vmatpush1.msra.mxu0 0.0
        %1842 = vmatprep.subr.mxu0 0.0
        %1843 = vmatpush1.msra.mxu0 0.0
        %1844 = vmatprep.subr.mxu0 0.0
        %1845 = vmatpush1.msra.mxu0 0.0
        %1846 = vmatprep.subr.mxu0 0.0
        %1847 = vmatpush1.msra.mxu0 0.0
        %1848 = vmatprep.subr.mxu0 0.0
        %1849 = vmatpush1.msra.mxu0 0.0
        %1850 = vmatprep.subr.mxu0 0.0
        %1851 = vmatpush1.msra.mxu0 0.0
        %1852 = vmatprep.subr.mxu0 0.0
        %1853 = vmatpush1.msra.mxu0 0.0
        %1854 = vmatprep.subr.mxu0 0.0
        %1855 = vmatpush1.msra.mxu0 0.0
        %1856 = vmatprep.subr.mxu0 0.0
        %1857 = vmatpush1.msra.mxu0 0.0
        %1858 = vmatprep.subr.mxu0 0.0
        %1859 = vmatpush1.msra.mxu0 0.0
        %1860 = vmatprep.subr.mxu0 0.0
        %1861 = vmatpush1.msra.mxu0 0.0
        %1862 = vmatprep.subr.mxu0 0.0
        %1863 = vmatpush1.msra.mxu0 0.0
        %1864 = vmatprep.subr.mxu0 0.0
        %1865 = vmatpush1.msra.mxu0 0.0
        %1866 = vmatprep.subr.mxu0 0.0
        %1867 = vmatpush1.msra.mxu0 0.0
        %1868 = vmatprep.subr.mxu0 0.0
        %1869 = vmatpush1.msra.mxu0 0.0
        %1870 = vmatprep.subr.mxu0 0.0
        %1871 = vmatpush1.msra.mxu0 0.0
        %1872 = vmatprep.subr.mxu0 0.0
        %1873 = vmatpush1.msra.mxu0 0.0
        %1874 = vmatprep.subr.mxu0 0.0
        %1875 = vmatpush1.msra.mxu0 0.0
        %1876 = vmatprep.mubr.f32.mxu0 0.0
        %1877 = vmatmul.mubr.f32.gmra.mrb[0].mxu0 %v1798
        %v1878 = vpop.f32.mrb[0].mxu0
        %v1879 = vadd.f32 0.0, %v1878
        %v1880 = vpop.f32.mrb[0].mxu0
        %1881 = vmatprep.mubr.f32.mxu0 0.0
        %1882 = vmatmul.mubr.f32.gmra.mrb[0].mxu0 %v1801
        %v1883 = vpop.f32.mrb[0].mxu0
        %v1884 = vadd.f32 0.0, %v1883
        %v1885 = vpop.f32.mrb[0].mxu0
        %1886 = vmatprep.mubr.f32.mxu0 0.0
        %1887 = vmatmul.mubr.f32.gmra.mrb[0].mxu0 %v1804
        %v1888 = vpop.f32.mrb[0].mxu0
        %v1889 = vadd.f32 0.0, %v1888
        %v1890 = vpop.f32.mrb[0].mxu0
        %1891 = vmatprep.mubr.f32.mxu0 0.0
        %1892 = vmatmul.mubr.f32.gmra.mrb[0].mxu0 %v1807
        %v1893 = vpop.f32.mrb[0].mxu0
        %v1894 = vadd.f32 0.0, %v1893
        %v1895 = vpop.f32.mrb[0].mxu0
        %1896 = vmatprep.mubr.f32.mxu0 0.0
        %1897 = vmatmul.mubr.f32.gmra.mrb[0].mxu0 %v1810
        %v1898 = vpop.f32.mrb[0].mxu0
        %v1899 = vadd.f32 0.0, %v1898
        %v1900 = vpop.f32.mrb[0].mxu0
        %1901 = vdwg.mxu0
        %v1902 = vadd.f32 %v1782, %v1879
        %v1903 = vadd.f32 %v1783, %v1884
        %v1904 = vadd.f32 %v1784, %v1889
        %v1905 = vadd.f32 %v1785, %v1894
        %v1906 = vadd.f32 %v1786, %v1899
        %v1907 = vld [vmem:[#allocation2 + $0xe] sm:$0xff]
        %v1908 = vld [vmem:[#allocation2 + $0x16] sm:$0xff]
        %v1909 = vld [vmem:[#allocation2 + $0x1e] sm:$0xff]
        %v1910 = vld [vmem:[#allocation2 + $0x26] sm:$0xff]
        %v1911 = vld [vmem:[#allocation2 + $0x2e] sm:$0x1]
        %s1912 = scalar_lea.vmem %s3, 192
        %v1913 = vld [vmem:[%s1912] sm:$0xff]
        %v1914 = vld [vmem:[%s1912 + $0x8] sm:$0xff]
        %v1915 = vld [vmem:[%s1912 + $0x10] sm:$0xff]
        %v1916 = vld [vmem:[%s1912 + $0x18] sm:$0xff]
        %v1918 = vsel %vm577, %v1907, 0
        %v1921 = vsel %vm577, %v1908, 0
        %v1924 = vsel %vm577, %v1909, 0
        %v1927 = vsel %vm577, %v1910, 0
        %v1930 = vsel %vm577, %v1911, 0
        %1932 = vmatprep.subr.mxu0 0.0
        %1933 = vmatpush1.msra.mxu0 %v1913
        %1934 = vmatprep.subr.mxu0 0.0
        %1935 = vmatpush1.msra.mxu0 %v1914
        %1936 = vmatprep.subr.mxu0 0.0
        %1937 = vmatpush1.msra.mxu0 %v1915
        %1938 = vmatprep.subr.mxu0 0.0
        %1939 = vmatpush1.msra.mxu0 %v1916
        %1940 = vmatprep.subr.mxu0 0.0
        %1941 = vmatpush1.msra.mxu0 0.0
        %1942 = vmatprep.subr.mxu0 0.0
        %1943 = vmatpush1.msra.mxu0 0.0
        %1944 = vmatprep.subr.mxu0 0.0
        %1945 = vmatpush1.msra.mxu0 0.0
        %1946 = vmatprep.subr.mxu0 0.0
        %1947 = vmatpush1.msra.mxu0 0.0
        %1948 = vmatprep.subr.mxu0 0.0
        %1949 = vmatpush1.msra.mxu0 0.0
        %1950 = vmatprep.subr.mxu0 0.0
        %1951 = vmatpush1.msra.mxu0 0.0
        %1952 = vmatprep.subr.mxu0 0.0
        %1953 = vmatpush1.msra.mxu0 0.0
        %1954 = vmatprep.subr.mxu0 0.0
        %1955 = vmatpush1.msra.mxu0 0.0
        %1956 = vmatprep.subr.mxu0 0.0
        %1957 = vmatpush1.msra.mxu0 0.0
        %1958 = vmatprep.subr.mxu0 0.0
        %1959 = vmatpush1.msra.mxu0 0.0
        %1960 = vmatprep.subr.mxu0 0.0
        %1961 = vmatpush1.msra.mxu0 0.0
        %1962 = vmatprep.subr.mxu0 0.0
        %1963 = vmatpush1.msra.mxu0 0.0
        %1964 = vmatprep.subr.mxu0 0.0
        %1965 = vmatpush1.msra.mxu0 0.0
        %1966 = vmatprep.subr.mxu0 0.0
        %1967 = vmatpush1.msra.mxu0 0.0
        %1968 = vmatprep.subr.mxu0 0.0
        %1969 = vmatpush1.msra.mxu0 0.0
        %1970 = vmatprep.subr.mxu0 0.0
        %1971 = vmatpush1.msra.mxu0 0.0
        %1972 = vmatprep.subr.mxu0 0.0
        %1973 = vmatpush1.msra.mxu0 0.0
        %1974 = vmatprep.subr.mxu0 0.0
        %1975 = vmatpush1.msra.mxu0 0.0
        %1976 = vmatprep.subr.mxu0 0.0
        %1977 = vmatpush1.msra.mxu0 0.0
        %1978 = vmatprep.subr.mxu0 0.0
        %1979 = vmatpush1.msra.mxu0 0.0
        %1980 = vmatprep.subr.mxu0 0.0
        %1981 = vmatpush1.msra.mxu0 0.0
        %1982 = vmatprep.subr.mxu0 0.0
        %1983 = vmatpush1.msra.mxu0 0.0
        %1984 = vmatprep.subr.mxu0 0.0
        %1985 = vmatpush1.msra.mxu0 0.0
        %1986 = vmatprep.subr.mxu0 0.0
        %1987 = vmatpush1.msra.mxu0 0.0
        %1988 = vmatprep.subr.mxu0 0.0
        %1989 = vmatpush1.msra.mxu0 0.0
        %1990 = vmatprep.subr.mxu0 0.0
        %1991 = vmatpush1.msra.mxu0 0.0
        %1992 = vmatprep.subr.mxu0 0.0
        %1993 = vmatpush1.msra.mxu0 0.0
        %1994 = vmatprep.subr.mxu0 0.0
        %1995 = vmatpush1.msra.mxu0 0.0
        %1996 = vmatprep.mubr.f32.mxu0 0.0
        %1997 = vmatmul.mubr.f32.gmra.mrb[0].mxu0 %v1918
        %v1998 = vpop.f32.mrb[0].mxu0
        %v1999 = vadd.f32 0.0, %v1998
        %v2000 = vpop.f32.mrb[0].mxu0
        %2001 = vmatprep.mubr.f32.mxu0 0.0
        %2002 = vmatmul.mubr.f32.gmra.mrb[0].mxu0 %v1921
        %v2003 = vpop.f32.mrb[0].mxu0
        %v2004 = vadd.f32 0.0, %v2003
        %v2005 = vpop.f32.mrb[0].mxu0
        %2006 = vmatprep.mubr.f32.mxu0 0.0
        %2007 = vmatmul.mubr.f32.gmra.mrb[0].mxu0 %v1924
        %v2008 = vpop.f32.mrb[0].mxu0
        %v2009 = vadd.f32 0.0, %v2008
        %v2010 = vpop.f32.mrb[0].mxu0
        %2011 = vmatprep.mubr.f32.mxu0 0.0
        %2012 = vmatmul.mubr.f32.gmra.mrb[0].mxu0 %v1927
        %v2013 = vpop.f32.mrb[0].mxu0
        %v2014 = vadd.f32 0.0, %v2013
        %v2015 = vpop.f32.mrb[0].mxu0
        %2016 = vmatprep.mubr.f32.mxu0 0.0
        %2017 = vmatmul.mubr.f32.gmra.mrb[0].mxu0 %v1930
        %v2018 = vpop.f32.mrb[0].mxu0
        %v2019 = vadd.f32 0.0, %v2018
        %v2020 = vpop.f32.mrb[0].mxu0
        %2021 = vdwg.mxu0
        %v2022 = vadd.f32 %v1902, %v1999
        %v2023 = vadd.f32 %v1903, %v2004
        %v2024 = vadd.f32 %v1904, %v2009
        %v2025 = vadd.f32 %v1905, %v2014
        %v2026 = vadd.f32 %v1906, %v2019
        %v2027 = vld [vmem:[#allocation2 + $0xf] sm:$0xff]
        %v2028 = vld [vmem:[#allocation2 + $0x17] sm:$0xff]
        %v2029 = vld [vmem:[#allocation2 + $0x1f] sm:$0xff]
        %v2030 = vld [vmem:[#allocation2 + $0x27] sm:$0xff]
        %v2031 = vld [vmem:[#allocation2 + $0x2f] sm:$0x1]
        %s2032 = scalar_lea.vmem %s3, 224
        %v2033 = vld [vmem:[%s2032] sm:$0xff]
        %v2034 = vld [vmem:[%s2032 + $0x8] sm:$0xff]
        %v2035 = vld [vmem:[%s2032 + $0x10] sm:$0xff]
        %v2036 = vld [vmem:[%s2032 + $0x18] sm:$0xff]
        %v2038 = vsel %vm577, %v2027, 0
        %v2041 = vsel %vm577, %v2028, 0
        %v2044 = vsel %vm577, %v2029, 0
        %v2047 = vsel %vm577, %v2030, 0
        %v2050 = vsel %vm577, %v2031, 0
        %2052 = vmatprep.subr.mxu0 0.0
        %2053 = vmatpush1.msra.mxu0 %v2033
        %2054 = vmatprep.subr.mxu0 0.0
        %2055 = vmatpush1.msra.mxu0 %v2034
        %2056 = vmatprep.subr.mxu0 0.0
        %2057 = vmatpush1.msra.mxu0 %v2035
        %2058 = vmatprep.subr.mxu0 0.0
        %2059 = vmatpush1.msra.mxu0 %v2036
        %2060 = vmatprep.subr.mxu0 0.0
        %2061 = vmatpush1.msra.mxu0 0.0
        %2062 = vmatprep.subr.mxu0 0.0
        %2063 = vmatpush1.msra.mxu0 0.0
        %2064 = vmatprep.subr.mxu0 0.0
        %2065 = vmatpush1.msra.mxu0 0.0
        %2066 = vmatprep.subr.mxu0 0.0
        %2067 = vmatpush1.msra.mxu0 0.0
        %2068 = vmatprep.subr.mxu0 0.0
        %2069 = vmatpush1.msra.mxu0 0.0
        %2070 = vmatprep.subr.mxu0 0.0
        %2071 = vmatpush1.msra.mxu0 0.0
        %2072 = vmatprep.subr.mxu0 0.0
        %2073 = vmatpush1.msra.mxu0 0.0
        %2074 = vmatprep.subr.mxu0 0.0
        %2075 = vmatpush1.msra.mxu0 0.0
        %2076 = vmatprep.subr.mxu0 0.0
        %2077 = vmatpush1.msra.mxu0 0.0
        %2078 = vmatprep.subr.mxu0 0.0
        %2079 = vmatpush1.msra.mxu0 0.0
        %2080 = vmatprep.subr.mxu0 0.0
        %2081 = vmatpush1.msra.mxu0 0.0
        %2082 = vmatprep.subr.mxu0 0.0
        %2083 = vmatpush1.msra.mxu0 0.0
        %2084 = vmatprep.subr.mxu0 0.0
        %2085 = vmatpush1.msra.mxu0 0.0
        %2086 = vmatprep.subr.mxu0 0.0
        %2087 = vmatpush1.msra.mxu0 0.0
        %2088 = vmatprep.subr.mxu0 0.0
        %2089 = vmatpush1.msra.mxu0 0.0
        %2090 = vmatprep.subr.mxu0 0.0
        %2091 = vmatpush1.msra.mxu0 0.0
        %2092 = vmatprep.subr.mxu0 0.0
        %2093 = vmatpush1.msra.mxu0 0.0
        %2094 = vmatprep.subr.mxu0 0.0
        %2095 = vmatpush1.msra.mxu0 0.0
        %2096 = vmatprep.subr.mxu0 0.0
        %2097 = vmatpush1.msra.mxu0 0.0
        %2098 = vmatprep.subr.mxu0 0.0
        %2099 = vmatpush1.msra.mxu0 0.0
        %2100 = vmatprep.subr.mxu0 0.0
        %2101 = vmatpush1.msra.mxu0 0.0
        %2102 = vmatprep.subr.mxu0 0.0
        %2103 = vmatpush1.msra.mxu0 0.0
        %2104 = vmatprep.subr.mxu0 0.0
        %2105 = vmatpush1.msra.mxu0 0.0
        %2106 = vmatprep.subr.mxu0 0.0
        %2107 = vmatpush1.msra.mxu0 0.0
        %2108 = vmatprep.subr.mxu0 0.0
        %2109 = vmatpush1.msra.mxu0 0.0
        %2110 = vmatprep.subr.mxu0 0.0
        %2111 = vmatpush1.msra.mxu0 0.0
        %2112 = vmatprep.subr.mxu0 0.0
        %2113 = vmatpush1.msra.mxu0 0.0
        %2114 = vmatprep.subr.mxu0 0.0
        %2115 = vmatpush1.msra.mxu0 0.0
        %2116 = vmatprep.mubr.f32.mxu0 0.0
        %2117 = vmatmul.mubr.f32.gmra.mrb[0].mxu0 %v2038
        %v2118 = vpop.f32.mrb[0].mxu0
        %v2119 = vadd.f32 0.0, %v2118
        %v2120 = vpop.f32.mrb[0].mxu0
        %2121 = vmatprep.mubr.f32.mxu0 0.0
        %2122 = vmatmul.mubr.f32.gmra.mrb[0].mxu0 %v2041
        %v2123 = vpop.f32.mrb[0].mxu0
        %v2124 = vadd.f32 0.0, %v2123
        %v2125 = vpop.f32.mrb[0].mxu0
        %2126 = vmatprep.mubr.f32.mxu0 0.0
        %2127 = vmatmul.mubr.f32.gmra.mrb[0].mxu0 %v2044
        %v2128 = vpop.f32.mrb[0].mxu0
        %v2129 = vadd.f32 0.0, %v2128
        %v2130 = vpop.f32.mrb[0].mxu0
        %2131 = vmatprep.mubr.f32.mxu0 0.0
        %2132 = vmatmul.mubr.f32.gmra.mrb[0].mxu0 %v2047
        %v2133 = vpop.f32.mrb[0].mxu0
        %v2134 = vadd.f32 0.0, %v2133
        %v2135 = vpop.f32.mrb[0].mxu0
        %2136 = vmatprep.mubr.f32.mxu0 0.0
        %2137 = vmatmul.mubr.f32.gmra.mrb[0].mxu0 %v2050
        %v2138 = vpop.f32.mrb[0].mxu0
        %v2139 = vadd.f32 0.0, %v2138
        %v2140 = vpop.f32.mrb[0].mxu0
        %2141 = vdwg.mxu0
        %v2142 = vadd.f32 %v2022, %v2119
        %v2143 = vadd.f32 %v2023, %v2124
        %v2144 = vadd.f32 %v2024, %v2129
        %v2145 = vadd.f32 %v2025, %v2134
        %v2146 = vadd.f32 %v2026, %v2139
        %v2147 = vld [vmem:[#allocation2 + $0x10] sm:$0xff]
        %v2148 = vld [vmem:[#allocation2 + $0x18] sm:$0xff]
        %v2149 = vld [vmem:[#allocation2 + $0x20] sm:$0xff]
        %v2150 = vld [vmem:[#allocation2 + $0x28] sm:$0xff]
        %v2151 = vld [vmem:[#allocation2 + $0x30] sm:$0x1]
        %s2152 = scalar_lea.vmem %s3, 256
        %v2153 = vld [vmem:[%s2152] sm:$0xff]
        %v2154 = vld [vmem:[%s2152 + $0x8] sm:$0xff]
        %v2155 = vld [vmem:[%s2152 + $0x10] sm:$0xff]
        %v2156 = vld [vmem:[%s2152 + $0x18] sm:$0xff]
        %v2158 = vsel %vm577, %v2147, 0
        %v2161 = vsel %vm577, %v2148, 0
        %v2164 = vsel %vm577, %v2149, 0
        %v2167 = vsel %vm577, %v2150, 0
        %v2170 = vsel %vm577, %v2151, 0
        %2172 = vmatprep.subr.mxu0 0.0
        %2173 = vmatpush1.msra.mxu0 %v2153
        %2174 = vmatprep.subr.mxu0 0.0
        %2175 = vmatpush1.msra.mxu0 %v2154
        %2176 = vmatprep.subr.mxu0 0.0
        %2177 = vmatpush1.msra.mxu0 %v2155
        %2178 = vmatprep.subr.mxu0 0.0
        %2179 = vmatpush1.msra.mxu0 %v2156
        %2180 = vmatprep.subr.mxu0 0.0
        %2181 = vmatpush1.msra.mxu0 0.0
        %2182 = vmatprep.subr.mxu0 0.0
        %2183 = vmatpush1.msra.mxu0 0.0
        %2184 = vmatprep.subr.mxu0 0.0
        %2185 = vmatpush1.msra.mxu0 0.0
        %2186 = vmatprep.subr.mxu0 0.0
        %2187 = vmatpush1.msra.mxu0 0.0
        %2188 = vmatprep.subr.mxu0 0.0
        %2189 = vmatpush1.msra.mxu0 0.0
        %2190 = vmatprep.subr.mxu0 0.0
        %2191 = vmatpush1.msra.mxu0 0.0
        %2192 = vmatprep.subr.mxu0 0.0
        %2193 = vmatpush1.msra.mxu0 0.0
        %2194 = vmatprep.subr.mxu0 0.0
        %2195 = vmatpush1.msra.mxu0 0.0
        %2196 = vmatprep.subr.mxu0 0.0
        %2197 = vmatpush1.msra.mxu0 0.0
        %2198 = vmatprep.subr.mxu0 0.0
        %2199 = vmatpush1.msra.mxu0 0.0
        %2200 = vmatprep.subr.mxu0 0.0
        %2201 = vmatpush1.msra.mxu0 0.0
        %2202 = vmatprep.subr.mxu0 0.0
        %2203 = vmatpush1.msra.mxu0 0.0
        %2204 = vmatprep.subr.mxu0 0.0
        %2205 = vmatpush1.msra.mxu0 0.0
        %2206 = vmatprep.subr.mxu0 0.0
        %2207 = vmatpush1.msra.mxu0 0.0
        %2208 = vmatprep.subr.mxu0 0.0
        %2209 = vmatpush1.msra.mxu0 0.0
        %2210 = vmatprep.subr.mxu0 0.0
        %2211 = vmatpush1.msra.mxu0 0.0
        %2212 = vmatprep.subr.mxu0 0.0
        %2213 = vmatpush1.msra.mxu0 0.0
        %2214 = vmatprep.subr.mxu0 0.0
        %2215 = vmatpush1.msra.mxu0 0.0
        %2216 = vmatprep.subr.mxu0 0.0
        %2217 = vmatpush1.msra.mxu0 0.0
        %2218 = vmatprep.subr.mxu0 0.0
        %2219 = vmatpush1.msra.mxu0 0.0
        %2220 = vmatprep.subr.mxu0 0.0
        %2221 = vmatpush1.msra.mxu0 0.0
        %2222 = vmatprep.subr.mxu0 0.0
        %2223 = vmatpush1.msra.mxu0 0.0
        %2224 = vmatprep.subr.mxu0 0.0
        %2225 = vmatpush1.msra.mxu0 0.0
        %2226 = vmatprep.subr.mxu0 0.0
        %2227 = vmatpush1.msra.mxu0 0.0
        %2228 = vmatprep.subr.mxu0 0.0
        %2229 = vmatpush1.msra.mxu0 0.0
        %2230 = vmatprep.subr.mxu0 0.0
        %2231 = vmatpush1.msra.mxu0 0.0
        %2232 = vmatprep.subr.mxu0 0.0
        %2233 = vmatpush1.msra.mxu0 0.0
        %2234 = vmatprep.subr.mxu0 0.0
        %2235 = vmatpush1.msra.mxu0 0.0
        %2236 = vmatprep.mubr.f32.mxu0 0.0
        %2237 = vmatmul.mubr.f32.gmra.mrb[0].mxu0 %v2158
        %v2238 = vpop.f32.mrb[0].mxu0
        %v2239 = vadd.f32 0.0, %v2238
        %v2240 = vpop.f32.mrb[0].mxu0
        %2241 = vmatprep.mubr.f32.mxu0 0.0
        %2242 = vmatmul.mubr.f32.gmra.mrb[0].mxu0 %v2161
        %v2243 = vpop.f32.mrb[0].mxu0
        %v2244 = vadd.f32 0.0, %v2243
        %v2245 = vpop.f32.mrb[0].mxu0
        %2246 = vmatprep.mubr.f32.mxu0 0.0
        %2247 = vmatmul.mubr.f32.gmra.mrb[0].mxu0 %v2164
        %v2248 = vpop.f32.mrb[0].mxu0
        %v2249 = vadd.f32 0.0, %v2248
        %v2250 = vpop.f32.mrb[0].mxu0
        %2251 = vmatprep.mubr.f32.mxu0 0.0
        %2252 = vmatmul.mubr.f32.gmra.mrb[0].mxu0 %v2167
        %v2253 = vpop.f32.mrb[0].mxu0
        %v2254 = vadd.f32 0.0, %v2253
        %v2255 = vpop.f32.mrb[0].mxu0
        %2256 = vmatprep.mubr.f32.mxu0 0.0
        %2257 = vmatmul.mubr.f32.gmra.mrb[0].mxu0 %v2170
        %v2258 = vpop.f32.mrb[0].mxu0
        %v2259 = vadd.f32 0.0, %v2258
        %v2260 = vpop.f32.mrb[0].mxu0
        %2261 = vdwg.mxu0
        %v2262 = vadd.f32 %v2142, %v2239
        %v2263 = vadd.f32 %v2143, %v2244
        %v2264 = vadd.f32 %v2144, %v2249
        %v2265 = vadd.f32 %v2145, %v2254
        %v2266 = vadd.f32 %v2146, %v2259
        %v2267 = vld [vmem:[%s4] sm:$0x1]
        %v2269 = vlaneseq
        %v2270 = vshrl.u32 %v2269, 7
        %v2271 = vsub.s32 0, %v2270
        %v2272 = vrot.slane %v2267, %v2271
        %v2274 = vadd.f32 %v2262, %v2272
        %v2275 = vadd.f32 %v2263, %v2272
        %v2276 = vadd.f32 %v2264, %v2272
        %v2277 = vadd.f32 %v2265, %v2272
        %v2278 = vadd.f32 %v2266, %v2272
        %v2279 = vmax.f32 %v2274, 0.0
        %v2280 = vmax.f32 %v2275, 0.0
        %v2281 = vmax.f32 %v2276, 0.0
        %v2282 = vmax.f32 %v2277, 0.0
        %v2283 = vmax.f32 %v2278, 0.0
        %vm2284 = vcmask 520192
        %2285 = vst.msk [vmem:[#allocation3] sm:$0x1f] %vm2284, %v2279
        %vm2286 = vcmask 523271
        %2287 = vst.msk [vmem:[#allocation3 - $0x2] sm:$0x80] %vm2286, %v2279
        %vm2288 = vcmask 519168
        %2289 = vst.msk [vmem:[#allocation3 + $0x6] sm:$0xf] %vm2288, %v2280
        %vm2290 = vcmask 523270
        %2291 = vst.msk [vmem:[#allocation3 + $0x4] sm:$0xc0] %vm2290, %v2280
        %vm2292 = vcmask 518144
        %2293 = vst.msk [vmem:[#allocation3 + $0xc] sm:$0x7] %vm2292, %v2281
        %vm2294 = vcmask 523269
        %2295 = vst.msk [vmem:[#allocation3 + $0xa] sm:$0xe0] %vm2294, %v2281
        %vm2296 = vcmask 517120
        %2297 = vst.msk [vmem:[#allocation3 + $0x12] sm:$0x3] %vm2296, %v2282
        %vm2298 = vcmask 523268
        %2299 = vst.msk [vmem:[#allocation3 + $0x10] sm:$0xf0] %vm2298, %v2282
        %2300 = vst.msk [vmem:[#allocation3 + $0x18] sm:$0x1] %vm590, %v2283
        %v2301 = vld [vmem:[#allocation3] sm:$0xff]
        %v2302 = vld [vmem:[#allocation3 + $0x8] sm:$0x1f]
        %v2303 = vld [vmem:[#allocation9] sm:$0xff]
        %v2304 = vld [vmem:[#allocation9 + $0x8] sm:$0xff]
        %v2305 = vld [vmem:[#allocation9 + $0x10] sm:$0xff]
        %v2306 = vld [vmem:[#allocation9 + $0x18] sm:$0xff]
        %v2307 = vld [vmem:[#allocation9 + $0x20] sm:$0xff]
        %v2308 = vld [vmem:[#allocation9 + $0x28] sm:$0xff]
        %v2309 = vld [vmem:[#allocation9 + $0x30] sm:$0xff]
        %v2310 = vld [vmem:[#allocation9 + $0x38] sm:$0xff]
        %v2311 = vld [vmem:[#allocation3 + $0x1] sm:$0xff]
        %v2312 = vld [vmem:[#allocation3 + $0x9] sm:$0x1f]
        %s2313 = scalar_lea.vmem [#allocation9], 64
        %v2314 = vld [vmem:[%s2313] sm:$0xff]
        %v2315 = vld [vmem:[%s2313 + $0x8] sm:$0xff]
        %v2316 = vld [vmem:[%s2313 + $0x10] sm:$0xff]
        %v2317 = vld [vmem:[%s2313 + $0x18] sm:$0xff]
        %v2318 = vld [vmem:[%s2313 + $0x20] sm:$0xff]
        %v2319 = vld [vmem:[%s2313 + $0x28] sm:$0xff]
        %v2320 = vld [vmem:[%s2313 + $0x30] sm:$0xff]
        %v2321 = vld [vmem:[%s2313 + $0x38] sm:$0xff]
        %v2323 = vsel %vm586, %v2311, 0
        %v2326 = vsel %vm586, %v2312, 0
        %2328 = vmatprep.subr.mxu0 0.0
        %2329 = vmatpush1.msra.mxu0 %v2314
        %2330 = vmatprep.subr.mxu0 0.0
        %2331 = vmatpush1.msra.mxu0 %v2315
        %2332 = vmatprep.subr.mxu0 0.0
        %2333 = vmatpush1.msra.mxu0 %v2316
        %2334 = vmatprep.subr.mxu0 0.0
        %2335 = vmatpush1.msra.mxu0 %v2317
        %2336 = vmatprep.subr.mxu0 0.0
        %2337 = vmatpush1.msra.mxu0 %v2318
        %2338 = vmatprep.subr.mxu0 0.0
        %2339 = vmatpush1.msra.mxu0 %v2319
        %2340 = vmatprep.subr.mxu0 0.0
        %2341 = vmatpush1.msra.mxu0 %v2320
        %2342 = vmatprep.subr.mxu0 0.0
        %2343 = vmatpush1.msra.mxu0 %v2321
        %2344 = vmatprep.subr.mxu0 0.0
        %2345 = vmatpush1.msra.mxu0 0.0
        %2346 = vmatprep.subr.mxu0 0.0
        %2347 = vmatpush1.msra.mxu0 0.0
        %2348 = vmatprep.subr.mxu0 0.0
        %2349 = vmatpush1.msra.mxu0 0.0
        %2350 = vmatprep.subr.mxu0 0.0
        %2351 = vmatpush1.msra.mxu0 0.0
        %2352 = vmatprep.subr.mxu0 0.0
        %2353 = vmatpush1.msra.mxu0 0.0
        %2354 = vmatprep.subr.mxu0 0.0
        %2355 = vmatpush1.msra.mxu0 0.0
        %2356 = vmatprep.subr.mxu0 0.0
        %2357 = vmatpush1.msra.mxu0 0.0
        %2358 = vmatprep.subr.mxu0 0.0
        %2359 = vmatpush1.msra.mxu0 0.0
        %2360 = vmatprep.subr.mxu0 0.0
        %2361 = vmatpush1.msra.mxu0 0.0
        %2362 = vmatprep.subr.mxu0 0.0
        %2363 = vmatpush1.msra.mxu0 0.0
        %2364 = vmatprep.subr.mxu0 0.0
        %2365 = vmatpush1.msra.mxu0 0.0
        %2366 = vmatprep.subr.mxu0 0.0
        %2367 = vmatpush1.msra.mxu0 0.0
        %2368 = vmatprep.subr.mxu0 0.0
        %2369 = vmatpush1.msra.mxu0 0.0
        %2370 = vmatprep.subr.mxu0 0.0
        %2371 = vmatpush1.msra.mxu0 0.0
        %2372 = vmatprep.subr.mxu0 0.0
        %2373 = vmatpush1.msra.mxu0 0.0
        %2374 = vmatprep.subr.mxu0 0.0
        %2375 = vmatpush1.msra.mxu0 0.0
        %2376 = vmatprep.subr.mxu0 0.0
        %2377 = vmatpush1.msra.mxu0 0.0
        %2378 = vmatprep.subr.mxu0 0.0
        %2379 = vmatpush1.msra.mxu0 0.0
        %2380 = vmatprep.subr.mxu0 0.0
        %2381 = vmatpush1.msra.mxu0 0.0
        %2382 = vmatprep.subr.mxu0 0.0
        %2383 = vmatpush1.msra.mxu0 0.0
        %2384 = vmatprep.subr.mxu0 0.0
        %2385 = vmatpush1.msra.mxu0 0.0
        %2386 = vmatprep.subr.mxu0 0.0
        %2387 = vmatpush1.msra.mxu0 0.0
        %2388 = vmatprep.subr.mxu0 0.0
        %2389 = vmatpush1.msra.mxu0 0.0
        %2390 = vmatprep.subr.mxu0 0.0
        %2391 = vmatpush1.msra.mxu0 0.0
        %2392 = vmatprep.mubr.f32.mxu0 0.0
        %2393 = vmatmul.mubr.f32.gmra.mrb[0].mxu0 %v2323
        %v2394 = vpop.f32.mrb[0].mxu0
        %v2395 = vadd.f32 0.0, %v2394
        %v2396 = vpop.f32.mrb[0].mxu0
        %2397 = vmatprep.mubr.f32.mxu0 0.0
        %2398 = vmatmul.mubr.f32.gmra.mrb[0].mxu0 %v2326
        %v2399 = vpop.f32.mrb[0].mxu0
        %v2400 = vadd.f32 0.0, %v2399
        %v2401 = vpop.f32.mrb[0].mxu0
        %2402 = vdwg.mxu0
        %v2404 = vsel %vm586, %v2301, 0
        %v2407 = vsel %vm586, %v2302, 0
        %2409 = vmatprep.subr.mxu0 0.0
        %2410 = vmatpush1.msra.mxu0 %v2303
        %2411 = vmatprep.subr.mxu0 0.0
        %2412 = vmatpush1.msra.mxu0 %v2304
        %2413 = vmatprep.subr.mxu0 0.0
        %2414 = vmatpush1.msra.mxu0 %v2305
        %2415 = vmatprep.subr.mxu0 0.0
        %2416 = vmatpush1.msra.mxu0 %v2306
        %2417 = vmatprep.subr.mxu0 0.0
        %2418 = vmatpush1.msra.mxu0 %v2307
        %2419 = vmatprep.subr.mxu0 0.0
        %2420 = vmatpush1.msra.mxu0 %v2308
        %2421 = vmatprep.subr.mxu0 0.0
        %2422 = vmatpush1.msra.mxu0 %v2309
        %2423 = vmatprep.subr.mxu0 0.0
        %2424 = vmatpush1.msra.mxu0 %v2310
        %2425 = vmatprep.subr.mxu0 0.0
        %2426 = vmatpush1.msra.mxu0 0.0
        %2427 = vmatprep.subr.mxu0 0.0
        %2428 = vmatpush1.msra.mxu0 0.0
        %2429 = vmatprep.subr.mxu0 0.0
        %2430 = vmatpush1.msra.mxu0 0.0
        %2431 = vmatprep.subr.mxu0 0.0
        %2432 = vmatpush1.msra.mxu0 0.0
        %2433 = vmatprep.subr.mxu0 0.0
        %2434 = vmatpush1.msra.mxu0 0.0
        %2435 = vmatprep.subr.mxu0 0.0
        %2436 = vmatpush1.msra.mxu0 0.0
        %2437 = vmatprep.subr.mxu0 0.0
        %2438 = vmatpush1.msra.mxu0 0.0
        %2439 = vmatprep.subr.mxu0 0.0
        %2440 = vmatpush1.msra.mxu0 0.0
        %2441 = vmatprep.subr.mxu0 0.0
        %2442 = vmatpush1.msra.mxu0 0.0
        %2443 = vmatprep.subr.mxu0 0.0
        %2444 = vmatpush1.msra.mxu0 0.0
        %2445 = vmatprep.subr.mxu0 0.0
        %2446 = vmatpush1.msra.mxu0 0.0
        %2447 = vmatprep.subr.mxu0 0.0
        %2448 = vmatpush1.msra.mxu0 0.0
        %2449 = vmatprep.subr.mxu0 0.0
        %2450 = vmatpush1.msra.mxu0 0.0
        %2451 = vmatprep.subr.mxu0 0.0
        %2452 = vmatpush1.msra.mxu0 0.0
        %2453 = vmatprep.subr.mxu0 0.0
        %2454 = vmatpush1.msra.mxu0 0.0
        %2455 = vmatprep.subr.mxu0 0.0
        %2456 = vmatpush1.msra.mxu0 0.0
        %2457 = vmatprep.subr.mxu0 0.0
        %2458 = vmatpush1.msra.mxu0 0.0
        %2459 = vmatprep.subr.mxu0 0.0
        %2460 = vmatpush1.msra.mxu0 0.0
        %2461 = vmatprep.subr.mxu0 0.0
        %2462 = vmatpush1.msra.mxu0 0.0
        %2463 = vmatprep.subr.mxu0 0.0
        %2464 = vmatpush1.msra.mxu0 0.0
        %2465 = vmatprep.subr.mxu0 0.0
        %2466 = vmatpush1.msra.mxu0 0.0
        %2467 = vmatprep.subr.mxu0 0.0
        %2468 = vmatpush1.msra.mxu0 0.0
        %2469 = vmatprep.subr.mxu0 0.0
        %2470 = vmatpush1.msra.mxu0 0.0
        %2471 = vmatprep.subr.mxu0 0.0
        %2472 = vmatpush1.msra.mxu0 0.0
        %2473 = vmatprep.mubr.f32.mxu0 0.0
        %2474 = vmatmul.mubr.f32.gmra.mrb[0].mxu0 %v2404
        %v2475 = vpop.f32.mrb[0].mxu0
        %v2476 = vadd.f32 %v2395, %v2475
        %v2477 = vpop.f32.mrb[0].mxu0
        %2478 = vmatprep.mubr.f32.mxu0 0.0
        %2479 = vmatmul.mubr.f32.gmra.mrb[0].mxu0 %v2407
        %v2480 = vpop.f32.mrb[0].mxu0
        %v2481 = vadd.f32 %v2400, %v2480
        %v2482 = vpop.f32.mrb[0].mxu0
        %2483 = vdwg.mxu0
        %v2484 = vld [vmem:[#allocation3 + $0x2] sm:$0xff]
        %v2485 = vld [vmem:[#allocation3 + $0xa] sm:$0x1f]
        %s2486 = scalar_lea.vmem [#allocation9], 128
        %v2487 = vld [vmem:[%s2486] sm:$0xff]
        %v2488 = vld [vmem:[%s2486 + $0x8] sm:$0xff]
        %v2489 = vld [vmem:[%s2486 + $0x10] sm:$0xff]
        %v2490 = vld [vmem:[%s2486 + $0x18] sm:$0xff]
        %v2491 = vld [vmem:[%s2486 + $0x20] sm:$0xff]
        %v2492 = vld [vmem:[%s2486 + $0x28] sm:$0xff]
        %v2493 = vld [vmem:[%s2486 + $0x30] sm:$0xff]
        %v2494 = vld [vmem:[%s2486 + $0x38] sm:$0xff]
        %v2496 = vsel %vm586, %v2484, 0
        %v2499 = vsel %vm586, %v2485, 0
        %2501 = vmatprep.subr.mxu0 0.0
        %2502 = vmatpush1.msra.mxu0 %v2487
        %2503 = vmatprep.subr.mxu0 0.0
        %2504 = vmatpush1.msra.mxu0 %v2488
        %2505 = vmatprep.subr.mxu0 0.0
        %2506 = vmatpush1.msra.mxu0 %v2489
        %2507 = vmatprep.subr.mxu0 0.0
        %2508 = vmatpush1.msra.mxu0 %v2490
        %2509 = vmatprep.subr.mxu0 0.0
        %2510 = vmatpush1.msra.mxu0 %v2491
        %2511 = vmatprep.subr.mxu0 0.0
        %2512 = vmatpush1.msra.mxu0 %v2492
        %2513 = vmatprep.subr.mxu0 0.0
        %2514 = vmatpush1.msra.mxu0 %v2493
        %2515 = vmatprep.subr.mxu0 0.0
        %2516 = vmatpush1.msra.mxu0 %v2494
        %2517 = vmatprep.subr.mxu0 0.0
        %2518 = vmatpush1.msra.mxu0 0.0
        %2519 = vmatprep.subr.mxu0 0.0
        %2520 = vmatpush1.msra.mxu0 0.0
        %2521 = vmatprep.subr.mxu0 0.0
        %2522 = vmatpush1.msra.mxu0 0.0
        %2523 = vmatprep.subr.mxu0 0.0
        %2524 = vmatpush1.msra.mxu0 0.0
        %2525 = vmatprep.subr.mxu0 0.0
        %2526 = vmatpush1.msra.mxu0 0.0
        %2527 = vmatprep.subr.mxu0 0.0
        %2528 = vmatpush1.msra.mxu0 0.0
        %2529 = vmatprep.subr.mxu0 0.0
        %2530 = vmatpush1.msra.mxu0 0.0
        %2531 = vmatprep.subr.mxu0 0.0
        %2532 = vmatpush1.msra.mxu0 0.0
        %2533 = vmatprep.subr.mxu0 0.0
        %2534 = vmatpush1.msra.mxu0 0.0
        %2535 = vmatprep.subr.mxu0 0.0
        %2536 = vmatpush1.msra.mxu0 0.0
        %2537 = vmatprep.subr.mxu0 0.0
        %2538 = vmatpush1.msra.mxu0 0.0
        %2539 = vmatprep.subr.mxu0 0.0
        %2540 = vmatpush1.msra.mxu0 0.0
        %2541 = vmatprep.subr.mxu0 0.0
        %2542 = vmatpush1.msra.mxu0 0.0
        %2543 = vmatprep.subr.mxu0 0.0
        %2544 = vmatpush1.msra.mxu0 0.0
        %2545 = vmatprep.subr.mxu0 0.0
        %2546 = vmatpush1.msra.mxu0 0.0
        %2547 = vmatprep.subr.mxu0 0.0
        %2548 = vmatpush1.msra.mxu0 0.0
        %2549 = vmatprep.subr.mxu0 0.0
        %2550 = vmatpush1.msra.mxu0 0.0
        %2551 = vmatprep.subr.mxu0 0.0
        %2552 = vmatpush1.msra.mxu0 0.0
        %2553 = vmatprep.subr.mxu0 0.0
        %2554 = vmatpush1.msra.mxu0 0.0
        %2555 = vmatprep.subr.mxu0 0.0
        %2556 = vmatpush1.msra.mxu0 0.0
        %2557 = vmatprep.subr.mxu0 0.0
        %2558 = vmatpush1.msra.mxu0 0.0
        %2559 = vmatprep.subr.mxu0 0.0
        %2560 = vmatpush1.msra.mxu0 0.0
        %2561 = vmatprep.subr.mxu0 0.0
        %2562 = vmatpush1.msra.mxu0 0.0
        %2563 = vmatprep.subr.mxu0 0.0
        %2564 = vmatpush1.msra.mxu0 0.0
        %2565 = vmatprep.mubr.f32.mxu0 0.0
        %2566 = vmatmul.mubr.f32.gmra.mrb[0].mxu0 %v2496
        %v2567 = vpop.f32.mrb[0].mxu0
        %v2568 = vadd.f32 0.0, %v2567
        %v2569 = vpop.f32.mrb[0].mxu0
        %2570 = vmatprep.mubr.f32.mxu0 0.0
        %2571 = vmatmul.mubr.f32.gmra.mrb[0].mxu0 %v2499
        %v2572 = vpop.f32.mrb[0].mxu0
        %v2573 = vadd.f32 0.0, %v2572
        %v2574 = vpop.f32.mrb[0].mxu0
        %2575 = vdwg.mxu0
        %v2576 = vadd.f32 %v2476, %v2568
        %v2577 = vadd.f32 %v2481, %v2573
        %v2578 = vld [vmem:[#allocation3 + $0x5] sm:$0xff]
        %v2579 = vld [vmem:[#allocation3 + $0xd] sm:$0x1f]
        %s2580 = scalar_lea.vmem [#allocation9], 192
        %v2581 = vld [vmem:[%s2580] sm:$0xff]
        %v2582 = vld [vmem:[%s2580 + $0x8] sm:$0xff]
        %v2583 = vld [vmem:[%s2580 + $0x10] sm:$0xff]
        %v2584 = vld [vmem:[%s2580 + $0x18] sm:$0xff]
        %v2585 = vld [vmem:[%s2580 + $0x20] sm:$0xff]
        %v2586 = vld [vmem:[%s2580 + $0x28] sm:$0xff]
        %v2587 = vld [vmem:[%s2580 + $0x30] sm:$0xff]
        %v2588 = vld [vmem:[%s2580 + $0x38] sm:$0xff]
        %v2590 = vsel %vm586, %v2578, 0
        %v2593 = vsel %vm586, %v2579, 0
        %2595 = vmatprep.subr.mxu0 0.0
        %2596 = vmatpush1.msra.mxu0 %v2581
        %2597 = vmatprep.subr.mxu0 0.0
        %2598 = vmatpush1.msra.mxu0 %v2582
        %2599 = vmatprep.subr.mxu0 0.0
        %2600 = vmatpush1.msra.mxu0 %v2583
        %2601 = vmatprep.subr.mxu0 0.0
        %2602 = vmatpush1.msra.mxu0 %v2584
        %2603 = vmatprep.subr.mxu0 0.0
        %2604 = vmatpush1.msra.mxu0 %v2585
        %2605 = vmatprep.subr.mxu0 0.0
        %2606 = vmatpush1.msra.mxu0 %v2586
        %2607 = vmatprep.subr.mxu0 0.0
        %2608 = vmatpush1.msra.mxu0 %v2587
        %2609 = vmatprep.subr.mxu0 0.0
        %2610 = vmatpush1.msra.mxu0 %v2588
        %2611 = vmatprep.subr.mxu0 0.0
        %2612 = vmatpush1.msra.mxu0 0.0
        %2613 = vmatprep.subr.mxu0 0.0
        %2614 = vmatpush1.msra.mxu0 0.0
        %2615 = vmatprep.subr.mxu0 0.0
        %2616 = vmatpush1.msra.mxu0 0.0
        %2617 = vmatprep.subr.mxu0 0.0
        %2618 = vmatpush1.msra.mxu0 0.0
        %2619 = vmatprep.subr.mxu0 0.0
        %2620 = vmatpush1.msra.mxu0 0.0
        %2621 = vmatprep.subr.mxu0 0.0
        %2622 = vmatpush1.msra.mxu0 0.0
        %2623 = vmatprep.subr.mxu0 0.0
        %2624 = vmatpush1.msra.mxu0 0.0
        %2625 = vmatprep.subr.mxu0 0.0
        %2626 = vmatpush1.msra.mxu0 0.0
        %2627 = vmatprep.subr.mxu0 0.0
        %2628 = vmatpush1.msra.mxu0 0.0
        %2629 = vmatprep.subr.mxu0 0.0
        %2630 = vmatpush1.msra.mxu0 0.0
        %2631 = vmatprep.subr.mxu0 0.0
        %2632 = vmatpush1.msra.mxu0 0.0
        %2633 = vmatprep.subr.mxu0 0.0
        %2634 = vmatpush1.msra.mxu0 0.0
        %2635 = vmatprep.subr.mxu0 0.0
        %2636 = vmatpush1.msra.mxu0 0.0
        %2637 = vmatprep.subr.mxu0 0.0
        %2638 = vmatpush1.msra.mxu0 0.0
        %2639 = vmatprep.subr.mxu0 0.0
        %2640 = vmatpush1.msra.mxu0 0.0
        %2641 = vmatprep.subr.mxu0 0.0
        %2642 = vmatpush1.msra.mxu0 0.0
        %2643 = vmatprep.subr.mxu0 0.0
        %2644 = vmatpush1.msra.mxu0 0.0
        %2645 = vmatprep.subr.mxu0 0.0
        %2646 = vmatpush1.msra.mxu0 0.0
        %2647 = vmatprep.subr.mxu0 0.0
        %2648 = vmatpush1.msra.mxu0 0.0
        %2649 = vmatprep.subr.mxu0 0.0
        %2650 = vmatpush1.msra.mxu0 0.0
        %2651 = vmatprep.subr.mxu0 0.0
        %2652 = vmatpush1.msra.mxu0 0.0
        %2653 = vmatprep.subr.mxu0 0.0
        %2654 = vmatpush1.msra.mxu0 0.0
        %2655 = vmatprep.subr.mxu0 0.0
        %2656 = vmatpush1.msra.mxu0 0.0
        %2657 = vmatprep.subr.mxu0 0.0
        %2658 = vmatpush1.msra.mxu0 0.0
        %2659 = vmatprep.mubr.f32.mxu0 0.0
        %2660 = vmatmul.mubr.f32.gmra.mrb[0].mxu0 %v2590
        %v2661 = vpop.f32.mrb[0].mxu0
        %v2662 = vadd.f32 0.0, %v2661
        %v2663 = vpop.f32.mrb[0].mxu0
        %2664 = vmatprep.mubr.f32.mxu0 0.0
        %2665 = vmatmul.mubr.f32.gmra.mrb[0].mxu0 %v2593
        %v2666 = vpop.f32.mrb[0].mxu0
        %v2667 = vadd.f32 0.0, %v2666
        %v2668 = vpop.f32.mrb[0].mxu0
        %2669 = vdwg.mxu0
        %v2670 = vadd.f32 %v2576, %v2662
        %v2671 = vadd.f32 %v2577, %v2667
        %v2672 = vld [vmem:[#allocation3 + $0x6] sm:$0xff]
        %v2673 = vld [vmem:[#allocation3 + $0xe] sm:$0x1f]
        %s2674 = scalar_lea.vmem [#allocation9], 256
        %v2675 = vld [vmem:[%s2674] sm:$0xff]
        %v2676 = vld [vmem:[%s2674 + $0x8] sm:$0xff]
        %v2677 = vld [vmem:[%s2674 + $0x10] sm:$0xff]
        %v2678 = vld [vmem:[%s2674 + $0x18] sm:$0xff]
        %v2679 = vld [vmem:[%s2674 + $0x20] sm:$0xff]
        %v2680 = vld [vmem:[%s2674 + $0x28] sm:$0xff]
        %v2681 = vld [vmem:[%s2674 + $0x30] sm:$0xff]
        %v2682 = vld [vmem:[%s2674 + $0x38] sm:$0xff]
        %v2684 = vsel %vm586, %v2672, 0
        %v2687 = vsel %vm586, %v2673, 0
        %2689 = vmatprep.subr.mxu0 0.0
        %2690 = vmatpush1.msra.mxu0 %v2675
        %2691 = vmatprep.subr.mxu0 0.0
        %2692 = vmatpush1.msra.mxu0 %v2676
        %2693 = vmatprep.subr.mxu0 0.0
        %2694 = vmatpush1.msra.mxu0 %v2677
        %2695 = vmatprep.subr.mxu0 0.0
        %2696 = vmatpush1.msra.mxu0 %v2678
        %2697 = vmatprep.subr.mxu0 0.0
        %2698 = vmatpush1.msra.mxu0 %v2679
        %2699 = vmatprep.subr.mxu0 0.0
        %2700 = vmatpush1.msra.mxu0 %v2680
        %2701 = vmatprep.subr.mxu0 0.0
        %2702 = vmatpush1.msra.mxu0 %v2681
        %2703 = vmatprep.subr.mxu0 0.0
        %2704 = vmatpush1.msra.mxu0 %v2682
        %2705 = vmatprep.subr.mxu0 0.0
        %2706 = vmatpush1.msra.mxu0 0.0
        %2707 = vmatprep.subr.mxu0 0.0
        %2708 = vmatpush1.msra.mxu0 0.0
        %2709 = vmatprep.subr.mxu0 0.0
        %2710 = vmatpush1.msra.mxu0 0.0
        %2711 = vmatprep.subr.mxu0 0.0
        %2712 = vmatpush1.msra.mxu0 0.0
        %2713 = vmatprep.subr.mxu0 0.0
        %2714 = vmatpush1.msra.mxu0 0.0
        %2715 = vmatprep.subr.mxu0 0.0
        %2716 = vmatpush1.msra.mxu0 0.0
        %2717 = vmatprep.subr.mxu0 0.0
        %2718 = vmatpush1.msra.mxu0 0.0
        %2719 = vmatprep.subr.mxu0 0.0
        %2720 = vmatpush1.msra.mxu0 0.0
        %2721 = vmatprep.subr.mxu0 0.0
        %2722 = vmatpush1.msra.mxu0 0.0
        %2723 = vmatprep.subr.mxu0 0.0
        %2724 = vmatpush1.msra.mxu0 0.0
        %2725 = vmatprep.subr.mxu0 0.0
        %2726 = vmatpush1.msra.mxu0 0.0
        %2727 = vmatprep.subr.mxu0 0.0
        %2728 = vmatpush1.msra.mxu0 0.0
        %2729 = vmatprep.subr.mxu0 0.0
        %2730 = vmatpush1.msra.mxu0 0.0
        %2731 = vmatprep.subr.mxu0 0.0
        %2732 = vmatpush1.msra.mxu0 0.0
        %2733 = vmatprep.subr.mxu0 0.0
        %2734 = vmatpush1.msra.mxu0 0.0
        %2735 = vmatprep.subr.mxu0 0.0
        %2736 = vmatpush1.msra.mxu0 0.0
        %2737 = vmatprep.subr.mxu0 0.0
        %2738 = vmatpush1.msra.mxu0 0.0
        %2739 = vmatprep.subr.mxu0 0.0
        %2740 = vmatpush1.msra.mxu0 0.0
        %2741 = vmatprep.subr.mxu0 0.0
        %2742 = vmatpush1.msra.mxu0 0.0
        %2743 = vmatprep.subr.mxu0 0.0
        %2744 = vmatpush1.msra.mxu0 0.0
        %2745 = vmatprep.subr.mxu0 0.0
        %2746 = vmatpush1.msra.mxu0 0.0
        %2747 = vmatprep.subr.mxu0 0.0
        %2748 = vmatpush1.msra.mxu0 0.0
        %2749 = vmatprep.subr.mxu0 0.0
        %2750 = vmatpush1.msra.mxu0 0.0
        %2751 = vmatprep.subr.mxu0 0.0
        %2752 = vmatpush1.msra.mxu0 0.0
        %2753 = vmatprep.mubr.f32.mxu0 0.0
        %2754 = vmatmul.mubr.f32.gmra.mrb[0].mxu0 %v2684
        %v2755 = vpop.f32.mrb[0].mxu0
        %v2756 = vadd.f32 0.0, %v2755
        %v2757 = vpop.f32.mrb[0].mxu0
        %2758 = vmatprep.mubr.f32.mxu0 0.0
        %2759 = vmatmul.mubr.f32.gmra.mrb[0].mxu0 %v2687
        %v2760 = vpop.f32.mrb[0].mxu0
        %v2761 = vadd.f32 0.0, %v2760
        %v2762 = vpop.f32.mrb[0].mxu0
        %2763 = vdwg.mxu0
        %v2764 = vadd.f32 %v2670, %v2756
        %v2765 = vadd.f32 %v2671, %v2761
        %v2766 = vld [vmem:[#allocation3 + $0x7] sm:$0xff]
        %v2767 = vld [vmem:[#allocation3 + $0xf] sm:$0x1f]
        %s2768 = scalar_lea.vmem [#allocation9], 320
        %v2769 = vld [vmem:[%s2768] sm:$0xff]
        %v2770 = vld [vmem:[%s2768 + $0x8] sm:$0xff]
        %v2771 = vld [vmem:[%s2768 + $0x10] sm:$0xff]
        %v2772 = vld [vmem:[%s2768 + $0x18] sm:$0xff]
        %v2773 = vld [vmem:[%s2768 + $0x20] sm:$0xff]
        %v2774 = vld [vmem:[%s2768 + $0x28] sm:$0xff]
        %v2775 = vld [vmem:[%s2768 + $0x30] sm:$0xff]
        %v2776 = vld [vmem:[%s2768 + $0x38] sm:$0xff]
        %v2778 = vsel %vm586, %v2766, 0
        %v2781 = vsel %vm586, %v2767, 0
        %2783 = vmatprep.subr.mxu0 0.0
        %2784 = vmatpush1.msra.mxu0 %v2769
        %2785 = vmatprep.subr.mxu0 0.0
        %2786 = vmatpush1.msra.mxu0 %v2770
        %2787 = vmatprep.subr.mxu0 0.0
        %2788 = vmatpush1.msra.mxu0 %v2771
        %2789 = vmatprep.subr.mxu0 0.0
        %2790 = vmatpush1.msra.mxu0 %v2772
        %2791 = vmatprep.subr.mxu0 0.0
        %2792 = vmatpush1.msra.mxu0 %v2773
        %2793 = vmatprep.subr.mxu0 0.0
        %2794 = vmatpush1.msra.mxu0 %v2774
        %2795 = vmatprep.subr.mxu0 0.0
        %2796 = vmatpush1.msra.mxu0 %v2775
        %2797 = vmatprep.subr.mxu0 0.0
        %2798 = vmatpush1.msra.mxu0 %v2776
        %2799 = vmatprep.subr.mxu0 0.0
        %2800 = vmatpush1.msra.mxu0 0.0
        %2801 = vmatprep.subr.mxu0 0.0
        %2802 = vmatpush1.msra.mxu0 0.0
        %2803 = vmatprep.subr.mxu0 0.0
        %2804 = vmatpush1.msra.mxu0 0.0
        %2805 = vmatprep.subr.mxu0 0.0
        %2806 = vmatpush1.msra.mxu0 0.0
        %2807 = vmatprep.subr.mxu0 0.0
        %2808 = vmatpush1.msra.mxu0 0.0
        %2809 = vmatprep.subr.mxu0 0.0
        %2810 = vmatpush1.msra.mxu0 0.0
        %2811 = vmatprep.subr.mxu0 0.0
        %2812 = vmatpush1.msra.mxu0 0.0
        %2813 = vmatprep.subr.mxu0 0.0
        %2814 = vmatpush1.msra.mxu0 0.0
        %2815 = vmatprep.subr.mxu0 0.0
        %2816 = vmatpush1.msra.mxu0 0.0
        %2817 = vmatprep.subr.mxu0 0.0
        %2818 = vmatpush1.msra.mxu0 0.0
        %2819 = vmatprep.subr.mxu0 0.0
        %2820 = vmatpush1.msra.mxu0 0.0
        %2821 = vmatprep.subr.mxu0 0.0
        %2822 = vmatpush1.msra.mxu0 0.0
        %2823 = vmatprep.subr.mxu0 0.0
        %2824 = vmatpush1.msra.mxu0 0.0
        %2825 = vmatprep.subr.mxu0 0.0
        %2826 = vmatpush1.msra.mxu0 0.0
        %2827 = vmatprep.subr.mxu0 0.0
        %2828 = vmatpush1.msra.mxu0 0.0
        %2829 = vmatprep.subr.mxu0 0.0
        %2830 = vmatpush1.msra.mxu0 0.0
        %2831 = vmatprep.subr.mxu0 0.0
        %2832 = vmatpush1.msra.mxu0 0.0
        %2833 = vmatprep.subr.mxu0 0.0
        %2834 = vmatpush1.msra.mxu0 0.0
        %2835 = vmatprep.subr.mxu0 0.0
        %2836 = vmatpush1.msra.mxu0 0.0
        %2837 = vmatprep.subr.mxu0 0.0
        %2838 = vmatpush1.msra.mxu0 0.0
        %2839 = vmatprep.subr.mxu0 0.0
        %2840 = vmatpush1.msra.mxu0 0.0
        %2841 = vmatprep.subr.mxu0 0.0
        %2842 = vmatpush1.msra.mxu0 0.0
        %2843 = vmatprep.subr.mxu0 0.0
        %2844 = vmatpush1.msra.mxu0 0.0
        %2845 = vmatprep.subr.mxu0 0.0
        %2846 = vmatpush1.msra.mxu0 0.0
        %2847 = vmatprep.mubr.f32.mxu0 0.0
        %2848 = vmatmul.mubr.f32.gmra.mrb[0].mxu0 %v2778
        %v2849 = vpop.f32.mrb[0].mxu0
        %v2850 = vadd.f32 0.0, %v2849
        %v2851 = vpop.f32.mrb[0].mxu0
        %2852 = vmatprep.mubr.f32.mxu0 0.0
        %2853 = vmatmul.mubr.f32.gmra.mrb[0].mxu0 %v2781
        %v2854 = vpop.f32.mrb[0].mxu0
        %v2855 = vadd.f32 0.0, %v2854
        %v2856 = vpop.f32.mrb[0].mxu0
        %2857 = vdwg.mxu0
        %v2858 = vadd.f32 %v2764, %v2850
        %v2859 = vadd.f32 %v2765, %v2855
        %v2860 = vld [vmem:[#allocation3 + $0xa] sm:$0xff]
        %v2861 = vld [vmem:[#allocation3 + $0x12] sm:$0x1f]
        %s2862 = scalar_lea.vmem [#allocation9], 384
        %v2863 = vld [vmem:[%s2862] sm:$0xff]
        %v2864 = vld [vmem:[%s2862 + $0x8] sm:$0xff]
        %v2865 = vld [vmem:[%s2862 + $0x10] sm:$0xff]
        %v2866 = vld [vmem:[%s2862 + $0x18] sm:$0xff]
        %v2867 = vld [vmem:[%s2862 + $0x20] sm:$0xff]
        %v2868 = vld [vmem:[%s2862 + $0x28] sm:$0xff]
        %v2869 = vld [vmem:[%s2862 + $0x30] sm:$0xff]
        %v2870 = vld [vmem:[%s2862 + $0x38] sm:$0xff]
        %v2872 = vsel %vm586, %v2860, 0
        %v2875 = vsel %vm586, %v2861, 0
        %2877 = vmatprep.subr.mxu0 0.0
        %2878 = vmatpush1.msra.mxu0 %v2863
        %2879 = vmatprep.subr.mxu0 0.0
        %2880 = vmatpush1.msra.mxu0 %v2864
        %2881 = vmatprep.subr.mxu0 0.0
        %2882 = vmatpush1.msra.mxu0 %v2865
        %2883 = vmatprep.subr.mxu0 0.0
        %2884 = vmatpush1.msra.mxu0 %v2866
        %2885 = vmatprep.subr.mxu0 0.0
        %2886 = vmatpush1.msra.mxu0 %v2867
        %2887 = vmatprep.subr.mxu0 0.0
        %2888 = vmatpush1.msra.mxu0 %v2868
        %2889 = vmatprep.subr.mxu0 0.0
        %2890 = vmatpush1.msra.mxu0 %v2869
        %2891 = vmatprep.subr.mxu0 0.0
        %2892 = vmatpush1.msra.mxu0 %v2870
        %2893 = vmatprep.subr.mxu0 0.0
        %2894 = vmatpush1.msra.mxu0 0.0
        %2895 = vmatprep.subr.mxu0 0.0
        %2896 = vmatpush1.msra.mxu0 0.0
        %2897 = vmatprep.subr.mxu0 0.0
        %2898 = vmatpush1.msra.mxu0 0.0
        %2899 = vmatprep.subr.mxu0 0.0
        %2900 = vmatpush1.msra.mxu0 0.0
        %2901 = vmatprep.subr.mxu0 0.0
        %2902 = vmatpush1.msra.mxu0 0.0
        %2903 = vmatprep.subr.mxu0 0.0
        %2904 = vmatpush1.msra.mxu0 0.0
        %2905 = vmatprep.subr.mxu0 0.0
        %2906 = vmatpush1.msra.mxu0 0.0
        %2907 = vmatprep.subr.mxu0 0.0
        %2908 = vmatpush1.msra.mxu0 0.0
        %2909 = vmatprep.subr.mxu0 0.0
        %2910 = vmatpush1.msra.mxu0 0.0
        %2911 = vmatprep.subr.mxu0 0.0
        %2912 = vmatpush1.msra.mxu0 0.0
        %2913 = vmatprep.subr.mxu0 0.0
        %2914 = vmatpush1.msra.mxu0 0.0
        %2915 = vmatprep.subr.mxu0 0.0
        %2916 = vmatpush1.msra.mxu0 0.0
        %2917 = vmatprep.subr.mxu0 0.0
        %2918 = vmatpush1.msra.mxu0 0.0
        %2919 = vmatprep.subr.mxu0 0.0
        %2920 = vmatpush1.msra.mxu0 0.0
        %2921 = vmatprep.subr.mxu0 0.0
        %2922 = vmatpush1.msra.mxu0 0.0
        %2923 = vmatprep.subr.mxu0 0.0
        %2924 = vmatpush1.msra.mxu0 0.0
        %2925 = vmatprep.subr.mxu0 0.0
        %2926 = vmatpush1.msra.mxu0 0.0
        %2927 = vmatprep.subr.mxu0 0.0
        %2928 = vmatpush1.msra.mxu0 0.0
        %2929 = vmatprep.subr.mxu0 0.0
        %2930 = vmatpush1.msra.mxu0 0.0
        %2931 = vmatprep.subr.mxu0 0.0
        %2932 = vmatpush1.msra.mxu0 0.0
        %2933 = vmatprep.subr.mxu0 0.0
        %2934 = vmatpush1.msra.mxu0 0.0
        %2935 = vmatprep.subr.mxu0 0.0
        %2936 = vmatpush1.msra.mxu0 0.0
        %2937 = vmatprep.subr.mxu0 0.0
        %2938 = vmatpush1.msra.mxu0 0.0
        %2939 = vmatprep.subr.mxu0 0.0
        %2940 = vmatpush1.msra.mxu0 0.0
        %2941 = vmatprep.mubr.f32.mxu0 0.0
        %2942 = vmatmul.mubr.f32.gmra.mrb[0].mxu0 %v2872
        %v2943 = vpop.f32.mrb[0].mxu0
        %v2944 = vadd.f32 0.0, %v2943
        %v2945 = vpop.f32.mrb[0].mxu0
        %2946 = vmatprep.mubr.f32.mxu0 0.0
        %2947 = vmatmul.mubr.f32.gmra.mrb[0].mxu0 %v2875
        %v2948 = vpop.f32.mrb[0].mxu0
        %v2949 = vadd.f32 0.0, %v2948
        %v2950 = vpop.f32.mrb[0].mxu0
        %2951 = vdwg.mxu0
        %v2952 = vadd.f32 %v2858, %v2944
        %v2953 = vadd.f32 %v2859, %v2949
        %v2954 = vld [vmem:[#allocation3 + $0xb] sm:$0xff]
        %v2955 = vld [vmem:[#allocation3 + $0x13] sm:$0x1f]
        %s2956 = scalar_lea.vmem [#allocation9], 448
        %v2957 = vld [vmem:[%s2956] sm:$0xff]
        %v2958 = vld [vmem:[%s2956 + $0x8] sm:$0xff]
        %v2959 = vld [vmem:[%s2956 + $0x10] sm:$0xff]
        %v2960 = vld [vmem:[%s2956 + $0x18] sm:$0xff]
        %v2961 = vld [vmem:[%s2956 + $0x20] sm:$0xff]
        %v2962 = vld [vmem:[%s2956 + $0x28] sm:$0xff]
        %v2963 = vld [vmem:[%s2956 + $0x30] sm:$0xff]
        %v2964 = vld [vmem:[%s2956 + $0x38] sm:$0xff]
        %v2966 = vsel %vm586, %v2954, 0
        %v2969 = vsel %vm586, %v2955, 0
        %2971 = vmatprep.subr.mxu0 0.0
        %2972 = vmatpush1.msra.mxu0 %v2957
        %2973 = vmatprep.subr.mxu0 0.0
        %2974 = vmatpush1.msra.mxu0 %v2958
        %2975 = vmatprep.subr.mxu0 0.0
        %2976 = vmatpush1.msra.mxu0 %v2959
        %2977 = vmatprep.subr.mxu0 0.0
        %2978 = vmatpush1.msra.mxu0 %v2960
        %2979 = vmatprep.subr.mxu0 0.0
        %2980 = vmatpush1.msra.mxu0 %v2961
        %2981 = vmatprep.subr.mxu0 0.0
        %2982 = vmatpush1.msra.mxu0 %v2962
        %2983 = vmatprep.subr.mxu0 0.0
        %2984 = vmatpush1.msra.mxu0 %v2963
        %2985 = vmatprep.subr.mxu0 0.0
        %2986 = vmatpush1.msra.mxu0 %v2964
        %2987 = vmatprep.subr.mxu0 0.0
        %2988 = vmatpush1.msra.mxu0 0.0
        %2989 = vmatprep.subr.mxu0 0.0
        %2990 = vmatpush1.msra.mxu0 0.0
        %2991 = vmatprep.subr.mxu0 0.0
        %2992 = vmatpush1.msra.mxu0 0.0
        %2993 = vmatprep.subr.mxu0 0.0
        %2994 = vmatpush1.msra.mxu0 0.0
        %2995 = vmatprep.subr.mxu0 0.0
        %2996 = vmatpush1.msra.mxu0 0.0
        %2997 = vmatprep.subr.mxu0 0.0
        %2998 = vmatpush1.msra.mxu0 0.0
        %2999 = vmatprep.subr.mxu0 0.0
        %3000 = vmatpush1.msra.mxu0 0.0
        %3001 = vmatprep.subr.mxu0 0.0
        %3002 = vmatpush1.msra.mxu0 0.0
        %3003 = vmatprep.subr.mxu0 0.0
        %3004 = vmatpush1.msra.mxu0 0.0
        %3005 = vmatprep.subr.mxu0 0.0
        %3006 = vmatpush1.msra.mxu0 0.0
        %3007 = vmatprep.subr.mxu0 0.0
        %3008 = vmatpush1.msra.mxu0 0.0
        %3009 = vmatprep.subr.mxu0 0.0
        %3010 = vmatpush1.msra.mxu0 0.0
        %3011 = vmatprep.subr.mxu0 0.0
        %3012 = vmatpush1.msra.mxu0 0.0
        %3013 = vmatprep.subr.mxu0 0.0
        %3014 = vmatpush1.msra.mxu0 0.0
        %3015 = vmatprep.subr.mxu0 0.0
        %3016 = vmatpush1.msra.mxu0 0.0
        %3017 = vmatprep.subr.mxu0 0.0
        %3018 = vmatpush1.msra.mxu0 0.0
        %3019 = vmatprep.subr.mxu0 0.0
        %3020 = vmatpush1.msra.mxu0 0.0
        %3021 = vmatprep.subr.mxu0 0.0
        %3022 = vmatpush1.msra.mxu0 0.0
        %3023 = vmatprep.subr.mxu0 0.0
        %3024 = vmatpush1.msra.mxu0 0.0
        %3025 = vmatprep.subr.mxu0 0.0
        %3026 = vmatpush1.msra.mxu0 0.0
        %3027 = vmatprep.subr.mxu0 0.0
        %3028 = vmatpush1.msra.mxu0 0.0
        %3029 = vmatprep.subr.mxu0 0.0
        %3030 = vmatpush1.msra.mxu0 0.0
        %3031 = vmatprep.subr.mxu0 0.0
        %3032 = vmatpush1.msra.mxu0 0.0
        %3033 = vmatprep.subr.mxu0 0.0
        %3034 = vmatpush1.msra.mxu0 0.0
        %3035 = vmatprep.mubr.f32.mxu0 0.0
        %3036 = vmatmul.mubr.f32.gmra.mrb[0].mxu0 %v2966
        %v3037 = vpop.f32.mrb[0].mxu0
        %v3038 = vadd.f32 0.0, %v3037
        %v3039 = vpop.f32.mrb[0].mxu0
        %3040 = vmatprep.mubr.f32.mxu0 0.0
        %3041 = vmatmul.mubr.f32.gmra.mrb[0].mxu0 %v2969
        %v3042 = vpop.f32.mrb[0].mxu0
        %v3043 = vadd.f32 0.0, %v3042
        %v3044 = vpop.f32.mrb[0].mxu0
        %3045 = vdwg.mxu0
        %v3046 = vadd.f32 %v2952, %v3038
        %v3047 = vadd.f32 %v2953, %v3043
        %v3048 = vld [vmem:[#allocation3 + $0xc] sm:$0xff]
        %v3049 = vld [vmem:[#allocation3 + $0x14] sm:$0x1f]
        %s3050 = scalar_lea.vmem [#allocation9], 512
        %v3051 = vld [vmem:[%s3050] sm:$0xff]
        %v3052 = vld [vmem:[%s3050 + $0x8] sm:$0xff]
        %v3053 = vld [vmem:[%s3050 + $0x10] sm:$0xff]
        %v3054 = vld [vmem:[%s3050 + $0x18] sm:$0xff]
        %v3055 = vld [vmem:[%s3050 + $0x20] sm:$0xff]
        %v3056 = vld [vmem:[%s3050 + $0x28] sm:$0xff]
        %v3057 = vld [vmem:[%s3050 + $0x30] sm:$0xff]
        %v3058 = vld [vmem:[%s3050 + $0x38] sm:$0xff]
        %v3060 = vsel %vm586, %v3048, 0
        %v3063 = vsel %vm586, %v3049, 0
        %3065 = vmatprep.subr.mxu0 0.0
        %3066 = vmatpush1.msra.mxu0 %v3051
        %3067 = vmatprep.subr.mxu0 0.0
        %3068 = vmatpush1.msra.mxu0 %v3052
        %3069 = vmatprep.subr.mxu0 0.0
        %3070 = vmatpush1.msra.mxu0 %v3053
        %3071 = vmatprep.subr.mxu0 0.0
        %3072 = vmatpush1.msra.mxu0 %v3054
        %3073 = vmatprep.subr.mxu0 0.0
        %3074 = vmatpush1.msra.mxu0 %v3055
        %3075 = vmatprep.subr.mxu0 0.0
        %3076 = vmatpush1.msra.mxu0 %v3056
        %3077 = vmatprep.subr.mxu0 0.0
        %3078 = vmatpush1.msra.mxu0 %v3057
        %3079 = vmatprep.subr.mxu0 0.0
        %3080 = vmatpush1.msra.mxu0 %v3058
        %3081 = vmatprep.subr.mxu0 0.0
        %3082 = vmatpush1.msra.mxu0 0.0
        %3083 = vmatprep.subr.mxu0 0.0
        %3084 = vmatpush1.msra.mxu0 0.0
        %3085 = vmatprep.subr.mxu0 0.0
        %3086 = vmatpush1.msra.mxu0 0.0
        %3087 = vmatprep.subr.mxu0 0.0
        %3088 = vmatpush1.msra.mxu0 0.0
        %3089 = vmatprep.subr.mxu0 0.0
        %3090 = vmatpush1.msra.mxu0 0.0
        %3091 = vmatprep.subr.mxu0 0.0
        %3092 = vmatpush1.msra.mxu0 0.0
        %3093 = vmatprep.subr.mxu0 0.0
        %3094 = vmatpush1.msra.mxu0 0.0
        %3095 = vmatprep.subr.mxu0 0.0
        %3096 = vmatpush1.msra.mxu0 0.0
        %3097 = vmatprep.subr.mxu0 0.0
        %3098 = vmatpush1.msra.mxu0 0.0
        %3099 = vmatprep.subr.mxu0 0.0
        %3100 = vmatpush1.msra.mxu0 0.0
        %3101 = vmatprep.subr.mxu0 0.0
        %3102 = vmatpush1.msra.mxu0 0.0
        %3103 = vmatprep.subr.mxu0 0.0
        %3104 = vmatpush1.msra.mxu0 0.0
        %3105 = vmatprep.subr.mxu0 0.0
        %3106 = vmatpush1.msra.mxu0 0.0
        %3107 = vmatprep.subr.mxu0 0.0
        %3108 = vmatpush1.msra.mxu0 0.0
        %3109 = vmatprep.subr.mxu0 0.0
        %3110 = vmatpush1.msra.mxu0 0.0
        %3111 = vmatprep.subr.mxu0 0.0
        %3112 = vmatpush1.msra.mxu0 0.0
        %3113 = vmatprep.subr.mxu0 0.0
        %3114 = vmatpush1.msra.mxu0 0.0
        %3115 = vmatprep.subr.mxu0 0.0
        %3116 = vmatpush1.msra.mxu0 0.0
        %3117 = vmatprep.subr.mxu0 0.0
        %3118 = vmatpush1.msra.mxu0 0.0
        %3119 = vmatprep.subr.mxu0 0.0
        %3120 = vmatpush1.msra.mxu0 0.0
        %3121 = vmatprep.subr.mxu0 0.0
        %3122 = vmatpush1.msra.mxu0 0.0
        %3123 = vmatprep.subr.mxu0 0.0
        %3124 = vmatpush1.msra.mxu0 0.0
        %3125 = vmatprep.subr.mxu0 0.0
        %3126 = vmatpush1.msra.mxu0 0.0
        %3127 = vmatprep.subr.mxu0 0.0
        %3128 = vmatpush1.msra.mxu0 0.0
        %3129 = vmatprep.mubr.f32.mxu0 0.0
        %3130 = vmatmul.mubr.f32.gmra.mrb[0].mxu0 %v3060
        %v3131 = vpop.f32.mrb[0].mxu0
        %v3132 = vadd.f32 0.0, %v3131
        %v3133 = vpop.f32.mrb[0].mxu0
        %3134 = vmatprep.mubr.f32.mxu0 0.0
        %3135 = vmatmul.mubr.f32.gmra.mrb[0].mxu0 %v3063
        %v3136 = vpop.f32.mrb[0].mxu0
        %v3137 = vadd.f32 0.0, %v3136
        %v3138 = vpop.f32.mrb[0].mxu0
        %3139 = vdwg.mxu0
        %v3140 = vadd.f32 %v3046, %v3132
        %v3141 = vadd.f32 %v3047, %v3137
        %v3142 = vld [vmem:[%s6] sm:$0x1]
        %v3144 = vlaneseq
        %v3145 = vshrl.u32 %v3144, 7
        %v3146 = vsub.s32 0, %v3145
        %v3147 = vrot.slane %v3142, %v3146
        %v3149 = vadd.f32 %v3140, %v3147
        %v3150 = vadd.f32 %v3141, %v3147
        %v3151 = vmax.f32 %v3149, 0.0
        %v3152 = vmax.f32 %v3150, 0.0
        %3153 = vst [vmem:[#allocation4] sm:$0x7] %v3151
        %3154 = vst [vmem:[#allocation4 - $0x2] sm:$0xe0] %v3151
        %3155 = vst [vmem:[#allocation4 + $0x4] sm:$0x1c] %v3152
        %v3156 = vld [vmem:[#allocation4] sm:$0xff]
        %v3157 = vld [vmem:[%s7] sm:$0xff]
        %v3158 = vld [vmem:[%s7 + $0x8] sm:$0xff]
        %v3159 = vld [vmem:[%s7 + $0x10] sm:$0xff]
        %v3160 = vld [vmem:[%s7 + $0x18] sm:$0xff]
        %v3161 = vld [vmem:[%s7 + $0x20] sm:$0xff]
        %v3162 = vld [vmem:[%s7 + $0x28] sm:$0xff]
        %v3163 = vld [vmem:[%s7 + $0x30] sm:$0xff]
        %v3164 = vld [vmem:[%s7 + $0x38] sm:$0xff]
        %v3165 = vld [vmem:[%s7 + $0x40] sm:$0xff]
        %v3166 = vld [vmem:[%s7 + $0x48] sm:$0xff]
        %v3167 = vld [vmem:[%s7 + $0x50] sm:$0xff]
        %v3168 = vld [vmem:[%s7 + $0x58] sm:$0xff]
        %v3169 = vld [vmem:[%s7 + $0x60] sm:$0xff]
        %v3170 = vld [vmem:[%s7 + $0x68] sm:$0xff]
        %v3171 = vld [vmem:[%s7 + $0x70] sm:$0xff]
        %v3172 = vld [vmem:[%s7 + $0x78] sm:$0xff]
        %v3173 = vld [vmem:[%s7 + $0x80] sm:$0xff]
        %v3174 = vld [vmem:[%s7 + $0x88] sm:$0xff]
        %v3175 = vld [vmem:[%s7 + $0x90] sm:$0xff]
        %v3176 = vld [vmem:[%s7 + $0x98] sm:$0xff]
        %v3177 = vld [vmem:[%s7 + $0xa0] sm:$0xff]
        %v3178 = vld [vmem:[%s7 + $0xa8] sm:$0xff]
        %v3179 = vld [vmem:[%s7 + $0xb0] sm:$0xff]
        %v3180 = vld [vmem:[%s7 + $0xb8] sm:$0xff]
        %v3181 = vld [vmem:[%s7 + $0xc0] sm:$0xff]
        %v3182 = vld [vmem:[%s7 + $0xc8] sm:$0xff]
        %v3183 = vld [vmem:[%s7 + $0xd0] sm:$0xff]
        %v3184 = vld [vmem:[%s7 + $0xd8] sm:$0xff]
        %v3185 = vld [vmem:[%s7 + $0xe0] sm:$0xff]
        %v3186 = vld [vmem:[%s7 + $0xe8] sm:$0xff]
        %v3187 = vld [vmem:[%s7 + $0xf0] sm:$0xff]
        %v3188 = vld [vmem:[%s7 + $0xf8] sm:$0xff]
        %v3189 = vld [vmem:[#allocation4 + $0x1] sm:$0xff]
        %s3190 = scalar_lea.vmem %s7, 256
        %v3191 = vld [vmem:[%s3190] sm:$0xff]
        %v3192 = vld [vmem:[%s3190 + $0x8] sm:$0xff]
        %v3193 = vld [vmem:[%s3190 + $0x10] sm:$0xff]
        %v3194 = vld [vmem:[%s3190 + $0x18] sm:$0xff]
        %v3195 = vld [vmem:[%s3190 + $0x20] sm:$0xff]
        %v3196 = vld [vmem:[%s3190 + $0x28] sm:$0xff]
        %v3197 = vld [vmem:[%s3190 + $0x30] sm:$0xff]
        %v3198 = vld [vmem:[%s3190 + $0x38] sm:$0xff]
        %v3199 = vld [vmem:[%s3190 + $0x40] sm:$0xff]
        %v3200 = vld [vmem:[%s3190 + $0x48] sm:$0xff]
        %v3201 = vld [vmem:[%s3190 + $0x50] sm:$0xff]
        %v3202 = vld [vmem:[%s3190 + $0x58] sm:$0xff]
        %v3203 = vld [vmem:[%s3190 + $0x60] sm:$0xff]
        %v3204 = vld [vmem:[%s3190 + $0x68] sm:$0xff]
        %v3205 = vld [vmem:[%s3190 + $0x70] sm:$0xff]
        %v3206 = vld [vmem:[%s3190 + $0x78] sm:$0xff]
        %v3207 = vld [vmem:[%s3190 + $0x80] sm:$0xff]
        %v3208 = vld [vmem:[%s3190 + $0x88] sm:$0xff]
        %v3209 = vld [vmem:[%s3190 + $0x90] sm:$0xff]
        %v3210 = vld [vmem:[%s3190 + $0x98] sm:$0xff]
        %v3211 = vld [vmem:[%s3190 + $0xa0] sm:$0xff]
        %v3212 = vld [vmem:[%s3190 + $0xa8] sm:$0xff]
        %v3213 = vld [vmem:[%s3190 + $0xb0] sm:$0xff]
        %v3214 = vld [vmem:[%s3190 + $0xb8] sm:$0xff]
        %v3215 = vld [vmem:[%s3190 + $0xc0] sm:$0xff]
        %v3216 = vld [vmem:[%s3190 + $0xc8] sm:$0xff]
        %v3217 = vld [vmem:[%s3190 + $0xd0] sm:$0xff]
        %v3218 = vld [vmem:[%s3190 + $0xd8] sm:$0xff]
        %v3219 = vld [vmem:[%s3190 + $0xe0] sm:$0xff]
        %v3220 = vld [vmem:[%s3190 + $0xe8] sm:$0xff]
        %v3221 = vld [vmem:[%s3190 + $0xf0] sm:$0xff]
        %v3222 = vld [vmem:[%s3190 + $0xf8] sm:$0xff]
        %3223 = vmatprep.subr.mxu0 %v3192
        %3224 = vmatpush1.msra.mxu0 %v3191
        %3225 = vmatprep.subr.mxu0 %v3194
        %3226 = vmatpush1.msra.mxu0 %v3193
        %3227 = vmatprep.subr.mxu0 %v3196
        %3228 = vmatpush1.msra.mxu0 %v3195
        %3229 = vmatprep.subr.mxu0 %v3198
        %3230 = vmatpush1.msra.mxu0 %v3197
        %3231 = vmatprep.subr.mxu0 %v3200
        %3232 = vmatpush1.msra.mxu0 %v3199
        %3233 = vmatprep.subr.mxu0 %v3202
        %3234 = vmatpush1.msra.mxu0 %v3201
        %3235 = vmatprep.subr.mxu0 %v3204
        %3236 = vmatpush1.msra.mxu0 %v3203
        %3237 = vmatprep.subr.mxu0 %v3206
        %3238 = vmatpush1.msra.mxu0 %v3205
        %3239 = vmatprep.subr.mxu0 %v3208
        %3240 = vmatpush1.msra.mxu0 %v3207
        %3241 = vmatprep.subr.mxu0 %v3210
        %3242 = vmatpush1.msra.mxu0 %v3209
        %3243 = vmatprep.subr.mxu0 %v3212
        %3244 = vmatpush1.msra.mxu0 %v3211
        %3245 = vmatprep.subr.mxu0 %v3214
        %3246 = vmatpush1.msra.mxu0 %v3213
        %3247 = vmatprep.subr.mxu0 %v3216
        %3248 = vmatpush1.msra.mxu0 %v3215
        %3249 = vmatprep.subr.mxu0 %v3218
        %3250 = vmatpush1.msra.mxu0 %v3217
        %3251 = vmatprep.subr.mxu0 %v3220
        %3252 = vmatpush1.msra.mxu0 %v3219
        %3253 = vmatprep.subr.mxu0 %v3222
        %3254 = vmatpush1.msra.mxu0 %v3221
        %3255 = vmatprep.subr.mxu0 0.0
        %3256 = vmatpush1.msra.mxu0 0.0
        %3257 = vmatprep.subr.mxu0 0.0
        %3258 = vmatpush1.msra.mxu0 0.0
        %3259 = vmatprep.subr.mxu0 0.0
        %3260 = vmatpush1.msra.mxu0 0.0
        %3261 = vmatprep.subr.mxu0 0.0
        %3262 = vmatpush1.msra.mxu0 0.0
        %3263 = vmatprep.subr.mxu0 0.0
        %3264 = vmatpush1.msra.mxu0 0.0
        %3265 = vmatprep.subr.mxu0 0.0
        %3266 = vmatpush1.msra.mxu0 0.0
        %3267 = vmatprep.subr.mxu0 0.0
        %3268 = vmatpush1.msra.mxu0 0.0
        %3269 = vmatprep.subr.mxu0 0.0
        %3270 = vmatpush1.msra.mxu0 0.0
        %3271 = vmatprep.subr.mxu0 0.0
        %3272 = vmatpush1.msra.mxu0 0.0
        %3273 = vmatprep.subr.mxu0 0.0
        %3274 = vmatpush1.msra.mxu0 0.0
        %3275 = vmatprep.subr.mxu0 0.0
        %3276 = vmatpush1.msra.mxu0 0.0
        %3277 = vmatprep.subr.mxu0 0.0
        %3278 = vmatpush1.msra.mxu0 0.0
        %3279 = vmatprep.subr.mxu0 0.0
        %3280 = vmatpush1.msra.mxu0 0.0
        %3281 = vmatprep.subr.mxu0 0.0
        %3282 = vmatpush1.msra.mxu0 0.0
        %3283 = vmatprep.subr.mxu0 0.0
        %3284 = vmatpush1.msra.mxu0 0.0
        %3285 = vmatprep.subr.mxu0 0.0
        %3286 = vmatpush1.msra.mxu0 0.0
        %3287 = vmatprep.mubr.f32.mxu0 0.0
        %3288 = vmatmul.mubr.f32.gmra.mrb[0].mxu0 %v3189
        %v3289 = vpop.f32.mrb[0].mxu0
        %v3290 = vadd.f32 0.0, %v3289
        %v3291 = vpop.f32.mrb[0].mxu0
        %v3292 = vadd.f32 0.0, %v3291
        %3293 = vdwg.mxu0
        %3294 = vmatprep.subr.mxu0 %v3158
        %3295 = vmatpush1.msra.mxu0 %v3157
        %3296 = vmatprep.subr.mxu0 %v3160
        %3297 = vmatpush1.msra.mxu0 %v3159
        %3298 = vmatprep.subr.mxu0 %v3162
        %3299 = vmatpush1.msra.mxu0 %v3161
        %3300 = vmatprep.subr.mxu0 %v3164
        %3301 = vmatpush1.msra.mxu0 %v3163
        %3302 = vmatprep.subr.mxu0 %v3166
        %3303 = vmatpush1.msra.mxu0 %v3165
        %3304 = vmatprep.subr.mxu0 %v3168
        %3305 = vmatpush1.msra.mxu0 %v3167
        %3306 = vmatprep.subr.mxu0 %v3170
        %3307 = vmatpush1.msra.mxu0 %v3169
        %3308 = vmatprep.subr.mxu0 %v3172
        %3309 = vmatpush1.msra.mxu0 %v3171
        %3310 = vmatprep.subr.mxu0 %v3174
        %3311 = vmatpush1.msra.mxu0 %v3173
        %3312 = vmatprep.subr.mxu0 %v3176
        %3313 = vmatpush1.msra.mxu0 %v3175
        %3314 = vmatprep.subr.mxu0 %v3178
        %3315 = vmatpush1.msra.mxu0 %v3177
        %3316 = vmatprep.subr.mxu0 %v3180
        %3317 = vmatpush1.msra.mxu0 %v3179
        %3318 = vmatprep.subr.mxu0 %v3182
        %3319 = vmatpush1.msra.mxu0 %v3181
        %3320 = vmatprep.subr.mxu0 %v3184
        %3321 = vmatpush1.msra.mxu0 %v3183
        %3322 = vmatprep.subr.mxu0 %v3186
        %3323 = vmatpush1.msra.mxu0 %v3185
        %3324 = vmatprep.subr.mxu0 %v3188
        %3325 = vmatpush1.msra.mxu0 %v3187
        %3326 = vmatprep.subr.mxu0 0.0
        %3327 = vmatpush1.msra.mxu0 0.0
        %3328 = vmatprep.subr.mxu0 0.0
        %3329 = vmatpush1.msra.mxu0 0.0
        %3330 = vmatprep.subr.mxu0 0.0
        %3331 = vmatpush1.msra.mxu0 0.0
        %3332 = vmatprep.subr.mxu0 0.0
        %3333 = vmatpush1.msra.mxu0 0.0
        %3334 = vmatprep.subr.mxu0 0.0
        %3335 = vmatpush1.msra.mxu0 0.0
        %3336 = vmatprep.subr.mxu0 0.0
        %3337 = vmatpush1.msra.mxu0 0.0
        %3338 = vmatprep.subr.mxu0 0.0
        %3339 = vmatpush1.msra.mxu0 0.0
        %3340 = vmatprep.subr.mxu0 0.0
        %3341 = vmatpush1.msra.mxu0 0.0
        %3342 = vmatprep.subr.mxu0 0.0
        %3343 = vmatpush1.msra.mxu0 0.0
        %3344 = vmatprep.subr.mxu0 0.0
        %3345 = vmatpush1.msra.mxu0 0.0
        %3346 = vmatprep.subr.mxu0 0.0
        %3347 = vmatpush1.msra.mxu0 0.0
        %3348 = vmatprep.subr.mxu0 0.0
        %3349 = vmatpush1.msra.mxu0 0.0
        %3350 = vmatprep.subr.mxu0 0.0
        %3351 = vmatpush1.msra.mxu0 0.0
        %3352 = vmatprep.subr.mxu0 0.0
        %3353 = vmatpush1.msra.mxu0 0.0
        %3354 = vmatprep.subr.mxu0 0.0
        %3355 = vmatpush1.msra.mxu0 0.0
        %3356 = vmatprep.subr.mxu0 0.0
        %3357 = vmatpush1.msra.mxu0 0.0
        %3358 = vmatprep.mubr.f32.mxu0 0.0
        %3359 = vmatmul.mubr.f32.gmra.mrb[0].mxu0 %v3156
        %v3360 = vpop.f32.mrb[0].mxu0
        %v3361 = vadd.f32 %v3290, %v3360
        %v3362 = vpop.f32.mrb[0].mxu0
        %v3363 = vadd.f32 %v3292, %v3362
        %3364 = vdwg.mxu0
        %v3365 = vld [vmem:[#allocation4 + $0x2] sm:$0xff]
        %s3366 = scalar_lea.vmem %s7, 512
        %v3367 = vld [vmem:[%s3366] sm:$0xff]
        %v3368 = vld [vmem:[%s3366 + $0x8] sm:$0xff]
        %v3369 = vld [vmem:[%s3366 + $0x10] sm:$0xff]
        %v3370 = vld [vmem:[%s3366 + $0x18] sm:$0xff]
        %v3371 = vld [vmem:[%s3366 + $0x20] sm:$0xff]
        %v3372 = vld [vmem:[%s3366 + $0x28] sm:$0xff]
        %v3373 = vld [vmem:[%s3366 + $0x30] sm:$0xff]
        %v3374 = vld [vmem:[%s3366 + $0x38] sm:$0xff]
        %v3375 = vld [vmem:[%s3366 + $0x40] sm:$0xff]
        %v3376 = vld [vmem:[%s3366 + $0x48] sm:$0xff]
        %v3377 = vld [vmem:[%s3366 + $0x50] sm:$0xff]
        %v3378 = vld [vmem:[%s3366 + $0x58] sm:$0xff]
        %v3379 = vld [vmem:[%s3366 + $0x60] sm:$0xff]
        %v3380 = vld [vmem:[%s3366 + $0x68] sm:$0xff]
        %v3381 = vld [vmem:[%s3366 + $0x70] sm:$0xff]
        %v3382 = vld [vmem:[%s3366 + $0x78] sm:$0xff]
        %v3383 = vld [vmem:[%s3366 + $0x80] sm:$0xff]
        %v3384 = vld [vmem:[%s3366 + $0x88] sm:$0xff]
        %v3385 = vld [vmem:[%s3366 + $0x90] sm:$0xff]
        %v3386 = vld [vmem:[%s3366 + $0x98] sm:$0xff]
        %v3387 = vld [vmem:[%s3366 + $0xa0] sm:$0xff]
        %v3388 = vld [vmem:[%s3366 + $0xa8] sm:$0xff]
        %v3389 = vld [vmem:[%s3366 + $0xb0] sm:$0xff]
        %v3390 = vld [vmem:[%s3366 + $0xb8] sm:$0xff]
        %v3391 = vld [vmem:[%s3366 + $0xc0] sm:$0xff]
        %v3392 = vld [vmem:[%s3366 + $0xc8] sm:$0xff]
        %v3393 = vld [vmem:[%s3366 + $0xd0] sm:$0xff]
        %v3394 = vld [vmem:[%s3366 + $0xd8] sm:$0xff]
        %v3395 = vld [vmem:[%s3366 + $0xe0] sm:$0xff]
        %v3396 = vld [vmem:[%s3366 + $0xe8] sm:$0xff]
        %v3397 = vld [vmem:[%s3366 + $0xf0] sm:$0xff]
        %v3398 = vld [vmem:[%s3366 + $0xf8] sm:$0xff]
        %3399 = vmatprep.subr.mxu0 %v3368
        %3400 = vmatpush1.msra.mxu0 %v3367
        %3401 = vmatprep.subr.mxu0 %v3370
        %3402 = vmatpush1.msra.mxu0 %v3369
        %3403 = vmatprep.subr.mxu0 %v3372
        %3404 = vmatpush1.msra.mxu0 %v3371
        %3405 = vmatprep.subr.mxu0 %v3374
        %3406 = vmatpush1.msra.mxu0 %v3373
        %3407 = vmatprep.subr.mxu0 %v3376
        %3408 = vmatpush1.msra.mxu0 %v3375
        %3409 = vmatprep.subr.mxu0 %v3378
        %3410 = vmatpush1.msra.mxu0 %v3377
        %3411 = vmatprep.subr.mxu0 %v3380
        %3412 = vmatpush1.msra.mxu0 %v3379
        %3413 = vmatprep.subr.mxu0 %v3382
        %3414 = vmatpush1.msra.mxu0 %v3381
        %3415 = vmatprep.subr.mxu0 %v3384
        %3416 = vmatpush1.msra.mxu0 %v3383
        %3417 = vmatprep.subr.mxu0 %v3386
        %3418 = vmatpush1.msra.mxu0 %v3385
        %3419 = vmatprep.subr.mxu0 %v3388
        %3420 = vmatpush1.msra.mxu0 %v3387
        %3421 = vmatprep.subr.mxu0 %v3390
        %3422 = vmatpush1.msra.mxu0 %v3389
        %3423 = vmatprep.subr.mxu0 %v3392
        %3424 = vmatpush1.msra.mxu0 %v3391
        %3425 = vmatprep.subr.mxu0 %v3394
        %3426 = vmatpush1.msra.mxu0 %v3393
        %3427 = vmatprep.subr.mxu0 %v3396
        %3428 = vmatpush1.msra.mxu0 %v3395
        %3429 = vmatprep.subr.mxu0 %v3398
        %3430 = vmatpush1.msra.mxu0 %v3397
        %3431 = vmatprep.subr.mxu0 0.0
        %3432 = vmatpush1.msra.mxu0 0.0
        %3433 = vmatprep.subr.mxu0 0.0
        %3434 = vmatpush1.msra.mxu0 0.0
        %3435 = vmatprep.subr.mxu0 0.0
        %3436 = vmatpush1.msra.mxu0 0.0
        %3437 = vmatprep.subr.mxu0 0.0
        %3438 = vmatpush1.msra.mxu0 0.0
        %3439 = vmatprep.subr.mxu0 0.0
        %3440 = vmatpush1.msra.mxu0 0.0
        %3441 = vmatprep.subr.mxu0 0.0
        %3442 = vmatpush1.msra.mxu0 0.0
        %3443 = vmatprep.subr.mxu0 0.0
        %3444 = vmatpush1.msra.mxu0 0.0
        %3445 = vmatprep.subr.mxu0 0.0
        %3446 = vmatpush1.msra.mxu0 0.0
        %3447 = vmatprep.subr.mxu0 0.0
        %3448 = vmatpush1.msra.mxu0 0.0
        %3449 = vmatprep.subr.mxu0 0.0
        %3450 = vmatpush1.msra.mxu0 0.0
        %3451 = vmatprep.subr.mxu0 0.0
        %3452 = vmatpush1.msra.mxu0 0.0
        %3453 = vmatprep.subr.mxu0 0.0
        %3454 = vmatpush1.msra.mxu0 0.0
        %3455 = vmatprep.subr.mxu0 0.0
        %3456 = vmatpush1.msra.mxu0 0.0
        %3457 = vmatprep.subr.mxu0 0.0
        %3458 = vmatpush1.msra.mxu0 0.0
        %3459 = vmatprep.subr.mxu0 0.0
        %3460 = vmatpush1.msra.mxu0 0.0
        %3461 = vmatprep.subr.mxu0 0.0
        %3462 = vmatpush1.msra.mxu0 0.0
        %3463 = vmatprep.mubr.f32.mxu0 0.0
        %3464 = vmatmul.mubr.f32.gmra.mrb[0].mxu0 %v3365
        %v3465 = vpop.f32.mrb[0].mxu0
        %v3466 = vadd.f32 0.0, %v3465
        %v3467 = vpop.f32.mrb[0].mxu0
        %v3468 = vadd.f32 0.0, %v3467
        %3469 = vdwg.mxu0
        %v3470 = vadd.f32 %v3361, %v3466
        %v3471 = vadd.f32 %v3363, %v3468
        %v3472 = vld [vmem:[#allocation4 + $0x3] sm:$0xff]
        %s3473 = scalar_lea.vmem %s7, 768
        %v3474 = vld [vmem:[%s3473] sm:$0xff]
        %v3475 = vld [vmem:[%s3473 + $0x8] sm:$0xff]
        %v3476 = vld [vmem:[%s3473 + $0x10] sm:$0xff]
        %v3477 = vld [vmem:[%s3473 + $0x18] sm:$0xff]
        %v3478 = vld [vmem:[%s3473 + $0x20] sm:$0xff]
        %v3479 = vld [vmem:[%s3473 + $0x28] sm:$0xff]
        %v3480 = vld [vmem:[%s3473 + $0x30] sm:$0xff]
        %v3481 = vld [vmem:[%s3473 + $0x38] sm:$0xff]
        %v3482 = vld [vmem:[%s3473 + $0x40] sm:$0xff]
        %v3483 = vld [vmem:[%s3473 + $0x48] sm:$0xff]
        %v3484 = vld [vmem:[%s3473 + $0x50] sm:$0xff]
        %v3485 = vld [vmem:[%s3473 + $0x58] sm:$0xff]
        %v3486 = vld [vmem:[%s3473 + $0x60] sm:$0xff]
        %v3487 = vld [vmem:[%s3473 + $0x68] sm:$0xff]
        %v3488 = vld [vmem:[%s3473 + $0x70] sm:$0xff]
        %v3489 = vld [vmem:[%s3473 + $0x78] sm:$0xff]
        %v3490 = vld [vmem:[%s3473 + $0x80] sm:$0xff]
        %v3491 = vld [vmem:[%s3473 + $0x88] sm:$0xff]
        %v3492 = vld [vmem:[%s3473 + $0x90] sm:$0xff]
        %v3493 = vld [vmem:[%s3473 + $0x98] sm:$0xff]
        %v3494 = vld [vmem:[%s3473 + $0xa0] sm:$0xff]
        %v3495 = vld [vmem:[%s3473 + $0xa8] sm:$0xff]
        %v3496 = vld [vmem:[%s3473 + $0xb0] sm:$0xff]
        %v3497 = vld [vmem:[%s3473 + $0xb8] sm:$0xff]
        %v3498 = vld [vmem:[%s3473 + $0xc0] sm:$0xff]
        %v3499 = vld [vmem:[%s3473 + $0xc8] sm:$0xff]
        %v3500 = vld [vmem:[%s3473 + $0xd0] sm:$0xff]
        %v3501 = vld [vmem:[%s3473 + $0xd8] sm:$0xff]
        %v3502 = vld [vmem:[%s3473 + $0xe0] sm:$0xff]
        %v3503 = vld [vmem:[%s3473 + $0xe8] sm:$0xff]
        %v3504 = vld [vmem:[%s3473 + $0xf0] sm:$0xff]
        %v3505 = vld [vmem:[%s3473 + $0xf8] sm:$0xff]
        %3506 = vmatprep.subr.mxu0 %v3475
        %3507 = vmatpush1.msra.mxu0 %v3474
        %3508 = vmatprep.subr.mxu0 %v3477
        %3509 = vmatpush1.msra.mxu0 %v3476
        %3510 = vmatprep.subr.mxu0 %v3479
        %3511 = vmatpush1.msra.mxu0 %v3478
        %3512 = vmatprep.subr.mxu0 %v3481
        %3513 = vmatpush1.msra.mxu0 %v3480
        %3514 = vmatprep.subr.mxu0 %v3483
        %3515 = vmatpush1.msra.mxu0 %v3482
        %3516 = vmatprep.subr.mxu0 %v3485
        %3517 = vmatpush1.msra.mxu0 %v3484
        %3518 = vmatprep.subr.mxu0 %v3487
        %3519 = vmatpush1.msra.mxu0 %v3486
        %3520 = vmatprep.subr.mxu0 %v3489
        %3521 = vmatpush1.msra.mxu0 %v3488
        %3522 = vmatprep.subr.mxu0 %v3491
        %3523 = vmatpush1.msra.mxu0 %v3490
        %3524 = vmatprep.subr.mxu0 %v3493
        %3525 = vmatpush1.msra.mxu0 %v3492
        %3526 = vmatprep.subr.mxu0 %v3495
        %3527 = vmatpush1.msra.mxu0 %v3494
        %3528 = vmatprep.subr.mxu0 %v3497
        %3529 = vmatpush1.msra.mxu0 %v3496
        %3530 = vmatprep.subr.mxu0 %v3499
        %3531 = vmatpush1.msra.mxu0 %v3498
        %3532 = vmatprep.subr.mxu0 %v3501
        %3533 = vmatpush1.msra.mxu0 %v3500
        %3534 = vmatprep.subr.mxu0 %v3503
        %3535 = vmatpush1.msra.mxu0 %v3502
        %3536 = vmatprep.subr.mxu0 %v3505
        %3537 = vmatpush1.msra.mxu0 %v3504
        %3538 = vmatprep.subr.mxu0 0.0
        %3539 = vmatpush1.msra.mxu0 0.0
        %3540 = vmatprep.subr.mxu0 0.0
        %3541 = vmatpush1.msra.mxu0 0.0
        %3542 = vmatprep.subr.mxu0 0.0
        %3543 = vmatpush1.msra.mxu0 0.0
        %3544 = vmatprep.subr.mxu0 0.0
        %3545 = vmatpush1.msra.mxu0 0.0
        %3546 = vmatprep.subr.mxu0 0.0
        %3547 = vmatpush1.msra.mxu0 0.0
        %3548 = vmatprep.subr.mxu0 0.0
        %3549 = vmatpush1.msra.mxu0 0.0
        %3550 = vmatprep.subr.mxu0 0.0
        %3551 = vmatpush1.msra.mxu0 0.0
        %3552 = vmatprep.subr.mxu0 0.0
        %3553 = vmatpush1.msra.mxu0 0.0
        %3554 = vmatprep.subr.mxu0 0.0
        %3555 = vmatpush1.msra.mxu0 0.0
        %3556 = vmatprep.subr.mxu0 0.0
        %3557 = vmatpush1.msra.mxu0 0.0
        %3558 = vmatprep.subr.mxu0 0.0
        %3559 = vmatpush1.msra.mxu0 0.0
        %3560 = vmatprep.subr.mxu0 0.0
        %3561 = vmatpush1.msra.mxu0 0.0
        %3562 = vmatprep.subr.mxu0 0.0
        %3563 = vmatpush1.msra.mxu0 0.0
        %3564 = vmatprep.subr.mxu0 0.0
        %3565 = vmatpush1.msra.mxu0 0.0
        %3566 = vmatprep.subr.mxu0 0.0
        %3567 = vmatpush1.msra.mxu0 0.0
        %3568 = vmatprep.subr.mxu0 0.0
        %3569 = vmatpush1.msra.mxu0 0.0
        %3570 = vmatprep.mubr.f32.mxu0 0.0
        %3571 = vmatmul.mubr.f32.gmra.mrb[0].mxu0 %v3472
        %v3572 = vpop.f32.mrb[0].mxu0
        %v3573 = vadd.f32 0.0, %v3572
        %v3574 = vpop.f32.mrb[0].mxu0
        %v3575 = vadd.f32 0.0, %v3574
        %3576 = vdwg.mxu0
        %v3577 = vadd.f32 %v3470, %v3573
        %v3578 = vadd.f32 %v3471, %v3575
        %v3579 = vld [vmem:[#allocation4 + $0x4] sm:$0xff]
        %s3580 = scalar_lea.vmem %s7, 1024
        %v3581 = vld [vmem:[%s3580] sm:$0xff]
        %v3582 = vld [vmem:[%s3580 + $0x8] sm:$0xff]
        %v3583 = vld [vmem:[%s3580 + $0x10] sm:$0xff]
        %v3584 = vld [vmem:[%s3580 + $0x18] sm:$0xff]
        %v3585 = vld [vmem:[%s3580 + $0x20] sm:$0xff]
        %v3586 = vld [vmem:[%s3580 + $0x28] sm:$0xff]
        %v3587 = vld [vmem:[%s3580 + $0x30] sm:$0xff]
        %v3588 = vld [vmem:[%s3580 + $0x38] sm:$0xff]
        %v3589 = vld [vmem:[%s3580 + $0x40] sm:$0xff]
        %v3590 = vld [vmem:[%s3580 + $0x48] sm:$0xff]
        %v3591 = vld [vmem:[%s3580 + $0x50] sm:$0xff]
        %v3592 = vld [vmem:[%s3580 + $0x58] sm:$0xff]
        %v3593 = vld [vmem:[%s3580 + $0x60] sm:$0xff]
        %v3594 = vld [vmem:[%s3580 + $0x68] sm:$0xff]
        %v3595 = vld [vmem:[%s3580 + $0x70] sm:$0xff]
        %v3596 = vld [vmem:[%s3580 + $0x78] sm:$0xff]
        %v3597 = vld [vmem:[%s3580 + $0x80] sm:$0xff]
        %v3598 = vld [vmem:[%s3580 + $0x88] sm:$0xff]
        %v3599 = vld [vmem:[%s3580 + $0x90] sm:$0xff]
        %v3600 = vld [vmem:[%s3580 + $0x98] sm:$0xff]
        %v3601 = vld [vmem:[%s3580 + $0xa0] sm:$0xff]
        %v3602 = vld [vmem:[%s3580 + $0xa8] sm:$0xff]
        %v3603 = vld [vmem:[%s3580 + $0xb0] sm:$0xff]
        %v3604 = vld [vmem:[%s3580 + $0xb8] sm:$0xff]
        %v3605 = vld [vmem:[%s3580 + $0xc0] sm:$0xff]
        %v3606 = vld [vmem:[%s3580 + $0xc8] sm:$0xff]
        %v3607 = vld [vmem:[%s3580 + $0xd0] sm:$0xff]
        %v3608 = vld [vmem:[%s3580 + $0xd8] sm:$0xff]
        %v3609 = vld [vmem:[%s3580 + $0xe0] sm:$0xff]
        %v3610 = vld [vmem:[%s3580 + $0xe8] sm:$0xff]
        %v3611 = vld [vmem:[%s3580 + $0xf0] sm:$0xff]
        %v3612 = vld [vmem:[%s3580 + $0xf8] sm:$0xff]
        %3613 = vmatprep.subr.mxu0 %v3582
        %3614 = vmatpush1.msra.mxu0 %v3581
        %3615 = vmatprep.subr.mxu0 %v3584
        %3616 = vmatpush1.msra.mxu0 %v3583
        %3617 = vmatprep.subr.mxu0 %v3586
        %3618 = vmatpush1.msra.mxu0 %v3585
        %3619 = vmatprep.subr.mxu0 %v3588
        %3620 = vmatpush1.msra.mxu0 %v3587
        %3621 = vmatprep.subr.mxu0 %v3590
        %3622 = vmatpush1.msra.mxu0 %v3589
        %3623 = vmatprep.subr.mxu0 %v3592
        %3624 = vmatpush1.msra.mxu0 %v3591
        %3625 = vmatprep.subr.mxu0 %v3594
        %3626 = vmatpush1.msra.mxu0 %v3593
        %3627 = vmatprep.subr.mxu0 %v3596
        %3628 = vmatpush1.msra.mxu0 %v3595
        %3629 = vmatprep.subr.mxu0 %v3598
        %3630 = vmatpush1.msra.mxu0 %v3597
        %3631 = vmatprep.subr.mxu0 %v3600
        %3632 = vmatpush1.msra.mxu0 %v3599
        %3633 = vmatprep.subr.mxu0 %v3602
        %3634 = vmatpush1.msra.mxu0 %v3601
        %3635 = vmatprep.subr.mxu0 %v3604
        %3636 = vmatpush1.msra.mxu0 %v3603
        %3637 = vmatprep.subr.mxu0 %v3606
        %3638 = vmatpush1.msra.mxu0 %v3605
        %3639 = vmatprep.subr.mxu0 %v3608
        %3640 = vmatpush1.msra.mxu0 %v3607
        %3641 = vmatprep.subr.mxu0 %v3610
        %3642 = vmatpush1.msra.mxu0 %v3609
        %3643 = vmatprep.subr.mxu0 %v3612
        %3644 = vmatpush1.msra.mxu0 %v3611
        %3645 = vmatprep.subr.mxu0 0.0
        %3646 = vmatpush1.msra.mxu0 0.0
        %3647 = vmatprep.subr.mxu0 0.0
        %3648 = vmatpush1.msra.mxu0 0.0
        %3649 = vmatprep.subr.mxu0 0.0
        %3650 = vmatpush1.msra.mxu0 0.0
        %3651 = vmatprep.subr.mxu0 0.0
        %3652 = vmatpush1.msra.mxu0 0.0
        %3653 = vmatprep.subr.mxu0 0.0
        %3654 = vmatpush1.msra.mxu0 0.0
        %3655 = vmatprep.subr.mxu0 0.0
        %3656 = vmatpush1.msra.mxu0 0.0
        %3657 = vmatprep.subr.mxu0 0.0
        %3658 = vmatpush1.msra.mxu0 0.0
        %3659 = vmatprep.subr.mxu0 0.0
        %3660 = vmatpush1.msra.mxu0 0.0
        %3661 = vmatprep.subr.mxu0 0.0
        %3662 = vmatpush1.msra.mxu0 0.0
        %3663 = vmatprep.subr.mxu0 0.0
        %3664 = vmatpush1.msra.mxu0 0.0
        %3665 = vmatprep.subr.mxu0 0.0
        %3666 = vmatpush1.msra.mxu0 0.0
        %3667 = vmatprep.subr.mxu0 0.0
        %3668 = vmatpush1.msra.mxu0 0.0
        %3669 = vmatprep.subr.mxu0 0.0
        %3670 = vmatpush1.msra.mxu0 0.0
        %3671 = vmatprep.subr.mxu0 0.0
        %3672 = vmatpush1.msra.mxu0 0.0
        %3673 = vmatprep.subr.mxu0 0.0
        %3674 = vmatpush1.msra.mxu0 0.0
        %3675 = vmatprep.subr.mxu0 0.0
        %3676 = vmatpush1.msra.mxu0 0.0
        %3677 = vmatprep.mubr.f32.mxu0 0.0
        %3678 = vmatmul.mubr.f32.gmra.mrb[0].mxu0 %v3579
        %v3679 = vpop.f32.mrb[0].mxu0
        %v3680 = vadd.f32 0.0, %v3679
        %v3681 = vpop.f32.mrb[0].mxu0
        %v3682 = vadd.f32 0.0, %v3681
        %3683 = vdwg.mxu0
        %v3684 = vadd.f32 %v3577, %v3680
        %v3685 = vadd.f32 %v3578, %v3682
        %v3686 = vld [vmem:[#allocation4 + $0x5] sm:$0xff]
        %s3687 = scalar_lea.vmem %s7, 1280
        %v3688 = vld [vmem:[%s3687] sm:$0xff]
        %v3689 = vld [vmem:[%s3687 + $0x8] sm:$0xff]
        %v3690 = vld [vmem:[%s3687 + $0x10] sm:$0xff]
        %v3691 = vld [vmem:[%s3687 + $0x18] sm:$0xff]
        %v3692 = vld [vmem:[%s3687 + $0x20] sm:$0xff]
        %v3693 = vld [vmem:[%s3687 + $0x28] sm:$0xff]
        %v3694 = vld [vmem:[%s3687 + $0x30] sm:$0xff]
        %v3695 = vld [vmem:[%s3687 + $0x38] sm:$0xff]
        %v3696 = vld [vmem:[%s3687 + $0x40] sm:$0xff]
        %v3697 = vld [vmem:[%s3687 + $0x48] sm:$0xff]
        %v3698 = vld [vmem:[%s3687 + $0x50] sm:$0xff]
        %v3699 = vld [vmem:[%s3687 + $0x58] sm:$0xff]
        %v3700 = vld [vmem:[%s3687 + $0x60] sm:$0xff]
        %v3701 = vld [vmem:[%s3687 + $0x68] sm:$0xff]
        %v3702 = vld [vmem:[%s3687 + $0x70] sm:$0xff]
        %v3703 = vld [vmem:[%s3687 + $0x78] sm:$0xff]
        %v3704 = vld [vmem:[%s3687 + $0x80] sm:$0xff]
        %v3705 = vld [vmem:[%s3687 + $0x88] sm:$0xff]
        %v3706 = vld [vmem:[%s3687 + $0x90] sm:$0xff]
        %v3707 = vld [vmem:[%s3687 + $0x98] sm:$0xff]
        %v3708 = vld [vmem:[%s3687 + $0xa0] sm:$0xff]
        %v3709 = vld [vmem:[%s3687 + $0xa8] sm:$0xff]
        %v3710 = vld [vmem:[%s3687 + $0xb0] sm:$0xff]
        %v3711 = vld [vmem:[%s3687 + $0xb8] sm:$0xff]
        %v3712 = vld [vmem:[%s3687 + $0xc0] sm:$0xff]
        %v3713 = vld [vmem:[%s3687 + $0xc8] sm:$0xff]
        %v3714 = vld [vmem:[%s3687 + $0xd0] sm:$0xff]
        %v3715 = vld [vmem:[%s3687 + $0xd8] sm:$0xff]
        %v3716 = vld [vmem:[%s3687 + $0xe0] sm:$0xff]
        %v3717 = vld [vmem:[%s3687 + $0xe8] sm:$0xff]
        %v3718 = vld [vmem:[%s3687 + $0xf0] sm:$0xff]
        %v3719 = vld [vmem:[%s3687 + $0xf8] sm:$0xff]
        %3720 = vmatprep.subr.mxu0 %v3689
        %3721 = vmatpush1.msra.mxu0 %v3688
        %3722 = vmatprep.subr.mxu0 %v3691
        %3723 = vmatpush1.msra.mxu0 %v3690
        %3724 = vmatprep.subr.mxu0 %v3693
        %3725 = vmatpush1.msra.mxu0 %v3692
        %3726 = vmatprep.subr.mxu0 %v3695
        %3727 = vmatpush1.msra.mxu0 %v3694
        %3728 = vmatprep.subr.mxu0 %v3697
        %3729 = vmatpush1.msra.mxu0 %v3696
        %3730 = vmatprep.subr.mxu0 %v3699
        %3731 = vmatpush1.msra.mxu0 %v3698
        %3732 = vmatprep.subr.mxu0 %v3701
        %3733 = vmatpush1.msra.mxu0 %v3700
        %3734 = vmatprep.subr.mxu0 %v3703
        %3735 = vmatpush1.msra.mxu0 %v3702
        %3736 = vmatprep.subr.mxu0 %v3705
        %3737 = vmatpush1.msra.mxu0 %v3704
        %3738 = vmatprep.subr.mxu0 %v3707
        %3739 = vmatpush1.msra.mxu0 %v3706
        %3740 = vmatprep.subr.mxu0 %v3709
        %3741 = vmatpush1.msra.mxu0 %v3708
        %3742 = vmatprep.subr.mxu0 %v3711
        %3743 = vmatpush1.msra.mxu0 %v3710
        %3744 = vmatprep.subr.mxu0 %v3713
        %3745 = vmatpush1.msra.mxu0 %v3712
        %3746 = vmatprep.subr.mxu0 %v3715
        %3747 = vmatpush1.msra.mxu0 %v3714
        %3748 = vmatprep.subr.mxu0 %v3717
        %3749 = vmatpush1.msra.mxu0 %v3716
        %3750 = vmatprep.subr.mxu0 %v3719
        %3751 = vmatpush1.msra.mxu0 %v3718
        %3752 = vmatprep.subr.mxu0 0.0
        %3753 = vmatpush1.msra.mxu0 0.0
        %3754 = vmatprep.subr.mxu0 0.0
        %3755 = vmatpush1.msra.mxu0 0.0
        %3756 = vmatprep.subr.mxu0 0.0
        %3757 = vmatpush1.msra.mxu0 0.0
        %3758 = vmatprep.subr.mxu0 0.0
        %3759 = vmatpush1.msra.mxu0 0.0
        %3760 = vmatprep.subr.mxu0 0.0
        %3761 = vmatpush1.msra.mxu0 0.0
        %3762 = vmatprep.subr.mxu0 0.0
        %3763 = vmatpush1.msra.mxu0 0.0
        %3764 = vmatprep.subr.mxu0 0.0
        %3765 = vmatpush1.msra.mxu0 0.0
        %3766 = vmatprep.subr.mxu0 0.0
        %3767 = vmatpush1.msra.mxu0 0.0
        %3768 = vmatprep.subr.mxu0 0.0
        %3769 = vmatpush1.msra.mxu0 0.0
        %3770 = vmatprep.subr.mxu0 0.0
        %3771 = vmatpush1.msra.mxu0 0.0
        %3772 = vmatprep.subr.mxu0 0.0
        %3773 = vmatpush1.msra.mxu0 0.0
        %3774 = vmatprep.subr.mxu0 0.0
        %3775 = vmatpush1.msra.mxu0 0.0
        %3776 = vmatprep.subr.mxu0 0.0
        %3777 = vmatpush1.msra.mxu0 0.0
        %3778 = vmatprep.subr.mxu0 0.0
        %3779 = vmatpush1.msra.mxu0 0.0
        %3780 = vmatprep.subr.mxu0 0.0
        %3781 = vmatpush1.msra.mxu0 0.0
        %3782 = vmatprep.subr.mxu0 0.0
        %3783 = vmatpush1.msra.mxu0 0.0
        %3784 = vmatprep.mubr.f32.mxu0 0.0
        %3785 = vmatmul.mubr.f32.gmra.mrb[0].mxu0 %v3686
        %v3786 = vpop.f32.mrb[0].mxu0
        %v3787 = vadd.f32 0.0, %v3786
        %v3788 = vpop.f32.mrb[0].mxu0
        %v3789 = vadd.f32 0.0, %v3788
        %3790 = vdwg.mxu0
        %v3791 = vadd.f32 %v3684, %v3787
        %v3792 = vadd.f32 %v3685, %v3789
        %v3793 = vld [vmem:[#allocation4 + $0x6] sm:$0xff]
        %s3794 = scalar_lea.vmem %s7, 1536
        %v3795 = vld [vmem:[%s3794] sm:$0xff]
        %v3796 = vld [vmem:[%s3794 + $0x8] sm:$0xff]
        %v3797 = vld [vmem:[%s3794 + $0x10] sm:$0xff]
        %v3798 = vld [vmem:[%s3794 + $0x18] sm:$0xff]
        %v3799 = vld [vmem:[%s3794 + $0x20] sm:$0xff]
        %v3800 = vld [vmem:[%s3794 + $0x28] sm:$0xff]
        %v3801 = vld [vmem:[%s3794 + $0x30] sm:$0xff]
        %v3802 = vld [vmem:[%s3794 + $0x38] sm:$0xff]
        %v3803 = vld [vmem:[%s3794 + $0x40] sm:$0xff]
        %v3804 = vld [vmem:[%s3794 + $0x48] sm:$0xff]
        %v3805 = vld [vmem:[%s3794 + $0x50] sm:$0xff]
        %v3806 = vld [vmem:[%s3794 + $0x58] sm:$0xff]
        %v3807 = vld [vmem:[%s3794 + $0x60] sm:$0xff]
        %v3808 = vld [vmem:[%s3794 + $0x68] sm:$0xff]
        %v3809 = vld [vmem:[%s3794 + $0x70] sm:$0xff]
        %v3810 = vld [vmem:[%s3794 + $0x78] sm:$0xff]
        %v3811 = vld [vmem:[%s3794 + $0x80] sm:$0xff]
        %v3812 = vld [vmem:[%s3794 + $0x88] sm:$0xff]
        %v3813 = vld [vmem:[%s3794 + $0x90] sm:$0xff]
        %v3814 = vld [vmem:[%s3794 + $0x98] sm:$0xff]
        %v3815 = vld [vmem:[%s3794 + $0xa0] sm:$0xff]
        %v3816 = vld [vmem:[%s3794 + $0xa8] sm:$0xff]
        %v3817 = vld [vmem:[%s3794 + $0xb0] sm:$0xff]
        %v3818 = vld [vmem:[%s3794 + $0xb8] sm:$0xff]
        %v3819 = vld [vmem:[%s3794 + $0xc0] sm:$0xff]
        %v3820 = vld [vmem:[%s3794 + $0xc8] sm:$0xff]
        %v3821 = vld [vmem:[%s3794 + $0xd0] sm:$0xff]
        %v3822 = vld [vmem:[%s3794 + $0xd8] sm:$0xff]
        %v3823 = vld [vmem:[%s3794 + $0xe0] sm:$0xff]
        %v3824 = vld [vmem:[%s3794 + $0xe8] sm:$0xff]
        %v3825 = vld [vmem:[%s3794 + $0xf0] sm:$0xff]
        %v3826 = vld [vmem:[%s3794 + $0xf8] sm:$0xff]
        %3827 = vmatprep.subr.mxu0 %v3796
        %3828 = vmatpush1.msra.mxu0 %v3795
        %3829 = vmatprep.subr.mxu0 %v3798
        %3830 = vmatpush1.msra.mxu0 %v3797
        %3831 = vmatprep.subr.mxu0 %v3800
        %3832 = vmatpush1.msra.mxu0 %v3799
        %3833 = vmatprep.subr.mxu0 %v3802
        %3834 = vmatpush1.msra.mxu0 %v3801
        %3835 = vmatprep.subr.mxu0 %v3804
        %3836 = vmatpush1.msra.mxu0 %v3803
        %3837 = vmatprep.subr.mxu0 %v3806
        %3838 = vmatpush1.msra.mxu0 %v3805
        %3839 = vmatprep.subr.mxu0 %v3808
        %3840 = vmatpush1.msra.mxu0 %v3807
        %3841 = vmatprep.subr.mxu0 %v3810
        %3842 = vmatpush1.msra.mxu0 %v3809
        %3843 = vmatprep.subr.mxu0 %v3812
        %3844 = vmatpush1.msra.mxu0 %v3811
        %3845 = vmatprep.subr.mxu0 %v3814
        %3846 = vmatpush1.msra.mxu0 %v3813
        %3847 = vmatprep.subr.mxu0 %v3816
        %3848 = vmatpush1.msra.mxu0 %v3815
        %3849 = vmatprep.subr.mxu0 %v3818
        %3850 = vmatpush1.msra.mxu0 %v3817
        %3851 = vmatprep.subr.mxu0 %v3820
        %3852 = vmatpush1.msra.mxu0 %v3819
        %3853 = vmatprep.subr.mxu0 %v3822
        %3854 = vmatpush1.msra.mxu0 %v3821
        %3855 = vmatprep.subr.mxu0 %v3824
        %3856 = vmatpush1.msra.mxu0 %v3823
        %3857 = vmatprep.subr.mxu0 %v3826
        %3858 = vmatpush1.msra.mxu0 %v3825
        %3859 = vmatprep.subr.mxu0 0.0
        %3860 = vmatpush1.msra.mxu0 0.0
        %3861 = vmatprep.subr.mxu0 0.0
        %3862 = vmatpush1.msra.mxu0 0.0
        %3863 = vmatprep.subr.mxu0 0.0
        %3864 = vmatpush1.msra.mxu0 0.0
        %3865 = vmatprep.subr.mxu0 0.0
        %3866 = vmatpush1.msra.mxu0 0.0
        %3867 = vmatprep.subr.mxu0 0.0
        %3868 = vmatpush1.msra.mxu0 0.0
        %3869 = vmatprep.subr.mxu0 0.0
        %3870 = vmatpush1.msra.mxu0 0.0
        %3871 = vmatprep.subr.mxu0 0.0
        %3872 = vmatpush1.msra.mxu0 0.0
        %3873 = vmatprep.subr.mxu0 0.0
        %3874 = vmatpush1.msra.mxu0 0.0
        %3875 = vmatprep.subr.mxu0 0.0
        %3876 = vmatpush1.msra.mxu0 0.0
        %3877 = vmatprep.subr.mxu0 0.0
        %3878 = vmatpush1.msra.mxu0 0.0
        %3879 = vmatprep.subr.mxu0 0.0
        %3880 = vmatpush1.msra.mxu0 0.0
        %3881 = vmatprep.subr.mxu0 0.0
        %3882 = vmatpush1.msra.mxu0 0.0
        %3883 = vmatprep.subr.mxu0 0.0
        %3884 = vmatpush1.msra.mxu0 0.0
        %3885 = vmatprep.subr.mxu0 0.0
        %3886 = vmatpush1.msra.mxu0 0.0
        %3887 = vmatprep.subr.mxu0 0.0
        %3888 = vmatpush1.msra.mxu0 0.0
        %3889 = vmatprep.subr.mxu0 0.0
        %3890 = vmatpush1.msra.mxu0 0.0
        %3891 = vmatprep.mubr.f32.mxu0 0.0
        %3892 = vmatmul.mubr.f32.gmra.mrb[0].mxu0 %v3793
        %v3893 = vpop.f32.mrb[0].mxu0
        %v3894 = vadd.f32 0.0, %v3893
        %v3895 = vpop.f32.mrb[0].mxu0
        %v3896 = vadd.f32 0.0, %v3895
        %3897 = vdwg.mxu0
        %v3898 = vadd.f32 %v3791, %v3894
        %v3899 = vadd.f32 %v3792, %v3896
        %v3900 = vld [vmem:[#allocation4 + $0x7] sm:$0xff]
        %s3901 = scalar_lea.vmem %s7, 1792
        %v3902 = vld [vmem:[%s3901] sm:$0xff]
        %v3903 = vld [vmem:[%s3901 + $0x8] sm:$0xff]
        %v3904 = vld [vmem:[%s3901 + $0x10] sm:$0xff]
        %v3905 = vld [vmem:[%s3901 + $0x18] sm:$0xff]
        %v3906 = vld [vmem:[%s3901 + $0x20] sm:$0xff]
        %v3907 = vld [vmem:[%s3901 + $0x28] sm:$0xff]
        %v3908 = vld [vmem:[%s3901 + $0x30] sm:$0xff]
        %v3909 = vld [vmem:[%s3901 + $0x38] sm:$0xff]
        %v3910 = vld [vmem:[%s3901 + $0x40] sm:$0xff]
        %v3911 = vld [vmem:[%s3901 + $0x48] sm:$0xff]
        %v3912 = vld [vmem:[%s3901 + $0x50] sm:$0xff]
        %v3913 = vld [vmem:[%s3901 + $0x58] sm:$0xff]
        %v3914 = vld [vmem:[%s3901 + $0x60] sm:$0xff]
        %v3915 = vld [vmem:[%s3901 + $0x68] sm:$0xff]
        %v3916 = vld [vmem:[%s3901 + $0x70] sm:$0xff]
        %v3917 = vld [vmem:[%s3901 + $0x78] sm:$0xff]
        %v3918 = vld [vmem:[%s3901 + $0x80] sm:$0xff]
        %v3919 = vld [vmem:[%s3901 + $0x88] sm:$0xff]
        %v3920 = vld [vmem:[%s3901 + $0x90] sm:$0xff]
        %v3921 = vld [vmem:[%s3901 + $0x98] sm:$0xff]
        %v3922 = vld [vmem:[%s3901 + $0xa0] sm:$0xff]
        %v3923 = vld [vmem:[%s3901 + $0xa8] sm:$0xff]
        %v3924 = vld [vmem:[%s3901 + $0xb0] sm:$0xff]
        %v3925 = vld [vmem:[%s3901 + $0xb8] sm:$0xff]
        %v3926 = vld [vmem:[%s3901 + $0xc0] sm:$0xff]
        %v3927 = vld [vmem:[%s3901 + $0xc8] sm:$0xff]
        %v3928 = vld [vmem:[%s3901 + $0xd0] sm:$0xff]
        %v3929 = vld [vmem:[%s3901 + $0xd8] sm:$0xff]
        %v3930 = vld [vmem:[%s3901 + $0xe0] sm:$0xff]
        %v3931 = vld [vmem:[%s3901 + $0xe8] sm:$0xff]
        %v3932 = vld [vmem:[%s3901 + $0xf0] sm:$0xff]
        %v3933 = vld [vmem:[%s3901 + $0xf8] sm:$0xff]
        %3934 = vmatprep.subr.mxu0 %v3903
        %3935 = vmatpush1.msra.mxu0 %v3902
        %3936 = vmatprep.subr.mxu0 %v3905
        %3937 = vmatpush1.msra.mxu0 %v3904
        %3938 = vmatprep.subr.mxu0 %v3907
        %3939 = vmatpush1.msra.mxu0 %v3906
        %3940 = vmatprep.subr.mxu0 %v3909
        %3941 = vmatpush1.msra.mxu0 %v3908
        %3942 = vmatprep.subr.mxu0 %v3911
        %3943 = vmatpush1.msra.mxu0 %v3910
        %3944 = vmatprep.subr.mxu0 %v3913
        %3945 = vmatpush1.msra.mxu0 %v3912
        %3946 = vmatprep.subr.mxu0 %v3915
        %3947 = vmatpush1.msra.mxu0 %v3914
        %3948 = vmatprep.subr.mxu0 %v3917
        %3949 = vmatpush1.msra.mxu0 %v3916
        %3950 = vmatprep.subr.mxu0 %v3919
        %3951 = vmatpush1.msra.mxu0 %v3918
        %3952 = vmatprep.subr.mxu0 %v3921
        %3953 = vmatpush1.msra.mxu0 %v3920
        %3954 = vmatprep.subr.mxu0 %v3923
        %3955 = vmatpush1.msra.mxu0 %v3922
        %3956 = vmatprep.subr.mxu0 %v3925
        %3957 = vmatpush1.msra.mxu0 %v3924
        %3958 = vmatprep.subr.mxu0 %v3927
        %3959 = vmatpush1.msra.mxu0 %v3926
        %3960 = vmatprep.subr.mxu0 %v3929
        %3961 = vmatpush1.msra.mxu0 %v3928
        %3962 = vmatprep.subr.mxu0 %v3931
        %3963 = vmatpush1.msra.mxu0 %v3930
        %3964 = vmatprep.subr.mxu0 %v3933
        %3965 = vmatpush1.msra.mxu0 %v3932
        %3966 = vmatprep.subr.mxu0 0.0
        %3967 = vmatpush1.msra.mxu0 0.0
        %3968 = vmatprep.subr.mxu0 0.0
        %3969 = vmatpush1.msra.mxu0 0.0
        %3970 = vmatprep.subr.mxu0 0.0
        %3971 = vmatpush1.msra.mxu0 0.0
        %3972 = vmatprep.subr.mxu0 0.0
        %3973 = vmatpush1.msra.mxu0 0.0
        %3974 = vmatprep.subr.mxu0 0.0
        %3975 = vmatpush1.msra.mxu0 0.0
        %3976 = vmatprep.subr.mxu0 0.0
        %3977 = vmatpush1.msra.mxu0 0.0
        %3978 = vmatprep.subr.mxu0 0.0
        %3979 = vmatpush1.msra.mxu0 0.0
        %3980 = vmatprep.subr.mxu0 0.0
        %3981 = vmatpush1.msra.mxu0 0.0
        %3982 = vmatprep.subr.mxu0 0.0
        %3983 = vmatpush1.msra.mxu0 0.0
        %3984 = vmatprep.subr.mxu0 0.0
        %3985 = vmatpush1.msra.mxu0 0.0
        %3986 = vmatprep.subr.mxu0 0.0
        %3987 = vmatpush1.msra.mxu0 0.0
        %3988 = vmatprep.subr.mxu0 0.0
        %3989 = vmatpush1.msra.mxu0 0.0
        %3990 = vmatprep.subr.mxu0 0.0
        %3991 = vmatpush1.msra.mxu0 0.0
        %3992 = vmatprep.subr.mxu0 0.0
        %3993 = vmatpush1.msra.mxu0 0.0
        %3994 = vmatprep.subr.mxu0 0.0
        %3995 = vmatpush1.msra.mxu0 0.0
        %3996 = vmatprep.subr.mxu0 0.0
        %3997 = vmatpush1.msra.mxu0 0.0
        %3998 = vmatprep.mubr.f32.mxu0 0.0
        %3999 = vmatmul.mubr.f32.gmra.mrb[0].mxu0 %v3900
        %v4000 = vpop.f32.mrb[0].mxu0
        %v4001 = vadd.f32 0.0, %v4000
        %v4002 = vpop.f32.mrb[0].mxu0
        %v4003 = vadd.f32 0.0, %v4002
        %4004 = vdwg.mxu0
        %v4005 = vadd.f32 %v3898, %v4001
        %v4006 = vadd.f32 %v3899, %v4003
        %v4007 = vld [vmem:[#allocation4 + $0x8] sm:$0xff]
        %s4008 = scalar_lea.vmem %s7, 2048
        %v4009 = vld [vmem:[%s4008] sm:$0xff]
        %v4010 = vld [vmem:[%s4008 + $0x8] sm:$0xff]
        %v4011 = vld [vmem:[%s4008 + $0x10] sm:$0xff]
        %v4012 = vld [vmem:[%s4008 + $0x18] sm:$0xff]
        %v4013 = vld [vmem:[%s4008 + $0x20] sm:$0xff]
        %v4014 = vld [vmem:[%s4008 + $0x28] sm:$0xff]
        %v4015 = vld [vmem:[%s4008 + $0x30] sm:$0xff]
        %v4016 = vld [vmem:[%s4008 + $0x38] sm:$0xff]
        %v4017 = vld [vmem:[%s4008 + $0x40] sm:$0xff]
        %v4018 = vld [vmem:[%s4008 + $0x48] sm:$0xff]
        %v4019 = vld [vmem:[%s4008 + $0x50] sm:$0xff]
        %v4020 = vld [vmem:[%s4008 + $0x58] sm:$0xff]
        %v4021 = vld [vmem:[%s4008 + $0x60] sm:$0xff]
        %v4022 = vld [vmem:[%s4008 + $0x68] sm:$0xff]
        %v4023 = vld [vmem:[%s4008 + $0x70] sm:$0xff]
        %v4024 = vld [vmem:[%s4008 + $0x78] sm:$0xff]
        %v4025 = vld [vmem:[%s4008 + $0x80] sm:$0xff]
        %v4026 = vld [vmem:[%s4008 + $0x88] sm:$0xff]
        %v4027 = vld [vmem:[%s4008 + $0x90] sm:$0xff]
        %v4028 = vld [vmem:[%s4008 + $0x98] sm:$0xff]
        %v4029 = vld [vmem:[%s4008 + $0xa0] sm:$0xff]
        %v4030 = vld [vmem:[%s4008 + $0xa8] sm:$0xff]
        %v4031 = vld [vmem:[%s4008 + $0xb0] sm:$0xff]
        %v4032 = vld [vmem:[%s4008 + $0xb8] sm:$0xff]
        %v4033 = vld [vmem:[%s4008 + $0xc0] sm:$0xff]
        %v4034 = vld [vmem:[%s4008 + $0xc8] sm:$0xff]
        %v4035 = vld [vmem:[%s4008 + $0xd0] sm:$0xff]
        %v4036 = vld [vmem:[%s4008 + $0xd8] sm:$0xff]
        %v4037 = vld [vmem:[%s4008 + $0xe0] sm:$0xff]
        %v4038 = vld [vmem:[%s4008 + $0xe8] sm:$0xff]
        %v4039 = vld [vmem:[%s4008 + $0xf0] sm:$0xff]
        %v4040 = vld [vmem:[%s4008 + $0xf8] sm:$0xff]
        %4041 = vmatprep.subr.mxu0 %v4010
        %4042 = vmatpush1.msra.mxu0 %v4009
        %4043 = vmatprep.subr.mxu0 %v4012
        %4044 = vmatpush1.msra.mxu0 %v4011
        %4045 = vmatprep.subr.mxu0 %v4014
        %4046 = vmatpush1.msra.mxu0 %v4013
        %4047 = vmatprep.subr.mxu0 %v4016
        %4048 = vmatpush1.msra.mxu0 %v4015
        %4049 = vmatprep.subr.mxu0 %v4018
        %4050 = vmatpush1.msra.mxu0 %v4017
        %4051 = vmatprep.subr.mxu0 %v4020
        %4052 = vmatpush1.msra.mxu0 %v4019
        %4053 = vmatprep.subr.mxu0 %v4022
        %4054 = vmatpush1.msra.mxu0 %v4021
        %4055 = vmatprep.subr.mxu0 %v4024
        %4056 = vmatpush1.msra.mxu0 %v4023
        %4057 = vmatprep.subr.mxu0 %v4026
        %4058 = vmatpush1.msra.mxu0 %v4025
        %4059 = vmatprep.subr.mxu0 %v4028
        %4060 = vmatpush1.msra.mxu0 %v4027
        %4061 = vmatprep.subr.mxu0 %v4030
        %4062 = vmatpush1.msra.mxu0 %v4029
        %4063 = vmatprep.subr.mxu0 %v4032
        %4064 = vmatpush1.msra.mxu0 %v4031
        %4065 = vmatprep.subr.mxu0 %v4034
        %4066 = vmatpush1.msra.mxu0 %v4033
        %4067 = vmatprep.subr.mxu0 %v4036
        %4068 = vmatpush1.msra.mxu0 %v4035
        %4069 = vmatprep.subr.mxu0 %v4038
        %4070 = vmatpush1.msra.mxu0 %v4037
        %4071 = vmatprep.subr.mxu0 %v4040
        %4072 = vmatpush1.msra.mxu0 %v4039
        %4073 = vmatprep.subr.mxu0 0.0
        %4074 = vmatpush1.msra.mxu0 0.0
        %4075 = vmatprep.subr.mxu0 0.0
        %4076 = vmatpush1.msra.mxu0 0.0
        %4077 = vmatprep.subr.mxu0 0.0
        %4078 = vmatpush1.msra.mxu0 0.0
        %4079 = vmatprep.subr.mxu0 0.0
        %4080 = vmatpush1.msra.mxu0 0.0
        %4081 = vmatprep.subr.mxu0 0.0
        %4082 = vmatpush1.msra.mxu0 0.0
        %4083 = vmatprep.subr.mxu0 0.0
        %4084 = vmatpush1.msra.mxu0 0.0
        %4085 = vmatprep.subr.mxu0 0.0
        %4086 = vmatpush1.msra.mxu0 0.0
        %4087 = vmatprep.subr.mxu0 0.0
        %4088 = vmatpush1.msra.mxu0 0.0
        %4089 = vmatprep.subr.mxu0 0.0
        %4090 = vmatpush1.msra.mxu0 0.0
        %4091 = vmatprep.subr.mxu0 0.0
        %4092 = vmatpush1.msra.mxu0 0.0
        %4093 = vmatprep.subr.mxu0 0.0
        %4094 = vmatpush1.msra.mxu0 0.0
        %4095 = vmatprep.subr.mxu0 0.0
        %4096 = vmatpush1.msra.mxu0 0.0
        %4097 = vmatprep.subr.mxu0 0.0
        %4098 = vmatpush1.msra.mxu0 0.0
        %4099 = vmatprep.subr.mxu0 0.0
        %4100 = vmatpush1.msra.mxu0 0.0
        %4101 = vmatprep.subr.mxu0 0.0
        %4102 = vmatpush1.msra.mxu0 0.0
        %4103 = vmatprep.subr.mxu0 0.0
        %4104 = vmatpush1.msra.mxu0 0.0
        %4105 = vmatprep.mubr.f32.mxu0 0.0
        %4106 = vmatmul.mubr.f32.gmra.mrb[0].mxu0 %v4007
        %v4107 = vpop.f32.mrb[0].mxu0
        %v4108 = vadd.f32 0.0, %v4107
        %v4109 = vpop.f32.mrb[0].mxu0
        %v4110 = vadd.f32 0.0, %v4109
        %4111 = vdwg.mxu0
        %v4112 = vadd.f32 %v4005, %v4108
        %v4113 = vadd.f32 %v4006, %v4110
        %v4114 = vld [vmem:[%s8] sm:$0x3]
        %v4116 = vlaneseq
        %v4117 = vshrl.u32 %v4116, 7
        %v4118 = vsub.s32 0, %v4117
        %v4119 = vrot.slane %v4114, %v4118
        %v4120 = vlaneseq
        %v4121 = vshrl.u32 %v4120, 7
        %v4122 = vsub.s32 1, %v4121
        %v4123 = vrot.slane %v4114, %v4122
        %v4126 = vadd.f32 %v4112, %v4119
        %v4127 = vadd.f32 %v4113, %v4123
        %v4128 = vmax.f32 %v4126, 0.0
        %v4129 = vmax.f32 %v4127, 0.0
        %v4132 = vcombine.low %v4128, %v4129
        %v4134 = vunpack.c.l.s4 1966171168
        %v4135 = vunpack.c.0.s8 %v4134
        %v4136 = vlaneseq
        %v4137 = vshrl.u32 %v4136, 7
        %v4138 = vsub.s32 %v4135, %v4137
        %v4139 = vrot.slane %v4132, %v4138
        %v4141 = vunpack.c.l.s4 1966171168
        %v4142 = vunpack.c.0.s8 %v4141
        %v4143 = vlaneseq
        %v4144 = vshrl.u32 %v4143, 7
        %v4145 = vsub.s32 %v4142, %v4144
        %v4146 = vrot.slane %v4139, %v4145
        %v4148 = vlaneseq
        %vm4149 = vcmp.ge.s32.totalorder %v4148, 0
        %vm4150 = vcmp.lt.s32.totalorder %v4148, 256
        %vm4151 = vmand %vm4149, %vm4150
        %s4152 = scalar_lea.vmem [#allocation5], 20
        %4153 = vst.msk [vmem:[%s4152] ss:$8 sm:$0x3] %vm4151, %v4146
        %4154 = vst.msk [vmem:[%s4152] ss:$8 sm:$0x0] %vm4151, %v4146
        %v4155 = vld [vmem:[#allocation5] sm:$0xff]
        %v4156 = vld [vmem:[#allocation5 + $0x8] sm:$0xff]
        %v4157 = vld [vmem:[#allocation5 + $0x10] sm:$0x1f]
        %v4158 = vld [vmem:[#allocation5 + $0x18] sm:$0x1f]
        %v4159 = vld [vmem:[#allocation12] sm:$0xff]
        %v4160 = vld [vmem:[#allocation12 + $0x8] sm:$0xff]
        %v4161 = vld [vmem:[#allocation12 + $0x10] sm:$0xff]
        %v4162 = vld [vmem:[#allocation12 + $0x18] sm:$0xff]
        %v4163 = vld [vmem:[#allocation12 + $0x20] sm:$0xff]
        %v4164 = vld [vmem:[#allocation12 + $0x28] sm:$0xff]
        %v4165 = vld [vmem:[#allocation12 + $0x30] sm:$0xff]
        %v4166 = vld [vmem:[#allocation12 + $0x38] sm:$0xff]
        %v4167 = vld [vmem:[#allocation12 + $0x40] sm:$0xff]
        %v4168 = vld [vmem:[#allocation12 + $0x48] sm:$0xff]
        %v4169 = vld [vmem:[#allocation12 + $0x50] sm:$0xff]
        %v4170 = vld [vmem:[#allocation12 + $0x58] sm:$0xff]
        %v4171 = vld [vmem:[#allocation12 + $0x60] sm:$0xff]
        %v4172 = vld [vmem:[#allocation12 + $0x68] sm:$0xff]
        %v4173 = vld [vmem:[#allocation12 + $0x70] sm:$0xff]
        %v4174 = vld [vmem:[#allocation12 + $0x78] sm:$0xff]
        %v4175 = vld [vmem:[#allocation12 + $0x80] sm:$0xff]
        %v4176 = vld [vmem:[#allocation12 + $0x88] sm:$0xff]
        %v4177 = vld [vmem:[#allocation12 + $0x90] sm:$0xff]
        %v4178 = vld [vmem:[#allocation12 + $0x98] sm:$0xff]
        %v4179 = vld [vmem:[#allocation12 + $0xa0] sm:$0xff]
        %v4180 = vld [vmem:[#allocation12 + $0xa8] sm:$0xff]
        %v4181 = vld [vmem:[#allocation12 + $0xb0] sm:$0xff]
        %v4182 = vld [vmem:[#allocation12 + $0xb8] sm:$0xff]
        %v4183 = vld [vmem:[#allocation12 + $0xc0] sm:$0xff]
        %v4184 = vld [vmem:[#allocation12 + $0xc8] sm:$0xff]
        %v4185 = vld [vmem:[#allocation12 + $0xd0] sm:$0xff]
        %v4186 = vld [vmem:[#allocation12 + $0xd8] sm:$0xff]
        %v4187 = vld [vmem:[#allocation12 + $0xe0] sm:$0xff]
        %v4188 = vld [vmem:[#allocation12 + $0xe8] sm:$0xff]
        %v4189 = vld [vmem:[#allocation12 + $0xf0] sm:$0xff]
        %v4190 = vld [vmem:[#allocation12 + $0xf8] sm:$0xff]
        %v4191 = vld [vmem:[#allocation5] sm:$0xfe]
        %v4192 = vld [vmem:[#allocation5 + $0x8] sm:$0xfe]
        %v4193 = vld [vmem:[#allocation5 + $0x10] sm:$0x3f]
        %v4194 = vld [vmem:[#allocation5 + $0x18] sm:$0x3f]
        %s4195 = scalar_lea.vmem [#allocation12], 256
        %v4196 = vld [vmem:[%s4195] sm:$0xff]
        %v4197 = vld [vmem:[%s4195 + $0x8] sm:$0xff]
        %v4198 = vld [vmem:[%s4195 + $0x10] sm:$0xff]
        %v4199 = vld [vmem:[%s4195 + $0x18] sm:$0xff]
        %v4200 = vld [vmem:[%s4195 + $0x20] sm:$0xff]
        %v4201 = vld [vmem:[%s4195 + $0x28] sm:$0xff]
        %v4202 = vld [vmem:[%s4195 + $0x30] sm:$0xff]
        %v4203 = vld [vmem:[%s4195 + $0x38] sm:$0xff]
        %v4204 = vld [vmem:[%s4195 + $0x40] sm:$0xff]
        %v4205 = vld [vmem:[%s4195 + $0x48] sm:$0xff]
        %v4206 = vld [vmem:[%s4195 + $0x50] sm:$0xff]
        %v4207 = vld [vmem:[%s4195 + $0x58] sm:$0xff]
        %v4208 = vld [vmem:[%s4195 + $0x60] sm:$0xff]
        %v4209 = vld [vmem:[%s4195 + $0x68] sm:$0xff]
        %v4210 = vld [vmem:[%s4195 + $0x70] sm:$0xff]
        %v4211 = vld [vmem:[%s4195 + $0x78] sm:$0xff]
        %v4212 = vld [vmem:[%s4195 + $0x80] sm:$0xff]
        %v4213 = vld [vmem:[%s4195 + $0x88] sm:$0xff]
        %v4214 = vld [vmem:[%s4195 + $0x90] sm:$0xff]
        %v4215 = vld [vmem:[%s4195 + $0x98] sm:$0xff]
        %v4216 = vld [vmem:[%s4195 + $0xa0] sm:$0xff]
        %v4217 = vld [vmem:[%s4195 + $0xa8] sm:$0xff]
        %v4218 = vld [vmem:[%s4195 + $0xb0] sm:$0xff]
        %v4219 = vld [vmem:[%s4195 + $0xb8] sm:$0xff]
        %v4220 = vld [vmem:[%s4195 + $0xc0] sm:$0xff]
        %v4221 = vld [vmem:[%s4195 + $0xc8] sm:$0xff]
        %v4222 = vld [vmem:[%s4195 + $0xd0] sm:$0xff]
        %v4223 = vld [vmem:[%s4195 + $0xd8] sm:$0xff]
        %v4224 = vld [vmem:[%s4195 + $0xe0] sm:$0xff]
        %v4225 = vld [vmem:[%s4195 + $0xe8] sm:$0xff]
        %v4226 = vld [vmem:[%s4195 + $0xf0] sm:$0xff]
        %v4227 = vld [vmem:[%s4195 + $0xf8] sm:$0xff]
        %vm4232 = vcmask 1046528
        %v4233 = vrot.slane %v4191, 1
        %v4234 = vrot.slane %v4193, 1
        %v4235 = vsel %vm4232, %v4233, %v4234
        %v4236 = vrot.slane %v4192, 1
        %v4237 = vrot.slane %v4194, 1
        %v4238 = vsel %vm4232, %v4236, %v4237
        %4243 = vmatprep.subr.mxu0 0.0
        %4244 = vmatpush1.msra.mxu0 %v4196
        %4245 = vmatprep.subr.mxu0 0.0
        %4246 = vmatpush1.msra.mxu0 %v4197
        %4247 = vmatprep.subr.mxu0 0.0
        %4248 = vmatpush1.msra.mxu0 %v4198
        %4249 = vmatprep.subr.mxu0 0.0
        %4250 = vmatpush1.msra.mxu0 %v4199
        %4251 = vmatprep.subr.mxu0 0.0
        %4252 = vmatpush1.msra.mxu0 %v4200
        %4253 = vmatprep.subr.mxu0 0.0
        %4254 = vmatpush1.msra.mxu0 %v4201
        %4255 = vmatprep.subr.mxu0 0.0
        %4256 = vmatpush1.msra.mxu0 %v4202
        %4257 = vmatprep.subr.mxu0 0.0
        %4258 = vmatpush1.msra.mxu0 %v4203
        %4259 = vmatprep.subr.mxu0 0.0
        %4260 = vmatpush1.msra.mxu0 %v4204
        %4261 = vmatprep.subr.mxu0 0.0
        %4262 = vmatpush1.msra.mxu0 %v4205
        %4263 = vmatprep.subr.mxu0 0.0
        %4264 = vmatpush1.msra.mxu0 %v4206
        %4265 = vmatprep.subr.mxu0 0.0
        %4266 = vmatpush1.msra.mxu0 %v4207
        %4267 = vmatprep.subr.mxu0 0.0
        %4268 = vmatpush1.msra.mxu0 %v4208
        %4269 = vmatprep.subr.mxu0 0.0
        %4270 = vmatpush1.msra.mxu0 %v4209
        %4271 = vmatprep.subr.mxu0 0.0
        %4272 = vmatpush1.msra.mxu0 %v4210
        %4273 = vmatprep.subr.mxu0 0.0
        %4274 = vmatpush1.msra.mxu0 %v4211
        %4275 = vmatprep.subr.mxu0 0.0
        %4276 = vmatpush1.msra.mxu0 %v4212
        %4277 = vmatprep.subr.mxu0 0.0
        %4278 = vmatpush1.msra.mxu0 %v4213
        %4279 = vmatprep.subr.mxu0 0.0
        %4280 = vmatpush1.msra.mxu0 %v4214
        %4281 = vmatprep.subr.mxu0 0.0
        %4282 = vmatpush1.msra.mxu0 %v4215
        %4283 = vmatprep.subr.mxu0 0.0
        %4284 = vmatpush1.msra.mxu0 %v4216
        %4285 = vmatprep.subr.mxu0 0.0
        %4286 = vmatpush1.msra.mxu0 %v4217
        %4287 = vmatprep.subr.mxu0 0.0
        %4288 = vmatpush1.msra.mxu0 %v4218
        %4289 = vmatprep.subr.mxu0 0.0
        %4290 = vmatpush1.msra.mxu0 %v4219
        %4291 = vmatprep.subr.mxu0 0.0
        %4292 = vmatpush1.msra.mxu0 %v4220
        %4293 = vmatprep.subr.mxu0 0.0
        %4294 = vmatpush1.msra.mxu0 %v4221
        %4295 = vmatprep.subr.mxu0 0.0
        %4296 = vmatpush1.msra.mxu0 %v4222
        %4297 = vmatprep.subr.mxu0 0.0
        %4298 = vmatpush1.msra.mxu0 %v4223
        %4299 = vmatprep.subr.mxu0 0.0
        %4300 = vmatpush1.msra.mxu0 %v4224
        %4301 = vmatprep.subr.mxu0 0.0
        %4302 = vmatpush1.msra.mxu0 %v4225
        %4303 = vmatprep.subr.mxu0 0.0
        %4304 = vmatpush1.msra.mxu0 %v4226
        %4305 = vmatprep.subr.mxu0 0.0
        %4306 = vmatpush1.msra.mxu0 %v4227
        %4307 = vmatprep.mubr.f32.mxu0 %v4238
        %4308 = vmatmul.mubr.f32.gmra.mrb[0].mxu0 %v4235
        %v4309 = vpop.f32.mrb[0].mxu0
        %v4310 = vadd.f32 0.0, %v4309
        %v4311 = vpop.f32.mrb[0].mxu0
        %4312 = vmatprep.mubr.f32.mxu0 %v4237
        %4313 = vmatmul.mubr.f32.gmra.mrb[0].mxu0 %v4234
        %v4314 = vpop.f32.mrb[0].mxu0
        %v4315 = vadd.f32 0.0, %v4314
        %v4316 = vpop.f32.mrb[0].mxu0
        %4317 = vdwg.mxu0
        %4318 = vmatprep.subr.mxu0 0.0
        %4319 = vmatpush1.msra.mxu0 %v4159
        %4320 = vmatprep.subr.mxu0 0.0
        %4321 = vmatpush1.msra.mxu0 %v4160
        %4322 = vmatprep.subr.mxu0 0.0
        %4323 = vmatpush1.msra.mxu0 %v4161
        %4324 = vmatprep.subr.mxu0 0.0
        %4325 = vmatpush1.msra.mxu0 %v4162
        %4326 = vmatprep.subr.mxu0 0.0
        %4327 = vmatpush1.msra.mxu0 %v4163
        %4328 = vmatprep.subr.mxu0 0.0
        %4329 = vmatpush1.msra.mxu0 %v4164
        %4330 = vmatprep.subr.mxu0 0.0
        %4331 = vmatpush1.msra.mxu0 %v4165
        %4332 = vmatprep.subr.mxu0 0.0
        %4333 = vmatpush1.msra.mxu0 %v4166
        %4334 = vmatprep.subr.mxu0 0.0
        %4335 = vmatpush1.msra.mxu0 %v4167
        %4336 = vmatprep.subr.mxu0 0.0
        %4337 = vmatpush1.msra.mxu0 %v4168
        %4338 = vmatprep.subr.mxu0 0.0
        %4339 = vmatpush1.msra.mxu0 %v4169
        %4340 = vmatprep.subr.mxu0 0.0
        %4341 = vmatpush1.msra.mxu0 %v4170
        %4342 = vmatprep.subr.mxu0 0.0
        %4343 = vmatpush1.msra.mxu0 %v4171
        %4344 = vmatprep.subr.mxu0 0.0
        %4345 = vmatpush1.msra.mxu0 %v4172
        %4346 = vmatprep.subr.mxu0 0.0
        %4347 = vmatpush1.msra.mxu0 %v4173
        %4348 = vmatprep.subr.mxu0 0.0
        %4349 = vmatpush1.msra.mxu0 %v4174
        %4350 = vmatprep.subr.mxu0 0.0
        %4351 = vmatpush1.msra.mxu0 %v4175
        %4352 = vmatprep.subr.mxu0 0.0
        %4353 = vmatpush1.msra.mxu0 %v4176
        %4354 = vmatprep.subr.mxu0 0.0
        %4355 = vmatpush1.msra.mxu0 %v4177
        %4356 = vmatprep.subr.mxu0 0.0
        %4357 = vmatpush1.msra.mxu0 %v4178
        %4358 = vmatprep.subr.mxu0 0.0
        %4359 = vmatpush1.msra.mxu0 %v4179
        %4360 = vmatprep.subr.mxu0 0.0
        %4361 = vmatpush1.msra.mxu0 %v4180
        %4362 = vmatprep.subr.mxu0 0.0
        %4363 = vmatpush1.msra.mxu0 %v4181
        %4364 = vmatprep.subr.mxu0 0.0
        %4365 = vmatpush1.msra.mxu0 %v4182
        %4366 = vmatprep.subr.mxu0 0.0
        %4367 = vmatpush1.msra.mxu0 %v4183
        %4368 = vmatprep.subr.mxu0 0.0
        %4369 = vmatpush1.msra.mxu0 %v4184
        %4370 = vmatprep.subr.mxu0 0.0
        %4371 = vmatpush1.msra.mxu0 %v4185
        %4372 = vmatprep.subr.mxu0 0.0
        %4373 = vmatpush1.msra.mxu0 %v4186
        %4374 = vmatprep.subr.mxu0 0.0
        %4375 = vmatpush1.msra.mxu0 %v4187
        %4376 = vmatprep.subr.mxu0 0.0
        %4377 = vmatpush1.msra.mxu0 %v4188
        %4378 = vmatprep.subr.mxu0 0.0
        %4379 = vmatpush1.msra.mxu0 %v4189
        %4380 = vmatprep.subr.mxu0 0.0
        %4381 = vmatpush1.msra.mxu0 %v4190
        %4382 = vmatprep.mubr.f32.mxu0 %v4156
        %4383 = vmatmul.mubr.f32.gmra.mrb[0].mxu0 %v4155
        %v4384 = vpop.f32.mrb[0].mxu0
        %v4385 = vadd.f32 %v4310, %v4384
        %v4386 = vpop.f32.mrb[0].mxu0
        %4387 = vmatprep.mubr.f32.mxu0 %v4158
        %4388 = vmatmul.mubr.f32.gmra.mrb[0].mxu0 %v4157
        %v4389 = vpop.f32.mrb[0].mxu0
        %v4390 = vadd.f32 %v4315, %v4389
        %v4391 = vpop.f32.mrb[0].mxu0
        %4392 = vdwg.mxu0
        %v4393 = vld [vmem:[#allocation5] sm:$0xfc]
        %v4394 = vld [vmem:[#allocation5 + $0x8] sm:$0xfc]
        %v4395 = vld [vmem:[#allocation5 + $0x10] sm:$0x7f]
        %v4396 = vld [vmem:[#allocation5 + $0x18] sm:$0x7f]
        %s4397 = scalar_lea.vmem [#allocation12], 512
        %v4398 = vld [vmem:[%s4397] sm:$0xff]
        %v4399 = vld [vmem:[%s4397 + $0x8] sm:$0xff]
        %v4400 = vld [vmem:[%s4397 + $0x10] sm:$0xff]
        %v4401 = vld [vmem:[%s4397 + $0x18] sm:$0xff]
        %v4402 = vld [vmem:[%s4397 + $0x20] sm:$0xff]
        %v4403 = vld [vmem:[%s4397 + $0x28] sm:$0xff]
        %v4404 = vld [vmem:[%s4397 + $0x30] sm:$0xff]
        %v4405 = vld [vmem:[%s4397 + $0x38] sm:$0xff]
        %v4406 = vld [vmem:[%s4397 + $0x40] sm:$0xff]
        %v4407 = vld [vmem:[%s4397 + $0x48] sm:$0xff]
        %v4408 = vld [vmem:[%s4397 + $0x50] sm:$0xff]
        %v4409 = vld [vmem:[%s4397 + $0x58] sm:$0xff]
        %v4410 = vld [vmem:[%s4397 + $0x60] sm:$0xff]
        %v4411 = vld [vmem:[%s4397 + $0x68] sm:$0xff]
        %v4412 = vld [vmem:[%s4397 + $0x70] sm:$0xff]
        %v4413 = vld [vmem:[%s4397 + $0x78] sm:$0xff]
        %v4414 = vld [vmem:[%s4397 + $0x80] sm:$0xff]
        %v4415 = vld [vmem:[%s4397 + $0x88] sm:$0xff]
        %v4416 = vld [vmem:[%s4397 + $0x90] sm:$0xff]
        %v4417 = vld [vmem:[%s4397 + $0x98] sm:$0xff]
        %v4418 = vld [vmem:[%s4397 + $0xa0] sm:$0xff]
        %v4419 = vld [vmem:[%s4397 + $0xa8] sm:$0xff]
        %v4420 = vld [vmem:[%s4397 + $0xb0] sm:$0xff]
        %v4421 = vld [vmem:[%s4397 + $0xb8] sm:$0xff]
        %v4422 = vld [vmem:[%s4397 + $0xc0] sm:$0xff]
        %v4423 = vld [vmem:[%s4397 + $0xc8] sm:$0xff]
        %v4424 = vld [vmem:[%s4397 + $0xd0] sm:$0xff]
        %v4425 = vld [vmem:[%s4397 + $0xd8] sm:$0xff]
        %v4426 = vld [vmem:[%s4397 + $0xe0] sm:$0xff]
        %v4427 = vld [vmem:[%s4397 + $0xe8] sm:$0xff]
        %v4428 = vld [vmem:[%s4397 + $0xf0] sm:$0xff]
        %v4429 = vld [vmem:[%s4397 + $0xf8] sm:$0xff]
        %vm4434 = vcmask 1045504
        %v4435 = vrot.slane %v4393, 2
        %v4436 = vrot.slane %v4395, 2
        %v4437 = vsel %vm4434, %v4435, %v4436
        %v4438 = vrot.slane %v4394, 2
        %v4439 = vrot.slane %v4396, 2
        %v4440 = vsel %vm4434, %v4438, %v4439
        %4445 = vmatprep.subr.mxu0 0.0
        %4446 = vmatpush1.msra.mxu0 %v4398
        %4447 = vmatprep.subr.mxu0 0.0
        %4448 = vmatpush1.msra.mxu0 %v4399
        %4449 = vmatprep.subr.mxu0 0.0
        %4450 = vmatpush1.msra.mxu0 %v4400
        %4451 = vmatprep.subr.mxu0 0.0
        %4452 = vmatpush1.msra.mxu0 %v4401
        %4453 = vmatprep.subr.mxu0 0.0
        %4454 = vmatpush1.msra.mxu0 %v4402
        %4455 = vmatprep.subr.mxu0 0.0
        %4456 = vmatpush1.msra.mxu0 %v4403
        %4457 = vmatprep.subr.mxu0 0.0
        %4458 = vmatpush1.msra.mxu0 %v4404
        %4459 = vmatprep.subr.mxu0 0.0
        %4460 = vmatpush1.msra.mxu0 %v4405
        %4461 = vmatprep.subr.mxu0 0.0
        %4462 = vmatpush1.msra.mxu0 %v4406
        %4463 = vmatprep.subr.mxu0 0.0
        %4464 = vmatpush1.msra.mxu0 %v4407
        %4465 = vmatprep.subr.mxu0 0.0
        %4466 = vmatpush1.msra.mxu0 %v4408
        %4467 = vmatprep.subr.mxu0 0.0
        %4468 = vmatpush1.msra.mxu0 %v4409
        %4469 = vmatprep.subr.mxu0 0.0
        %4470 = vmatpush1.msra.mxu0 %v4410
        %4471 = vmatprep.subr.mxu0 0.0
        %4472 = vmatpush1.msra.mxu0 %v4411
        %4473 = vmatprep.subr.mxu0 0.0
        %4474 = vmatpush1.msra.mxu0 %v4412
        %4475 = vmatprep.subr.mxu0 0.0
        %4476 = vmatpush1.msra.mxu0 %v4413
        %4477 = vmatprep.subr.mxu0 0.0
        %4478 = vmatpush1.msra.mxu0 %v4414
        %4479 = vmatprep.subr.mxu0 0.0
        %4480 = vmatpush1.msra.mxu0 %v4415
        %4481 = vmatprep.subr.mxu0 0.0
        %4482 = vmatpush1.msra.mxu0 %v4416
        %4483 = vmatprep.subr.mxu0 0.0
        %4484 = vmatpush1.msra.mxu0 %v4417
        %4485 = vmatprep.subr.mxu0 0.0
        %4486 = vmatpush1.msra.mxu0 %v4418
        %4487 = vmatprep.subr.mxu0 0.0
        %4488 = vmatpush1.msra.mxu0 %v4419
        %4489 = vmatprep.subr.mxu0 0.0
        %4490 = vmatpush1.msra.mxu0 %v4420
        %4491 = vmatprep.subr.mxu0 0.0
        %4492 = vmatpush1.msra.mxu0 %v4421
        %4493 = vmatprep.subr.mxu0 0.0
        %4494 = vmatpush1.msra.mxu0 %v4422
        %4495 = vmatprep.subr.mxu0 0.0
        %4496 = vmatpush1.msra.mxu0 %v4423
        %4497 = vmatprep.subr.mxu0 0.0
        %4498 = vmatpush1.msra.mxu0 %v4424
        %4499 = vmatprep.subr.mxu0 0.0
        %4500 = vmatpush1.msra.mxu0 %v4425
        %4501 = vmatprep.subr.mxu0 0.0
        %4502 = vmatpush1.msra.mxu0 %v4426
        %4503 = vmatprep.subr.mxu0 0.0
        %4504 = vmatpush1.msra.mxu0 %v4427
        %4505 = vmatprep.subr.mxu0 0.0
        %4506 = vmatpush1.msra.mxu0 %v4428
        %4507 = vmatprep.subr.mxu0 0.0
        %4508 = vmatpush1.msra.mxu0 %v4429
        %4509 = vmatprep.mubr.f32.mxu0 %v4440
        %4510 = vmatmul.mubr.f32.gmra.mrb[0].mxu0 %v4437
        %v4511 = vpop.f32.mrb[0].mxu0
        %v4512 = vadd.f32 0.0, %v4511
        %v4513 = vpop.f32.mrb[0].mxu0
        %4514 = vmatprep.mubr.f32.mxu0 %v4439
        %4515 = vmatmul.mubr.f32.gmra.mrb[0].mxu0 %v4436
        %v4516 = vpop.f32.mrb[0].mxu0
        %v4517 = vadd.f32 0.0, %v4516
        %v4518 = vpop.f32.mrb[0].mxu0
        %4519 = vdwg.mxu0
        %v4520 = vadd.f32 %v4385, %v4512
        %v4521 = vadd.f32 %v4390, %v4517
        %v4522 = vld [vmem:[#allocation5] sm:$0xe0]
        %v4523 = vld [vmem:[#allocation5 + $0x8] sm:$0xe0]
        %v4524 = vld [vmem:[#allocation5 + $0x10] sm:$0xff]
        %v4525 = vld [vmem:[#allocation5 + $0x18] sm:$0xff]
        %v4526 = vld [vmem:[#allocation5 + $0x20] sm:$0x3]
        %v4527 = vld [vmem:[#allocation5 + $0x28] sm:$0x3]
        %s4528 = scalar_lea.vmem [#allocation12], 768
        %v4529 = vld [vmem:[%s4528] sm:$0xff]
        %v4530 = vld [vmem:[%s4528 + $0x8] sm:$0xff]
        %v4531 = vld [vmem:[%s4528 + $0x10] sm:$0xff]
        %v4532 = vld [vmem:[%s4528 + $0x18] sm:$0xff]
        %v4533 = vld [vmem:[%s4528 + $0x20] sm:$0xff]
        %v4534 = vld [vmem:[%s4528 + $0x28] sm:$0xff]
        %v4535 = vld [vmem:[%s4528 + $0x30] sm:$0xff]
        %v4536 = vld [vmem:[%s4528 + $0x38] sm:$0xff]
        %v4537 = vld [vmem:[%s4528 + $0x40] sm:$0xff]
        %v4538 = vld [vmem:[%s4528 + $0x48] sm:$0xff]
        %v4539 = vld [vmem:[%s4528 + $0x50] sm:$0xff]
        %v4540 = vld [vmem:[%s4528 + $0x58] sm:$0xff]
        %v4541 = vld [vmem:[%s4528 + $0x60] sm:$0xff]
        %v4542 = vld [vmem:[%s4528 + $0x68] sm:$0xff]
        %v4543 = vld [vmem:[%s4528 + $0x70] sm:$0xff]
        %v4544 = vld [vmem:[%s4528 + $0x78] sm:$0xff]
        %v4545 = vld [vmem:[%s4528 + $0x80] sm:$0xff]
        %v4546 = vld [vmem:[%s4528 + $0x88] sm:$0xff]
        %v4547 = vld [vmem:[%s4528 + $0x90] sm:$0xff]
        %v4548 = vld [vmem:[%s4528 + $0x98] sm:$0xff]
        %v4549 = vld [vmem:[%s4528 + $0xa0] sm:$0xff]
        %v4550 = vld [vmem:[%s4528 + $0xa8] sm:$0xff]
        %v4551 = vld [vmem:[%s4528 + $0xb0] sm:$0xff]
        %v4552 = vld [vmem:[%s4528 + $0xb8] sm:$0xff]
        %v4553 = vld [vmem:[%s4528 + $0xc0] sm:$0xff]
        %v4554 = vld [vmem:[%s4528 + $0xc8] sm:$0xff]
        %v4555 = vld [vmem:[%s4528 + $0xd0] sm:$0xff]
        %v4556 = vld [vmem:[%s4528 + $0xd8] sm:$0xff]
        %v4557 = vld [vmem:[%s4528 + $0xe0] sm:$0xff]
        %v4558 = vld [vmem:[%s4528 + $0xe8] sm:$0xff]
        %v4559 = vld [vmem:[%s4528 + $0xf0] sm:$0xff]
        %v4560 = vld [vmem:[%s4528 + $0xf8] sm:$0xff]
        %vm4567 = vcmask 1042432
        %v4568 = vrot.slane %v4522, 5
        %v4569 = vrot.slane %v4524, 5
        %v4570 = vsel %vm4567, %v4568, %v4569
        %v4571 = vrot.slane %v4523, 5
        %v4572 = vrot.slane %v4525, 5
        %v4573 = vsel %vm4567, %v4571, %v4572
        %v4574 = vrot.slane %v4526, 5
        %v4575 = vsel %vm4567, %v4569, %v4574
        %v4576 = vrot.slane %v4527, 5
        %v4577 = vsel %vm4567, %v4572, %v4576
        %4582 = vmatprep.subr.mxu0 0.0
        %4583 = vmatpush1.msra.mxu0 %v4529
        %4584 = vmatprep.subr.mxu0 0.0
        %4585 = vmatpush1.msra.mxu0 %v4530
        %4586 = vmatprep.subr.mxu0 0.0
        %4587 = vmatpush1.msra.mxu0 %v4531
        %4588 = vmatprep.subr.mxu0 0.0
        %4589 = vmatpush1.msra.mxu0 %v4532
        %4590 = vmatprep.subr.mxu0 0.0
        %4591 = vmatpush1.msra.mxu0 %v4533
        %4592 = vmatprep.subr.mxu0 0.0
        %4593 = vmatpush1.msra.mxu0 %v4534
        %4594 = vmatprep.subr.mxu0 0.0
        %4595 = vmatpush1.msra.mxu0 %v4535
        %4596 = vmatprep.subr.mxu0 0.0
        %4597 = vmatpush1.msra.mxu0 %v4536
        %4598 = vmatprep.subr.mxu0 0.0
        %4599 = vmatpush1.msra.mxu0 %v4537
        %4600 = vmatprep.subr.mxu0 0.0
        %4601 = vmatpush1.msra.mxu0 %v4538
        %4602 = vmatprep.subr.mxu0 0.0
        %4603 = vmatpush1.msra.mxu0 %v4539
        %4604 = vmatprep.subr.mxu0 0.0
        %4605 = vmatpush1.msra.mxu0 %v4540
        %4606 = vmatprep.subr.mxu0 0.0
        %4607 = vmatpush1.msra.mxu0 %v4541
        %4608 = vmatprep.subr.mxu0 0.0
        %4609 = vmatpush1.msra.mxu0 %v4542
        %4610 = vmatprep.subr.mxu0 0.0
        %4611 = vmatpush1.msra.mxu0 %v4543
        %4612 = vmatprep.subr.mxu0 0.0
        %4613 = vmatpush1.msra.mxu0 %v4544
        %4614 = vmatprep.subr.mxu0 0.0
        %4615 = vmatpush1.msra.mxu0 %v4545
        %4616 = vmatprep.subr.mxu0 0.0
        %4617 = vmatpush1.msra.mxu0 %v4546
        %4618 = vmatprep.subr.mxu0 0.0
        %4619 = vmatpush1.msra.mxu0 %v4547
        %4620 = vmatprep.subr.mxu0 0.0
        %4621 = vmatpush1.msra.mxu0 %v4548
        %4622 = vmatprep.subr.mxu0 0.0
        %4623 = vmatpush1.msra.mxu0 %v4549
        %4624 = vmatprep.subr.mxu0 0.0
        %4625 = vmatpush1.msra.mxu0 %v4550
        %4626 = vmatprep.subr.mxu0 0.0
        %4627 = vmatpush1.msra.mxu0 %v4551
        %4628 = vmatprep.subr.mxu0 0.0
        %4629 = vmatpush1.msra.mxu0 %v4552
        %4630 = vmatprep.subr.mxu0 0.0
        %4631 = vmatpush1.msra.mxu0 %v4553
        %4632 = vmatprep.subr.mxu0 0.0
        %4633 = vmatpush1.msra.mxu0 %v4554
        %4634 = vmatprep.subr.mxu0 0.0
        %4635 = vmatpush1.msra.mxu0 %v4555
        %4636 = vmatprep.subr.mxu0 0.0
        %4637 = vmatpush1.msra.mxu0 %v4556
        %4638 = vmatprep.subr.mxu0 0.0
        %4639 = vmatpush1.msra.mxu0 %v4557
        %4640 = vmatprep.subr.mxu0 0.0
        %4641 = vmatpush1.msra.mxu0 %v4558
        %4642 = vmatprep.subr.mxu0 0.0
        %4643 = vmatpush1.msra.mxu0 %v4559
        %4644 = vmatprep.subr.mxu0 0.0
        %4645 = vmatpush1.msra.mxu0 %v4560
        %4646 = vmatprep.mubr.f32.mxu0 %v4573
        %4647 = vmatmul.mubr.f32.gmra.mrb[0].mxu0 %v4570
        %v4648 = vpop.f32.mrb[0].mxu0
        %v4649 = vadd.f32 0.0, %v4648
        %v4650 = vpop.f32.mrb[0].mxu0
        %4651 = vmatprep.mubr.f32.mxu0 %v4577
        %4652 = vmatmul.mubr.f32.gmra.mrb[0].mxu0 %v4575
        %v4653 = vpop.f32.mrb[0].mxu0
        %v4654 = vadd.f32 0.0, %v4653
        %v4655 = vpop.f32.mrb[0].mxu0
        %4656 = vdwg.mxu0
        %v4657 = vadd.f32 %v4520, %v4649
        %v4658 = vadd.f32 %v4521, %v4654
        %v4659 = vld [vmem:[#allocation5] sm:$0xc0]
        %v4660 = vld [vmem:[#allocation5 + $0x8] sm:$0xc0]
        %v4661 = vld [vmem:[#allocation5 + $0x20] sm:$0x7]
        %v4662 = vld [vmem:[#allocation5 + $0x28] sm:$0x7]
        %s4663 = scalar_lea.vmem [#allocation12], 1024
        %v4664 = vld [vmem:[%s4663] sm:$0xff]
        %v4665 = vld [vmem:[%s4663 + $0x8] sm:$0xff]
        %v4666 = vld [vmem:[%s4663 + $0x10] sm:$0xff]
        %v4667 = vld [vmem:[%s4663 + $0x18] sm:$0xff]
        %v4668 = vld [vmem:[%s4663 + $0x20] sm:$0xff]
        %v4669 = vld [vmem:[%s4663 + $0x28] sm:$0xff]
        %v4670 = vld [vmem:[%s4663 + $0x30] sm:$0xff]
        %v4671 = vld [vmem:[%s4663 + $0x38] sm:$0xff]
        %v4672 = vld [vmem:[%s4663 + $0x40] sm:$0xff]
        %v4673 = vld [vmem:[%s4663 + $0x48] sm:$0xff]
        %v4674 = vld [vmem:[%s4663 + $0x50] sm:$0xff]
        %v4675 = vld [vmem:[%s4663 + $0x58] sm:$0xff]
        %v4676 = vld [vmem:[%s4663 + $0x60] sm:$0xff]
        %v4677 = vld [vmem:[%s4663 + $0x68] sm:$0xff]
        %v4678 = vld [vmem:[%s4663 + $0x70] sm:$0xff]
        %v4679 = vld [vmem:[%s4663 + $0x78] sm:$0xff]
        %v4680 = vld [vmem:[%s4663 + $0x80] sm:$0xff]
        %v4681 = vld [vmem:[%s4663 + $0x88] sm:$0xff]
        %v4682 = vld [vmem:[%s4663 + $0x90] sm:$0xff]
        %v4683 = vld [vmem:[%s4663 + $0x98] sm:$0xff]
        %v4684 = vld [vmem:[%s4663 + $0xa0] sm:$0xff]
        %v4685 = vld [vmem:[%s4663 + $0xa8] sm:$0xff]
        %v4686 = vld [vmem:[%s4663 + $0xb0] sm:$0xff]
        %v4687 = vld [vmem:[%s4663 + $0xb8] sm:$0xff]
        %v4688 = vld [vmem:[%s4663 + $0xc0] sm:$0xff]
        %v4689 = vld [vmem:[%s4663 + $0xc8] sm:$0xff]
        %v4690 = vld [vmem:[%s4663 + $0xd0] sm:$0xff]
        %v4691 = vld [vmem:[%s4663 + $0xd8] sm:$0xff]
        %v4692 = vld [vmem:[%s4663 + $0xe0] sm:$0xff]
        %v4693 = vld [vmem:[%s4663 + $0xe8] sm:$0xff]
        %v4694 = vld [vmem:[%s4663 + $0xf0] sm:$0xff]
        %v4695 = vld [vmem:[%s4663 + $0xf8] sm:$0xff]
        %vm4700 = vcmask 1041408
        %v4701 = vrot.slane %v4659, 6
        %v4702 = vrot.slane %v4524, 6
        %v4703 = vsel %vm4700, %v4701, %v4702
        %v4704 = vrot.slane %v4660, 6
        %v4705 = vrot.slane %v4525, 6
        %v4706 = vsel %vm4700, %v4704, %v4705
        %v4707 = vrot.slane %v4661, 6
        %v4708 = vsel %vm4700, %v4702, %v4707
        %v4709 = vrot.slane %v4662, 6
        %v4710 = vsel %vm4700, %v4705, %v4709
        %4715 = vmatprep.subr.mxu0 0.0
        %4716 = vmatpush1.msra.mxu0 %v4664
        %4717 = vmatprep.subr.mxu0 0.0
        %4718 = vmatpush1.msra.mxu0 %v4665
        %4719 = vmatprep.subr.mxu0 0.0
        %4720 = vmatpush1.msra.mxu0 %v4666
        %4721 = vmatprep.subr.mxu0 0.0
        %4722 = vmatpush1.msra.mxu0 %v4667
        %4723 = vmatprep.subr.mxu0 0.0
        %4724 = vmatpush1.msra.mxu0 %v4668
        %4725 = vmatprep.subr.mxu0 0.0
        %4726 = vmatpush1.msra.mxu0 %v4669
        %4727 = vmatprep.subr.mxu0 0.0
        %4728 = vmatpush1.msra.mxu0 %v4670
        %4729 = vmatprep.subr.mxu0 0.0
        %4730 = vmatpush1.msra.mxu0 %v4671
        %4731 = vmatprep.subr.mxu0 0.0
        %4732 = vmatpush1.msra.mxu0 %v4672
        %4733 = vmatprep.subr.mxu0 0.0
        %4734 = vmatpush1.msra.mxu0 %v4673
        %4735 = vmatprep.subr.mxu0 0.0
        %4736 = vmatpush1.msra.mxu0 %v4674
        %4737 = vmatprep.subr.mxu0 0.0
        %4738 = vmatpush1.msra.mxu0 %v4675
        %4739 = vmatprep.subr.mxu0 0.0
        %4740 = vmatpush1.msra.mxu0 %v4676
        %4741 = vmatprep.subr.mxu0 0.0
        %4742 = vmatpush1.msra.mxu0 %v4677
        %4743 = vmatprep.subr.mxu0 0.0
        %4744 = vmatpush1.msra.mxu0 %v4678
        %4745 = vmatprep.subr.mxu0 0.0
        %4746 = vmatpush1.msra.mxu0 %v4679
        %4747 = vmatprep.subr.mxu0 0.0
        %4748 = vmatpush1.msra.mxu0 %v4680
        %4749 = vmatprep.subr.mxu0 0.0
        %4750 = vmatpush1.msra.mxu0 %v4681
        %4751 = vmatprep.subr.mxu0 0.0
        %4752 = vmatpush1.msra.mxu0 %v4682
        %4753 = vmatprep.subr.mxu0 0.0
        %4754 = vmatpush1.msra.mxu0 %v4683
        %4755 = vmatprep.subr.mxu0 0.0
        %4756 = vmatpush1.msra.mxu0 %v4684
        %4757 = vmatprep.subr.mxu0 0.0
        %4758 = vmatpush1.msra.mxu0 %v4685
        %4759 = vmatprep.subr.mxu0 0.0
        %4760 = vmatpush1.msra.mxu0 %v4686
        %4761 = vmatprep.subr.mxu0 0.0
        %4762 = vmatpush1.msra.mxu0 %v4687
        %4763 = vmatprep.subr.mxu0 0.0
        %4764 = vmatpush1.msra.mxu0 %v4688
        %4765 = vmatprep.subr.mxu0 0.0
        %4766 = vmatpush1.msra.mxu0 %v4689
        %4767 = vmatprep.subr.mxu0 0.0
        %4768 = vmatpush1.msra.mxu0 %v4690
        %4769 = vmatprep.subr.mxu0 0.0
        %4770 = vmatpush1.msra.mxu0 %v4691
        %4771 = vmatprep.subr.mxu0 0.0
        %4772 = vmatpush1.msra.mxu0 %v4692
        %4773 = vmatprep.subr.mxu0 0.0
        %4774 = vmatpush1.msra.mxu0 %v4693
        %4775 = vmatprep.subr.mxu0 0.0
        %4776 = vmatpush1.msra.mxu0 %v4694
        %4777 = vmatprep.subr.mxu0 0.0
        %4778 = vmatpush1.msra.mxu0 %v4695
        %4779 = vmatprep.mubr.f32.mxu0 %v4706
        %4780 = vmatmul.mubr.f32.gmra.mrb[0].mxu0 %v4703
        %v4781 = vpop.f32.mrb[0].mxu0
        %v4782 = vadd.f32 0.0, %v4781
        %v4783 = vpop.f32.mrb[0].mxu0
        %4784 = vmatprep.mubr.f32.mxu0 %v4710
        %4785 = vmatmul.mubr.f32.gmra.mrb[0].mxu0 %v4708
        %v4786 = vpop.f32.mrb[0].mxu0
        %v4787 = vadd.f32 0.0, %v4786
        %v4788 = vpop.f32.mrb[0].mxu0
        %4789 = vdwg.mxu0
        %v4790 = vadd.f32 %v4657, %v4782
        %v4791 = vadd.f32 %v4658, %v4787
        %v4792 = vld [vmem:[#allocation5] sm:$0x80]
        %v4793 = vld [vmem:[#allocation5 + $0x8] sm:$0x80]
        %v4794 = vld [vmem:[#allocation5 + $0x20] sm:$0xf]
        %v4795 = vld [vmem:[#allocation5 + $0x28] sm:$0xf]
        %s4796 = scalar_lea.vmem [#allocation12], 1280
        %v4797 = vld [vmem:[%s4796] sm:$0xff]
        %v4798 = vld [vmem:[%s4796 + $0x8] sm:$0xff]
        %v4799 = vld [vmem:[%s4796 + $0x10] sm:$0xff]
        %v4800 = vld [vmem:[%s4796 + $0x18] sm:$0xff]
        %v4801 = vld [vmem:[%s4796 + $0x20] sm:$0xff]
        %v4802 = vld [vmem:[%s4796 + $0x28] sm:$0xff]
        %v4803 = vld [vmem:[%s4796 + $0x30] sm:$0xff]
        %v4804 = vld [vmem:[%s4796 + $0x38] sm:$0xff]
        %v4805 = vld [vmem:[%s4796 + $0x40] sm:$0xff]
        %v4806 = vld [vmem:[%s4796 + $0x48] sm:$0xff]
        %v4807 = vld [vmem:[%s4796 + $0x50] sm:$0xff]
        %v4808 = vld [vmem:[%s4796 + $0x58] sm:$0xff]
        %v4809 = vld [vmem:[%s4796 + $0x60] sm:$0xff]
        %v4810 = vld [vmem:[%s4796 + $0x68] sm:$0xff]
        %v4811 = vld [vmem:[%s4796 + $0x70] sm:$0xff]
        %v4812 = vld [vmem:[%s4796 + $0x78] sm:$0xff]
        %v4813 = vld [vmem:[%s4796 + $0x80] sm:$0xff]
        %v4814 = vld [vmem:[%s4796 + $0x88] sm:$0xff]
        %v4815 = vld [vmem:[%s4796 + $0x90] sm:$0xff]
        %v4816 = vld [vmem:[%s4796 + $0x98] sm:$0xff]
        %v4817 = vld [vmem:[%s4796 + $0xa0] sm:$0xff]
        %v4818 = vld [vmem:[%s4796 + $0xa8] sm:$0xff]
        %v4819 = vld [vmem:[%s4796 + $0xb0] sm:$0xff]
        %v4820 = vld [vmem:[%s4796 + $0xb8] sm:$0xff]
        %v4821 = vld [vmem:[%s4796 + $0xc0] sm:$0xff]
        %v4822 = vld [vmem:[%s4796 + $0xc8] sm:$0xff]
        %v4823 = vld [vmem:[%s4796 + $0xd0] sm:$0xff]
        %v4824 = vld [vmem:[%s4796 + $0xd8] sm:$0xff]
        %v4825 = vld [vmem:[%s4796 + $0xe0] sm:$0xff]
        %v4826 = vld [vmem:[%s4796 + $0xe8] sm:$0xff]
        %v4827 = vld [vmem:[%s4796 + $0xf0] sm:$0xff]
        %v4828 = vld [vmem:[%s4796 + $0xf8] sm:$0xff]
        %vm4833 = vcmask 1040384
        %v4834 = vrot.slane %v4792, 7
        %v4835 = vrot.slane %v4524, 7
        %v4836 = vsel %vm4833, %v4834, %v4835
        %v4837 = vrot.slane %v4793, 7
        %v4838 = vrot.slane %v4525, 7
        %v4839 = vsel %vm4833, %v4837, %v4838
        %v4840 = vrot.slane %v4794, 7
        %v4841 = vsel %vm4833, %v4835, %v4840
        %v4842 = vrot.slane %v4795, 7
        %v4843 = vsel %vm4833, %v4838, %v4842
        %4848 = vmatprep.subr.mxu0 0.0
        %4849 = vmatpush1.msra.mxu0 %v4797
        %4850 = vmatprep.subr.mxu0 0.0
        %4851 = vmatpush1.msra.mxu0 %v4798
        %4852 = vmatprep.subr.mxu0 0.0
        %4853 = vmatpush1.msra.mxu0 %v4799
        %4854 = vmatprep.subr.mxu0 0.0
        %4855 = vmatpush1.msra.mxu0 %v4800
        %4856 = vmatprep.subr.mxu0 0.0
        %4857 = vmatpush1.msra.mxu0 %v4801
        %4858 = vmatprep.subr.mxu0 0.0
        %4859 = vmatpush1.msra.mxu0 %v4802
        %4860 = vmatprep.subr.mxu0 0.0
        %4861 = vmatpush1.msra.mxu0 %v4803
        %4862 = vmatprep.subr.mxu0 0.0
        %4863 = vmatpush1.msra.mxu0 %v4804
        %4864 = vmatprep.subr.mxu0 0.0
        %4865 = vmatpush1.msra.mxu0 %v4805
        %4866 = vmatprep.subr.mxu0 0.0
        %4867 = vmatpush1.msra.mxu0 %v4806
        %4868 = vmatprep.subr.mxu0 0.0
        %4869 = vmatpush1.msra.mxu0 %v4807
        %4870 = vmatprep.subr.mxu0 0.0
        %4871 = vmatpush1.msra.mxu0 %v4808
        %4872 = vmatprep.subr.mxu0 0.0
        %4873 = vmatpush1.msra.mxu0 %v4809
        %4874 = vmatprep.subr.mxu0 0.0
        %4875 = vmatpush1.msra.mxu0 %v4810
        %4876 = vmatprep.subr.mxu0 0.0
        %4877 = vmatpush1.msra.mxu0 %v4811
        %4878 = vmatprep.subr.mxu0 0.0
        %4879 = vmatpush1.msra.mxu0 %v4812
        %4880 = vmatprep.subr.mxu0 0.0
        %4881 = vmatpush1.msra.mxu0 %v4813
        %4882 = vmatprep.subr.mxu0 0.0
        %4883 = vmatpush1.msra.mxu0 %v4814
        %4884 = vmatprep.subr.mxu0 0.0
        %4885 = vmatpush1.msra.mxu0 %v4815
        %4886 = vmatprep.subr.mxu0 0.0
        %4887 = vmatpush1.msra.mxu0 %v4816
        %4888 = vmatprep.subr.mxu0 0.0
        %4889 = vmatpush1.msra.mxu0 %v4817
        %4890 = vmatprep.subr.mxu0 0.0
        %4891 = vmatpush1.msra.mxu0 %v4818
        %4892 = vmatprep.subr.mxu0 0.0
        %4893 = vmatpush1.msra.mxu0 %v4819
        %4894 = vmatprep.subr.mxu0 0.0
        %4895 = vmatpush1.msra.mxu0 %v4820
        %4896 = vmatprep.subr.mxu0 0.0
        %4897 = vmatpush1.msra.mxu0 %v4821
        %4898 = vmatprep.subr.mxu0 0.0
        %4899 = vmatpush1.msra.mxu0 %v4822
        %4900 = vmatprep.subr.mxu0 0.0
        %4901 = vmatpush1.msra.mxu0 %v4823
        %4902 = vmatprep.subr.mxu0 0.0
        %4903 = vmatpush1.msra.mxu0 %v4824
        %4904 = vmatprep.subr.mxu0 0.0
        %4905 = vmatpush1.msra.mxu0 %v4825
        %4906 = vmatprep.subr.mxu0 0.0
        %4907 = vmatpush1.msra.mxu0 %v4826
        %4908 = vmatprep.subr.mxu0 0.0
        %4909 = vmatpush1.msra.mxu0 %v4827
        %4910 = vmatprep.subr.mxu0 0.0
        %4911 = vmatpush1.msra.mxu0 %v4828
        %4912 = vmatprep.mubr.f32.mxu0 %v4839
        %4913 = vmatmul.mubr.f32.gmra.mrb[0].mxu0 %v4836
        %v4914 = vpop.f32.mrb[0].mxu0
        %v4915 = vadd.f32 0.0, %v4914
        %v4916 = vpop.f32.mrb[0].mxu0
        %4917 = vmatprep.mubr.f32.mxu0 %v4843
        %4918 = vmatmul.mubr.f32.gmra.mrb[0].mxu0 %v4841
        %v4919 = vpop.f32.mrb[0].mxu0
        %v4920 = vadd.f32 0.0, %v4919
        %v4921 = vpop.f32.mrb[0].mxu0
        %4922 = vdwg.mxu0
        %v4923 = vadd.f32 %v4790, %v4915
        %v4924 = vadd.f32 %v4791, %v4920
        %v4925 = vld [vmem:[#allocation5 + $0x10] sm:$0xfc]
        %v4926 = vld [vmem:[#allocation5 + $0x18] sm:$0xfc]
        %v4927 = vld [vmem:[#allocation5 + $0x20] sm:$0x7f]
        %v4928 = vld [vmem:[#allocation5 + $0x28] sm:$0x7f]
        %s4929 = scalar_lea.vmem [#allocation12], 1536
        %v4930 = vld [vmem:[%s4929] sm:$0xff]
        %v4931 = vld [vmem:[%s4929 + $0x8] sm:$0xff]
        %v4932 = vld [vmem:[%s4929 + $0x10] sm:$0xff]
        %v4933 = vld [vmem:[%s4929 + $0x18] sm:$0xff]
        %v4934 = vld [vmem:[%s4929 + $0x20] sm:$0xff]
        %v4935 = vld [vmem:[%s4929 + $0x28] sm:$0xff]
        %v4936 = vld [vmem:[%s4929 + $0x30] sm:$0xff]
        %v4937 = vld [vmem:[%s4929 + $0x38] sm:$0xff]
        %v4938 = vld [vmem:[%s4929 + $0x40] sm:$0xff]
        %v4939 = vld [vmem:[%s4929 + $0x48] sm:$0xff]
        %v4940 = vld [vmem:[%s4929 + $0x50] sm:$0xff]
        %v4941 = vld [vmem:[%s4929 + $0x58] sm:$0xff]
        %v4942 = vld [vmem:[%s4929 + $0x60] sm:$0xff]
        %v4943 = vld [vmem:[%s4929 + $0x68] sm:$0xff]
        %v4944 = vld [vmem:[%s4929 + $0x70] sm:$0xff]
        %v4945 = vld [vmem:[%s4929 + $0x78] sm:$0xff]
        %v4946 = vld [vmem:[%s4929 + $0x80] sm:$0xff]
        %v4947 = vld [vmem:[%s4929 + $0x88] sm:$0xff]
        %v4948 = vld [vmem:[%s4929 + $0x90] sm:$0xff]
        %v4949 = vld [vmem:[%s4929 + $0x98] sm:$0xff]
        %v4950 = vld [vmem:[%s4929 + $0xa0] sm:$0xff]
        %v4951 = vld [vmem:[%s4929 + $0xa8] sm:$0xff]
        %v4952 = vld [vmem:[%s4929 + $0xb0] sm:$0xff]
        %v4953 = vld [vmem:[%s4929 + $0xb8] sm:$0xff]
        %v4954 = vld [vmem:[%s4929 + $0xc0] sm:$0xff]
        %v4955 = vld [vmem:[%s4929 + $0xc8] sm:$0xff]
        %v4956 = vld [vmem:[%s4929 + $0xd0] sm:$0xff]
        %v4957 = vld [vmem:[%s4929 + $0xd8] sm:$0xff]
        %v4958 = vld [vmem:[%s4929 + $0xe0] sm:$0xff]
        %v4959 = vld [vmem:[%s4929 + $0xe8] sm:$0xff]
        %v4960 = vld [vmem:[%s4929 + $0xf0] sm:$0xff]
        %v4961 = vld [vmem:[%s4929 + $0xf8] sm:$0xff]
        %v4966 = vrot.slane %v4925, 2
        %v4967 = vrot.slane %v4927, 2
        %v4968 = vsel %vm4434, %v4966, %v4967
        %v4969 = vrot.slane %v4926, 2
        %v4970 = vrot.slane %v4928, 2
        %v4971 = vsel %vm4434, %v4969, %v4970
        %4976 = vmatprep.subr.mxu0 0.0
        %4977 = vmatpush1.msra.mxu0 %v4930
        %4978 = vmatprep.subr.mxu0 0.0
        %4979 = vmatpush1.msra.mxu0 %v4931
        %4980 = vmatprep.subr.mxu0 0.0
        %4981 = vmatpush1.msra.mxu0 %v4932
        %4982 = vmatprep.subr.mxu0 0.0
        %4983 = vmatpush1.msra.mxu0 %v4933
        %4984 = vmatprep.subr.mxu0 0.0
        %4985 = vmatpush1.msra.mxu0 %v4934
        %4986 = vmatprep.subr.mxu0 0.0
        %4987 = vmatpush1.msra.mxu0 %v4935
        %4988 = vmatprep.subr.mxu0 0.0
        %4989 = vmatpush1.msra.mxu0 %v4936
        %4990 = vmatprep.subr.mxu0 0.0
        %4991 = vmatpush1.msra.mxu0 %v4937
        %4992 = vmatprep.subr.mxu0 0.0
        %4993 = vmatpush1.msra.mxu0 %v4938
        %4994 = vmatprep.subr.mxu0 0.0
        %4995 = vmatpush1.msra.mxu0 %v4939
        %4996 = vmatprep.subr.mxu0 0.0
        %4997 = vmatpush1.msra.mxu0 %v4940
        %4998 = vmatprep.subr.mxu0 0.0
        %4999 = vmatpush1.msra.mxu0 %v4941
        %5000 = vmatprep.subr.mxu0 0.0
        %5001 = vmatpush1.msra.mxu0 %v4942
        %5002 = vmatprep.subr.mxu0 0.0
        %5003 = vmatpush1.msra.mxu0 %v4943
        %5004 = vmatprep.subr.mxu0 0.0
        %5005 = vmatpush1.msra.mxu0 %v4944
        %5006 = vmatprep.subr.mxu0 0.0
        %5007 = vmatpush1.msra.mxu0 %v4945
        %5008 = vmatprep.subr.mxu0 0.0
        %5009 = vmatpush1.msra.mxu0 %v4946
        %5010 = vmatprep.subr.mxu0 0.0
        %5011 = vmatpush1.msra.mxu0 %v4947
        %5012 = vmatprep.subr.mxu0 0.0
        %5013 = vmatpush1.msra.mxu0 %v4948
        %5014 = vmatprep.subr.mxu0 0.0
        %5015 = vmatpush1.msra.mxu0 %v4949
        %5016 = vmatprep.subr.mxu0 0.0
        %5017 = vmatpush1.msra.mxu0 %v4950
        %5018 = vmatprep.subr.mxu0 0.0
        %5019 = vmatpush1.msra.mxu0 %v4951
        %5020 = vmatprep.subr.mxu0 0.0
        %5021 = vmatpush1.msra.mxu0 %v4952
        %5022 = vmatprep.subr.mxu0 0.0
        %5023 = vmatpush1.msra.mxu0 %v4953
        %5024 = vmatprep.subr.mxu0 0.0
        %5025 = vmatpush1.msra.mxu0 %v4954
        %5026 = vmatprep.subr.mxu0 0.0
        %5027 = vmatpush1.msra.mxu0 %v4955
        %5028 = vmatprep.subr.mxu0 0.0
        %5029 = vmatpush1.msra.mxu0 %v4956
        %5030 = vmatprep.subr.mxu0 0.0
        %5031 = vmatpush1.msra.mxu0 %v4957
        %5032 = vmatprep.subr.mxu0 0.0
        %5033 = vmatpush1.msra.mxu0 %v4958
        %5034 = vmatprep.subr.mxu0 0.0
        %5035 = vmatpush1.msra.mxu0 %v4959
        %5036 = vmatprep.subr.mxu0 0.0
        %5037 = vmatpush1.msra.mxu0 %v4960
        %5038 = vmatprep.subr.mxu0 0.0
        %5039 = vmatpush1.msra.mxu0 %v4961
        %5040 = vmatprep.mubr.f32.mxu0 %v4971
        %5041 = vmatmul.mubr.f32.gmra.mrb[0].mxu0 %v4968
        %v5042 = vpop.f32.mrb[0].mxu0
        %v5043 = vadd.f32 0.0, %v5042
        %v5044 = vpop.f32.mrb[0].mxu0
        %5045 = vmatprep.mubr.f32.mxu0 %v4970
        %5046 = vmatmul.mubr.f32.gmra.mrb[0].mxu0 %v4967
        %v5047 = vpop.f32.mrb[0].mxu0
        %v5048 = vadd.f32 0.0, %v5047
        %v5049 = vpop.f32.mrb[0].mxu0
        %5050 = vdwg.mxu0
        %v5051 = vadd.f32 %v4923, %v5043
        %v5052 = vadd.f32 %v4924, %v5048
        %v5053 = vld [vmem:[#allocation5 + $0x10] sm:$0xf8]
        %v5054 = vld [vmem:[#allocation5 + $0x18] sm:$0xf8]
        %v5055 = vld [vmem:[#allocation5 + $0x20] sm:$0xff]
        %v5056 = vld [vmem:[#allocation5 + $0x28] sm:$0xff]
        %s5057 = scalar_lea.vmem [#allocation12], 1792
        %v5058 = vld [vmem:[%s5057] sm:$0xff]
        %v5059 = vld [vmem:[%s5057 + $0x8] sm:$0xff]
        %v5060 = vld [vmem:[%s5057 + $0x10] sm:$0xff]
        %v5061 = vld [vmem:[%s5057 + $0x18] sm:$0xff]
        %v5062 = vld [vmem:[%s5057 + $0x20] sm:$0xff]
        %v5063 = vld [vmem:[%s5057 + $0x28] sm:$0xff]
        %v5064 = vld [vmem:[%s5057 + $0x30] sm:$0xff]
        %v5065 = vld [vmem:[%s5057 + $0x38] sm:$0xff]
        %v5066 = vld [vmem:[%s5057 + $0x40] sm:$0xff]
        %v5067 = vld [vmem:[%s5057 + $0x48] sm:$0xff]
        %v5068 = vld [vmem:[%s5057 + $0x50] sm:$0xff]
        %v5069 = vld [vmem:[%s5057 + $0x58] sm:$0xff]
        %v5070 = vld [vmem:[%s5057 + $0x60] sm:$0xff]
        %v5071 = vld [vmem:[%s5057 + $0x68] sm:$0xff]
        %v5072 = vld [vmem:[%s5057 + $0x70] sm:$0xff]
        %v5073 = vld [vmem:[%s5057 + $0x78] sm:$0xff]
        %v5074 = vld [vmem:[%s5057 + $0x80] sm:$0xff]
        %v5075 = vld [vmem:[%s5057 + $0x88] sm:$0xff]
        %v5076 = vld [vmem:[%s5057 + $0x90] sm:$0xff]
        %v5077 = vld [vmem:[%s5057 + $0x98] sm:$0xff]
        %v5078 = vld [vmem:[%s5057 + $0xa0] sm:$0xff]
        %v5079 = vld [vmem:[%s5057 + $0xa8] sm:$0xff]
        %v5080 = vld [vmem:[%s5057 + $0xb0] sm:$0xff]
        %v5081 = vld [vmem:[%s5057 + $0xb8] sm:$0xff]
        %v5082 = vld [vmem:[%s5057 + $0xc0] sm:$0xff]
        %v5083 = vld [vmem:[%s5057 + $0xc8] sm:$0xff]
        %v5084 = vld [vmem:[%s5057 + $0xd0] sm:$0xff]
        %v5085 = vld [vmem:[%s5057 + $0xd8] sm:$0xff]
        %v5086 = vld [vmem:[%s5057 + $0xe0] sm:$0xff]
        %v5087 = vld [vmem:[%s5057 + $0xe8] sm:$0xff]
        %v5088 = vld [vmem:[%s5057 + $0xf0] sm:$0xff]
        %v5089 = vld [vmem:[%s5057 + $0xf8] sm:$0xff]
        %vm5094 = vcmask 1044480
        %v5095 = vrot.slane %v5053, 3
        %v5096 = vrot.slane %v5055, 3
        %v5097 = vsel %vm5094, %v5095, %v5096
        %v5098 = vrot.slane %v5054, 3
        %v5099 = vrot.slane %v5056, 3
        %v5100 = vsel %vm5094, %v5098, %v5099
        %5105 = vmatprep.subr.mxu0 0.0
        %5106 = vmatpush1.msra.mxu0 %v5058
        %5107 = vmatprep.subr.mxu0 0.0
        %5108 = vmatpush1.msra.mxu0 %v5059
        %5109 = vmatprep.subr.mxu0 0.0
        %5110 = vmatpush1.msra.mxu0 %v5060
        %5111 = vmatprep.subr.mxu0 0.0
        %5112 = vmatpush1.msra.mxu0 %v5061
        %5113 = vmatprep.subr.mxu0 0.0
        %5114 = vmatpush1.msra.mxu0 %v5062
        %5115 = vmatprep.subr.mxu0 0.0
        %5116 = vmatpush1.msra.mxu0 %v5063
        %5117 = vmatprep.subr.mxu0 0.0
        %5118 = vmatpush1.msra.mxu0 %v5064
        %5119 = vmatprep.subr.mxu0 0.0
        %5120 = vmatpush1.msra.mxu0 %v5065
        %5121 = vmatprep.subr.mxu0 0.0
        %5122 = vmatpush1.msra.mxu0 %v5066
        %5123 = vmatprep.subr.mxu0 0.0
        %5124 = vmatpush1.msra.mxu0 %v5067
        %5125 = vmatprep.subr.mxu0 0.0
        %5126 = vmatpush1.msra.mxu0 %v5068
        %5127 = vmatprep.subr.mxu0 0.0
        %5128 = vmatpush1.msra.mxu0 %v5069
        %5129 = vmatprep.subr.mxu0 0.0
        %5130 = vmatpush1.msra.mxu0 %v5070
        %5131 = vmatprep.subr.mxu0 0.0
        %5132 = vmatpush1.msra.mxu0 %v5071
        %5133 = vmatprep.subr.mxu0 0.0
        %5134 = vmatpush1.msra.mxu0 %v5072
        %5135 = vmatprep.subr.mxu0 0.0
        %5136 = vmatpush1.msra.mxu0 %v5073
        %5137 = vmatprep.subr.mxu0 0.0
        %5138 = vmatpush1.msra.mxu0 %v5074
        %5139 = vmatprep.subr.mxu0 0.0
        %5140 = vmatpush1.msra.mxu0 %v5075
        %5141 = vmatprep.subr.mxu0 0.0
        %5142 = vmatpush1.msra.mxu0 %v5076
        %5143 = vmatprep.subr.mxu0 0.0
        %5144 = vmatpush1.msra.mxu0 %v5077
        %5145 = vmatprep.subr.mxu0 0.0
        %5146 = vmatpush1.msra.mxu0 %v5078
        %5147 = vmatprep.subr.mxu0 0.0
        %5148 = vmatpush1.msra.mxu0 %v5079
        %5149 = vmatprep.subr.mxu0 0.0
        %5150 = vmatpush1.msra.mxu0 %v5080
        %5151 = vmatprep.subr.mxu0 0.0
        %5152 = vmatpush1.msra.mxu0 %v5081
        %5153 = vmatprep.subr.mxu0 0.0
        %5154 = vmatpush1.msra.mxu0 %v5082
        %5155 = vmatprep.subr.mxu0 0.0
        %5156 = vmatpush1.msra.mxu0 %v5083
        %5157 = vmatprep.subr.mxu0 0.0
        %5158 = vmatpush1.msra.mxu0 %v5084
        %5159 = vmatprep.subr.mxu0 0.0
        %5160 = vmatpush1.msra.mxu0 %v5085
        %5161 = vmatprep.subr.mxu0 0.0
        %5162 = vmatpush1.msra.mxu0 %v5086
        %5163 = vmatprep.subr.mxu0 0.0
        %5164 = vmatpush1.msra.mxu0 %v5087
        %5165 = vmatprep.subr.mxu0 0.0
        %5166 = vmatpush1.msra.mxu0 %v5088
        %5167 = vmatprep.subr.mxu0 0.0
        %5168 = vmatpush1.msra.mxu0 %v5089
        %5169 = vmatprep.mubr.f32.mxu0 %v5100
        %5170 = vmatmul.mubr.f32.gmra.mrb[0].mxu0 %v5097
        %v5171 = vpop.f32.mrb[0].mxu0
        %v5172 = vadd.f32 0.0, %v5171
        %v5173 = vpop.f32.mrb[0].mxu0
        %5174 = vmatprep.mubr.f32.mxu0 %v5099
        %5175 = vmatmul.mubr.f32.gmra.mrb[0].mxu0 %v5096
        %v5176 = vpop.f32.mrb[0].mxu0
        %v5177 = vadd.f32 0.0, %v5176
        %v5178 = vpop.f32.mrb[0].mxu0
        %5179 = vdwg.mxu0
        %v5180 = vadd.f32 %v5051, %v5172
        %v5181 = vadd.f32 %v5052, %v5177
        %v5182 = vld [vmem:[#allocation5 + $0x10] sm:$0xf0]
        %v5183 = vld [vmem:[#allocation5 + $0x18] sm:$0xf0]
        %v5184 = vld [vmem:[#allocation5 + $0x20] sm:$0xff]
        %v5185 = vld [vmem:[#allocation5 + $0x28] sm:$0xff]
        %v5186 = vld [vmem:[#allocation5 + $0x30] sm:$0x1]
        %v5187 = vld [vmem:[#allocation5 + $0x38] sm:$0x1]
        %s5188 = scalar_lea.vmem [#allocation12], 2048
        %v5189 = vld [vmem:[%s5188] sm:$0xff]
        %v5190 = vld [vmem:[%s5188 + $0x8] sm:$0xff]
        %v5191 = vld [vmem:[%s5188 + $0x10] sm:$0xff]
        %v5192 = vld [vmem:[%s5188 + $0x18] sm:$0xff]
        %v5193 = vld [vmem:[%s5188 + $0x20] sm:$0xff]
        %v5194 = vld [vmem:[%s5188 + $0x28] sm:$0xff]
        %v5195 = vld [vmem:[%s5188 + $0x30] sm:$0xff]
        %v5196 = vld [vmem:[%s5188 + $0x38] sm:$0xff]
        %v5197 = vld [vmem:[%s5188 + $0x40] sm:$0xff]
        %v5198 = vld [vmem:[%s5188 + $0x48] sm:$0xff]
        %v5199 = vld [vmem:[%s5188 + $0x50] sm:$0xff]
        %v5200 = vld [vmem:[%s5188 + $0x58] sm:$0xff]
        %v5201 = vld [vmem:[%s5188 + $0x60] sm:$0xff]
        %v5202 = vld [vmem:[%s5188 + $0x68] sm:$0xff]
        %v5203 = vld [vmem:[%s5188 + $0x70] sm:$0xff]
        %v5204 = vld [vmem:[%s5188 + $0x78] sm:$0xff]
        %v5205 = vld [vmem:[%s5188 + $0x80] sm:$0xff]
        %v5206 = vld [vmem:[%s5188 + $0x88] sm:$0xff]
        %v5207 = vld [vmem:[%s5188 + $0x90] sm:$0xff]
        %v5208 = vld [vmem:[%s5188 + $0x98] sm:$0xff]
        %v5209 = vld [vmem:[%s5188 + $0xa0] sm:$0xff]
        %v5210 = vld [vmem:[%s5188 + $0xa8] sm:$0xff]
        %v5211 = vld [vmem:[%s5188 + $0xb0] sm:$0xff]
        %v5212 = vld [vmem:[%s5188 + $0xb8] sm:$0xff]
        %v5213 = vld [vmem:[%s5188 + $0xc0] sm:$0xff]
        %v5214 = vld [vmem:[%s5188 + $0xc8] sm:$0xff]
        %v5215 = vld [vmem:[%s5188 + $0xd0] sm:$0xff]
        %v5216 = vld [vmem:[%s5188 + $0xd8] sm:$0xff]
        %v5217 = vld [vmem:[%s5188 + $0xe0] sm:$0xff]
        %v5218 = vld [vmem:[%s5188 + $0xe8] sm:$0xff]
        %v5219 = vld [vmem:[%s5188 + $0xf0] sm:$0xff]
        %v5220 = vld [vmem:[%s5188 + $0xf8] sm:$0xff]
        %vm5227 = vcmask 1043456
        %v5228 = vrot.slane %v5182, 4
        %v5229 = vrot.slane %v5184, 4
        %v5230 = vsel %vm5227, %v5228, %v5229
        %v5231 = vrot.slane %v5183, 4
        %v5232 = vrot.slane %v5185, 4
        %v5233 = vsel %vm5227, %v5231, %v5232
        %v5234 = vrot.slane %v5186, 4
        %v5235 = vsel %vm5227, %v5229, %v5234
        %v5236 = vrot.slane %v5187, 4
        %v5237 = vsel %vm5227, %v5232, %v5236
        %5242 = vmatprep.subr.mxu0 0.0
        %5243 = vmatpush1.msra.mxu0 %v5189
        %5244 = vmatprep.subr.mxu0 0.0
        %5245 = vmatpush1.msra.mxu0 %v5190
        %5246 = vmatprep.subr.mxu0 0.0
        %5247 = vmatpush1.msra.mxu0 %v5191
        %5248 = vmatprep.subr.mxu0 0.0
        %5249 = vmatpush1.msra.mxu0 %v5192
        %5250 = vmatprep.subr.mxu0 0.0
        %5251 = vmatpush1.msra.mxu0 %v5193
        %5252 = vmatprep.subr.mxu0 0.0
        %5253 = vmatpush1.msra.mxu0 %v5194
        %5254 = vmatprep.subr.mxu0 0.0
        %5255 = vmatpush1.msra.mxu0 %v5195
        %5256 = vmatprep.subr.mxu0 0.0
        %5257 = vmatpush1.msra.mxu0 %v5196
        %5258 = vmatprep.subr.mxu0 0.0
        %5259 = vmatpush1.msra.mxu0 %v5197
        %5260 = vmatprep.subr.mxu0 0.0
        %5261 = vmatpush1.msra.mxu0 %v5198
        %5262 = vmatprep.subr.mxu0 0.0
        %5263 = vmatpush1.msra.mxu0 %v5199
        %5264 = vmatprep.subr.mxu0 0.0
        %5265 = vmatpush1.msra.mxu0 %v5200
        %5266 = vmatprep.subr.mxu0 0.0
        %5267 = vmatpush1.msra.mxu0 %v5201
        %5268 = vmatprep.subr.mxu0 0.0
        %5269 = vmatpush1.msra.mxu0 %v5202
        %5270 = vmatprep.subr.mxu0 0.0
        %5271 = vmatpush1.msra.mxu0 %v5203
        %5272 = vmatprep.subr.mxu0 0.0
        %5273 = vmatpush1.msra.mxu0 %v5204
        %5274 = vmatprep.subr.mxu0 0.0
        %5275 = vmatpush1.msra.mxu0 %v5205
        %5276 = vmatprep.subr.mxu0 0.0
        %5277 = vmatpush1.msra.mxu0 %v5206
        %5278 = vmatprep.subr.mxu0 0.0
        %5279 = vmatpush1.msra.mxu0 %v5207
        %5280 = vmatprep.subr.mxu0 0.0
        %5281 = vmatpush1.msra.mxu0 %v5208
        %5282 = vmatprep.subr.mxu0 0.0
        %5283 = vmatpush1.msra.mxu0 %v5209
        %5284 = vmatprep.subr.mxu0 0.0
        %5285 = vmatpush1.msra.mxu0 %v5210
        %5286 = vmatprep.subr.mxu0 0.0
        %5287 = vmatpush1.msra.mxu0 %v5211
        %5288 = vmatprep.subr.mxu0 0.0
        %5289 = vmatpush1.msra.mxu0 %v5212
        %5290 = vmatprep.subr.mxu0 0.0
        %5291 = vmatpush1.msra.mxu0 %v5213
        %5292 = vmatprep.subr.mxu0 0.0
        %5293 = vmatpush1.msra.mxu0 %v5214
        %5294 = vmatprep.subr.mxu0 0.0
        %5295 = vmatpush1.msra.mxu0 %v5215
        %5296 = vmatprep.subr.mxu0 0.0
        %5297 = vmatpush1.msra.mxu0 %v5216
        %5298 = vmatprep.subr.mxu0 0.0
        %5299 = vmatpush1.msra.mxu0 %v5217
        %5300 = vmatprep.subr.mxu0 0.0
        %5301 = vmatpush1.msra.mxu0 %v5218
        %5302 = vmatprep.subr.mxu0 0.0
        %5303 = vmatpush1.msra.mxu0 %v5219
        %5304 = vmatprep.subr.mxu0 0.0
        %5305 = vmatpush1.msra.mxu0 %v5220
        %5306 = vmatprep.mubr.f32.mxu0 %v5233
        %5307 = vmatmul.mubr.f32.gmra.mrb[0].mxu0 %v5230
        %v5308 = vpop.f32.mrb[0].mxu0
        %v5309 = vadd.f32 0.0, %v5308
        %v5310 = vpop.f32.mrb[0].mxu0
        %5311 = vmatprep.mubr.f32.mxu0 %v5237
        %5312 = vmatmul.mubr.f32.gmra.mrb[0].mxu0 %v5235
        %v5313 = vpop.f32.mrb[0].mxu0
        %v5314 = vadd.f32 0.0, %v5313
        %v5315 = vpop.f32.mrb[0].mxu0
        %5316 = vdwg.mxu0
        %v5317 = vadd.f32 %v5180, %v5309
        %v5318 = vadd.f32 %v5181, %v5314
        %v5319 = vld [vmem:[%s10] sm:$0x1]
        %v5321 = vlaneseq
        %v5322 = vshrl.u32 %v5321, 7
        %v5323 = vsub.s32 0, %v5322
        %v5324 = vrot.slane %v5319, %v5323
        %v5326 = vadd.f32 %v5317, %v5324
        %v5327 = vadd.f32 %v5318, %v5324
        %v5328 = vmax.f32 %v5326, 0.0
        %v5329 = vmax.f32 %v5327, 0.0
        %5330 = vst [vmem:[#allocation6 + $0x10] sm:$0x7] %v5328
        %5331 = vst [vmem:[#allocation6 + $0x12] sm:$0xe0] %v5328
        %5332 = vst [vmem:[#allocation6 + $0x1c] sm:$0x1c] %v5329
        %v5333 = vld [vmem:[#allocation6] sm:$0xff]
        %v5334 = vld [vmem:[#allocation6 + $0x8] sm:$0xff]
        %v5335 = vld [vmem:[#allocation6 + $0x10] sm:$0xff]
        %v5336 = vld [vmem:[#allocation6 + $0x18] sm:$0xff]
        %v5337 = vld [vmem:[#allocation6 + $0x20] sm:$0x1]
        %v5338 = vld [vmem:[%s11] sm:$0xff]
        %v5339 = vld [vmem:[%s11 + $0x8] sm:$0xff]
        %v5340 = vld [vmem:[%s11 + $0x10] sm:$0xff]
        %v5341 = vld [vmem:[%s11 + $0x18] sm:$0xff]
        %v5342 = vld [vmem:[%s11 + $0x20] sm:$0xff]
        %v5343 = vld [vmem:[%s11 + $0x28] sm:$0xff]
        %v5344 = vld [vmem:[%s11 + $0x30] sm:$0xff]
        %v5345 = vld [vmem:[%s11 + $0x38] sm:$0xff]
        %v5346 = vld [vmem:[%s11 + $0x40] sm:$0xff]
        %v5347 = vld [vmem:[%s11 + $0x48] sm:$0xff]
        %v5348 = vld [vmem:[%s11 + $0x50] sm:$0xff]
        %v5349 = vld [vmem:[%s11 + $0x58] sm:$0xff]
        %v5350 = vld [vmem:[%s11 + $0x60] sm:$0xff]
        %v5351 = vld [vmem:[%s11 + $0x68] sm:$0xff]
        %v5352 = vld [vmem:[%s11 + $0x70] sm:$0xff]
        %v5353 = vld [vmem:[%s11 + $0x78] sm:$0xff]
        %v5354 = vld [vmem:[#allocation6 + $0x1] sm:$0xff]
        %v5355 = vld [vmem:[#allocation6 + $0x9] sm:$0xff]
        %v5356 = vld [vmem:[#allocation6 + $0x11] sm:$0xff]
        %v5357 = vld [vmem:[#allocation6 + $0x19] sm:$0xff]
        %v5358 = vld [vmem:[#allocation6 + $0x21] sm:$0x1]
        %s5359 = scalar_lea.vmem %s11, 128
        %v5360 = vld [vmem:[%s5359] sm:$0xff]
        %v5361 = vld [vmem:[%s5359 + $0x8] sm:$0xff]
        %v5362 = vld [vmem:[%s5359 + $0x10] sm:$0xff]
        %v5363 = vld [vmem:[%s5359 + $0x18] sm:$0xff]
        %v5364 = vld [vmem:[%s5359 + $0x20] sm:$0xff]
        %v5365 = vld [vmem:[%s5359 + $0x28] sm:$0xff]
        %v5366 = vld [vmem:[%s5359 + $0x30] sm:$0xff]
        %v5367 = vld [vmem:[%s5359 + $0x38] sm:$0xff]
        %v5368 = vld [vmem:[%s5359 + $0x40] sm:$0xff]
        %v5369 = vld [vmem:[%s5359 + $0x48] sm:$0xff]
        %v5370 = vld [vmem:[%s5359 + $0x50] sm:$0xff]
        %v5371 = vld [vmem:[%s5359 + $0x58] sm:$0xff]
        %v5372 = vld [vmem:[%s5359 + $0x60] sm:$0xff]
        %v5373 = vld [vmem:[%s5359 + $0x68] sm:$0xff]
        %v5374 = vld [vmem:[%s5359 + $0x70] sm:$0xff]
        %v5375 = vld [vmem:[%s5359 + $0x78] sm:$0xff]
        %5376 = vmatprep.subr.mxu0 0.0
        %5377 = vmatpush1.msra.mxu0 %v5360
        %5378 = vmatprep.subr.mxu0 0.0
        %5379 = vmatpush1.msra.mxu0 %v5361
        %5380 = vmatprep.subr.mxu0 0.0
        %5381 = vmatpush1.msra.mxu0 %v5362
        %5382 = vmatprep.subr.mxu0 0.0
        %5383 = vmatpush1.msra.mxu0 %v5363
        %5384 = vmatprep.subr.mxu0 0.0
        %5385 = vmatpush1.msra.mxu0 %v5364
        %5386 = vmatprep.subr.mxu0 0.0
        %5387 = vmatpush1.msra.mxu0 %v5365
        %5388 = vmatprep.subr.mxu0 0.0
        %5389 = vmatpush1.msra.mxu0 %v5366
        %5390 = vmatprep.subr.mxu0 0.0
        %5391 = vmatpush1.msra.mxu0 %v5367
        %5392 = vmatprep.subr.mxu0 0.0
        %5393 = vmatpush1.msra.mxu0 %v5368
        %5394 = vmatprep.subr.mxu0 0.0
        %5395 = vmatpush1.msra.mxu0 %v5369
        %5396 = vmatprep.subr.mxu0 0.0
        %5397 = vmatpush1.msra.mxu0 %v5370
        %5398 = vmatprep.subr.mxu0 0.0
        %5399 = vmatpush1.msra.mxu0 %v5371
        %5400 = vmatprep.subr.mxu0 0.0
        %5401 = vmatpush1.msra.mxu0 %v5372
        %5402 = vmatprep.subr.mxu0 0.0
        %5403 = vmatpush1.msra.mxu0 %v5373
        %5404 = vmatprep.subr.mxu0 0.0
        %5405 = vmatpush1.msra.mxu0 %v5374
        %5406 = vmatprep.subr.mxu0 0.0
        %5407 = vmatpush1.msra.mxu0 %v5375
        %5408 = vmatprep.subr.mxu0 0.0
        %5409 = vmatpush1.msra.mxu0 0.0
        %5410 = vmatprep.subr.mxu0 0.0
        %5411 = vmatpush1.msra.mxu0 0.0
        %5412 = vmatprep.subr.mxu0 0.0
        %5413 = vmatpush1.msra.mxu0 0.0
        %5414 = vmatprep.subr.mxu0 0.0
        %5415 = vmatpush1.msra.mxu0 0.0
        %5416 = vmatprep.subr.mxu0 0.0
        %5417 = vmatpush1.msra.mxu0 0.0
        %5418 = vmatprep.subr.mxu0 0.0
        %5419 = vmatpush1.msra.mxu0 0.0
        %5420 = vmatprep.subr.mxu0 0.0
        %5421 = vmatpush1.msra.mxu0 0.0
        %5422 = vmatprep.subr.mxu0 0.0
        %5423 = vmatpush1.msra.mxu0 0.0
        %5424 = vmatprep.subr.mxu0 0.0
        %5425 = vmatpush1.msra.mxu0 0.0
        %5426 = vmatprep.subr.mxu0 0.0
        %5427 = vmatpush1.msra.mxu0 0.0
        %5428 = vmatprep.subr.mxu0 0.0
        %5429 = vmatpush1.msra.mxu0 0.0
        %5430 = vmatprep.subr.mxu0 0.0
        %5431 = vmatpush1.msra.mxu0 0.0
        %5432 = vmatprep.subr.mxu0 0.0
        %5433 = vmatpush1.msra.mxu0 0.0
        %5434 = vmatprep.subr.mxu0 0.0
        %5435 = vmatpush1.msra.mxu0 0.0
        %5436 = vmatprep.subr.mxu0 0.0
        %5437 = vmatpush1.msra.mxu0 0.0
        %5438 = vmatprep.subr.mxu0 0.0
        %5439 = vmatpush1.msra.mxu0 0.0
        %5440 = vmatprep.mubr.f32.mxu0 0.0
        %5441 = vmatmul.mubr.f32.gmra.mrb[0].mxu0 %v5354
        %v5442 = vpop.f32.mrb[0].mxu0
        %v5443 = vadd.f32 0.0, %v5442
        %v5444 = vpop.f32.mrb[0].mxu0
        %5445 = vmatprep.mubr.f32.mxu0 0.0
        %5446 = vmatmul.mubr.f32.gmra.mrb[0].mxu0 %v5355
        %v5447 = vpop.f32.mrb[0].mxu0
        %v5448 = vadd.f32 0.0, %v5447
        %v5449 = vpop.f32.mrb[0].mxu0
        %5450 = vmatprep.mubr.f32.mxu0 0.0
        %5451 = vmatmul.mubr.f32.gmra.mrb[0].mxu0 %v5356
        %v5452 = vpop.f32.mrb[0].mxu0
        %v5453 = vadd.f32 0.0, %v5452
        %v5454 = vpop.f32.mrb[0].mxu0
        %5455 = vmatprep.mubr.f32.mxu0 0.0
        %5456 = vmatmul.mubr.f32.gmra.mrb[0].mxu0 %v5357
        %v5457 = vpop.f32.mrb[0].mxu0
        %v5458 = vadd.f32 0.0, %v5457
        %v5459 = vpop.f32.mrb[0].mxu0
        %5460 = vmatprep.mubr.f32.mxu0 0.0
        %5461 = vmatmul.mubr.f32.gmra.mrb[0].mxu0 %v5358
        %v5462 = vpop.f32.mrb[0].mxu0
        %v5463 = vadd.f32 0.0, %v5462
        %v5464 = vpop.f32.mrb[0].mxu0
        %5465 = vdwg.mxu0
        %5466 = vmatprep.subr.mxu0 0.0
        %5467 = vmatpush1.msra.mxu0 %v5338
        %5468 = vmatprep.subr.mxu0 0.0
        %5469 = vmatpush1.msra.mxu0 %v5339
        %5470 = vmatprep.subr.mxu0 0.0
        %5471 = vmatpush1.msra.mxu0 %v5340
        %5472 = vmatprep.subr.mxu0 0.0
        %5473 = vmatpush1.msra.mxu0 %v5341
        %5474 = vmatprep.subr.mxu0 0.0
        %5475 = vmatpush1.msra.mxu0 %v5342
        %5476 = vmatprep.subr.mxu0 0.0
        %5477 = vmatpush1.msra.mxu0 %v5343
        %5478 = vmatprep.subr.mxu0 0.0
        %5479 = vmatpush1.msra.mxu0 %v5344
        %5480 = vmatprep.subr.mxu0 0.0
        %5481 = vmatpush1.msra.mxu0 %v5345
        %5482 = vmatprep.subr.mxu0 0.0
        %5483 = vmatpush1.msra.mxu0 %v5346
        %5484 = vmatprep.subr.mxu0 0.0
        %5485 = vmatpush1.msra.mxu0 %v5347
        %5486 = vmatprep.subr.mxu0 0.0
        %5487 = vmatpush1.msra.mxu0 %v5348
        %5488 = vmatprep.subr.mxu0 0.0
        %5489 = vmatpush1.msra.mxu0 %v5349
        %5490 = vmatprep.subr.mxu0 0.0
        %5491 = vmatpush1.msra.mxu0 %v5350
        %5492 = vmatprep.subr.mxu0 0.0
        %5493 = vmatpush1.msra.mxu0 %v5351
        %5494 = vmatprep.subr.mxu0 0.0
        %5495 = vmatpush1.msra.mxu0 %v5352
        %5496 = vmatprep.subr.mxu0 0.0
        %5497 = vmatpush1.msra.mxu0 %v5353
        %5498 = vmatprep.subr.mxu0 0.0
        %5499 = vmatpush1.msra.mxu0 0.0
        %5500 = vmatprep.subr.mxu0 0.0
        %5501 = vmatpush1.msra.mxu0 0.0
        %5502 = vmatprep.subr.mxu0 0.0
        %5503 = vmatpush1.msra.mxu0 0.0
        %5504 = vmatprep.subr.mxu0 0.0
        %5505 = vmatpush1.msra.mxu0 0.0
        %5506 = vmatprep.subr.mxu0 0.0
        %5507 = vmatpush1.msra.mxu0 0.0
        %5508 = vmatprep.subr.mxu0 0.0
        %5509 = vmatpush1.msra.mxu0 0.0
        %5510 = vmatprep.subr.mxu0 0.0
        %5511 = vmatpush1.msra.mxu0 0.0
        %5512 = vmatprep.subr.mxu0 0.0
        %5513 = vmatpush1.msra.mxu0 0.0
        %5514 = vmatprep.subr.mxu0 0.0
        %5515 = vmatpush1.msra.mxu0 0.0
        %5516 = vmatprep.subr.mxu0 0.0
        %5517 = vmatpush1.msra.mxu0 0.0
        %5518 = vmatprep.subr.mxu0 0.0
        %5519 = vmatpush1.msra.mxu0 0.0
        %5520 = vmatprep.subr.mxu0 0.0
        %5521 = vmatpush1.msra.mxu0 0.0
        %5522 = vmatprep.subr.mxu0 0.0
        %5523 = vmatpush1.msra.mxu0 0.0
        %5524 = vmatprep.subr.mxu0 0.0
        %5525 = vmatpush1.msra.mxu0 0.0
        %5526 = vmatprep.subr.mxu0 0.0
        %5527 = vmatpush1.msra.mxu0 0.0
        %5528 = vmatprep.subr.mxu0 0.0
        %5529 = vmatpush1.msra.mxu0 0.0
        %5530 = vmatprep.mubr.f32.mxu0 0.0
        %5531 = vmatmul.mubr.f32.gmra.mrb[0].mxu0 %v5333
        %v5532 = vpop.f32.mrb[0].mxu0
        %v5533 = vadd.f32 %v5443, %v5532
        %v5534 = vpop.f32.mrb[0].mxu0
        %5535 = vmatprep.mubr.f32.mxu0 0.0
        %5536 = vmatmul.mubr.f32.gmra.mrb[0].mxu0 %v5334
        %v5537 = vpop.f32.mrb[0].mxu0
        %v5538 = vadd.f32 %v5448, %v5537
        %v5539 = vpop.f32.mrb[0].mxu0
        %5540 = vmatprep.mubr.f32.mxu0 0.0
        %5541 = vmatmul.mubr.f32.gmra.mrb[0].mxu0 %v5335
        %v5542 = vpop.f32.mrb[0].mxu0
        %v5543 = vadd.f32 %v5453, %v5542
        %v5544 = vpop.f32.mrb[0].mxu0
        %5545 = vmatprep.mubr.f32.mxu0 0.0
        %5546 = vmatmul.mubr.f32.gmra.mrb[0].mxu0 %v5336
        %v5547 = vpop.f32.mrb[0].mxu0
        %v5548 = vadd.f32 %v5458, %v5547
        %v5549 = vpop.f32.mrb[0].mxu0
        %5550 = vmatprep.mubr.f32.mxu0 0.0
        %5551 = vmatmul.mubr.f32.gmra.mrb[0].mxu0 %v5337
        %v5552 = vpop.f32.mrb[0].mxu0
        %v5553 = vadd.f32 %v5463, %v5552
        %v5554 = vpop.f32.mrb[0].mxu0
        %5555 = vdwg.mxu0
        %v5556 = vld [vmem:[#allocation6 + $0x2] sm:$0xff]
        %v5557 = vld [vmem:[#allocation6 + $0xa] sm:$0xff]
        %v5558 = vld [vmem:[#allocation6 + $0x12] sm:$0xff]
        %v5559 = vld [vmem:[#allocation6 + $0x1a] sm:$0xff]
        %v5560 = vld [vmem:[#allocation6 + $0x22] sm:$0x1]
        %s5561 = scalar_lea.vmem %s11, 256
        %v5562 = vld [vmem:[%s5561] sm:$0xff]
        %v5563 = vld [vmem:[%s5561 + $0x8] sm:$0xff]
        %v5564 = vld [vmem:[%s5561 + $0x10] sm:$0xff]
        %v5565 = vld [vmem:[%s5561 + $0x18] sm:$0xff]
        %v5566 = vld [vmem:[%s5561 + $0x20] sm:$0xff]
        %v5567 = vld [vmem:[%s5561 + $0x28] sm:$0xff]
        %v5568 = vld [vmem:[%s5561 + $0x30] sm:$0xff]
        %v5569 = vld [vmem:[%s5561 + $0x38] sm:$0xff]
        %v5570 = vld [vmem:[%s5561 + $0x40] sm:$0xff]
        %v5571 = vld [vmem:[%s5561 + $0x48] sm:$0xff]
        %v5572 = vld [vmem:[%s5561 + $0x50] sm:$0xff]
        %v5573 = vld [vmem:[%s5561 + $0x58] sm:$0xff]
        %v5574 = vld [vmem:[%s5561 + $0x60] sm:$0xff]
        %v5575 = vld [vmem:[%s5561 + $0x68] sm:$0xff]
        %v5576 = vld [vmem:[%s5561 + $0x70] sm:$0xff]
        %v5577 = vld [vmem:[%s5561 + $0x78] sm:$0xff]
        %5578 = vmatprep.subr.mxu0 0.0
        %5579 = vmatpush1.msra.mxu0 %v5562
        %5580 = vmatprep.subr.mxu0 0.0
        %5581 = vmatpush1.msra.mxu0 %v5563
        %5582 = vmatprep.subr.mxu0 0.0
        %5583 = vmatpush1.msra.mxu0 %v5564
        %5584 = vmatprep.subr.mxu0 0.0
        %5585 = vmatpush1.msra.mxu0 %v5565
        %5586 = vmatprep.subr.mxu0 0.0
        %5587 = vmatpush1.msra.mxu0 %v5566
        %5588 = vmatprep.subr.mxu0 0.0
        %5589 = vmatpush1.msra.mxu0 %v5567
        %5590 = vmatprep.subr.mxu0 0.0
        %5591 = vmatpush1.msra.mxu0 %v5568
        %5592 = vmatprep.subr.mxu0 0.0
        %5593 = vmatpush1.msra.mxu0 %v5569
        %5594 = vmatprep.subr.mxu0 0.0
        %5595 = vmatpush1.msra.mxu0 %v5570
        %5596 = vmatprep.subr.mxu0 0.0
        %5597 = vmatpush1.msra.mxu0 %v5571
        %5598 = vmatprep.subr.mxu0 0.0
        %5599 = vmatpush1.msra.mxu0 %v5572
        %5600 = vmatprep.subr.mxu0 0.0
        %5601 = vmatpush1.msra.mxu0 %v5573
        %5602 = vmatprep.subr.mxu0 0.0
        %5603 = vmatpush1.msra.mxu0 %v5574
        %5604 = vmatprep.subr.mxu0 0.0
        %5605 = vmatpush1.msra.mxu0 %v5575
        %5606 = vmatprep.subr.mxu0 0.0
        %5607 = vmatpush1.msra.mxu0 %v5576
        %5608 = vmatprep.subr.mxu0 0.0
        %5609 = vmatpush1.msra.mxu0 %v5577
        %5610 = vmatprep.subr.mxu0 0.0
        %5611 = vmatpush1.msra.mxu0 0.0
        %5612 = vmatprep.subr.mxu0 0.0
        %5613 = vmatpush1.msra.mxu0 0.0
        %5614 = vmatprep.subr.mxu0 0.0
        %5615 = vmatpush1.msra.mxu0 0.0
        %5616 = vmatprep.subr.mxu0 0.0
        %5617 = vmatpush1.msra.mxu0 0.0
        %5618 = vmatprep.subr.mxu0 0.0
        %5619 = vmatpush1.msra.mxu0 0.0
        %5620 = vmatprep.subr.mxu0 0.0
        %5621 = vmatpush1.msra.mxu0 0.0
        %5622 = vmatprep.subr.mxu0 0.0
        %5623 = vmatpush1.msra.mxu0 0.0
        %5624 = vmatprep.subr.mxu0 0.0
        %5625 = vmatpush1.msra.mxu0 0.0
        %5626 = vmatprep.subr.mxu0 0.0
        %5627 = vmatpush1.msra.mxu0 0.0
        %5628 = vmatprep.subr.mxu0 0.0
        %5629 = vmatpush1.msra.mxu0 0.0
        %5630 = vmatprep.subr.mxu0 0.0
        %5631 = vmatpush1.msra.mxu0 0.0
        %5632 = vmatprep.subr.mxu0 0.0
        %5633 = vmatpush1.msra.mxu0 0.0
        %5634 = vmatprep.subr.mxu0 0.0
        %5635 = vmatpush1.msra.mxu0 0.0
        %5636 = vmatprep.subr.mxu0 0.0
        %5637 = vmatpush1.msra.mxu0 0.0
        %5638 = vmatprep.subr.mxu0 0.0
        %5639 = vmatpush1.msra.mxu0 0.0
        %5640 = vmatprep.subr.mxu0 0.0
        %5641 = vmatpush1.msra.mxu0 0.0
        %5642 = vmatprep.mubr.f32.mxu0 0.0
        %5643 = vmatmul.mubr.f32.gmra.mrb[0].mxu0 %v5556
        %v5644 = vpop.f32.mrb[0].mxu0
        %v5645 = vadd.f32 0.0, %v5644
        %v5646 = vpop.f32.mrb[0].mxu0
        %5647 = vmatprep.mubr.f32.mxu0 0.0
        %5648 = vmatmul.mubr.f32.gmra.mrb[0].mxu0 %v5557
        %v5649 = vpop.f32.mrb[0].mxu0
        %v5650 = vadd.f32 0.0, %v5649
        %v5651 = vpop.f32.mrb[0].mxu0
        %5652 = vmatprep.mubr.f32.mxu0 0.0
        %5653 = vmatmul.mubr.f32.gmra.mrb[0].mxu0 %v5558
        %v5654 = vpop.f32.mrb[0].mxu0
        %v5655 = vadd.f32 0.0, %v5654
        %v5656 = vpop.f32.mrb[0].mxu0
        %5657 = vmatprep.mubr.f32.mxu0 0.0
        %5658 = vmatmul.mubr.f32.gmra.mrb[0].mxu0 %v5559
        %v5659 = vpop.f32.mrb[0].mxu0
        %v5660 = vadd.f32 0.0, %v5659
        %v5661 = vpop.f32.mrb[0].mxu0
        %5662 = vmatprep.mubr.f32.mxu0 0.0
        %5663 = vmatmul.mubr.f32.gmra.mrb[0].mxu0 %v5560
        %v5664 = vpop.f32.mrb[0].mxu0
        %v5665 = vadd.f32 0.0, %v5664
        %v5666 = vpop.f32.mrb[0].mxu0
        %5667 = vdwg.mxu0
        %v5668 = vadd.f32 %v5533, %v5645
        %v5669 = vadd.f32 %v5538, %v5650
        %v5670 = vadd.f32 %v5543, %v5655
        %v5671 = vadd.f32 %v5548, %v5660
        %v5672 = vadd.f32 %v5553, %v5665
        %v5673 = vld [vmem:[#allocation6 + $0x7] sm:$0xff]
        %v5674 = vld [vmem:[#allocation6 + $0xf] sm:$0xff]
        %v5675 = vld [vmem:[#allocation6 + $0x17] sm:$0xff]
        %v5676 = vld [vmem:[#allocation6 + $0x1f] sm:$0xff]
        %v5677 = vld [vmem:[#allocation6 + $0x27] sm:$0x1]
        %s5678 = scalar_lea.vmem %s11, 384
        %v5679 = vld [vmem:[%s5678] sm:$0xff]
        %v5680 = vld [vmem:[%s5678 + $0x8] sm:$0xff]
        %v5681 = vld [vmem:[%s5678 + $0x10] sm:$0xff]
        %v5682 = vld [vmem:[%s5678 + $0x18] sm:$0xff]
        %v5683 = vld [vmem:[%s5678 + $0x20] sm:$0xff]
        %v5684 = vld [vmem:[%s5678 + $0x28] sm:$0xff]
        %v5685 = vld [vmem:[%s5678 + $0x30] sm:$0xff]
        %v5686 = vld [vmem:[%s5678 + $0x38] sm:$0xff]
        %v5687 = vld [vmem:[%s5678 + $0x40] sm:$0xff]
        %v5688 = vld [vmem:[%s5678 + $0x48] sm:$0xff]
        %v5689 = vld [vmem:[%s5678 + $0x50] sm:$0xff]
        %v5690 = vld [vmem:[%s5678 + $0x58] sm:$0xff]
        %v5691 = vld [vmem:[%s5678 + $0x60] sm:$0xff]
        %v5692 = vld [vmem:[%s5678 + $0x68] sm:$0xff]
        %v5693 = vld [vmem:[%s5678 + $0x70] sm:$0xff]
        %v5694 = vld [vmem:[%s5678 + $0x78] sm:$0xff]
        %5695 = vmatprep.subr.mxu0 0.0
        %5696 = vmatpush1.msra.mxu0 %v5679
        %5697 = vmatprep.subr.mxu0 0.0
        %5698 = vmatpush1.msra.mxu0 %v5680
        %5699 = vmatprep.subr.mxu0 0.0
        %5700 = vmatpush1.msra.mxu0 %v5681
        %5701 = vmatprep.subr.mxu0 0.0
        %5702 = vmatpush1.msra.mxu0 %v5682
        %5703 = vmatprep.subr.mxu0 0.0
        %5704 = vmatpush1.msra.mxu0 %v5683
        %5705 = vmatprep.subr.mxu0 0.0
        %5706 = vmatpush1.msra.mxu0 %v5684
        %5707 = vmatprep.subr.mxu0 0.0
        %5708 = vmatpush1.msra.mxu0 %v5685
        %5709 = vmatprep.subr.mxu0 0.0
        %5710 = vmatpush1.msra.mxu0 %v5686
        %5711 = vmatprep.subr.mxu0 0.0
        %5712 = vmatpush1.msra.mxu0 %v5687
        %5713 = vmatprep.subr.mxu0 0.0
        %5714 = vmatpush1.msra.mxu0 %v5688
        %5715 = vmatprep.subr.mxu0 0.0
        %5716 = vmatpush1.msra.mxu0 %v5689
        %5717 = vmatprep.subr.mxu0 0.0
        %5718 = vmatpush1.msra.mxu0 %v5690
        %5719 = vmatprep.subr.mxu0 0.0
        %5720 = vmatpush1.msra.mxu0 %v5691
        %5721 = vmatprep.subr.mxu0 0.0
        %5722 = vmatpush1.msra.mxu0 %v5692
        %5723 = vmatprep.subr.mxu0 0.0
        %5724 = vmatpush1.msra.mxu0 %v5693
        %5725 = vmatprep.subr.mxu0 0.0
        %5726 = vmatpush1.msra.mxu0 %v5694
        %5727 = vmatprep.subr.mxu0 0.0
        %5728 = vmatpush1.msra.mxu0 0.0
        %5729 = vmatprep.subr.mxu0 0.0
        %5730 = vmatpush1.msra.mxu0 0.0
        %5731 = vmatprep.subr.mxu0 0.0
        %5732 = vmatpush1.msra.mxu0 0.0
        %5733 = vmatprep.subr.mxu0 0.0
        %5734 = vmatpush1.msra.mxu0 0.0
        %5735 = vmatprep.subr.mxu0 0.0
        %5736 = vmatpush1.msra.mxu0 0.0
        %5737 = vmatprep.subr.mxu0 0.0
        %5738 = vmatpush1.msra.mxu0 0.0
        %5739 = vmatprep.subr.mxu0 0.0
        %5740 = vmatpush1.msra.mxu0 0.0
        %5741 = vmatprep.subr.mxu0 0.0
        %5742 = vmatpush1.msra.mxu0 0.0
        %5743 = vmatprep.subr.mxu0 0.0
        %5744 = vmatpush1.msra.mxu0 0.0
        %5745 = vmatprep.subr.mxu0 0.0
        %5746 = vmatpush1.msra.mxu0 0.0
        %5747 = vmatprep.subr.mxu0 0.0
        %5748 = vmatpush1.msra.mxu0 0.0
        %5749 = vmatprep.subr.mxu0 0.0
        %5750 = vmatpush1.msra.mxu0 0.0
        %5751 = vmatprep.subr.mxu0 0.0
        %5752 = vmatpush1.msra.mxu0 0.0
        %5753 = vmatprep.subr.mxu0 0.0
        %5754 = vmatpush1.msra.mxu0 0.0
        %5755 = vmatprep.subr.mxu0 0.0
        %5756 = vmatpush1.msra.mxu0 0.0
        %5757 = vmatprep.subr.mxu0 0.0
        %5758 = vmatpush1.msra.mxu0 0.0
        %5759 = vmatprep.mubr.f32.mxu0 0.0
        %5760 = vmatmul.mubr.f32.gmra.mrb[0].mxu0 %v5673
        %v5761 = vpop.f32.mrb[0].mxu0
        %v5762 = vadd.f32 0.0, %v5761
        %v5763 = vpop.f32.mrb[0].mxu0
        %5764 = vmatprep.mubr.f32.mxu0 0.0
        %5765 = vmatmul.mubr.f32.gmra.mrb[0].mxu0 %v5674
        %v5766 = vpop.f32.mrb[0].mxu0
        %v5767 = vadd.f32 0.0, %v5766
        %v5768 = vpop.f32.mrb[0].mxu0
        %5769 = vmatprep.mubr.f32.mxu0 0.0
        %5770 = vmatmul.mubr.f32.gmra.mrb[0].mxu0 %v5675
        %v5771 = vpop.f32.mrb[0].mxu0
        %v5772 = vadd.f32 0.0, %v5771
        %v5773 = vpop.f32.mrb[0].mxu0
        %5774 = vmatprep.mubr.f32.mxu0 0.0
        %5775 = vmatmul.mubr.f32.gmra.mrb[0].mxu0 %v5676
        %v5776 = vpop.f32.mrb[0].mxu0
        %v5777 = vadd.f32 0.0, %v5776
        %v5778 = vpop.f32.mrb[0].mxu0
        %5779 = vmatprep.mubr.f32.mxu0 0.0
        %5780 = vmatmul.mubr.f32.gmra.mrb[0].mxu0 %v5677
        %v5781 = vpop.f32.mrb[0].mxu0
        %v5782 = vadd.f32 0.0, %v5781
        %v5783 = vpop.f32.mrb[0].mxu0
        %5784 = vdwg.mxu0
        %v5785 = vadd.f32 %v5668, %v5762
        %v5786 = vadd.f32 %v5669, %v5767
        %v5787 = vadd.f32 %v5670, %v5772
        %v5788 = vadd.f32 %v5671, %v5777
        %v5789 = vadd.f32 %v5672, %v5782
        %v5790 = vld [vmem:[#allocation6 + $0x8] sm:$0xff]
        %v5791 = vld [vmem:[#allocation6 + $0x10] sm:$0xff]
        %v5792 = vld [vmem:[#allocation6 + $0x18] sm:$0xff]
        %v5793 = vld [vmem:[#allocation6 + $0x20] sm:$0xff]
        %v5794 = vld [vmem:[#allocation6 + $0x28] sm:$0x1]
        %s5795 = scalar_lea.vmem %s11, 512
        %v5796 = vld [vmem:[%s5795] sm:$0xff]
        %v5797 = vld [vmem:[%s5795 + $0x8] sm:$0xff]
        %v5798 = vld [vmem:[%s5795 + $0x10] sm:$0xff]
        %v5799 = vld [vmem:[%s5795 + $0x18] sm:$0xff]
        %v5800 = vld [vmem:[%s5795 + $0x20] sm:$0xff]
        %v5801 = vld [vmem:[%s5795 + $0x28] sm:$0xff]
        %v5802 = vld [vmem:[%s5795 + $0x30] sm:$0xff]
        %v5803 = vld [vmem:[%s5795 + $0x38] sm:$0xff]
        %v5804 = vld [vmem:[%s5795 + $0x40] sm:$0xff]
        %v5805 = vld [vmem:[%s5795 + $0x48] sm:$0xff]
        %v5806 = vld [vmem:[%s5795 + $0x50] sm:$0xff]
        %v5807 = vld [vmem:[%s5795 + $0x58] sm:$0xff]
        %v5808 = vld [vmem:[%s5795 + $0x60] sm:$0xff]
        %v5809 = vld [vmem:[%s5795 + $0x68] sm:$0xff]
        %v5810 = vld [vmem:[%s5795 + $0x70] sm:$0xff]
        %v5811 = vld [vmem:[%s5795 + $0x78] sm:$0xff]
        %5812 = vmatprep.subr.mxu0 0.0
        %5813 = vmatpush1.msra.mxu0 %v5796
        %5814 = vmatprep.subr.mxu0 0.0
        %5815 = vmatpush1.msra.mxu0 %v5797
        %5816 = vmatprep.subr.mxu0 0.0
        %5817 = vmatpush1.msra.mxu0 %v5798
        %5818 = vmatprep.subr.mxu0 0.0
        %5819 = vmatpush1.msra.mxu0 %v5799
        %5820 = vmatprep.subr.mxu0 0.0
        %5821 = vmatpush1.msra.mxu0 %v5800
        %5822 = vmatprep.subr.mxu0 0.0
        %5823 = vmatpush1.msra.mxu0 %v5801
        %5824 = vmatprep.subr.mxu0 0.0
        %5825 = vmatpush1.msra.mxu0 %v5802
        %5826 = vmatprep.subr.mxu0 0.0
        %5827 = vmatpush1.msra.mxu0 %v5803
        %5828 = vmatprep.subr.mxu0 0.0
        %5829 = vmatpush1.msra.mxu0 %v5804
        %5830 = vmatprep.subr.mxu0 0.0
        %5831 = vmatpush1.msra.mxu0 %v5805
        %5832 = vmatprep.subr.mxu0 0.0
        %5833 = vmatpush1.msra.mxu0 %v5806
        %5834 = vmatprep.subr.mxu0 0.0
        %5835 = vmatpush1.msra.mxu0 %v5807
        %5836 = vmatprep.subr.mxu0 0.0
        %5837 = vmatpush1.msra.mxu0 %v5808
        %5838 = vmatprep.subr.mxu0 0.0
        %5839 = vmatpush1.msra.mxu0 %v5809
        %5840 = vmatprep.subr.mxu0 0.0
        %5841 = vmatpush1.msra.mxu0 %v5810
        %5842 = vmatprep.subr.mxu0 0.0
        %5843 = vmatpush1.msra.mxu0 %v5811
        %5844 = vmatprep.subr.mxu0 0.0
        %5845 = vmatpush1.msra.mxu0 0.0
        %5846 = vmatprep.subr.mxu0 0.0
        %5847 = vmatpush1.msra.mxu0 0.0
        %5848 = vmatprep.subr.mxu0 0.0
        %5849 = vmatpush1.msra.mxu0 0.0
        %5850 = vmatprep.subr.mxu0 0.0
        %5851 = vmatpush1.msra.mxu0 0.0
        %5852 = vmatprep.subr.mxu0 0.0
        %5853 = vmatpush1.msra.mxu0 0.0
        %5854 = vmatprep.subr.mxu0 0.0
        %5855 = vmatpush1.msra.mxu0 0.0
        %5856 = vmatprep.subr.mxu0 0.0
        %5857 = vmatpush1.msra.mxu0 0.0
        %5858 = vmatprep.subr.mxu0 0.0
        %5859 = vmatpush1.msra.mxu0 0.0
        %5860 = vmatprep.subr.mxu0 0.0
        %5861 = vmatpush1.msra.mxu0 0.0
        %5862 = vmatprep.subr.mxu0 0.0
        %5863 = vmatpush1.msra.mxu0 0.0
        %5864 = vmatprep.subr.mxu0 0.0
        %5865 = vmatpush1.msra.mxu0 0.0
        %5866 = vmatprep.subr.mxu0 0.0
        %5867 = vmatpush1.msra.mxu0 0.0
        %5868 = vmatprep.subr.mxu0 0.0
        %5869 = vmatpush1.msra.mxu0 0.0
        %5870 = vmatprep.subr.mxu0 0.0
        %5871 = vmatpush1.msra.mxu0 0.0
        %5872 = vmatprep.subr.mxu0 0.0
        %5873 = vmatpush1.msra.mxu0 0.0
        %5874 = vmatprep.subr.mxu0 0.0
        %5875 = vmatpush1.msra.mxu0 0.0
        %5876 = vmatprep.mubr.f32.mxu0 0.0
        %5877 = vmatmul.mubr.f32.gmra.mrb[0].mxu0 %v5790
        %v5878 = vpop.f32.mrb[0].mxu0
        %v5879 = vadd.f32 0.0, %v5878
        %v5880 = vpop.f32.mrb[0].mxu0
        %5881 = vmatprep.mubr.f32.mxu0 0.0
        %5882 = vmatmul.mubr.f32.gmra.mrb[0].mxu0 %v5791
        %v5883 = vpop.f32.mrb[0].mxu0
        %v5884 = vadd.f32 0.0, %v5883
        %v5885 = vpop.f32.mrb[0].mxu0
        %5886 = vmatprep.mubr.f32.mxu0 0.0
        %5887 = vmatmul.mubr.f32.gmra.mrb[0].mxu0 %v5792
        %v5888 = vpop.f32.mrb[0].mxu0
        %v5889 = vadd.f32 0.0, %v5888
        %v5890 = vpop.f32.mrb[0].mxu0
        %5891 = vmatprep.mubr.f32.mxu0 0.0
        %5892 = vmatmul.mubr.f32.gmra.mrb[0].mxu0 %v5793
        %v5893 = vpop.f32.mrb[0].mxu0
        %v5894 = vadd.f32 0.0, %v5893
        %v5895 = vpop.f32.mrb[0].mxu0
        %5896 = vmatprep.mubr.f32.mxu0 0.0
        %5897 = vmatmul.mubr.f32.gmra.mrb[0].mxu0 %v5794
        %v5898 = vpop.f32.mrb[0].mxu0
        %v5899 = vadd.f32 0.0, %v5898
        %v5900 = vpop.f32.mrb[0].mxu0
        %5901 = vdwg.mxu0
        %v5902 = vadd.f32 %v5785, %v5879
        %v5903 = vadd.f32 %v5786, %v5884
        %v5904 = vadd.f32 %v5787, %v5889
        %v5905 = vadd.f32 %v5788, %v5894
        %v5906 = vadd.f32 %v5789, %v5899
        %v5907 = vld [vmem:[#allocation6 + $0x9] sm:$0xff]
        %v5908 = vld [vmem:[#allocation6 + $0x11] sm:$0xff]
        %v5909 = vld [vmem:[#allocation6 + $0x19] sm:$0xff]
        %v5910 = vld [vmem:[#allocation6 + $0x21] sm:$0xff]
        %v5911 = vld [vmem:[#allocation6 + $0x29] sm:$0x1]
        %s5912 = scalar_lea.vmem %s11, 640
        %v5913 = vld [vmem:[%s5912] sm:$0xff]
        %v5914 = vld [vmem:[%s5912 + $0x8] sm:$0xff]
        %v5915 = vld [vmem:[%s5912 + $0x10] sm:$0xff]
        %v5916 = vld [vmem:[%s5912 + $0x18] sm:$0xff]
        %v5917 = vld [vmem:[%s5912 + $0x20] sm:$0xff]
        %v5918 = vld [vmem:[%s5912 + $0x28] sm:$0xff]
        %v5919 = vld [vmem:[%s5912 + $0x30] sm:$0xff]
        %v5920 = vld [vmem:[%s5912 + $0x38] sm:$0xff]
        %v5921 = vld [vmem:[%s5912 + $0x40] sm:$0xff]
        %v5922 = vld [vmem:[%s5912 + $0x48] sm:$0xff]
        %v5923 = vld [vmem:[%s5912 + $0x50] sm:$0xff]
        %v5924 = vld [vmem:[%s5912 + $0x58] sm:$0xff]
        %v5925 = vld [vmem:[%s5912 + $0x60] sm:$0xff]
        %v5926 = vld [vmem:[%s5912 + $0x68] sm:$0xff]
        %v5927 = vld [vmem:[%s5912 + $0x70] sm:$0xff]
        %v5928 = vld [vmem:[%s5912 + $0x78] sm:$0xff]
        %5929 = vmatprep.subr.mxu0 0.0
        %5930 = vmatpush1.msra.mxu0 %v5913
        %5931 = vmatprep.subr.mxu0 0.0
        %5932 = vmatpush1.msra.mxu0 %v5914
        %5933 = vmatprep.subr.mxu0 0.0
        %5934 = vmatpush1.msra.mxu0 %v5915
        %5935 = vmatprep.subr.mxu0 0.0
        %5936 = vmatpush1.msra.mxu0 %v5916
        %5937 = vmatprep.subr.mxu0 0.0
        %5938 = vmatpush1.msra.mxu0 %v5917
        %5939 = vmatprep.subr.mxu0 0.0
        %5940 = vmatpush1.msra.mxu0 %v5918
        %5941 = vmatprep.subr.mxu0 0.0
        %5942 = vmatpush1.msra.mxu0 %v5919
        %5943 = vmatprep.subr.mxu0 0.0
        %5944 = vmatpush1.msra.mxu0 %v5920
        %5945 = vmatprep.subr.mxu0 0.0
        %5946 = vmatpush1.msra.mxu0 %v5921
        %5947 = vmatprep.subr.mxu0 0.0
        %5948 = vmatpush1.msra.mxu0 %v5922
        %5949 = vmatprep.subr.mxu0 0.0
        %5950 = vmatpush1.msra.mxu0 %v5923
        %5951 = vmatprep.subr.mxu0 0.0
        %5952 = vmatpush1.msra.mxu0 %v5924
        %5953 = vmatprep.subr.mxu0 0.0
        %5954 = vmatpush1.msra.mxu0 %v5925
        %5955 = vmatprep.subr.mxu0 0.0
        %5956 = vmatpush1.msra.mxu0 %v5926
        %5957 = vmatprep.subr.mxu0 0.0
        %5958 = vmatpush1.msra.mxu0 %v5927
        %5959 = vmatprep.subr.mxu0 0.0
        %5960 = vmatpush1.msra.mxu0 %v5928
        %5961 = vmatprep.subr.mxu0 0.0
        %5962 = vmatpush1.msra.mxu0 0.0
        %5963 = vmatprep.subr.mxu0 0.0
        %5964 = vmatpush1.msra.mxu0 0.0
        %5965 = vmatprep.subr.mxu0 0.0
        %5966 = vmatpush1.msra.mxu0 0.0
        %5967 = vmatprep.subr.mxu0 0.0
        %5968 = vmatpush1.msra.mxu0 0.0
        %5969 = vmatprep.subr.mxu0 0.0
        %5970 = vmatpush1.msra.mxu0 0.0
        %5971 = vmatprep.subr.mxu0 0.0
        %5972 = vmatpush1.msra.mxu0 0.0
        %5973 = vmatprep.subr.mxu0 0.0
        %5974 = vmatpush1.msra.mxu0 0.0
        %5975 = vmatprep.subr.mxu0 0.0
        %5976 = vmatpush1.msra.mxu0 0.0
        %5977 = vmatprep.subr.mxu0 0.0
        %5978 = vmatpush1.msra.mxu0 0.0
        %5979 = vmatprep.subr.mxu0 0.0
        %5980 = vmatpush1.msra.mxu0 0.0
        %5981 = vmatprep.subr.mxu0 0.0
        %5982 = vmatpush1.msra.mxu0 0.0
        %5983 = vmatprep.subr.mxu0 0.0
        %5984 = vmatpush1.msra.mxu0 0.0
        %5985 = vmatprep.subr.mxu0 0.0
        %5986 = vmatpush1.msra.mxu0 0.0
        %5987 = vmatprep.subr.mxu0 0.0
        %5988 = vmatpush1.msra.mxu0 0.0
        %5989 = vmatprep.subr.mxu0 0.0
        %5990 = vmatpush1.msra.mxu0 0.0
        %5991 = vmatprep.subr.mxu0 0.0
        %5992 = vmatpush1.msra.mxu0 0.0
        %5993 = vmatprep.mubr.f32.mxu0 0.0
        %5994 = vmatmul.mubr.f32.gmra.mrb[0].mxu0 %v5907
        %v5995 = vpop.f32.mrb[0].mxu0
        %v5996 = vadd.f32 0.0, %v5995
        %v5997 = vpop.f32.mrb[0].mxu0
        %5998 = vmatprep.mubr.f32.mxu0 0.0
        %5999 = vmatmul.mubr.f32.gmra.mrb[0].mxu0 %v5908
        %v6000 = vpop.f32.mrb[0].mxu0
        %v6001 = vadd.f32 0.0, %v6000
        %v6002 = vpop.f32.mrb[0].mxu0
        %6003 = vmatprep.mubr.f32.mxu0 0.0
        %6004 = vmatmul.mubr.f32.gmra.mrb[0].mxu0 %v5909
        %v6005 = vpop.f32.mrb[0].mxu0
        %v6006 = vadd.f32 0.0, %v6005
        %v6007 = vpop.f32.mrb[0].mxu0
        %6008 = vmatprep.mubr.f32.mxu0 0.0
        %6009 = vmatmul.mubr.f32.gmra.mrb[0].mxu0 %v5910
        %v6010 = vpop.f32.mrb[0].mxu0
        %v6011 = vadd.f32 0.0, %v6010
        %v6012 = vpop.f32.mrb[0].mxu0
        %6013 = vmatprep.mubr.f32.mxu0 0.0
        %6014 = vmatmul.mubr.f32.gmra.mrb[0].mxu0 %v5911
        %v6015 = vpop.f32.mrb[0].mxu0
        %v6016 = vadd.f32 0.0, %v6015
        %v6017 = vpop.f32.mrb[0].mxu0
        %6018 = vdwg.mxu0
        %v6019 = vadd.f32 %v5902, %v5996
        %v6020 = vadd.f32 %v5903, %v6001
        %v6021 = vadd.f32 %v5904, %v6006
        %v6022 = vadd.f32 %v5905, %v6011
        %v6023 = vadd.f32 %v5906, %v6016
        %v6024 = vld [vmem:[#allocation6 + $0xe] sm:$0xff]
        %v6025 = vld [vmem:[#allocation6 + $0x16] sm:$0xff]
        %v6026 = vld [vmem:[#allocation6 + $0x1e] sm:$0xff]
        %v6027 = vld [vmem:[#allocation6 + $0x26] sm:$0xff]
        %v6028 = vld [vmem:[#allocation6 + $0x2e] sm:$0x1]
        %s6029 = scalar_lea.vmem %s11, 768
        %v6030 = vld [vmem:[%s6029] sm:$0xff]
        %v6031 = vld [vmem:[%s6029 + $0x8] sm:$0xff]
        %v6032 = vld [vmem:[%s6029 + $0x10] sm:$0xff]
        %v6033 = vld [vmem:[%s6029 + $0x18] sm:$0xff]
        %v6034 = vld [vmem:[%s6029 + $0x20] sm:$0xff]
        %v6035 = vld [vmem:[%s6029 + $0x28] sm:$0xff]
        %v6036 = vld [vmem:[%s6029 + $0x30] sm:$0xff]
        %v6037 = vld [vmem:[%s6029 + $0x38] sm:$0xff]
        %v6038 = vld [vmem:[%s6029 + $0x40] sm:$0xff]
        %v6039 = vld [vmem:[%s6029 + $0x48] sm:$0xff]
        %v6040 = vld [vmem:[%s6029 + $0x50] sm:$0xff]
        %v6041 = vld [vmem:[%s6029 + $0x58] sm:$0xff]
        %v6042 = vld [vmem:[%s6029 + $0x60] sm:$0xff]
        %v6043 = vld [vmem:[%s6029 + $0x68] sm:$0xff]
        %v6044 = vld [vmem:[%s6029 + $0x70] sm:$0xff]
        %v6045 = vld [vmem:[%s6029 + $0x78] sm:$0xff]
        %6046 = vmatprep.subr.mxu0 0.0
        %6047 = vmatpush1.msra.mxu0 %v6030
        %6048 = vmatprep.subr.mxu0 0.0
        %6049 = vmatpush1.msra.mxu0 %v6031
        %6050 = vmatprep.subr.mxu0 0.0
        %6051 = vmatpush1.msra.mxu0 %v6032
        %6052 = vmatprep.subr.mxu0 0.0
        %6053 = vmatpush1.msra.mxu0 %v6033
        %6054 = vmatprep.subr.mxu0 0.0
        %6055 = vmatpush1.msra.mxu0 %v6034
        %6056 = vmatprep.subr.mxu0 0.0
        %6057 = vmatpush1.msra.mxu0 %v6035
        %6058 = vmatprep.subr.mxu0 0.0
        %6059 = vmatpush1.msra.mxu0 %v6036
        %6060 = vmatprep.subr.mxu0 0.0
        %6061 = vmatpush1.msra.mxu0 %v6037
        %6062 = vmatprep.subr.mxu0 0.0
        %6063 = vmatpush1.msra.mxu0 %v6038
        %6064 = vmatprep.subr.mxu0 0.0
        %6065 = vmatpush1.msra.mxu0 %v6039
        %6066 = vmatprep.subr.mxu0 0.0
        %6067 = vmatpush1.msra.mxu0 %v6040
        %6068 = vmatprep.subr.mxu0 0.0
        %6069 = vmatpush1.msra.mxu0 %v6041
        %6070 = vmatprep.subr.mxu0 0.0
        %6071 = vmatpush1.msra.mxu0 %v6042
        %6072 = vmatprep.subr.mxu0 0.0
        %6073 = vmatpush1.msra.mxu0 %v6043
        %6074 = vmatprep.subr.mxu0 0.0
        %6075 = vmatpush1.msra.mxu0 %v6044
        %6076 = vmatprep.subr.mxu0 0.0
        %6077 = vmatpush1.msra.mxu0 %v6045
        %6078 = vmatprep.subr.mxu0 0.0
        %6079 = vmatpush1.msra.mxu0 0.0
        %6080 = vmatprep.subr.mxu0 0.0
        %6081 = vmatpush1.msra.mxu0 0.0
        %6082 = vmatprep.subr.mxu0 0.0
        %6083 = vmatpush1.msra.mxu0 0.0
        %6084 = vmatprep.subr.mxu0 0.0
        %6085 = vmatpush1.msra.mxu0 0.0
        %6086 = vmatprep.subr.mxu0 0.0
        %6087 = vmatpush1.msra.mxu0 0.0
        %6088 = vmatprep.subr.mxu0 0.0
        %6089 = vmatpush1.msra.mxu0 0.0
        %6090 = vmatprep.subr.mxu0 0.0
        %6091 = vmatpush1.msra.mxu0 0.0
        %6092 = vmatprep.subr.mxu0 0.0
        %6093 = vmatpush1.msra.mxu0 0.0
        %6094 = vmatprep.subr.mxu0 0.0
        %6095 = vmatpush1.msra.mxu0 0.0
        %6096 = vmatprep.subr.mxu0 0.0
        %6097 = vmatpush1.msra.mxu0 0.0
        %6098 = vmatprep.subr.mxu0 0.0
        %6099 = vmatpush1.msra.mxu0 0.0
        %6100 = vmatprep.subr.mxu0 0.0
        %6101 = vmatpush1.msra.mxu0 0.0
        %6102 = vmatprep.subr.mxu0 0.0
        %6103 = vmatpush1.msra.mxu0 0.0
        %6104 = vmatprep.subr.mxu0 0.0
        %6105 = vmatpush1.msra.mxu0 0.0
        %6106 = vmatprep.subr.mxu0 0.0
        %6107 = vmatpush1.msra.mxu0 0.0
        %6108 = vmatprep.subr.mxu0 0.0
        %6109 = vmatpush1.msra.mxu0 0.0
        %6110 = vmatprep.mubr.f32.mxu0 0.0
        %6111 = vmatmul.mubr.f32.gmra.mrb[0].mxu0 %v6024
        %v6112 = vpop.f32.mrb[0].mxu0
        %v6113 = vadd.f32 0.0, %v6112
        %v6114 = vpop.f32.mrb[0].mxu0
        %6115 = vmatprep.mubr.f32.mxu0 0.0
        %6116 = vmatmul.mubr.f32.gmra.mrb[0].mxu0 %v6025
        %v6117 = vpop.f32.mrb[0].mxu0
        %v6118 = vadd.f32 0.0, %v6117
        %v6119 = vpop.f32.mrb[0].mxu0
        %6120 = vmatprep.mubr.f32.mxu0 0.0
        %6121 = vmatmul.mubr.f32.gmra.mrb[0].mxu0 %v6026
        %v6122 = vpop.f32.mrb[0].mxu0
        %v6123 = vadd.f32 0.0, %v6122
        %v6124 = vpop.f32.mrb[0].mxu0
        %6125 = vmatprep.mubr.f32.mxu0 0.0
        %6126 = vmatmul.mubr.f32.gmra.mrb[0].mxu0 %v6027
        %v6127 = vpop.f32.mrb[0].mxu0
        %v6128 = vadd.f32 0.0, %v6127
        %v6129 = vpop.f32.mrb[0].mxu0
        %6130 = vmatprep.mubr.f32.mxu0 0.0
        %6131 = vmatmul.mubr.f32.gmra.mrb[0].mxu0 %v6028
        %v6132 = vpop.f32.mrb[0].mxu0
        %v6133 = vadd.f32 0.0, %v6132
        %v6134 = vpop.f32.mrb[0].mxu0
        %6135 = vdwg.mxu0
        %v6136 = vadd.f32 %v6019, %v6113
        %v6137 = vadd.f32 %v6020, %v6118
        %v6138 = vadd.f32 %v6021, %v6123
        %v6139 = vadd.f32 %v6022, %v6128
        %v6140 = vadd.f32 %v6023, %v6133
        %v6141 = vld [vmem:[#allocation6 + $0xf] sm:$0xff]
        %v6142 = vld [vmem:[#allocation6 + $0x17] sm:$0xff]
        %v6143 = vld [vmem:[#allocation6 + $0x1f] sm:$0xff]
        %v6144 = vld [vmem:[#allocation6 + $0x27] sm:$0xff]
        %v6145 = vld [vmem:[#allocation6 + $0x2f] sm:$0x1]
        %s6146 = scalar_lea.vmem %s11, 896
        %v6147 = vld [vmem:[%s6146] sm:$0xff]
        %v6148 = vld [vmem:[%s6146 + $0x8] sm:$0xff]
        %v6149 = vld [vmem:[%s6146 + $0x10] sm:$0xff]
        %v6150 = vld [vmem:[%s6146 + $0x18] sm:$0xff]
        %v6151 = vld [vmem:[%s6146 + $0x20] sm:$0xff]
        %v6152 = vld [vmem:[%s6146 + $0x28] sm:$0xff]
        %v6153 = vld [vmem:[%s6146 + $0x30] sm:$0xff]
        %v6154 = vld [vmem:[%s6146 + $0x38] sm:$0xff]
        %v6155 = vld [vmem:[%s6146 + $0x40] sm:$0xff]
        %v6156 = vld [vmem:[%s6146 + $0x48] sm:$0xff]
        %v6157 = vld [vmem:[%s6146 + $0x50] sm:$0xff]
        %v6158 = vld [vmem:[%s6146 + $0x58] sm:$0xff]
        %v6159 = vld [vmem:[%s6146 + $0x60] sm:$0xff]
        %v6160 = vld [vmem:[%s6146 + $0x68] sm:$0xff]
        %v6161 = vld [vmem:[%s6146 + $0x70] sm:$0xff]
        %v6162 = vld [vmem:[%s6146 + $0x78] sm:$0xff]
        %6163 = vmatprep.subr.mxu0 0.0
        %6164 = vmatpush1.msra.mxu0 %v6147
        %6165 = vmatprep.subr.mxu0 0.0
        %6166 = vmatpush1.msra.mxu0 %v6148
        %6167 = vmatprep.subr.mxu0 0.0
        %6168 = vmatpush1.msra.mxu0 %v6149
        %6169 = vmatprep.subr.mxu0 0.0
        %6170 = vmatpush1.msra.mxu0 %v6150
        %6171 = vmatprep.subr.mxu0 0.0
        %6172 = vmatpush1.msra.mxu0 %v6151
        %6173 = vmatprep.subr.mxu0 0.0
        %6174 = vmatpush1.msra.mxu0 %v6152
        %6175 = vmatprep.subr.mxu0 0.0
        %6176 = vmatpush1.msra.mxu0 %v6153
        %6177 = vmatprep.subr.mxu0 0.0
        %6178 = vmatpush1.msra.mxu0 %v6154
        %6179 = vmatprep.subr.mxu0 0.0
        %6180 = vmatpush1.msra.mxu0 %v6155
        %6181 = vmatprep.subr.mxu0 0.0
        %6182 = vmatpush1.msra.mxu0 %v6156
        %6183 = vmatprep.subr.mxu0 0.0
        %6184 = vmatpush1.msra.mxu0 %v6157
        %6185 = vmatprep.subr.mxu0 0.0
        %6186 = vmatpush1.msra.mxu0 %v6158
        %6187 = vmatprep.subr.mxu0 0.0
        %6188 = vmatpush1.msra.mxu0 %v6159
        %6189 = vmatprep.subr.mxu0 0.0
        %6190 = vmatpush1.msra.mxu0 %v6160
        %6191 = vmatprep.subr.mxu0 0.0
        %6192 = vmatpush1.msra.mxu0 %v6161
        %6193 = vmatprep.subr.mxu0 0.0
        %6194 = vmatpush1.msra.mxu0 %v6162
        %6195 = vmatprep.subr.mxu0 0.0
        %6196 = vmatpush1.msra.mxu0 0.0
        %6197 = vmatprep.subr.mxu0 0.0
        %6198 = vmatpush1.msra.mxu0 0.0
        %6199 = vmatprep.subr.mxu0 0.0
        %6200 = vmatpush1.msra.mxu0 0.0
        %6201 = vmatprep.subr.mxu0 0.0
        %6202 = vmatpush1.msra.mxu0 0.0
        %6203 = vmatprep.subr.mxu0 0.0
        %6204 = vmatpush1.msra.mxu0 0.0
        %6205 = vmatprep.subr.mxu0 0.0
        %6206 = vmatpush1.msra.mxu0 0.0
        %6207 = vmatprep.subr.mxu0 0.0
        %6208 = vmatpush1.msra.mxu0 0.0
        %6209 = vmatprep.subr.mxu0 0.0
        %6210 = vmatpush1.msra.mxu0 0.0
        %6211 = vmatprep.subr.mxu0 0.0
        %6212 = vmatpush1.msra.mxu0 0.0
        %6213 = vmatprep.subr.mxu0 0.0
        %6214 = vmatpush1.msra.mxu0 0.0
        %6215 = vmatprep.subr.mxu0 0.0
        %6216 = vmatpush1.msra.mxu0 0.0
        %6217 = vmatprep.subr.mxu0 0.0
        %6218 = vmatpush1.msra.mxu0 0.0
        %6219 = vmatprep.subr.mxu0 0.0
        %6220 = vmatpush1.msra.mxu0 0.0
        %6221 = vmatprep.subr.mxu0 0.0
        %6222 = vmatpush1.msra.mxu0 0.0
        %6223 = vmatprep.subr.mxu0 0.0
        %6224 = vmatpush1.msra.mxu0 0.0
        %6225 = vmatprep.subr.mxu0 0.0
        %6226 = vmatpush1.msra.mxu0 0.0
        %6227 = vmatprep.mubr.f32.mxu0 0.0
        %6228 = vmatmul.mubr.f32.gmra.mrb[0].mxu0 %v6141
        %v6229 = vpop.f32.mrb[0].mxu0
        %v6230 = vadd.f32 0.0, %v6229
        %v6231 = vpop.f32.mrb[0].mxu0
        %6232 = vmatprep.mubr.f32.mxu0 0.0
        %6233 = vmatmul.mubr.f32.gmra.mrb[0].mxu0 %v6142
        %v6234 = vpop.f32.mrb[0].mxu0
        %v6235 = vadd.f32 0.0, %v6234
        %v6236 = vpop.f32.mrb[0].mxu0
        %6237 = vmatprep.mubr.f32.mxu0 0.0
        %6238 = vmatmul.mubr.f32.gmra.mrb[0].mxu0 %v6143
        %v6239 = vpop.f32.mrb[0].mxu0
        %v6240 = vadd.f32 0.0, %v6239
        %v6241 = vpop.f32.mrb[0].mxu0
        %6242 = vmatprep.mubr.f32.mxu0 0.0
        %6243 = vmatmul.mubr.f32.gmra.mrb[0].mxu0 %v6144
        %v6244 = vpop.f32.mrb[0].mxu0
        %v6245 = vadd.f32 0.0, %v6244
        %v6246 = vpop.f32.mrb[0].mxu0
        %6247 = vmatprep.mubr.f32.mxu0 0.0
        %6248 = vmatmul.mubr.f32.gmra.mrb[0].mxu0 %v6145
        %v6249 = vpop.f32.mrb[0].mxu0
        %v6250 = vadd.f32 0.0, %v6249
        %v6251 = vpop.f32.mrb[0].mxu0
        %6252 = vdwg.mxu0
        %v6253 = vadd.f32 %v6136, %v6230
        %v6254 = vadd.f32 %v6137, %v6235
        %v6255 = vadd.f32 %v6138, %v6240
        %v6256 = vadd.f32 %v6139, %v6245
        %v6257 = vadd.f32 %v6140, %v6250
        %v6258 = vld [vmem:[#allocation6 + $0x10] sm:$0xff]
        %v6259 = vld [vmem:[#allocation6 + $0x18] sm:$0xff]
        %v6260 = vld [vmem:[#allocation6 + $0x20] sm:$0xff]
        %v6261 = vld [vmem:[#allocation6 + $0x28] sm:$0xff]
        %v6262 = vld [vmem:[#allocation6 + $0x30] sm:$0x1]
        %s6263 = scalar_lea.vmem %s11, 1024
        %v6264 = vld [vmem:[%s6263] sm:$0xff]
        %v6265 = vld [vmem:[%s6263 + $0x8] sm:$0xff]
        %v6266 = vld [vmem:[%s6263 + $0x10] sm:$0xff]
        %v6267 = vld [vmem:[%s6263 + $0x18] sm:$0xff]
        %v6268 = vld [vmem:[%s6263 + $0x20] sm:$0xff]
        %v6269 = vld [vmem:[%s6263 + $0x28] sm:$0xff]
        %v6270 = vld [vmem:[%s6263 + $0x30] sm:$0xff]
        %v6271 = vld [vmem:[%s6263 + $0x38] sm:$0xff]
        %v6272 = vld [vmem:[%s6263 + $0x40] sm:$0xff]
        %v6273 = vld [vmem:[%s6263 + $0x48] sm:$0xff]
        %v6274 = vld [vmem:[%s6263 + $0x50] sm:$0xff]
        %v6275 = vld [vmem:[%s6263 + $0x58] sm:$0xff]
        %v6276 = vld [vmem:[%s6263 + $0x60] sm:$0xff]
        %v6277 = vld [vmem:[%s6263 + $0x68] sm:$0xff]
        %v6278 = vld [vmem:[%s6263 + $0x70] sm:$0xff]
        %v6279 = vld [vmem:[%s6263 + $0x78] sm:$0xff]
        %6280 = vmatprep.subr.mxu0 0.0
        %6281 = vmatpush1.msra.mxu0 %v6264
        %6282 = vmatprep.subr.mxu0 0.0
        %6283 = vmatpush1.msra.mxu0 %v6265
        %6284 = vmatprep.subr.mxu0 0.0
        %6285 = vmatpush1.msra.mxu0 %v6266
        %6286 = vmatprep.subr.mxu0 0.0
        %6287 = vmatpush1.msra.mxu0 %v6267
        %6288 = vmatprep.subr.mxu0 0.0
        %6289 = vmatpush1.msra.mxu0 %v6268
        %6290 = vmatprep.subr.mxu0 0.0
        %6291 = vmatpush1.msra.mxu0 %v6269
        %6292 = vmatprep.subr.mxu0 0.0
        %6293 = vmatpush1.msra.mxu0 %v6270
        %6294 = vmatprep.subr.mxu0 0.0
        %6295 = vmatpush1.msra.mxu0 %v6271
        %6296 = vmatprep.subr.mxu0 0.0
        %6297 = vmatpush1.msra.mxu0 %v6272
        %6298 = vmatprep.subr.mxu0 0.0
        %6299 = vmatpush1.msra.mxu0 %v6273
        %6300 = vmatprep.subr.mxu0 0.0
        %6301 = vmatpush1.msra.mxu0 %v6274
        %6302 = vmatprep.subr.mxu0 0.0
        %6303 = vmatpush1.msra.mxu0 %v6275
        %6304 = vmatprep.subr.mxu0 0.0
        %6305 = vmatpush1.msra.mxu0 %v6276
        %6306 = vmatprep.subr.mxu0 0.0
        %6307 = vmatpush1.msra.mxu0 %v6277
        %6308 = vmatprep.subr.mxu0 0.0
        %6309 = vmatpush1.msra.mxu0 %v6278
        %6310 = vmatprep.subr.mxu0 0.0
        %6311 = vmatpush1.msra.mxu0 %v6279
        %6312 = vmatprep.subr.mxu0 0.0
        %6313 = vmatpush1.msra.mxu0 0.0
        %6314 = vmatprep.subr.mxu0 0.0
        %6315 = vmatpush1.msra.mxu0 0.0
        %6316 = vmatprep.subr.mxu0 0.0
        %6317 = vmatpush1.msra.mxu0 0.0
        %6318 = vmatprep.subr.mxu0 0.0
        %6319 = vmatpush1.msra.mxu0 0.0
        %6320 = vmatprep.subr.mxu0 0.0
        %6321 = vmatpush1.msra.mxu0 0.0
        %6322 = vmatprep.subr.mxu0 0.0
        %6323 = vmatpush1.msra.mxu0 0.0
        %6324 = vmatprep.subr.mxu0 0.0
        %6325 = vmatpush1.msra.mxu0 0.0
        %6326 = vmatprep.subr.mxu0 0.0
        %6327 = vmatpush1.msra.mxu0 0.0
        %6328 = vmatprep.subr.mxu0 0.0
        %6329 = vmatpush1.msra.mxu0 0.0
        %6330 = vmatprep.subr.mxu0 0.0
        %6331 = vmatpush1.msra.mxu0 0.0
        %6332 = vmatprep.subr.mxu0 0.0
        %6333 = vmatpush1.msra.mxu0 0.0
        %6334 = vmatprep.subr.mxu0 0.0
        %6335 = vmatpush1.msra.mxu0 0.0
        %6336 = vmatprep.subr.mxu0 0.0
        %6337 = vmatpush1.msra.mxu0 0.0
        %6338 = vmatprep.subr.mxu0 0.0
        %6339 = vmatpush1.msra.mxu0 0.0
        %6340 = vmatprep.subr.mxu0 0.0
        %6341 = vmatpush1.msra.mxu0 0.0
        %6342 = vmatprep.subr.mxu0 0.0
        %6343 = vmatpush1.msra.mxu0 0.0
        %6344 = vmatprep.mubr.f32.mxu0 0.0
        %6345 = vmatmul.mubr.f32.gmra.mrb[0].mxu0 %v6258
        %v6346 = vpop.f32.mrb[0].mxu0
        %v6347 = vadd.f32 0.0, %v6346
        %v6348 = vpop.f32.mrb[0].mxu0
        %6349 = vmatprep.mubr.f32.mxu0 0.0
        %6350 = vmatmul.mubr.f32.gmra.mrb[0].mxu0 %v6259
        %v6351 = vpop.f32.mrb[0].mxu0
        %v6352 = vadd.f32 0.0, %v6351
        %v6353 = vpop.f32.mrb[0].mxu0
        %6354 = vmatprep.mubr.f32.mxu0 0.0
        %6355 = vmatmul.mubr.f32.gmra.mrb[0].mxu0 %v6260
        %v6356 = vpop.f32.mrb[0].mxu0
        %v6357 = vadd.f32 0.0, %v6356
        %v6358 = vpop.f32.mrb[0].mxu0
        %6359 = vmatprep.mubr.f32.mxu0 0.0
        %6360 = vmatmul.mubr.f32.gmra.mrb[0].mxu0 %v6261
        %v6361 = vpop.f32.mrb[0].mxu0
        %v6362 = vadd.f32 0.0, %v6361
        %v6363 = vpop.f32.mrb[0].mxu0
        %6364 = vmatprep.mubr.f32.mxu0 0.0
        %6365 = vmatmul.mubr.f32.gmra.mrb[0].mxu0 %v6262
        %v6366 = vpop.f32.mrb[0].mxu0
        %v6367 = vadd.f32 0.0, %v6366
        %v6368 = vpop.f32.mrb[0].mxu0
        %6369 = vdwg.mxu0
        %v6370 = vadd.f32 %v6253, %v6347
        %v6371 = vadd.f32 %v6254, %v6352
        %v6372 = vadd.f32 %v6255, %v6357
        %v6373 = vadd.f32 %v6256, %v6362
        %v6374 = vadd.f32 %v6257, %v6367
        %v6375 = vld [vmem:[%s12] sm:$0x1]
        %v6377 = vlaneseq
        %v6378 = vshrl.u32 %v6377, 7
        %v6379 = vsub.s32 0, %v6378
        %v6380 = vrot.slane %v6375, %v6379
        %v6382 = vadd.f32 %v6370, %v6380
        %v6383 = vadd.f32 %v6371, %v6380
        %v6384 = vadd.f32 %v6372, %v6380
        %v6385 = vadd.f32 %v6373, %v6380
        %v6386 = vadd.f32 %v6374, %v6380
        %v6387 = vmax.f32 %v6382, 0.0
        %v6388 = vmax.f32 %v6383, 0.0
        %v6389 = vmax.f32 %v6384, 0.0
        %v6390 = vmax.f32 %v6385, 0.0
        %v6391 = vmax.f32 %v6386, 0.0
        %6392 = vst.msk [vmem:[#allocation7 + $0x14] sm:$0x1f] %vm2284, %v6387
        %6393 = vst.msk [vmem:[#allocation7 + $0x16] sm:$0x80] %vm2286, %v6387
        %6394 = vst.msk [vmem:[#allocation7 + $0x1e] sm:$0xf] %vm2288, %v6388
        %6395 = vst.msk [vmem:[#allocation7 + $0x20] sm:$0xc0] %vm2290, %v6388
        %6396 = vst.msk [vmem:[#allocation7 + $0x28] sm:$0x7] %vm2292, %v6389
        %6397 = vst.msk [vmem:[#allocation7 + $0x2a] sm:$0xe0] %vm2294, %v6389
        %6398 = vst.msk [vmem:[#allocation7 + $0x32] sm:$0x3] %vm2296, %v6390
        %6399 = vst.msk [vmem:[#allocation7 + $0x34] sm:$0xf0] %vm2298, %v6390
        %6400 = vst.msk [vmem:[#allocation7 + $0x3c] sm:$0x1] %vm590, %v6391
        %v6401 = vld [vmem:[#allocation7] sm:$0xff]
        %v6402 = vld [vmem:[#allocation7 + $0x8] sm:$0xff]
        %v6403 = vld [vmem:[#allocation7 + $0x10] sm:$0xff]
        %v6404 = vld [vmem:[#allocation7 + $0x18] sm:$0xff]
        %v6405 = vld [vmem:[#allocation7 + $0x20] sm:$0xff]
        %v6406 = vld [vmem:[#allocation7 + $0x28] sm:$0xff]
        %v6407 = vld [vmem:[#allocation7 + $0x30] sm:$0xff]
        %v6408 = vld [vmem:[#allocation7 + $0x38] sm:$0x1f]
        %v6409 = vld [vmem:[%s13] sm:$0xff]
        %v6410 = vld [vmem:[%s13 + $0x8] sm:$0xff]
        %v6411 = vld [vmem:[%s13 + $0x10] sm:$0xff]
        %v6412 = vld [vmem:[%s13 + $0x18] sm:$0xff]
        %v6413 = vld [vmem:[%s13 + $0x20] sm:$0xff]
        %v6414 = vld [vmem:[%s13 + $0x28] sm:$0xff]
        %v6415 = vld [vmem:[%s13 + $0x30] sm:$0xff]
        %v6416 = vld [vmem:[%s13 + $0x38] sm:$0xff]
        %v6417 = vld [vmem:[#allocation7 + $0x1] sm:$0xff]
        %v6418 = vld [vmem:[#allocation7 + $0x9] sm:$0xff]
        %v6419 = vld [vmem:[#allocation7 + $0x11] sm:$0xff]
        %v6420 = vld [vmem:[#allocation7 + $0x19] sm:$0xff]
        %v6421 = vld [vmem:[#allocation7 + $0x21] sm:$0xff]
        %v6422 = vld [vmem:[#allocation7 + $0x29] sm:$0xff]
        %v6423 = vld [vmem:[#allocation7 + $0x31] sm:$0xff]
        %v6424 = vld [vmem:[#allocation7 + $0x39] sm:$0x1f]
        %s6425 = scalar_lea.vmem %s13, 64
        %v6426 = vld [vmem:[%s6425] sm:$0xff]
        %v6427 = vld [vmem:[%s6425 + $0x8] sm:$0xff]
        %v6428 = vld [vmem:[%s6425 + $0x10] sm:$0xff]
        %v6429 = vld [vmem:[%s6425 + $0x18] sm:$0xff]
        %v6430 = vld [vmem:[%s6425 + $0x20] sm:$0xff]
        %v6431 = vld [vmem:[%s6425 + $0x28] sm:$0xff]
        %v6432 = vld [vmem:[%s6425 + $0x30] sm:$0xff]
        %v6433 = vld [vmem:[%s6425 + $0x38] sm:$0xff]
        %v6435 = vsel %vm586, %v6417, 0
        %v6438 = vsel %vm586, %v6418, 0
        %v6441 = vsel %vm586, %v6419, 0
        %v6444 = vsel %vm586, %v6420, 0
        %v6447 = vsel %vm586, %v6421, 0
        %v6450 = vsel %vm586, %v6422, 0
        %v6453 = vsel %vm586, %v6423, 0
        %v6456 = vsel %vm586, %v6424, 0
        %6458 = vmatprep.subr.mxu0 0.0
        %6459 = vmatpush1.msra.mxu0 %v6426
        %6460 = vmatprep.subr.mxu0 0.0
        %6461 = vmatpush1.msra.mxu0 %v6427
        %6462 = vmatprep.subr.mxu0 0.0
        %6463 = vmatpush1.msra.mxu0 %v6428
        %6464 = vmatprep.subr.mxu0 0.0
        %6465 = vmatpush1.msra.mxu0 %v6429
        %6466 = vmatprep.subr.mxu0 0.0
        %6467 = vmatpush1.msra.mxu0 %v6430
        %6468 = vmatprep.subr.mxu0 0.0
        %6469 = vmatpush1.msra.mxu0 %v6431
        %6470 = vmatprep.subr.mxu0 0.0
        %6471 = vmatpush1.msra.mxu0 %v6432
        %6472 = vmatprep.subr.mxu0 0.0
        %6473 = vmatpush1.msra.mxu0 %v6433
        %6474 = vmatprep.subr.mxu0 0.0
        %6475 = vmatpush1.msra.mxu0 0.0
        %6476 = vmatprep.subr.mxu0 0.0
        %6477 = vmatpush1.msra.mxu0 0.0
        %6478 = vmatprep.subr.mxu0 0.0
        %6479 = vmatpush1.msra.mxu0 0.0
        %6480 = vmatprep.subr.mxu0 0.0
        %6481 = vmatpush1.msra.mxu0 0.0
        %6482 = vmatprep.subr.mxu0 0.0
        %6483 = vmatpush1.msra.mxu0 0.0
        %6484 = vmatprep.subr.mxu0 0.0
        %6485 = vmatpush1.msra.mxu0 0.0
        %6486 = vmatprep.subr.mxu0 0.0
        %6487 = vmatpush1.msra.mxu0 0.0
        %6488 = vmatprep.subr.mxu0 0.0
        %6489 = vmatpush1.msra.mxu0 0.0
        %6490 = vmatprep.subr.mxu0 0.0
        %6491 = vmatpush1.msra.mxu0 0.0
        %6492 = vmatprep.subr.mxu0 0.0
        %6493 = vmatpush1.msra.mxu0 0.0
        %6494 = vmatprep.subr.mxu0 0.0
        %6495 = vmatpush1.msra.mxu0 0.0
        %6496 = vmatprep.subr.mxu0 0.0
        %6497 = vmatpush1.msra.mxu0 0.0
        %6498 = vmatprep.subr.mxu0 0.0
        %6499 = vmatpush1.msra.mxu0 0.0
        %6500 = vmatprep.subr.mxu0 0.0
        %6501 = vmatpush1.msra.mxu0 0.0
        %6502 = vmatprep.subr.mxu0 0.0
        %6503 = vmatpush1.msra.mxu0 0.0
        %6504 = vmatprep.subr.mxu0 0.0
        %6505 = vmatpush1.msra.mxu0 0.0
        %6506 = vmatprep.subr.mxu0 0.0
        %6507 = vmatpush1.msra.mxu0 0.0
        %6508 = vmatprep.subr.mxu0 0.0
        %6509 = vmatpush1.msra.mxu0 0.0
        %6510 = vmatprep.subr.mxu0 0.0
        %6511 = vmatpush1.msra.mxu0 0.0
        %6512 = vmatprep.subr.mxu0 0.0
        %6513 = vmatpush1.msra.mxu0 0.0
        %6514 = vmatprep.subr.mxu0 0.0
        %6515 = vmatpush1.msra.mxu0 0.0
        %6516 = vmatprep.subr.mxu0 0.0
        %6517 = vmatpush1.msra.mxu0 0.0
        %6518 = vmatprep.subr.mxu0 0.0
        %6519 = vmatpush1.msra.mxu0 0.0
        %6520 = vmatprep.subr.mxu0 0.0
        %6521 = vmatpush1.msra.mxu0 0.0
        %6522 = vmatprep.mubr.f32.mxu0 0.0
        %6523 = vmatmul.mubr.f32.gmra.mrb[0].mxu0 %v6435
        %v6524 = vpop.f32.mrb[0].mxu0
        %v6525 = vadd.f32 0.0, %v6524
        %v6526 = vpop.f32.mrb[0].mxu0
        %6527 = vmatprep.mubr.f32.mxu0 0.0
        %6528 = vmatmul.mubr.f32.gmra.mrb[0].mxu0 %v6438
        %v6529 = vpop.f32.mrb[0].mxu0
        %v6530 = vadd.f32 0.0, %v6529
        %v6531 = vpop.f32.mrb[0].mxu0
        %6532 = vmatprep.mubr.f32.mxu0 0.0
        %6533 = vmatmul.mubr.f32.gmra.mrb[0].mxu0 %v6441
        %v6534 = vpop.f32.mrb[0].mxu0
        %v6535 = vadd.f32 0.0, %v6534
        %v6536 = vpop.f32.mrb[0].mxu0
        %6537 = vmatprep.mubr.f32.mxu0 0.0
        %6538 = vmatmul.mubr.f32.gmra.mrb[0].mxu0 %v6444
        %v6539 = vpop.f32.mrb[0].mxu0
        %v6540 = vadd.f32 0.0, %v6539
        %v6541 = vpop.f32.mrb[0].mxu0
        %6542 = vmatprep.mubr.f32.mxu0 0.0
        %6543 = vmatmul.mubr.f32.gmra.mrb[0].mxu0 %v6447
        %v6544 = vpop.f32.mrb[0].mxu0
        %v6545 = vadd.f32 0.0, %v6544
        %v6546 = vpop.f32.mrb[0].mxu0
        %6547 = vmatprep.mubr.f32.mxu0 0.0
        %6548 = vmatmul.mubr.f32.gmra.mrb[0].mxu0 %v6450
        %v6549 = vpop.f32.mrb[0].mxu0
        %v6550 = vadd.f32 0.0, %v6549
        %v6551 = vpop.f32.mrb[0].mxu0
        %6552 = vmatprep.mubr.f32.mxu0 0.0
        %6553 = vmatmul.mubr.f32.gmra.mrb[0].mxu0 %v6453
        %v6554 = vpop.f32.mrb[0].mxu0
        %v6555 = vadd.f32 0.0, %v6554
        %v6556 = vpop.f32.mrb[0].mxu0
        %6557 = vmatprep.mubr.f32.mxu0 0.0
        %6558 = vmatmul.mubr.f32.gmra.mrb[0].mxu0 %v6456
        %v6559 = vpop.f32.mrb[0].mxu0
        %v6560 = vadd.f32 0.0, %v6559
        %v6561 = vpop.f32.mrb[0].mxu0
        %6562 = vdwg.mxu0
        %v6564 = vsel %vm586, %v6401, 0
        %v6567 = vsel %vm586, %v6402, 0
        %v6570 = vsel %vm586, %v6403, 0
        %v6573 = vsel %vm586, %v6404, 0
        %v6576 = vsel %vm586, %v6405, 0
        %v6579 = vsel %vm586, %v6406, 0
        %v6582 = vsel %vm586, %v6407, 0
        %v6585 = vsel %vm586, %v6408, 0
        %6587 = vmatprep.subr.mxu0 0.0
        %6588 = vmatpush1.msra.mxu0 %v6409
        %6589 = vmatprep.subr.mxu0 0.0
        %6590 = vmatpush1.msra.mxu0 %v6410
        %6591 = vmatprep.subr.mxu0 0.0
        %6592 = vmatpush1.msra.mxu0 %v6411
        %6593 = vmatprep.subr.mxu0 0.0
        %6594 = vmatpush1.msra.mxu0 %v6412
        %6595 = vmatprep.subr.mxu0 0.0
        %6596 = vmatpush1.msra.mxu0 %v6413
        %6597 = vmatprep.subr.mxu0 0.0
        %6598 = vmatpush1.msra.mxu0 %v6414
        %6599 = vmatprep.subr.mxu0 0.0
        %6600 = vmatpush1.msra.mxu0 %v6415
        %6601 = vmatprep.subr.mxu0 0.0
        %6602 = vmatpush1.msra.mxu0 %v6416
        %6603 = vmatprep.subr.mxu0 0.0
        %6604 = vmatpush1.msra.mxu0 0.0
        %6605 = vmatprep.subr.mxu0 0.0
        %6606 = vmatpush1.msra.mxu0 0.0
        %6607 = vmatprep.subr.mxu0 0.0
        %6608 = vmatpush1.msra.mxu0 0.0
        %6609 = vmatprep.subr.mxu0 0.0
        %6610 = vmatpush1.msra.mxu0 0.0
        %6611 = vmatprep.subr.mxu0 0.0
        %6612 = vmatpush1.msra.mxu0 0.0
        %6613 = vmatprep.subr.mxu0 0.0
        %6614 = vmatpush1.msra.mxu0 0.0
        %6615 = vmatprep.subr.mxu0 0.0
        %6616 = vmatpush1.msra.mxu0 0.0
        %6617 = vmatprep.subr.mxu0 0.0
        %6618 = vmatpush1.msra.mxu0 0.0
        %6619 = vmatprep.subr.mxu0 0.0
        %6620 = vmatpush1.msra.mxu0 0.0
        %6621 = vmatprep.subr.mxu0 0.0
        %6622 = vmatpush1.msra.mxu0 0.0
        %6623 = vmatprep.subr.mxu0 0.0
        %6624 = vmatpush1.msra.mxu0 0.0
        %6625 = vmatprep.subr.mxu0 0.0
        %6626 = vmatpush1.msra.mxu0 0.0
        %6627 = vmatprep.subr.mxu0 0.0
        %6628 = vmatpush1.msra.mxu0 0.0
        %6629 = vmatprep.subr.mxu0 0.0
        %6630 = vmatpush1.msra.mxu0 0.0
        %6631 = vmatprep.subr.mxu0 0.0
        %6632 = vmatpush1.msra.mxu0 0.0
        %6633 = vmatprep.subr.mxu0 0.0
        %6634 = vmatpush1.msra.mxu0 0.0
        %6635 = vmatprep.subr.mxu0 0.0
        %6636 = vmatpush1.msra.mxu0 0.0
        %6637 = vmatprep.subr.mxu0 0.0
        %6638 = vmatpush1.msra.mxu0 0.0
        %6639 = vmatprep.subr.mxu0 0.0
        %6640 = vmatpush1.msra.mxu0 0.0
        %6641 = vmatprep.subr.mxu0 0.0
        %6642 = vmatpush1.msra.mxu0 0.0
        %6643 = vmatprep.subr.mxu0 0.0
        %6644 = vmatpush1.msra.mxu0 0.0
        %6645 = vmatprep.subr.mxu0 0.0
        %6646 = vmatpush1.msra.mxu0 0.0
        %6647 = vmatprep.subr.mxu0 0.0
        %6648 = vmatpush1.msra.mxu0 0.0
        %6649 = vmatprep.subr.mxu0 0.0
        %6650 = vmatpush1.msra.mxu0 0.0
        %6651 = vmatprep.mubr.f32.mxu0 0.0
        %6652 = vmatmul.mubr.f32.gmra.mrb[0].mxu0 %v6564
        %v6653 = vpop.f32.mrb[0].mxu0
        %v6654 = vadd.f32 %v6525, %v6653
        %v6655 = vpop.f32.mrb[0].mxu0
        %6656 = vmatprep.mubr.f32.mxu0 0.0
        %6657 = vmatmul.mubr.f32.gmra.mrb[0].mxu0 %v6567
        %v6658 = vpop.f32.mrb[0].mxu0
        %v6659 = vadd.f32 %v6530, %v6658
        %v6660 = vpop.f32.mrb[0].mxu0
        %6661 = vmatprep.mubr.f32.mxu0 0.0
        %6662 = vmatmul.mubr.f32.gmra.mrb[0].mxu0 %v6570
        %v6663 = vpop.f32.mrb[0].mxu0
        %v6664 = vadd.f32 %v6535, %v6663
        %v6665 = vpop.f32.mrb[0].mxu0
        %6666 = vmatprep.mubr.f32.mxu0 0.0
        %6667 = vmatmul.mubr.f32.gmra.mrb[0].mxu0 %v6573
        %v6668 = vpop.f32.mrb[0].mxu0
        %v6669 = vadd.f32 %v6540, %v6668
        %v6670 = vpop.f32.mrb[0].mxu0
        %6671 = vmatprep.mubr.f32.mxu0 0.0
        %6672 = vmatmul.mubr.f32.gmra.mrb[0].mxu0 %v6576
        %v6673 = vpop.f32.mrb[0].mxu0
        %v6674 = vadd.f32 %v6545, %v6673
        %v6675 = vpop.f32.mrb[0].mxu0
        %6676 = vmatprep.mubr.f32.mxu0 0.0
        %6677 = vmatmul.mubr.f32.gmra.mrb[0].mxu0 %v6579
        %v6678 = vpop.f32.mrb[0].mxu0
        %v6679 = vadd.f32 %v6550, %v6678
        %v6680 = vpop.f32.mrb[0].mxu0
        %6681 = vmatprep.mubr.f32.mxu0 0.0
        %6682 = vmatmul.mubr.f32.gmra.mrb[0].mxu0 %v6582
        %v6683 = vpop.f32.mrb[0].mxu0
        %v6684 = vadd.f32 %v6555, %v6683
        %v6685 = vpop.f32.mrb[0].mxu0
        %6686 = vmatprep.mubr.f32.mxu0 0.0
        %6687 = vmatmul.mubr.f32.gmra.mrb[0].mxu0 %v6585
        %v6688 = vpop.f32.mrb[0].mxu0
        %v6689 = vadd.f32 %v6560, %v6688
        %v6690 = vpop.f32.mrb[0].mxu0
        %6691 = vdwg.mxu0
        %v6692 = vld [vmem:[#allocation7 + $0x2] sm:$0xff]
        %v6693 = vld [vmem:[#allocation7 + $0xa] sm:$0xff]
        %v6694 = vld [vmem:[#allocation7 + $0x12] sm:$0xff]
        %v6695 = vld [vmem:[#allocation7 + $0x1a] sm:$0xff]
        %v6696 = vld [vmem:[#allocation7 + $0x22] sm:$0xff]
        %v6697 = vld [vmem:[#allocation7 + $0x2a] sm:$0xff]
        %v6698 = vld [vmem:[#allocation7 + $0x32] sm:$0xff]
        %v6699 = vld [vmem:[#allocation7 + $0x3a] sm:$0x1f]
        %s6700 = scalar_lea.vmem %s13, 128
        %v6701 = vld [vmem:[%s6700] sm:$0xff]
        %v6702 = vld [vmem:[%s6700 + $0x8] sm:$0xff]
        %v6703 = vld [vmem:[%s6700 + $0x10] sm:$0xff]
        %v6704 = vld [vmem:[%s6700 + $0x18] sm:$0xff]
        %v6705 = vld [vmem:[%s6700 + $0x20] sm:$0xff]
        %v6706 = vld [vmem:[%s6700 + $0x28] sm:$0xff]
        %v6707 = vld [vmem:[%s6700 + $0x30] sm:$0xff]
        %v6708 = vld [vmem:[%s6700 + $0x38] sm:$0xff]
        %v6710 = vsel %vm586, %v6692, 0
        %v6713 = vsel %vm586, %v6693, 0
        %v6716 = vsel %vm586, %v6694, 0
        %v6719 = vsel %vm586, %v6695, 0
        %v6722 = vsel %vm586, %v6696, 0
        %v6725 = vsel %vm586, %v6697, 0
        %v6728 = vsel %vm586, %v6698, 0
        %v6731 = vsel %vm586, %v6699, 0
        %6733 = vmatprep.subr.mxu0 0.0
        %6734 = vmatpush1.msra.mxu0 %v6701
        %6735 = vmatprep.subr.mxu0 0.0
        %6736 = vmatpush1.msra.mxu0 %v6702
        %6737 = vmatprep.subr.mxu0 0.0
        %6738 = vmatpush1.msra.mxu0 %v6703
        %6739 = vmatprep.subr.mxu0 0.0
        %6740 = vmatpush1.msra.mxu0 %v6704
        %6741 = vmatprep.subr.mxu0 0.0
        %6742 = vmatpush1.msra.mxu0 %v6705
        %6743 = vmatprep.subr.mxu0 0.0
        %6744 = vmatpush1.msra.mxu0 %v6706
        %6745 = vmatprep.subr.mxu0 0.0
        %6746 = vmatpush1.msra.mxu0 %v6707
        %6747 = vmatprep.subr.mxu0 0.0
        %6748 = vmatpush1.msra.mxu0 %v6708
        %6749 = vmatprep.subr.mxu0 0.0
        %6750 = vmatpush1.msra.mxu0 0.0
        %6751 = vmatprep.subr.mxu0 0.0
        %6752 = vmatpush1.msra.mxu0 0.0
        %6753 = vmatprep.subr.mxu0 0.0
        %6754 = vmatpush1.msra.mxu0 0.0
        %6755 = vmatprep.subr.mxu0 0.0
        %6756 = vmatpush1.msra.mxu0 0.0
        %6757 = vmatprep.subr.mxu0 0.0
        %6758 = vmatpush1.msra.mxu0 0.0
        %6759 = vmatprep.subr.mxu0 0.0
        %6760 = vmatpush1.msra.mxu0 0.0
        %6761 = vmatprep.subr.mxu0 0.0
        %6762 = vmatpush1.msra.mxu0 0.0
        %6763 = vmatprep.subr.mxu0 0.0
        %6764 = vmatpush1.msra.mxu0 0.0
        %6765 = vmatprep.subr.mxu0 0.0
        %6766 = vmatpush1.msra.mxu0 0.0
        %6767 = vmatprep.subr.mxu0 0.0
        %6768 = vmatpush1.msra.mxu0 0.0
        %6769 = vmatprep.subr.mxu0 0.0
        %6770 = vmatpush1.msra.mxu0 0.0
        %6771 = vmatprep.subr.mxu0 0.0
        %6772 = vmatpush1.msra.mxu0 0.0
        %6773 = vmatprep.subr.mxu0 0.0
        %6774 = vmatpush1.msra.mxu0 0.0
        %6775 = vmatprep.subr.mxu0 0.0
        %6776 = vmatpush1.msra.mxu0 0.0
        %6777 = vmatprep.subr.mxu0 0.0
        %6778 = vmatpush1.msra.mxu0 0.0
        %6779 = vmatprep.subr.mxu0 0.0
        %6780 = vmatpush1.msra.mxu0 0.0
        %6781 = vmatprep.subr.mxu0 0.0
        %6782 = vmatpush1.msra.mxu0 0.0
        %6783 = vmatprep.subr.mxu0 0.0
        %6784 = vmatpush1.msra.mxu0 0.0
        %6785 = vmatprep.subr.mxu0 0.0
        %6786 = vmatpush1.msra.mxu0 0.0
        %6787 = vmatprep.subr.mxu0 0.0
        %6788 = vmatpush1.msra.mxu0 0.0
        %6789 = vmatprep.subr.mxu0 0.0
        %6790 = vmatpush1.msra.mxu0 0.0
        %6791 = vmatprep.subr.mxu0 0.0
        %6792 = vmatpush1.msra.mxu0 0.0
        %6793 = vmatprep.subr.mxu0 0.0
        %6794 = vmatpush1.msra.mxu0 0.0
        %6795 = vmatprep.subr.mxu0 0.0
        %6796 = vmatpush1.msra.mxu0 0.0
        %6797 = vmatprep.mubr.f32.mxu0 0.0
        %6798 = vmatmul.mubr.f32.gmra.mrb[0].mxu0 %v6710
        %v6799 = vpop.f32.mrb[0].mxu0
        %v6800 = vadd.f32 0.0, %v6799
        %v6801 = vpop.f32.mrb[0].mxu0
        %6802 = vmatprep.mubr.f32.mxu0 0.0
        %6803 = vmatmul.mubr.f32.gmra.mrb[0].mxu0 %v6713
        %v6804 = vpop.f32.mrb[0].mxu0
        %v6805 = vadd.f32 0.0, %v6804
        %v6806 = vpop.f32.mrb[0].mxu0
        %6807 = vmatprep.mubr.f32.mxu0 0.0
        %6808 = vmatmul.mubr.f32.gmra.mrb[0].mxu0 %v6716
        %v6809 = vpop.f32.mrb[0].mxu0
        %v6810 = vadd.f32 0.0, %v6809
        %v6811 = vpop.f32.mrb[0].mxu0
        %6812 = vmatprep.mubr.f32.mxu0 0.0
        %6813 = vmatmul.mubr.f32.gmra.mrb[0].mxu0 %v6719
        %v6814 = vpop.f32.mrb[0].mxu0
        %v6815 = vadd.f32 0.0, %v6814
        %v6816 = vpop.f32.mrb[0].mxu0
        %6817 = vmatprep.mubr.f32.mxu0 0.0
        %6818 = vmatmul.mubr.f32.gmra.mrb[0].mxu0 %v6722
        %v6819 = vpop.f32.mrb[0].mxu0
        %v6820 = vadd.f32 0.0, %v6819
        %v6821 = vpop.f32.mrb[0].mxu0
        %6822 = vmatprep.mubr.f32.mxu0 0.0
        %6823 = vmatmul.mubr.f32.gmra.mrb[0].mxu0 %v6725
        %v6824 = vpop.f32.mrb[0].mxu0
        %v6825 = vadd.f32 0.0, %v6824
        %v6826 = vpop.f32.mrb[0].mxu0
        %6827 = vmatprep.mubr.f32.mxu0 0.0
        %6828 = vmatmul.mubr.f32.gmra.mrb[0].mxu0 %v6728
        %v6829 = vpop.f32.mrb[0].mxu0
        %v6830 = vadd.f32 0.0, %v6829
        %v6831 = vpop.f32.mrb[0].mxu0
        %6832 = vmatprep.mubr.f32.mxu0 0.0
        %6833 = vmatmul.mubr.f32.gmra.mrb[0].mxu0 %v6731
        %v6834 = vpop.f32.mrb[0].mxu0
        %v6835 = vadd.f32 0.0, %v6834
        %v6836 = vpop.f32.mrb[0].mxu0
        %6837 = vdwg.mxu0
        %v6838 = vadd.f32 %v6654, %v6800
        %v6839 = vadd.f32 %v6659, %v6805
        %v6840 = vadd.f32 %v6664, %v6810
        %v6841 = vadd.f32 %v6669, %v6815
        %v6842 = vadd.f32 %v6674, %v6820
        %v6843 = vadd.f32 %v6679, %v6825
        %v6844 = vadd.f32 %v6684, %v6830
        %v6845 = vadd.f32 %v6689, %v6835
        %v6846 = vld [vmem:[#allocation7 + $0x9] sm:$0xff]
        %v6847 = vld [vmem:[#allocation7 + $0x11] sm:$0xff]
        %v6848 = vld [vmem:[#allocation7 + $0x19] sm:$0xff]
        %v6849 = vld [vmem:[#allocation7 + $0x21] sm:$0xff]
        %v6850 = vld [vmem:[#allocation7 + $0x29] sm:$0xff]
        %v6851 = vld [vmem:[#allocation7 + $0x31] sm:$0xff]
        %v6852 = vld [vmem:[#allocation7 + $0x39] sm:$0xff]
        %v6853 = vld [vmem:[#allocation7 + $0x41] sm:$0x1f]
        %s6854 = scalar_lea.vmem %s13, 192
        %v6855 = vld [vmem:[%s6854] sm:$0xff]
        %v6856 = vld [vmem:[%s6854 + $0x8] sm:$0xff]
        %v6857 = vld [vmem:[%s6854 + $0x10] sm:$0xff]
        %v6858 = vld [vmem:[%s6854 + $0x18] sm:$0xff]
        %v6859 = vld [vmem:[%s6854 + $0x20] sm:$0xff]
        %v6860 = vld [vmem:[%s6854 + $0x28] sm:$0xff]
        %v6861 = vld [vmem:[%s6854 + $0x30] sm:$0xff]
        %v6862 = vld [vmem:[%s6854 + $0x38] sm:$0xff]
        %v6864 = vsel %vm586, %v6846, 0
        %v6867 = vsel %vm586, %v6847, 0
        %v6870 = vsel %vm586, %v6848, 0
        %v6873 = vsel %vm586, %v6849, 0
        %v6876 = vsel %vm586, %v6850, 0
        %v6879 = vsel %vm586, %v6851, 0
        %v6882 = vsel %vm586, %v6852, 0
        %v6885 = vsel %vm586, %v6853, 0
        %6887 = vmatprep.subr.mxu0 0.0
        %6888 = vmatpush1.msra.mxu0 %v6855
        %6889 = vmatprep.subr.mxu0 0.0
        %6890 = vmatpush1.msra.mxu0 %v6856
        %6891 = vmatprep.subr.mxu0 0.0
        %6892 = vmatpush1.msra.mxu0 %v6857
        %6893 = vmatprep.subr.mxu0 0.0
        %6894 = vmatpush1.msra.mxu0 %v6858
        %6895 = vmatprep.subr.mxu0 0.0
        %6896 = vmatpush1.msra.mxu0 %v6859
        %6897 = vmatprep.subr.mxu0 0.0
        %6898 = vmatpush1.msra.mxu0 %v6860
        %6899 = vmatprep.subr.mxu0 0.0
        %6900 = vmatpush1.msra.mxu0 %v6861
        %6901 = vmatprep.subr.mxu0 0.0
        %6902 = vmatpush1.msra.mxu0 %v6862
        %6903 = vmatprep.subr.mxu0 0.0
        %6904 = vmatpush1.msra.mxu0 0.0
        %6905 = vmatprep.subr.mxu0 0.0
        %6906 = vmatpush1.msra.mxu0 0.0
        %6907 = vmatprep.subr.mxu0 0.0
        %6908 = vmatpush1.msra.mxu0 0.0
        %6909 = vmatprep.subr.mxu0 0.0
        %6910 = vmatpush1.msra.mxu0 0.0
        %6911 = vmatprep.subr.mxu0 0.0
        %6912 = vmatpush1.msra.mxu0 0.0
        %6913 = vmatprep.subr.mxu0 0.0
        %6914 = vmatpush1.msra.mxu0 0.0
        %6915 = vmatprep.subr.mxu0 0.0
        %6916 = vmatpush1.msra.mxu0 0.0
        %6917 = vmatprep.subr.mxu0 0.0
        %6918 = vmatpush1.msra.mxu0 0.0
        %6919 = vmatprep.subr.mxu0 0.0
        %6920 = vmatpush1.msra.mxu0 0.0
        %6921 = vmatprep.subr.mxu0 0.0
        %6922 = vmatpush1.msra.mxu0 0.0
        %6923 = vmatprep.subr.mxu0 0.0
        %6924 = vmatpush1.msra.mxu0 0.0
        %6925 = vmatprep.subr.mxu0 0.0
        %6926 = vmatpush1.msra.mxu0 0.0
        %6927 = vmatprep.subr.mxu0 0.0
        %6928 = vmatpush1.msra.mxu0 0.0
        %6929 = vmatprep.subr.mxu0 0.0
        %6930 = vmatpush1.msra.mxu0 0.0
        %6931 = vmatprep.subr.mxu0 0.0
        %6932 = vmatpush1.msra.mxu0 0.0
        %6933 = vmatprep.subr.mxu0 0.0
        %6934 = vmatpush1.msra.mxu0 0.0
        %6935 = vmatprep.subr.mxu0 0.0
        %6936 = vmatpush1.msra.mxu0 0.0
        %6937 = vmatprep.subr.mxu0 0.0
        %6938 = vmatpush1.msra.mxu0 0.0
        %6939 = vmatprep.subr.mxu0 0.0
        %6940 = vmatpush1.msra.mxu0 0.0
        %6941 = vmatprep.subr.mxu0 0.0
        %6942 = vmatpush1.msra.mxu0 0.0
        %6943 = vmatprep.subr.mxu0 0.0
        %6944 = vmatpush1.msra.mxu0 0.0
        %6945 = vmatprep.subr.mxu0 0.0
        %6946 = vmatpush1.msra.mxu0 0.0
        %6947 = vmatprep.subr.mxu0 0.0
        %6948 = vmatpush1.msra.mxu0 0.0
        %6949 = vmatprep.subr.mxu0 0.0
        %6950 = vmatpush1.msra.mxu0 0.0
        %6951 = vmatprep.mubr.f32.mxu0 0.0
        %6952 = vmatmul.mubr.f32.gmra.mrb[0].mxu0 %v6864
        %v6953 = vpop.f32.mrb[0].mxu0
        %v6954 = vadd.f32 0.0, %v6953
        %v6955 = vpop.f32.mrb[0].mxu0
        %6956 = vmatprep.mubr.f32.mxu0 0.0
        %6957 = vmatmul.mubr.f32.gmra.mrb[0].mxu0 %v6867
        %v6958 = vpop.f32.mrb[0].mxu0
        %v6959 = vadd.f32 0.0, %v6958
        %v6960 = vpop.f32.mrb[0].mxu0
        %6961 = vmatprep.mubr.f32.mxu0 0.0
        %6962 = vmatmul.mubr.f32.gmra.mrb[0].mxu0 %v6870
        %v6963 = vpop.f32.mrb[0].mxu0
        %v6964 = vadd.f32 0.0, %v6963
        %v6965 = vpop.f32.mrb[0].mxu0
        %6966 = vmatprep.mubr.f32.mxu0 0.0
        %6967 = vmatmul.mubr.f32.gmra.mrb[0].mxu0 %v6873
        %v6968 = vpop.f32.mrb[0].mxu0
        %v6969 = vadd.f32 0.0, %v6968
        %v6970 = vpop.f32.mrb[0].mxu0
        %6971 = vmatprep.mubr.f32.mxu0 0.0
        %6972 = vmatmul.mubr.f32.gmra.mrb[0].mxu0 %v6876
        %v6973 = vpop.f32.mrb[0].mxu0
        %v6974 = vadd.f32 0.0, %v6973
        %v6975 = vpop.f32.mrb[0].mxu0
        %6976 = vmatprep.mubr.f32.mxu0 0.0
        %6977 = vmatmul.mubr.f32.gmra.mrb[0].mxu0 %v6879
        %v6978 = vpop.f32.mrb[0].mxu0
        %v6979 = vadd.f32 0.0, %v6978
        %v6980 = vpop.f32.mrb[0].mxu0
        %6981 = vmatprep.mubr.f32.mxu0 0.0
        %6982 = vmatmul.mubr.f32.gmra.mrb[0].mxu0 %v6882
        %v6983 = vpop.f32.mrb[0].mxu0
        %v6984 = vadd.f32 0.0, %v6983
        %v6985 = vpop.f32.mrb[0].mxu0
        %6986 = vmatprep.mubr.f32.mxu0 0.0
        %6987 = vmatmul.mubr.f32.gmra.mrb[0].mxu0 %v6885
        %v6988 = vpop.f32.mrb[0].mxu0
        %v6989 = vadd.f32 0.0, %v6988
        %v6990 = vpop.f32.mrb[0].mxu0
        %6991 = vdwg.mxu0
        %v6992 = vadd.f32 %v6838, %v6954
        %v6993 = vadd.f32 %v6839, %v6959
        %v6994 = vadd.f32 %v6840, %v6964
        %v6995 = vadd.f32 %v6841, %v6969
        %v6996 = vadd.f32 %v6842, %v6974
        %v6997 = vadd.f32 %v6843, %v6979
        %v6998 = vadd.f32 %v6844, %v6984
        %v6999 = vadd.f32 %v6845, %v6989
        %v7000 = vld [vmem:[#allocation7 + $0xa] sm:$0xff]
        %v7001 = vld [vmem:[#allocation7 + $0x12] sm:$0xff]
        %v7002 = vld [vmem:[#allocation7 + $0x1a] sm:$0xff]
        %v7003 = vld [vmem:[#allocation7 + $0x22] sm:$0xff]
        %v7004 = vld [vmem:[#allocation7 + $0x2a] sm:$0xff]
        %v7005 = vld [vmem:[#allocation7 + $0x32] sm:$0xff]
        %v7006 = vld [vmem:[#allocation7 + $0x3a] sm:$0xff]
        %v7007 = vld [vmem:[#allocation7 + $0x42] sm:$0x1f]
        %s7008 = scalar_lea.vmem %s13, 256
        %v7009 = vld [vmem:[%s7008] sm:$0xff]
        %v7010 = vld [vmem:[%s7008 + $0x8] sm:$0xff]
        %v7011 = vld [vmem:[%s7008 + $0x10] sm:$0xff]
        %v7012 = vld [vmem:[%s7008 + $0x18] sm:$0xff]
        %v7013 = vld [vmem:[%s7008 + $0x20] sm:$0xff]
        %v7014 = vld [vmem:[%s7008 + $0x28] sm:$0xff]
        %v7015 = vld [vmem:[%s7008 + $0x30] sm:$0xff]
        %v7016 = vld [vmem:[%s7008 + $0x38] sm:$0xff]
        %v7018 = vsel %vm586, %v7000, 0
        %v7021 = vsel %vm586, %v7001, 0
        %v7024 = vsel %vm586, %v7002, 0
        %v7027 = vsel %vm586, %v7003, 0
        %v7030 = vsel %vm586, %v7004, 0
        %v7033 = vsel %vm586, %v7005, 0
        %v7036 = vsel %vm586, %v7006, 0
        %v7039 = vsel %vm586, %v7007, 0
        %7041 = vmatprep.subr.mxu0 0.0
        %7042 = vmatpush1.msra.mxu0 %v7009
        %7043 = vmatprep.subr.mxu0 0.0
        %7044 = vmatpush1.msra.mxu0 %v7010
        %7045 = vmatprep.subr.mxu0 0.0
        %7046 = vmatpush1.msra.mxu0 %v7011
        %7047 = vmatprep.subr.mxu0 0.0
        %7048 = vmatpush1.msra.mxu0 %v7012
        %7049 = vmatprep.subr.mxu0 0.0
        %7050 = vmatpush1.msra.mxu0 %v7013
        %7051 = vmatprep.subr.mxu0 0.0
        %7052 = vmatpush1.msra.mxu0 %v7014
        %7053 = vmatprep.subr.mxu0 0.0
        %7054 = vmatpush1.msra.mxu0 %v7015
        %7055 = vmatprep.subr.mxu0 0.0
        %7056 = vmatpush1.msra.mxu0 %v7016
        %7057 = vmatprep.subr.mxu0 0.0
        %7058 = vmatpush1.msra.mxu0 0.0
        %7059 = vmatprep.subr.mxu0 0.0
        %7060 = vmatpush1.msra.mxu0 0.0
        %7061 = vmatprep.subr.mxu0 0.0
        %7062 = vmatpush1.msra.mxu0 0.0
        %7063 = vmatprep.subr.mxu0 0.0
        %7064 = vmatpush1.msra.mxu0 0.0
        %7065 = vmatprep.subr.mxu0 0.0
        %7066 = vmatpush1.msra.mxu0 0.0
        %7067 = vmatprep.subr.mxu0 0.0
        %7068 = vmatpush1.msra.mxu0 0.0
        %7069 = vmatprep.subr.mxu0 0.0
        %7070 = vmatpush1.msra.mxu0 0.0
        %7071 = vmatprep.subr.mxu0 0.0
        %7072 = vmatpush1.msra.mxu0 0.0
        %7073 = vmatprep.subr.mxu0 0.0
        %7074 = vmatpush1.msra.mxu0 0.0
        %7075 = vmatprep.subr.mxu0 0.0
        %7076 = vmatpush1.msra.mxu0 0.0
        %7077 = vmatprep.subr.mxu0 0.0
        %7078 = vmatpush1.msra.mxu0 0.0
        %7079 = vmatprep.subr.mxu0 0.0
        %7080 = vmatpush1.msra.mxu0 0.0
        %7081 = vmatprep.subr.mxu0 0.0
        %7082 = vmatpush1.msra.mxu0 0.0
        %7083 = vmatprep.subr.mxu0 0.0
        %7084 = vmatpush1.msra.mxu0 0.0
        %7085 = vmatprep.subr.mxu0 0.0
        %7086 = vmatpush1.msra.mxu0 0.0
        %7087 = vmatprep.subr.mxu0 0.0
        %7088 = vmatpush1.msra.mxu0 0.0
        %7089 = vmatprep.subr.mxu0 0.0
        %7090 = vmatpush1.msra.mxu0 0.0
        %7091 = vmatprep.subr.mxu0 0.0
        %7092 = vmatpush1.msra.mxu0 0.0
        %7093 = vmatprep.subr.mxu0 0.0
        %7094 = vmatpush1.msra.mxu0 0.0
        %7095 = vmatprep.subr.mxu0 0.0
        %7096 = vmatpush1.msra.mxu0 0.0
        %7097 = vmatprep.subr.mxu0 0.0
        %7098 = vmatpush1.msra.mxu0 0.0
        %7099 = vmatprep.subr.mxu0 0.0
        %7100 = vmatpush1.msra.mxu0 0.0
        %7101 = vmatprep.subr.mxu0 0.0
        %7102 = vmatpush1.msra.mxu0 0.0
        %7103 = vmatprep.subr.mxu0 0.0
        %7104 = vmatpush1.msra.mxu0 0.0
        %7105 = vmatprep.mubr.f32.mxu0 0.0
        %7106 = vmatmul.mubr.f32.gmra.mrb[0].mxu0 %v7018
        %v7107 = vpop.f32.mrb[0].mxu0
        %v7108 = vadd.f32 0.0, %v7107
        %v7109 = vpop.f32.mrb[0].mxu0
        %7110 = vmatprep.mubr.f32.mxu0 0.0
        %7111 = vmatmul.mubr.f32.gmra.mrb[0].mxu0 %v7021
        %v7112 = vpop.f32.mrb[0].mxu0
        %v7113 = vadd.f32 0.0, %v7112
        %v7114 = vpop.f32.mrb[0].mxu0
        %7115 = vmatprep.mubr.f32.mxu0 0.0
        %7116 = vmatmul.mubr.f32.gmra.mrb[0].mxu0 %v7024
        %v7117 = vpop.f32.mrb[0].mxu0
        %v7118 = vadd.f32 0.0, %v7117
        %v7119 = vpop.f32.mrb[0].mxu0
        %7120 = vmatprep.mubr.f32.mxu0 0.0
        %7121 = vmatmul.mubr.f32.gmra.mrb[0].mxu0 %v7027
        %v7122 = vpop.f32.mrb[0].mxu0
        %v7123 = vadd.f32 0.0, %v7122
        %v7124 = vpop.f32.mrb[0].mxu0
        %7125 = vmatprep.mubr.f32.mxu0 0.0
        %7126 = vmatmul.mubr.f32.gmra.mrb[0].mxu0 %v7030
        %v7127 = vpop.f32.mrb[0].mxu0
        %v7128 = vadd.f32 0.0, %v7127
        %v7129 = vpop.f32.mrb[0].mxu0
        %7130 = vmatprep.mubr.f32.mxu0 0.0
        %7131 = vmatmul.mubr.f32.gmra.mrb[0].mxu0 %v7033
        %v7132 = vpop.f32.mrb[0].mxu0
        %v7133 = vadd.f32 0.0, %v7132
        %v7134 = vpop.f32.mrb[0].mxu0
        %7135 = vmatprep.mubr.f32.mxu0 0.0
        %7136 = vmatmul.mubr.f32.gmra.mrb[0].mxu0 %v7036
        %v7137 = vpop.f32.mrb[0].mxu0
        %v7138 = vadd.f32 0.0, %v7137
        %v7139 = vpop.f32.mrb[0].mxu0
        %7140 = vmatprep.mubr.f32.mxu0 0.0
        %7141 = vmatmul.mubr.f32.gmra.mrb[0].mxu0 %v7039
        %v7142 = vpop.f32.mrb[0].mxu0
        %v7143 = vadd.f32 0.0, %v7142
        %v7144 = vpop.f32.mrb[0].mxu0
        %7145 = vdwg.mxu0
        %v7146 = vadd.f32 %v6992, %v7108
        %v7147 = vadd.f32 %v6993, %v7113
        %v7148 = vadd.f32 %v6994, %v7118
        %v7149 = vadd.f32 %v6995, %v7123
        %v7150 = vadd.f32 %v6996, %v7128
        %v7151 = vadd.f32 %v6997, %v7133
        %v7152 = vadd.f32 %v6998, %v7138
        %v7153 = vadd.f32 %v6999, %v7143
        %v7154 = vld [vmem:[#allocation7 + $0xb] sm:$0xff]
        %v7155 = vld [vmem:[#allocation7 + $0x13] sm:$0xff]
        %v7156 = vld [vmem:[#allocation7 + $0x1b] sm:$0xff]
        %v7157 = vld [vmem:[#allocation7 + $0x23] sm:$0xff]
        %v7158 = vld [vmem:[#allocation7 + $0x2b] sm:$0xff]
        %v7159 = vld [vmem:[#allocation7 + $0x33] sm:$0xff]
        %v7160 = vld [vmem:[#allocation7 + $0x3b] sm:$0xff]
        %v7161 = vld [vmem:[#allocation7 + $0x43] sm:$0x1f]
        %s7162 = scalar_lea.vmem %s13, 320
        %v7163 = vld [vmem:[%s7162] sm:$0xff]
        %v7164 = vld [vmem:[%s7162 + $0x8] sm:$0xff]
        %v7165 = vld [vmem:[%s7162 + $0x10] sm:$0xff]
        %v7166 = vld [vmem:[%s7162 + $0x18] sm:$0xff]
        %v7167 = vld [vmem:[%s7162 + $0x20] sm:$0xff]
        %v7168 = vld [vmem:[%s7162 + $0x28] sm:$0xff]
        %v7169 = vld [vmem:[%s7162 + $0x30] sm:$0xff]
        %v7170 = vld [vmem:[%s7162 + $0x38] sm:$0xff]
        %v7172 = vsel %vm586, %v7154, 0
        %v7175 = vsel %vm586, %v7155, 0
        %v7178 = vsel %vm586, %v7156, 0
        %v7181 = vsel %vm586, %v7157, 0
        %v7184 = vsel %vm586, %v7158, 0
        %v7187 = vsel %vm586, %v7159, 0
        %v7190 = vsel %vm586, %v7160, 0
        %v7193 = vsel %vm586, %v7161, 0
        %7195 = vmatprep.subr.mxu0 0.0
        %7196 = vmatpush1.msra.mxu0 %v7163
        %7197 = vmatprep.subr.mxu0 0.0
        %7198 = vmatpush1.msra.mxu0 %v7164
        %7199 = vmatprep.subr.mxu0 0.0
        %7200 = vmatpush1.msra.mxu0 %v7165
        %7201 = vmatprep.subr.mxu0 0.0
        %7202 = vmatpush1.msra.mxu0 %v7166
        %7203 = vmatprep.subr.mxu0 0.0
        %7204 = vmatpush1.msra.mxu0 %v7167
        %7205 = vmatprep.subr.mxu0 0.0
        %7206 = vmatpush1.msra.mxu0 %v7168
        %7207 = vmatprep.subr.mxu0 0.0
        %7208 = vmatpush1.msra.mxu0 %v7169
        %7209 = vmatprep.subr.mxu0 0.0
        %7210 = vmatpush1.msra.mxu0 %v7170
        %7211 = vmatprep.subr.mxu0 0.0
        %7212 = vmatpush1.msra.mxu0 0.0
        %7213 = vmatprep.subr.mxu0 0.0
        %7214 = vmatpush1.msra.mxu0 0.0
        %7215 = vmatprep.subr.mxu0 0.0
        %7216 = vmatpush1.msra.mxu0 0.0
        %7217 = vmatprep.subr.mxu0 0.0
        %7218 = vmatpush1.msra.mxu0 0.0
        %7219 = vmatprep.subr.mxu0 0.0
        %7220 = vmatpush1.msra.mxu0 0.0
        %7221 = vmatprep.subr.mxu0 0.0
        %7222 = vmatpush1.msra.mxu0 0.0
        %7223 = vmatprep.subr.mxu0 0.0
        %7224 = vmatpush1.msra.mxu0 0.0
        %7225 = vmatprep.subr.mxu0 0.0
        %7226 = vmatpush1.msra.mxu0 0.0
        %7227 = vmatprep.subr.mxu0 0.0
        %7228 = vmatpush1.msra.mxu0 0.0
        %7229 = vmatprep.subr.mxu0 0.0
        %7230 = vmatpush1.msra.mxu0 0.0
        %7231 = vmatprep.subr.mxu0 0.0
        %7232 = vmatpush1.msra.mxu0 0.0
        %7233 = vmatprep.subr.mxu0 0.0
        %7234 = vmatpush1.msra.mxu0 0.0
        %7235 = vmatprep.subr.mxu0 0.0
        %7236 = vmatpush1.msra.mxu0 0.0
        %7237 = vmatprep.subr.mxu0 0.0
        %7238 = vmatpush1.msra.mxu0 0.0
        %7239 = vmatprep.subr.mxu0 0.0
        %7240 = vmatpush1.msra.mxu0 0.0
        %7241 = vmatprep.subr.mxu0 0.0
        %7242 = vmatpush1.msra.mxu0 0.0
        %7243 = vmatprep.subr.mxu0 0.0
        %7244 = vmatpush1.msra.mxu0 0.0
        %7245 = vmatprep.subr.mxu0 0.0
        %7246 = vmatpush1.msra.mxu0 0.0
        %7247 = vmatprep.subr.mxu0 0.0
        %7248 = vmatpush1.msra.mxu0 0.0
        %7249 = vmatprep.subr.mxu0 0.0
        %7250 = vmatpush1.msra.mxu0 0.0
        %7251 = vmatprep.subr.mxu0 0.0
        %7252 = vmatpush1.msra.mxu0 0.0
        %7253 = vmatprep.subr.mxu0 0.0
        %7254 = vmatpush1.msra.mxu0 0.0
        %7255 = vmatprep.subr.mxu0 0.0
        %7256 = vmatpush1.msra.mxu0 0.0
        %7257 = vmatprep.subr.mxu0 0.0
        %7258 = vmatpush1.msra.mxu0 0.0
        %7259 = vmatprep.mubr.f32.mxu0 0.0
        %7260 = vmatmul.mubr.f32.gmra.mrb[0].mxu0 %v7172
        %v7261 = vpop.f32.mrb[0].mxu0
        %v7262 = vadd.f32 0.0, %v7261
        %v7263 = vpop.f32.mrb[0].mxu0
        %7264 = vmatprep.mubr.f32.mxu0 0.0
        %7265 = vmatmul.mubr.f32.gmra.mrb[0].mxu0 %v7175
        %v7266 = vpop.f32.mrb[0].mxu0
        %v7267 = vadd.f32 0.0, %v7266
        %v7268 = vpop.f32.mrb[0].mxu0
        %7269 = vmatprep.mubr.f32.mxu0 0.0
        %7270 = vmatmul.mubr.f32.gmra.mrb[0].mxu0 %v7178
        %v7271 = vpop.f32.mrb[0].mxu0
        %v7272 = vadd.f32 0.0, %v7271
        %v7273 = vpop.f32.mrb[0].mxu0
        %7274 = vmatprep.mubr.f32.mxu0 0.0
        %7275 = vmatmul.mubr.f32.gmra.mrb[0].mxu0 %v7181
        %v7276 = vpop.f32.mrb[0].mxu0
        %v7277 = vadd.f32 0.0, %v7276
        %v7278 = vpop.f32.mrb[0].mxu0
        %7279 = vmatprep.mubr.f32.mxu0 0.0
        %7280 = vmatmul.mubr.f32.gmra.mrb[0].mxu0 %v7184
        %v7281 = vpop.f32.mrb[0].mxu0
        %v7282 = vadd.f32 0.0, %v7281
        %v7283 = vpop.f32.mrb[0].mxu0
        %7284 = vmatprep.mubr.f32.mxu0 0.0
        %7285 = vmatmul.mubr.f32.gmra.mrb[0].mxu0 %v7187
        %v7286 = vpop.f32.mrb[0].mxu0
        %v7287 = vadd.f32 0.0, %v7286
        %v7288 = vpop.f32.mrb[0].mxu0
        %7289 = vmatprep.mubr.f32.mxu0 0.0
        %7290 = vmatmul.mubr.f32.gmra.mrb[0].mxu0 %v7190
        %v7291 = vpop.f32.mrb[0].mxu0
        %v7292 = vadd.f32 0.0, %v7291
        %v7293 = vpop.f32.mrb[0].mxu0
        %7294 = vmatprep.mubr.f32.mxu0 0.0
        %7295 = vmatmul.mubr.f32.gmra.mrb[0].mxu0 %v7193
        %v7296 = vpop.f32.mrb[0].mxu0
        %v7297 = vadd.f32 0.0, %v7296
        %v7298 = vpop.f32.mrb[0].mxu0
        %7299 = vdwg.mxu0
        %v7300 = vadd.f32 %v7146, %v7262
        %v7301 = vadd.f32 %v7147, %v7267
        %v7302 = vadd.f32 %v7148, %v7272
        %v7303 = vadd.f32 %v7149, %v7277
        %v7304 = vadd.f32 %v7150, %v7282
        %v7305 = vadd.f32 %v7151, %v7287
        %v7306 = vadd.f32 %v7152, %v7292
        %v7307 = vadd.f32 %v7153, %v7297
        %v7308 = vld [vmem:[#allocation7 + $0x12] sm:$0xff]
        %v7309 = vld [vmem:[#allocation7 + $0x1a] sm:$0xff]
        %v7310 = vld [vmem:[#allocation7 + $0x22] sm:$0xff]
        %v7311 = vld [vmem:[#allocation7 + $0x2a] sm:$0xff]
        %v7312 = vld [vmem:[#allocation7 + $0x32] sm:$0xff]
        %v7313 = vld [vmem:[#allocation7 + $0x3a] sm:$0xff]
        %v7314 = vld [vmem:[#allocation7 + $0x42] sm:$0xff]
        %v7315 = vld [vmem:[#allocation7 + $0x4a] sm:$0x1f]
        %s7316 = scalar_lea.vmem %s13, 384
        %v7317 = vld [vmem:[%s7316] sm:$0xff]
        %v7318 = vld [vmem:[%s7316 + $0x8] sm:$0xff]
        %v7319 = vld [vmem:[%s7316 + $0x10] sm:$0xff]
        %v7320 = vld [vmem:[%s7316 + $0x18] sm:$0xff]
        %v7321 = vld [vmem:[%s7316 + $0x20] sm:$0xff]
        %v7322 = vld [vmem:[%s7316 + $0x28] sm:$0xff]
        %v7323 = vld [vmem:[%s7316 + $0x30] sm:$0xff]
        %v7324 = vld [vmem:[%s7316 + $0x38] sm:$0xff]
        %v7326 = vsel %vm586, %v7308, 0
        %v7329 = vsel %vm586, %v7309, 0
        %v7332 = vsel %vm586, %v7310, 0
        %v7335 = vsel %vm586, %v7311, 0
        %v7338 = vsel %vm586, %v7312, 0
        %v7341 = vsel %vm586, %v7313, 0
        %v7344 = vsel %vm586, %v7314, 0
        %v7347 = vsel %vm586, %v7315, 0
        %7349 = vmatprep.subr.mxu0 0.0
        %7350 = vmatpush1.msra.mxu0 %v7317
        %7351 = vmatprep.subr.mxu0 0.0
        %7352 = vmatpush1.msra.mxu0 %v7318
        %7353 = vmatprep.subr.mxu0 0.0
        %7354 = vmatpush1.msra.mxu0 %v7319
        %7355 = vmatprep.subr.mxu0 0.0
        %7356 = vmatpush1.msra.mxu0 %v7320
        %7357 = vmatprep.subr.mxu0 0.0
        %7358 = vmatpush1.msra.mxu0 %v7321
        %7359 = vmatprep.subr.mxu0 0.0
        %7360 = vmatpush1.msra.mxu0 %v7322
        %7361 = vmatprep.subr.mxu0 0.0
        %7362 = vmatpush1.msra.mxu0 %v7323
        %7363 = vmatprep.subr.mxu0 0.0
        %7364 = vmatpush1.msra.mxu0 %v7324
        %7365 = vmatprep.subr.mxu0 0.0
        %7366 = vmatpush1.msra.mxu0 0.0
        %7367 = vmatprep.subr.mxu0 0.0
        %7368 = vmatpush1.msra.mxu0 0.0
        %7369 = vmatprep.subr.mxu0 0.0
        %7370 = vmatpush1.msra.mxu0 0.0
        %7371 = vmatprep.subr.mxu0 0.0
        %7372 = vmatpush1.msra.mxu0 0.0
        %7373 = vmatprep.subr.mxu0 0.0
        %7374 = vmatpush1.msra.mxu0 0.0
        %7375 = vmatprep.subr.mxu0 0.0
        %7376 = vmatpush1.msra.mxu0 0.0
        %7377 = vmatprep.subr.mxu0 0.0
        %7378 = vmatpush1.msra.mxu0 0.0
        %7379 = vmatprep.subr.mxu0 0.0
        %7380 = vmatpush1.msra.mxu0 0.0
        %7381 = vmatprep.subr.mxu0 0.0
        %7382 = vmatpush1.msra.mxu0 0.0
        %7383 = vmatprep.subr.mxu0 0.0
        %7384 = vmatpush1.msra.mxu0 0.0
        %7385 = vmatprep.subr.mxu0 0.0
        %7386 = vmatpush1.msra.mxu0 0.0
        %7387 = vmatprep.subr.mxu0 0.0
        %7388 = vmatpush1.msra.mxu0 0.0
        %7389 = vmatprep.subr.mxu0 0.0
        %7390 = vmatpush1.msra.mxu0 0.0
        %7391 = vmatprep.subr.mxu0 0.0
        %7392 = vmatpush1.msra.mxu0 0.0
        %7393 = vmatprep.subr.mxu0 0.0
        %7394 = vmatpush1.msra.mxu0 0.0
        %7395 = vmatprep.subr.mxu0 0.0
        %7396 = vmatpush1.msra.mxu0 0.0
        %7397 = vmatprep.subr.mxu0 0.0
        %7398 = vmatpush1.msra.mxu0 0.0
        %7399 = vmatprep.subr.mxu0 0.0
        %7400 = vmatpush1.msra.mxu0 0.0
        %7401 = vmatprep.subr.mxu0 0.0
        %7402 = vmatpush1.msra.mxu0 0.0
        %7403 = vmatprep.subr.mxu0 0.0
        %7404 = vmatpush1.msra.mxu0 0.0
        %7405 = vmatprep.subr.mxu0 0.0
        %7406 = vmatpush1.msra.mxu0 0.0
        %7407 = vmatprep.subr.mxu0 0.0
        %7408 = vmatpush1.msra.mxu0 0.0
        %7409 = vmatprep.subr.mxu0 0.0
        %7410 = vmatpush1.msra.mxu0 0.0
        %7411 = vmatprep.subr.mxu0 0.0
        %7412 = vmatpush1.msra.mxu0 0.0
        %7413 = vmatprep.mubr.f32.mxu0 0.0
        %7414 = vmatmul.mubr.f32.gmra.mrb[0].mxu0 %v7326
        %v7415 = vpop.f32.mrb[0].mxu0
        %v7416 = vadd.f32 0.0, %v7415
        %v7417 = vpop.f32.mrb[0].mxu0
        %7418 = vmatprep.mubr.f32.mxu0 0.0
        %7419 = vmatmul.mubr.f32.gmra.mrb[0].mxu0 %v7329
        %v7420 = vpop.f32.mrb[0].mxu0
        %v7421 = vadd.f32 0.0, %v7420
        %v7422 = vpop.f32.mrb[0].mxu0
        %7423 = vmatprep.mubr.f32.mxu0 0.0
        %7424 = vmatmul.mubr.f32.gmra.mrb[0].mxu0 %v7332
        %v7425 = vpop.f32.mrb[0].mxu0
        %v7426 = vadd.f32 0.0, %v7425
        %v7427 = vpop.f32.mrb[0].mxu0
        %7428 = vmatprep.mubr.f32.mxu0 0.0
        %7429 = vmatmul.mubr.f32.gmra.mrb[0].mxu0 %v7335
        %v7430 = vpop.f32.mrb[0].mxu0
        %v7431 = vadd.f32 0.0, %v7430
        %v7432 = vpop.f32.mrb[0].mxu0
        %7433 = vmatprep.mubr.f32.mxu0 0.0
        %7434 = vmatmul.mubr.f32.gmra.mrb[0].mxu0 %v7338
        %v7435 = vpop.f32.mrb[0].mxu0
        %v7436 = vadd.f32 0.0, %v7435
        %v7437 = vpop.f32.mrb[0].mxu0
        %7438 = vmatprep.mubr.f32.mxu0 0.0
        %7439 = vmatmul.mubr.f32.gmra.mrb[0].mxu0 %v7341
        %v7440 = vpop.f32.mrb[0].mxu0
        %v7441 = vadd.f32 0.0, %v7440
        %v7442 = vpop.f32.mrb[0].mxu0
        %7443 = vmatprep.mubr.f32.mxu0 0.0
        %7444 = vmatmul.mubr.f32.gmra.mrb[0].mxu0 %v7344
        %v7445 = vpop.f32.mrb[0].mxu0
        %v7446 = vadd.f32 0.0, %v7445
        %v7447 = vpop.f32.mrb[0].mxu0
        %7448 = vmatprep.mubr.f32.mxu0 0.0
        %7449 = vmatmul.mubr.f32.gmra.mrb[0].mxu0 %v7347
        %v7450 = vpop.f32.mrb[0].mxu0
        %v7451 = vadd.f32 0.0, %v7450
        %v7452 = vpop.f32.mrb[0].mxu0
        %7453 = vdwg.mxu0
        %v7454 = vadd.f32 %v7300, %v7416
        %v7455 = vadd.f32 %v7301, %v7421
        %v7456 = vadd.f32 %v7302, %v7426
        %v7457 = vadd.f32 %v7303, %v7431
        %v7458 = vadd.f32 %v7304, %v7436
        %v7459 = vadd.f32 %v7305, %v7441
        %v7460 = vadd.f32 %v7306, %v7446
        %v7461 = vadd.f32 %v7307, %v7451
        %v7462 = vld [vmem:[#allocation7 + $0x13] sm:$0xff]
        %v7463 = vld [vmem:[#allocation7 + $0x1b] sm:$0xff]
        %v7464 = vld [vmem:[#allocation7 + $0x23] sm:$0xff]
        %v7465 = vld [vmem:[#allocation7 + $0x2b] sm:$0xff]
        %v7466 = vld [vmem:[#allocation7 + $0x33] sm:$0xff]
        %v7467 = vld [vmem:[#allocation7 + $0x3b] sm:$0xff]
        %v7468 = vld [vmem:[#allocation7 + $0x43] sm:$0xff]
        %v7469 = vld [vmem:[#allocation7 + $0x4b] sm:$0x1f]
        %s7470 = scalar_lea.vmem %s13, 448
        %v7471 = vld [vmem:[%s7470] sm:$0xff]
        %v7472 = vld [vmem:[%s7470 + $0x8] sm:$0xff]
        %v7473 = vld [vmem:[%s7470 + $0x10] sm:$0xff]
        %v7474 = vld [vmem:[%s7470 + $0x18] sm:$0xff]
        %v7475 = vld [vmem:[%s7470 + $0x20] sm:$0xff]
        %v7476 = vld [vmem:[%s7470 + $0x28] sm:$0xff]
        %v7477 = vld [vmem:[%s7470 + $0x30] sm:$0xff]
        %v7478 = vld [vmem:[%s7470 + $0x38] sm:$0xff]
        %v7480 = vsel %vm586, %v7462, 0
        %v7483 = vsel %vm586, %v7463, 0
        %v7486 = vsel %vm586, %v7464, 0
        %v7489 = vsel %vm586, %v7465, 0
        %v7492 = vsel %vm586, %v7466, 0
        %v7495 = vsel %vm586, %v7467, 0
        %v7498 = vsel %vm586, %v7468, 0
        %v7501 = vsel %vm586, %v7469, 0
        %7503 = vmatprep.subr.mxu0 0.0
        %7504 = vmatpush1.msra.mxu0 %v7471
        %7505 = vmatprep.subr.mxu0 0.0
        %7506 = vmatpush1.msra.mxu0 %v7472
        %7507 = vmatprep.subr.mxu0 0.0
        %7508 = vmatpush1.msra.mxu0 %v7473
        %7509 = vmatprep.subr.mxu0 0.0
        %7510 = vmatpush1.msra.mxu0 %v7474
        %7511 = vmatprep.subr.mxu0 0.0
        %7512 = vmatpush1.msra.mxu0 %v7475
        %7513 = vmatprep.subr.mxu0 0.0
        %7514 = vmatpush1.msra.mxu0 %v7476
        %7515 = vmatprep.subr.mxu0 0.0
        %7516 = vmatpush1.msra.mxu0 %v7477
        %7517 = vmatprep.subr.mxu0 0.0
        %7518 = vmatpush1.msra.mxu0 %v7478
        %7519 = vmatprep.subr.mxu0 0.0
        %7520 = vmatpush1.msra.mxu0 0.0
        %7521 = vmatprep.subr.mxu0 0.0
        %7522 = vmatpush1.msra.mxu0 0.0
        %7523 = vmatprep.subr.mxu0 0.0
        %7524 = vmatpush1.msra.mxu0 0.0
        %7525 = vmatprep.subr.mxu0 0.0
        %7526 = vmatpush1.msra.mxu0 0.0
        %7527 = vmatprep.subr.mxu0 0.0
        %7528 = vmatpush1.msra.mxu0 0.0
        %7529 = vmatprep.subr.mxu0 0.0
        %7530 = vmatpush1.msra.mxu0 0.0
        %7531 = vmatprep.subr.mxu0 0.0
        %7532 = vmatpush1.msra.mxu0 0.0
        %7533 = vmatprep.subr.mxu0 0.0
        %7534 = vmatpush1.msra.mxu0 0.0
        %7535 = vmatprep.subr.mxu0 0.0
        %7536 = vmatpush1.msra.mxu0 0.0
        %7537 = vmatprep.subr.mxu0 0.0
        %7538 = vmatpush1.msra.mxu0 0.0
        %7539 = vmatprep.subr.mxu0 0.0
        %7540 = vmatpush1.msra.mxu0 0.0
        %7541 = vmatprep.subr.mxu0 0.0
        %7542 = vmatpush1.msra.mxu0 0.0
        %7543 = vmatprep.subr.mxu0 0.0
        %7544 = vmatpush1.msra.mxu0 0.0
        %7545 = vmatprep.subr.mxu0 0.0
        %7546 = vmatpush1.msra.mxu0 0.0
        %7547 = vmatprep.subr.mxu0 0.0
        %7548 = vmatpush1.msra.mxu0 0.0
        %7549 = vmatprep.subr.mxu0 0.0
        %7550 = vmatpush1.msra.mxu0 0.0
        %7551 = vmatprep.subr.mxu0 0.0
        %7552 = vmatpush1.msra.mxu0 0.0
        %7553 = vmatprep.subr.mxu0 0.0
        %7554 = vmatpush1.msra.mxu0 0.0
        %7555 = vmatprep.subr.mxu0 0.0
        %7556 = vmatpush1.msra.mxu0 0.0
        %7557 = vmatprep.subr.mxu0 0.0
        %7558 = vmatpush1.msra.mxu0 0.0
        %7559 = vmatprep.subr.mxu0 0.0
        %7560 = vmatpush1.msra.mxu0 0.0
        %7561 = vmatprep.subr.mxu0 0.0
        %7562 = vmatpush1.msra.mxu0 0.0
        %7563 = vmatprep.subr.mxu0 0.0
        %7564 = vmatpush1.msra.mxu0 0.0
        %7565 = vmatprep.subr.mxu0 0.0
        %7566 = vmatpush1.msra.mxu0 0.0
        %7567 = vmatprep.mubr.f32.mxu0 0.0
        %7568 = vmatmul.mubr.f32.gmra.mrb[0].mxu0 %v7480
        %v7569 = vpop.f32.mrb[0].mxu0
        %v7570 = vadd.f32 0.0, %v7569
        %v7571 = vpop.f32.mrb[0].mxu0
        %7572 = vmatprep.mubr.f32.mxu0 0.0
        %7573 = vmatmul.mubr.f32.gmra.mrb[0].mxu0 %v7483
        %v7574 = vpop.f32.mrb[0].mxu0
        %v7575 = vadd.f32 0.0, %v7574
        %v7576 = vpop.f32.mrb[0].mxu0
        %7577 = vmatprep.mubr.f32.mxu0 0.0
        %7578 = vmatmul.mubr.f32.gmra.mrb[0].mxu0 %v7486
        %v7579 = vpop.f32.mrb[0].mxu0
        %v7580 = vadd.f32 0.0, %v7579
        %v7581 = vpop.f32.mrb[0].mxu0
        %7582 = vmatprep.mubr.f32.mxu0 0.0
        %7583 = vmatmul.mubr.f32.gmra.mrb[0].mxu0 %v7489
        %v7584 = vpop.f32.mrb[0].mxu0
        %v7585 = vadd.f32 0.0, %v7584
        %v7586 = vpop.f32.mrb[0].mxu0
        %7587 = vmatprep.mubr.f32.mxu0 0.0
        %7588 = vmatmul.mubr.f32.gmra.mrb[0].mxu0 %v7492
        %v7589 = vpop.f32.mrb[0].mxu0
        %v7590 = vadd.f32 0.0, %v7589
        %v7591 = vpop.f32.mrb[0].mxu0
        %7592 = vmatprep.mubr.f32.mxu0 0.0
        %7593 = vmatmul.mubr.f32.gmra.mrb[0].mxu0 %v7495
        %v7594 = vpop.f32.mrb[0].mxu0
        %v7595 = vadd.f32 0.0, %v7594
        %v7596 = vpop.f32.mrb[0].mxu0
        %7597 = vmatprep.mubr.f32.mxu0 0.0
        %7598 = vmatmul.mubr.f32.gmra.mrb[0].mxu0 %v7498
        %v7599 = vpop.f32.mrb[0].mxu0
        %v7600 = vadd.f32 0.0, %v7599
        %v7601 = vpop.f32.mrb[0].mxu0
        %7602 = vmatprep.mubr.f32.mxu0 0.0
        %7603 = vmatmul.mubr.f32.gmra.mrb[0].mxu0 %v7501
        %v7604 = vpop.f32.mrb[0].mxu0
        %v7605 = vadd.f32 0.0, %v7604
        %v7606 = vpop.f32.mrb[0].mxu0
        %7607 = vdwg.mxu0
        %v7608 = vadd.f32 %v7454, %v7570
        %v7609 = vadd.f32 %v7455, %v7575
        %v7610 = vadd.f32 %v7456, %v7580
        %v7611 = vadd.f32 %v7457, %v7585
        %v7612 = vadd.f32 %v7458, %v7590
        %v7613 = vadd.f32 %v7459, %v7595
        %v7614 = vadd.f32 %v7460, %v7600
        %v7615 = vadd.f32 %v7461, %v7605
        %v7616 = vld [vmem:[#allocation7 + $0x14] sm:$0xff]
        %v7617 = vld [vmem:[#allocation7 + $0x1c] sm:$0xff]
        %v7618 = vld [vmem:[#allocation7 + $0x24] sm:$0xff]
        %v7619 = vld [vmem:[#allocation7 + $0x2c] sm:$0xff]
        %v7620 = vld [vmem:[#allocation7 + $0x34] sm:$0xff]
        %v7621 = vld [vmem:[#allocation7 + $0x3c] sm:$0xff]
        %v7622 = vld [vmem:[#allocation7 + $0x44] sm:$0xff]
        %v7623 = vld [vmem:[#allocation7 + $0x4c] sm:$0x1f]
        %s7624 = scalar_lea.vmem %s13, 512
        %v7625 = vld [vmem:[%s7624] sm:$0xff]
        %v7626 = vld [vmem:[%s7624 + $0x8] sm:$0xff]
        %v7627 = vld [vmem:[%s7624 + $0x10] sm:$0xff]
        %v7628 = vld [vmem:[%s7624 + $0x18] sm:$0xff]
        %v7629 = vld [vmem:[%s7624 + $0x20] sm:$0xff]
        %v7630 = vld [vmem:[%s7624 + $0x28] sm:$0xff]
        %v7631 = vld [vmem:[%s7624 + $0x30] sm:$0xff]
        %v7632 = vld [vmem:[%s7624 + $0x38] sm:$0xff]
        %v7634 = vsel %vm586, %v7616, 0
        %v7637 = vsel %vm586, %v7617, 0
        %v7640 = vsel %vm586, %v7618, 0
        %v7643 = vsel %vm586, %v7619, 0
        %v7646 = vsel %vm586, %v7620, 0
        %v7649 = vsel %vm586, %v7621, 0
        %v7652 = vsel %vm586, %v7622, 0
        %v7655 = vsel %vm586, %v7623, 0
        %7657 = vmatprep.subr.mxu0 0.0
        %7658 = vmatpush1.msra.mxu0 %v7625
        %7659 = vmatprep.subr.mxu0 0.0
        %7660 = vmatpush1.msra.mxu0 %v7626
        %7661 = vmatprep.subr.mxu0 0.0
        %7662 = vmatpush1.msra.mxu0 %v7627
        %7663 = vmatprep.subr.mxu0 0.0
        %7664 = vmatpush1.msra.mxu0 %v7628
        %7665 = vmatprep.subr.mxu0 0.0
        %7666 = vmatpush1.msra.mxu0 %v7629
        %7667 = vmatprep.subr.mxu0 0.0
        %7668 = vmatpush1.msra.mxu0 %v7630
        %7669 = vmatprep.subr.mxu0 0.0
        %7670 = vmatpush1.msra.mxu0 %v7631
        %7671 = vmatprep.subr.mxu0 0.0
        %7672 = vmatpush1.msra.mxu0 %v7632
        %7673 = vmatprep.subr.mxu0 0.0
        %7674 = vmatpush1.msra.mxu0 0.0
        %7675 = vmatprep.subr.mxu0 0.0
        %7676 = vmatpush1.msra.mxu0 0.0
        %7677 = vmatprep.subr.mxu0 0.0
        %7678 = vmatpush1.msra.mxu0 0.0
        %7679 = vmatprep.subr.mxu0 0.0
        %7680 = vmatpush1.msra.mxu0 0.0
        %7681 = vmatprep.subr.mxu0 0.0
        %7682 = vmatpush1.msra.mxu0 0.0
        %7683 = vmatprep.subr.mxu0 0.0
        %7684 = vmatpush1.msra.mxu0 0.0
        %7685 = vmatprep.subr.mxu0 0.0
        %7686 = vmatpush1.msra.mxu0 0.0
        %7687 = vmatprep.subr.mxu0 0.0
        %7688 = vmatpush1.msra.mxu0 0.0
        %7689 = vmatprep.subr.mxu0 0.0
        %7690 = vmatpush1.msra.mxu0 0.0
        %7691 = vmatprep.subr.mxu0 0.0
        %7692 = vmatpush1.msra.mxu0 0.0
        %7693 = vmatprep.subr.mxu0 0.0
        %7694 = vmatpush1.msra.mxu0 0.0
        %7695 = vmatprep.subr.mxu0 0.0
        %7696 = vmatpush1.msra.mxu0 0.0
        %7697 = vmatprep.subr.mxu0 0.0
        %7698 = vmatpush1.msra.mxu0 0.0
        %7699 = vmatprep.subr.mxu0 0.0
        %7700 = vmatpush1.msra.mxu0 0.0
        %7701 = vmatprep.subr.mxu0 0.0
        %7702 = vmatpush1.msra.mxu0 0.0
        %7703 = vmatprep.subr.mxu0 0.0
        %7704 = vmatpush1.msra.mxu0 0.0
        %7705 = vmatprep.subr.mxu0 0.0
        %7706 = vmatpush1.msra.mxu0 0.0
        %7707 = vmatprep.subr.mxu0 0.0
        %7708 = vmatpush1.msra.mxu0 0.0
        %7709 = vmatprep.subr.mxu0 0.0
        %7710 = vmatpush1.msra.mxu0 0.0
        %7711 = vmatprep.subr.mxu0 0.0
        %7712 = vmatpush1.msra.mxu0 0.0
        %7713 = vmatprep.subr.mxu0 0.0
        %7714 = vmatpush1.msra.mxu0 0.0
        %7715 = vmatprep.subr.mxu0 0.0
        %7716 = vmatpush1.msra.mxu0 0.0
        %7717 = vmatprep.subr.mxu0 0.0
        %7718 = vmatpush1.msra.mxu0 0.0
        %7719 = vmatprep.subr.mxu0 0.0
        %7720 = vmatpush1.msra.mxu0 0.0
        %7721 = vmatprep.mubr.f32.mxu0 0.0
        %7722 = vmatmul.mubr.f32.gmra.mrb[0].mxu0 %v7634
        %v7723 = vpop.f32.mrb[0].mxu0
        %v7724 = vadd.f32 0.0, %v7723
        %v7725 = vpop.f32.mrb[0].mxu0
        %7726 = vmatprep.mubr.f32.mxu0 0.0
        %7727 = vmatmul.mubr.f32.gmra.mrb[0].mxu0 %v7637
        %v7728 = vpop.f32.mrb[0].mxu0
        %v7729 = vadd.f32 0.0, %v7728
        %v7730 = vpop.f32.mrb[0].mxu0
        %7731 = vmatprep.mubr.f32.mxu0 0.0
        %7732 = vmatmul.mubr.f32.gmra.mrb[0].mxu0 %v7640
        %v7733 = vpop.f32.mrb[0].mxu0
        %v7734 = vadd.f32 0.0, %v7733
        %v7735 = vpop.f32.mrb[0].mxu0
        %7736 = vmatprep.mubr.f32.mxu0 0.0
        %7737 = vmatmul.mubr.f32.gmra.mrb[0].mxu0 %v7643
        %v7738 = vpop.f32.mrb[0].mxu0
        %v7739 = vadd.f32 0.0, %v7738
        %v7740 = vpop.f32.mrb[0].mxu0
        %7741 = vmatprep.mubr.f32.mxu0 0.0
        %7742 = vmatmul.mubr.f32.gmra.mrb[0].mxu0 %v7646
        %v7743 = vpop.f32.mrb[0].mxu0
        %v7744 = vadd.f32 0.0, %v7743
        %v7745 = vpop.f32.mrb[0].mxu0
        %7746 = vmatprep.mubr.f32.mxu0 0.0
        %7747 = vmatmul.mubr.f32.gmra.mrb[0].mxu0 %v7649
        %v7748 = vpop.f32.mrb[0].mxu0
        %v7749 = vadd.f32 0.0, %v7748
        %v7750 = vpop.f32.mrb[0].mxu0
        %7751 = vmatprep.mubr.f32.mxu0 0.0
        %7752 = vmatmul.mubr.f32.gmra.mrb[0].mxu0 %v7652
        %v7753 = vpop.f32.mrb[0].mxu0
        %v7754 = vadd.f32 0.0, %v7753
        %v7755 = vpop.f32.mrb[0].mxu0
        %7756 = vmatprep.mubr.f32.mxu0 0.0
        %7757 = vmatmul.mubr.f32.gmra.mrb[0].mxu0 %v7655
        %v7758 = vpop.f32.mrb[0].mxu0
        %v7759 = vadd.f32 0.0, %v7758
        %v7760 = vpop.f32.mrb[0].mxu0
        %7761 = vdwg.mxu0
        %v7762 = vadd.f32 %v7608, %v7724
        %v7763 = vadd.f32 %v7609, %v7729
        %v7764 = vadd.f32 %v7610, %v7734
        %v7765 = vadd.f32 %v7611, %v7739
        %v7766 = vadd.f32 %v7612, %v7744
        %v7767 = vadd.f32 %v7613, %v7749
        %v7768 = vadd.f32 %v7614, %v7754
        %v7769 = vadd.f32 %v7615, %v7759
        %v7770 = vld [vmem:[%s14] sm:$0x1]
        %v7772 = vlaneseq
        %v7773 = vshrl.u32 %v7772, 7
        %v7774 = vsub.s32 0, %v7773
        %v7775 = vrot.slane %v7770, %v7774
        %v7777 = vadd.f32 %v7762, %v7775
        %v7778 = vadd.f32 %v7763, %v7775
        %v7779 = vadd.f32 %v7764, %v7775
        %v7780 = vadd.f32 %v7765, %v7775
        %v7781 = vadd.f32 %v7766, %v7775
        %v7782 = vadd.f32 %v7767, %v7775
        %v7783 = vadd.f32 %v7768, %v7775
        %v7784 = vadd.f32 %v7769, %v7775
        %v7785 = vmax.f32 %v7777, 0.0
        %v7786 = vmax.f32 %v7778, 0.0
        %v7787 = vmax.f32 %v7779, 0.0
        %v7788 = vmax.f32 %v7780, 0.0
        %v7789 = vmax.f32 %v7781, 0.0
        %v7790 = vmax.f32 %v7782, 0.0
        %v7791 = vmax.f32 %v7783, 0.0
        %v7792 = vmax.f32 %v7784, 0.0
        %7793 = vst.msk [vmem:[#allocation8 + $0xa] sm:$0x7f] %vm1190, %v7785
        %vm7794 = vcmask 261121
        %7795 = vst.msk [vmem:[#allocation8 + $0x12] sm:$0xfe] %vm7794, %v7786
        %vm7796 = vcmask 261122
        %7797 = vst.msk [vmem:[#allocation8 + $0x1a] sm:$0xfc] %vm7796, %v7787
        %7798 = vst.msk [vmem:[#allocation8 + $0x22] sm:$0x1] %vm584, %v7788
        %vm7799 = vcmask 261123
        %7800 = vst.msk [vmem:[#allocation8 + $0x22] sm:$0xf8] %vm7799, %v7788
        %vm7801 = vcmask 254976
        %7802 = vst.msk [vmem:[#allocation8 + $0x2a] sm:$0x3] %vm7801, %v7789
        %vm7803 = vcmask 261124
        %7804 = vst.msk [vmem:[#allocation8 + $0x2a] sm:$0xf0] %vm7803, %v7789
        %vm7805 = vcmask 256000
        %7806 = vst.msk [vmem:[#allocation8 + $0x32] sm:$0x7] %vm7805, %v7790
        %vm7807 = vcmask 261125
        %7808 = vst.msk [vmem:[#allocation8 + $0x32] sm:$0xe0] %vm7807, %v7790
        %vm7809 = vcmask 257024
        %7810 = vst.msk [vmem:[#allocation8 + $0x3a] sm:$0xf] %vm7809, %v7791
        %vm7811 = vcmask 261126
        %7812 = vst.msk [vmem:[#allocation8 + $0x3a] sm:$0xc0] %vm7811, %v7791
        %vm7813 = vcmask 258048
        %7814 = vst.msk [vmem:[#allocation8 + $0x42] sm:$0x1f] %vm7813, %v7792
        %v7815 = vld [vmem:[#allocation8] sm:$0xff]
        %v7816 = vld [vmem:[#allocation8 + $0x8] sm:$0xff]
        %v7817 = vld [vmem:[#allocation8 + $0x10] sm:$0xff]
        %v7818 = vld [vmem:[#allocation8 + $0x18] sm:$0xff]
        %v7819 = vld [vmem:[#allocation8 + $0x20] sm:$0xff]
        %v7820 = vld [vmem:[#allocation8 + $0x28] sm:$0xff]
        %v7821 = vld [vmem:[#allocation8 + $0x30] sm:$0xff]
        %v7822 = vld [vmem:[#allocation8 + $0x38] sm:$0xff]
        %v7823 = vld [vmem:[#allocation8 + $0x40] sm:$0x7f]
        %v7824 = vld [vmem:[%s15] sm:$0xff]
        %v7825 = vld [vmem:[%s15 + $0x8] sm:$0xff]
        %v7826 = vld [vmem:[%s15 + $0x10] sm:$0xff]
        %v7827 = vld [vmem:[%s15 + $0x18] sm:$0xff]
        %v7828 = vld [vmem:[#allocation8 + $0x1] sm:$0xff]
        %v7829 = vld [vmem:[#allocation8 + $0x9] sm:$0xff]
        %v7830 = vld [vmem:[#allocation8 + $0x11] sm:$0xff]
        %v7831 = vld [vmem:[#allocation8 + $0x19] sm:$0xff]
        %v7832 = vld [vmem:[#allocation8 + $0x21] sm:$0xff]
        %v7833 = vld [vmem:[#allocation8 + $0x29] sm:$0xff]
        %v7834 = vld [vmem:[#allocation8 + $0x31] sm:$0xff]
        %v7835 = vld [vmem:[#allocation8 + $0x39] sm:$0xff]
        %v7836 = vld [vmem:[#allocation8 + $0x41] sm:$0x7f]
        %s7837 = scalar_lea.vmem %s15, 32
        %v7838 = vld [vmem:[%s7837] sm:$0xff]
        %v7839 = vld [vmem:[%s7837 + $0x8] sm:$0xff]
        %v7840 = vld [vmem:[%s7837 + $0x10] sm:$0xff]
        %v7841 = vld [vmem:[%s7837 + $0x18] sm:$0xff]
        %v7843 = vsel %vm577, %v7828, 0
        %v7846 = vsel %vm577, %v7829, 0
        %v7849 = vsel %vm577, %v7830, 0
        %v7852 = vsel %vm577, %v7831, 0
        %v7855 = vsel %vm577, %v7832, 0
        %v7858 = vsel %vm577, %v7833, 0
        %v7861 = vsel %vm577, %v7834, 0
        %v7864 = vsel %vm577, %v7835, 0
        %v7867 = vsel %vm577, %v7836, 0
        %7869 = vmatprep.subr.mxu0 0.0
        %7870 = vmatpush1.msra.mxu0 %v7838
        %7871 = vmatprep.subr.mxu0 0.0
        %7872 = vmatpush1.msra.mxu0 %v7839
        %7873 = vmatprep.subr.mxu0 0.0
        %7874 = vmatpush1.msra.mxu0 %v7840
        %7875 = vmatprep.subr.mxu0 0.0
        %7876 = vmatpush1.msra.mxu0 %v7841
        %7877 = vmatprep.subr.mxu0 0.0
        %7878 = vmatpush1.msra.mxu0 0.0
        %7879 = vmatprep.subr.mxu0 0.0
        %7880 = vmatpush1.msra.mxu0 0.0
        %7881 = vmatprep.subr.mxu0 0.0
        %7882 = vmatpush1.msra.mxu0 0.0
        %7883 = vmatprep.subr.mxu0 0.0
        %7884 = vmatpush1.msra.mxu0 0.0
        %7885 = vmatprep.subr.mxu0 0.0
        %7886 = vmatpush1.msra.mxu0 0.0
        %7887 = vmatprep.subr.mxu0 0.0
        %7888 = vmatpush1.msra.mxu0 0.0
        %7889 = vmatprep.subr.mxu0 0.0
        %7890 = vmatpush1.msra.mxu0 0.0
        %7891 = vmatprep.subr.mxu0 0.0
        %7892 = vmatpush1.msra.mxu0 0.0
        %7893 = vmatprep.subr.mxu0 0.0
        %7894 = vmatpush1.msra.mxu0 0.0
        %7895 = vmatprep.subr.mxu0 0.0
        %7896 = vmatpush1.msra.mxu0 0.0
        %7897 = vmatprep.subr.mxu0 0.0
        %7898 = vmatpush1.msra.mxu0 0.0
        %7899 = vmatprep.subr.mxu0 0.0
        %7900 = vmatpush1.msra.mxu0 0.0
        %7901 = vmatprep.subr.mxu0 0.0
        %7902 = vmatpush1.msra.mxu0 0.0
        %7903 = vmatprep.subr.mxu0 0.0
        %7904 = vmatpush1.msra.mxu0 0.0
        %7905 = vmatprep.subr.mxu0 0.0
        %7906 = vmatpush1.msra.mxu0 0.0
        %7907 = vmatprep.subr.mxu0 0.0
        %7908 = vmatpush1.msra.mxu0 0.0
        %7909 = vmatprep.subr.mxu0 0.0
        %7910 = vmatpush1.msra.mxu0 0.0
        %7911 = vmatprep.subr.mxu0 0.0
        %7912 = vmatpush1.msra.mxu0 0.0
        %7913 = vmatprep.subr.mxu0 0.0
        %7914 = vmatpush1.msra.mxu0 0.0
        %7915 = vmatprep.subr.mxu0 0.0
        %7916 = vmatpush1.msra.mxu0 0.0
        %7917 = vmatprep.subr.mxu0 0.0
        %7918 = vmatpush1.msra.mxu0 0.0
        %7919 = vmatprep.subr.mxu0 0.0
        %7920 = vmatpush1.msra.mxu0 0.0
        %7921 = vmatprep.subr.mxu0 0.0
        %7922 = vmatpush1.msra.mxu0 0.0
        %7923 = vmatprep.subr.mxu0 0.0
        %7924 = vmatpush1.msra.mxu0 0.0
        %7925 = vmatprep.subr.mxu0 0.0
        %7926 = vmatpush1.msra.mxu0 0.0
        %7927 = vmatprep.subr.mxu0 0.0
        %7928 = vmatpush1.msra.mxu0 0.0
        %7929 = vmatprep.subr.mxu0 0.0
        %7930 = vmatpush1.msra.mxu0 0.0
        %7931 = vmatprep.subr.mxu0 0.0
        %7932 = vmatpush1.msra.mxu0 0.0
        %7933 = vmatprep.mubr.f32.mxu0 0.0
        %7934 = vmatmul.mubr.f32.gmra.mrb[0].mxu0 %v7843
        %v7935 = vpop.f32.mrb[0].mxu0
        %v7936 = vadd.f32 0.0, %v7935
        %v7937 = vpop.f32.mrb[0].mxu0
        %7938 = vmatprep.mubr.f32.mxu0 0.0
        %7939 = vmatmul.mubr.f32.gmra.mrb[0].mxu0 %v7846
        %v7940 = vpop.f32.mrb[0].mxu0
        %v7941 = vadd.f32 0.0, %v7940
        %v7942 = vpop.f32.mrb[0].mxu0
        %7943 = vmatprep.mubr.f32.mxu0 0.0
        %7944 = vmatmul.mubr.f32.gmra.mrb[0].mxu0 %v7849
        %v7945 = vpop.f32.mrb[0].mxu0
        %v7946 = vadd.f32 0.0, %v7945
        %v7947 = vpop.f32.mrb[0].mxu0
        %7948 = vmatprep.mubr.f32.mxu0 0.0
        %7949 = vmatmul.mubr.f32.gmra.mrb[0].mxu0 %v7852
        %v7950 = vpop.f32.mrb[0].mxu0
        %v7951 = vadd.f32 0.0, %v7950
        %v7952 = vpop.f32.mrb[0].mxu0
        %7953 = vmatprep.mubr.f32.mxu0 0.0
        %7954 = vmatmul.mubr.f32.gmra.mrb[0].mxu0 %v7855
        %v7955 = vpop.f32.mrb[0].mxu0
        %v7956 = vadd.f32 0.0, %v7955
        %v7957 = vpop.f32.mrb[0].mxu0
        %7958 = vmatprep.mubr.f32.mxu0 0.0
        %7959 = vmatmul.mubr.f32.gmra.mrb[0].mxu0 %v7858
        %v7960 = vpop.f32.mrb[0].mxu0
        %v7961 = vadd.f32 0.0, %v7960
        %v7962 = vpop.f32.mrb[0].mxu0
        %7963 = vmatprep.mubr.f32.mxu0 0.0
        %7964 = vmatmul.mubr.f32.gmra.mrb[0].mxu0 %v7861
        %v7965 = vpop.f32.mrb[0].mxu0
        %v7966 = vadd.f32 0.0, %v7965
        %v7967 = vpop.f32.mrb[0].mxu0
        %7968 = vmatprep.mubr.f32.mxu0 0.0
        %7969 = vmatmul.mubr.f32.gmra.mrb[0].mxu0 %v7864
        %v7970 = vpop.f32.mrb[0].mxu0
        %v7971 = vadd.f32 0.0, %v7970
        %v7972 = vpop.f32.mrb[0].mxu0
        %7973 = vmatprep.mubr.f32.mxu0 0.0
        %7974 = vmatmul.mubr.f32.gmra.mrb[0].mxu0 %v7867
        %v7975 = vpop.f32.mrb[0].mxu0
        %v7976 = vadd.f32 0.0, %v7975
        %v7977 = vpop.f32.mrb[0].mxu0
        %7978 = vdwg.mxu0
        %v7980 = vsel %vm577, %v7815, 0
        %v7983 = vsel %vm577, %v7816, 0
        %v7986 = vsel %vm577, %v7817, 0
        %v7989 = vsel %vm577, %v7818, 0
        %v7992 = vsel %vm577, %v7819, 0
        %v7995 = vsel %vm577, %v7820, 0
        %v7998 = vsel %vm577, %v7821, 0
        %v8001 = vsel %vm577, %v7822, 0
        %v8004 = vsel %vm577, %v7823, 0
        %8006 = vmatprep.subr.mxu0 0.0
        %8007 = vmatpush1.msra.mxu0 %v7824
        %8008 = vmatprep.subr.mxu0 0.0
        %8009 = vmatpush1.msra.mxu0 %v7825
        %8010 = vmatprep.subr.mxu0 0.0
        %8011 = vmatpush1.msra.mxu0 %v7826
        %8012 = vmatprep.subr.mxu0 0.0
        %8013 = vmatpush1.msra.mxu0 %v7827
        %8014 = vmatprep.subr.mxu0 0.0
        %8015 = vmatpush1.msra.mxu0 0.0
        %8016 = vmatprep.subr.mxu0 0.0
        %8017 = vmatpush1.msra.mxu0 0.0
        %8018 = vmatprep.subr.mxu0 0.0
        %8019 = vmatpush1.msra.mxu0 0.0
        %8020 = vmatprep.subr.mxu0 0.0
        %8021 = vmatpush1.msra.mxu0 0.0
        %8022 = vmatprep.subr.mxu0 0.0
        %8023 = vmatpush1.msra.mxu0 0.0
        %8024 = vmatprep.subr.mxu0 0.0
        %8025 = vmatpush1.msra.mxu0 0.0
        %8026 = vmatprep.subr.mxu0 0.0
        %8027 = vmatpush1.msra.mxu0 0.0
        %8028 = vmatprep.subr.mxu0 0.0
        %8029 = vmatpush1.msra.mxu0 0.0
        %8030 = vmatprep.subr.mxu0 0.0
        %8031 = vmatpush1.msra.mxu0 0.0
        %8032 = vmatprep.subr.mxu0 0.0
        %8033 = vmatpush1.msra.mxu0 0.0
        %8034 = vmatprep.subr.mxu0 0.0
        %8035 = vmatpush1.msra.mxu0 0.0
        %8036 = vmatprep.subr.mxu0 0.0
        %8037 = vmatpush1.msra.mxu0 0.0
        %8038 = vmatprep.subr.mxu0 0.0
        %8039 = vmatpush1.msra.mxu0 0.0
        %8040 = vmatprep.subr.mxu0 0.0
        %8041 = vmatpush1.msra.mxu0 0.0
        %8042 = vmatprep.subr.mxu0 0.0
        %8043 = vmatpush1.msra.mxu0 0.0
        %8044 = vmatprep.subr.mxu0 0.0
        %8045 = vmatpush1.msra.mxu0 0.0
        %8046 = vmatprep.subr.mxu0 0.0
        %8047 = vmatpush1.msra.mxu0 0.0
        %8048 = vmatprep.subr.mxu0 0.0
        %8049 = vmatpush1.msra.mxu0 0.0
        %8050 = vmatprep.subr.mxu0 0.0
        %8051 = vmatpush1.msra.mxu0 0.0
        %8052 = vmatprep.subr.mxu0 0.0
        %8053 = vmatpush1.msra.mxu0 0.0
        %8054 = vmatprep.subr.mxu0 0.0
        %8055 = vmatpush1.msra.mxu0 0.0
        %8056 = vmatprep.subr.mxu0 0.0
        %8057 = vmatpush1.msra.mxu0 0.0
        %8058 = vmatprep.subr.mxu0 0.0
        %8059 = vmatpush1.msra.mxu0 0.0
        %8060 = vmatprep.subr.mxu0 0.0
        %8061 = vmatpush1.msra.mxu0 0.0
        %8062 = vmatprep.subr.mxu0 0.0
        %8063 = vmatpush1.msra.mxu0 0.0
        %8064 = vmatprep.subr.mxu0 0.0
        %8065 = vmatpush1.msra.mxu0 0.0
        %8066 = vmatprep.subr.mxu0 0.0
        %8067 = vmatpush1.msra.mxu0 0.0
        %8068 = vmatprep.subr.mxu0 0.0
        %8069 = vmatpush1.msra.mxu0 0.0
        %8070 = vmatprep.mubr.f32.mxu0 0.0
        %8071 = vmatmul.mubr.f32.gmra.mrb[0].mxu0 %v7980
        %v8072 = vpop.f32.mrb[0].mxu0
        %v8073 = vadd.f32 %v7936, %v8072
        %v8074 = vpop.f32.mrb[0].mxu0
        %8075 = vmatprep.mubr.f32.mxu0 0.0
        %8076 = vmatmul.mubr.f32.gmra.mrb[0].mxu0 %v7983
        %v8077 = vpop.f32.mrb[0].mxu0
        %v8078 = vadd.f32 %v7941, %v8077
        %v8079 = vpop.f32.mrb[0].mxu0
        %8080 = vmatprep.mubr.f32.mxu0 0.0
        %8081 = vmatmul.mubr.f32.gmra.mrb[0].mxu0 %v7986
        %v8082 = vpop.f32.mrb[0].mxu0
        %v8083 = vadd.f32 %v7946, %v8082
        %v8084 = vpop.f32.mrb[0].mxu0
        %8085 = vmatprep.mubr.f32.mxu0 0.0
        %8086 = vmatmul.mubr.f32.gmra.mrb[0].mxu0 %v7989
        %v8087 = vpop.f32.mrb[0].mxu0
        %v8088 = vadd.f32 %v7951, %v8087
        %v8089 = vpop.f32.mrb[0].mxu0
        %8090 = vmatprep.mubr.f32.mxu0 0.0
        %8091 = vmatmul.mubr.f32.gmra.mrb[0].mxu0 %v7992
        %v8092 = vpop.f32.mrb[0].mxu0
        %v8093 = vadd.f32 %v7956, %v8092
        %v8094 = vpop.f32.mrb[0].mxu0
        %8095 = vmatprep.mubr.f32.mxu0 0.0
        %8096 = vmatmul.mubr.f32.gmra.mrb[0].mxu0 %v7995
        %v8097 = vpop.f32.mrb[0].mxu0
        %v8098 = vadd.f32 %v7961, %v8097
        %v8099 = vpop.f32.mrb[0].mxu0
        %8100 = vmatprep.mubr.f32.mxu0 0.0
        %8101 = vmatmul.mubr.f32.gmra.mrb[0].mxu0 %v7998
        %v8102 = vpop.f32.mrb[0].mxu0
        %v8103 = vadd.f32 %v7966, %v8102
        %v8104 = vpop.f32.mrb[0].mxu0
        %8105 = vmatprep.mubr.f32.mxu0 0.0
        %8106 = vmatmul.mubr.f32.gmra.mrb[0].mxu0 %v8001
        %v8107 = vpop.f32.mrb[0].mxu0
        %v8108 = vadd.f32 %v7971, %v8107
        %v8109 = vpop.f32.mrb[0].mxu0
        %8110 = vmatprep.mubr.f32.mxu0 0.0
        %8111 = vmatmul.mubr.f32.gmra.mrb[0].mxu0 %v8004
        %v8112 = vpop.f32.mrb[0].mxu0
        %v8113 = vadd.f32 %v7976, %v8112
        %v8114 = vpop.f32.mrb[0].mxu0
        %8115 = vdwg.mxu0
        %v8116 = vld [vmem:[#allocation8 + $0x9] sm:$0xff]
        %v8117 = vld [vmem:[#allocation8 + $0x11] sm:$0xff]
        %v8118 = vld [vmem:[#allocation8 + $0x19] sm:$0xff]
        %v8119 = vld [vmem:[#allocation8 + $0x21] sm:$0xff]
        %v8120 = vld [vmem:[#allocation8 + $0x29] sm:$0xff]
        %v8121 = vld [vmem:[#allocation8 + $0x31] sm:$0xff]
        %v8122 = vld [vmem:[#allocation8 + $0x39] sm:$0xff]
        %v8123 = vld [vmem:[#allocation8 + $0x41] sm:$0xff]
        %v8124 = vld [vmem:[#allocation8 + $0x49] sm:$0x7f]
        %s8125 = scalar_lea.vmem %s15, 64
        %v8126 = vld [vmem:[%s8125] sm:$0xff]
        %v8127 = vld [vmem:[%s8125 + $0x8] sm:$0xff]
        %v8128 = vld [vmem:[%s8125 + $0x10] sm:$0xff]
        %v8129 = vld [vmem:[%s8125 + $0x18] sm:$0xff]
        %v8131 = vsel %vm577, %v8116, 0
        %v8134 = vsel %vm577, %v8117, 0
        %v8137 = vsel %vm577, %v8118, 0
        %v8140 = vsel %vm577, %v8119, 0
        %v8143 = vsel %vm577, %v8120, 0
        %v8146 = vsel %vm577, %v8121, 0
        %v8149 = vsel %vm577, %v8122, 0
        %v8152 = vsel %vm577, %v8123, 0
        %v8155 = vsel %vm577, %v8124, 0
        %8157 = vmatprep.subr.mxu0 0.0
        %8158 = vmatpush1.msra.mxu0 %v8126
        %8159 = vmatprep.subr.mxu0 0.0
        %8160 = vmatpush1.msra.mxu0 %v8127
        %8161 = vmatprep.subr.mxu0 0.0
        %8162 = vmatpush1.msra.mxu0 %v8128
        %8163 = vmatprep.subr.mxu0 0.0
        %8164 = vmatpush1.msra.mxu0 %v8129
        %8165 = vmatprep.subr.mxu0 0.0
        %8166 = vmatpush1.msra.mxu0 0.0
        %8167 = vmatprep.subr.mxu0 0.0
        %8168 = vmatpush1.msra.mxu0 0.0
        %8169 = vmatprep.subr.mxu0 0.0
        %8170 = vmatpush1.msra.mxu0 0.0
        %8171 = vmatprep.subr.mxu0 0.0
        %8172 = vmatpush1.msra.mxu0 0.0
        %8173 = vmatprep.subr.mxu0 0.0
        %8174 = vmatpush1.msra.mxu0 0.0
        %8175 = vmatprep.subr.mxu0 0.0
        %8176 = vmatpush1.msra.mxu0 0.0
        %8177 = vmatprep.subr.mxu0 0.0
        %8178 = vmatpush1.msra.mxu0 0.0
        %8179 = vmatprep.subr.mxu0 0.0
        %8180 = vmatpush1.msra.mxu0 0.0
        %8181 = vmatprep.subr.mxu0 0.0
        %8182 = vmatpush1.msra.mxu0 0.0
        %8183 = vmatprep.subr.mxu0 0.0
        %8184 = vmatpush1.msra.mxu0 0.0
        %8185 = vmatprep.subr.mxu0 0.0
        %8186 = vmatpush1.msra.mxu0 0.0
        %8187 = vmatprep.subr.mxu0 0.0
        %8188 = vmatpush1.msra.mxu0 0.0
        %8189 = vmatprep.subr.mxu0 0.0
        %8190 = vmatpush1.msra.mxu0 0.0
        %8191 = vmatprep.subr.mxu0 0.0
        %8192 = vmatpush1.msra.mxu0 0.0
        %8193 = vmatprep.subr.mxu0 0.0
        %8194 = vmatpush1.msra.mxu0 0.0
        %8195 = vmatprep.subr.mxu0 0.0
        %8196 = vmatpush1.msra.mxu0 0.0
        %8197 = vmatprep.subr.mxu0 0.0
        %8198 = vmatpush1.msra.mxu0 0.0
        %8199 = vmatprep.subr.mxu0 0.0
        %8200 = vmatpush1.msra.mxu0 0.0
        %8201 = vmatprep.subr.mxu0 0.0
        %8202 = vmatpush1.msra.mxu0 0.0
        %8203 = vmatprep.subr.mxu0 0.0
        %8204 = vmatpush1.msra.mxu0 0.0
        %8205 = vmatprep.subr.mxu0 0.0
        %8206 = vmatpush1.msra.mxu0 0.0
        %8207 = vmatprep.subr.mxu0 0.0
        %8208 = vmatpush1.msra.mxu0 0.0
        %8209 = vmatprep.subr.mxu0 0.0
        %8210 = vmatpush1.msra.mxu0 0.0
        %8211 = vmatprep.subr.mxu0 0.0
        %8212 = vmatpush1.msra.mxu0 0.0
        %8213 = vmatprep.subr.mxu0 0.0
        %8214 = vmatpush1.msra.mxu0 0.0
        %8215 = vmatprep.subr.mxu0 0.0
        %8216 = vmatpush1.msra.mxu0 0.0
        %8217 = vmatprep.subr.mxu0 0.0
        %8218 = vmatpush1.msra.mxu0 0.0
        %8219 = vmatprep.subr.mxu0 0.0
        %8220 = vmatpush1.msra.mxu0 0.0
        %8221 = vmatprep.mubr.f32.mxu0 0.0
        %8222 = vmatmul.mubr.f32.gmra.mrb[0].mxu0 %v8131
        %v8223 = vpop.f32.mrb[0].mxu0
        %v8224 = vadd.f32 0.0, %v8223
        %v8225 = vpop.f32.mrb[0].mxu0
        %8226 = vmatprep.mubr.f32.mxu0 0.0
        %8227 = vmatmul.mubr.f32.gmra.mrb[0].mxu0 %v8134
        %v8228 = vpop.f32.mrb[0].mxu0
        %v8229 = vadd.f32 0.0, %v8228
        %v8230 = vpop.f32.mrb[0].mxu0
        %8231 = vmatprep.mubr.f32.mxu0 0.0
        %8232 = vmatmul.mubr.f32.gmra.mrb[0].mxu0 %v8137
        %v8233 = vpop.f32.mrb[0].mxu0
        %v8234 = vadd.f32 0.0, %v8233
        %v8235 = vpop.f32.mrb[0].mxu0
        %8236 = vmatprep.mubr.f32.mxu0 0.0
        %8237 = vmatmul.mubr.f32.gmra.mrb[0].mxu0 %v8140
        %v8238 = vpop.f32.mrb[0].mxu0
        %v8239 = vadd.f32 0.0, %v8238
        %v8240 = vpop.f32.mrb[0].mxu0
        %8241 = vmatprep.mubr.f32.mxu0 0.0
        %8242 = vmatmul.mubr.f32.gmra.mrb[0].mxu0 %v8143
        %v8243 = vpop.f32.mrb[0].mxu0
        %v8244 = vadd.f32 0.0, %v8243
        %v8245 = vpop.f32.mrb[0].mxu0
        %8246 = vmatprep.mubr.f32.mxu0 0.0
        %8247 = vmatmul.mubr.f32.gmra.mrb[0].mxu0 %v8146
        %v8248 = vpop.f32.mrb[0].mxu0
        %v8249 = vadd.f32 0.0, %v8248
        %v8250 = vpop.f32.mrb[0].mxu0
        %8251 = vmatprep.mubr.f32.mxu0 0.0
        %8252 = vmatmul.mubr.f32.gmra.mrb[0].mxu0 %v8149
        %v8253 = vpop.f32.mrb[0].mxu0
        %v8254 = vadd.f32 0.0, %v8253
        %v8255 = vpop.f32.mrb[0].mxu0
        %8256 = vmatprep.mubr.f32.mxu0 0.0
        %8257 = vmatmul.mubr.f32.gmra.mrb[0].mxu0 %v8152
        %v8258 = vpop.f32.mrb[0].mxu0
        %v8259 = vadd.f32 0.0, %v8258
        %v8260 = vpop.f32.mrb[0].mxu0
        %8261 = vmatprep.mubr.f32.mxu0 0.0
        %8262 = vmatmul.mubr.f32.gmra.mrb[0].mxu0 %v8155
        %v8263 = vpop.f32.mrb[0].mxu0
        %v8264 = vadd.f32 0.0, %v8263
        %v8265 = vpop.f32.mrb[0].mxu0
        %8266 = vdwg.mxu0
        %v8267 = vadd.f32 %v8073, %v8224
        %v8268 = vadd.f32 %v8078, %v8229
        %v8269 = vadd.f32 %v8083, %v8234
        %v8270 = vadd.f32 %v8088, %v8239
        %v8271 = vadd.f32 %v8093, %v8244
        %v8272 = vadd.f32 %v8098, %v8249
        %v8273 = vadd.f32 %v8103, %v8254
        %v8274 = vadd.f32 %v8108, %v8259
        %v8275 = vadd.f32 %v8113, %v8264
        %v8276 = vld [vmem:[#allocation8 + $0xa] sm:$0xff]
        %v8277 = vld [vmem:[#allocation8 + $0x12] sm:$0xff]
        %v8278 = vld [vmem:[#allocation8 + $0x1a] sm:$0xff]
        %v8279 = vld [vmem:[#allocation8 + $0x22] sm:$0xff]
        %v8280 = vld [vmem:[#allocation8 + $0x2a] sm:$0xff]
        %v8281 = vld [vmem:[#allocation8 + $0x32] sm:$0xff]
        %v8282 = vld [vmem:[#allocation8 + $0x3a] sm:$0xff]
        %v8283 = vld [vmem:[#allocation8 + $0x42] sm:$0xff]
        %v8284 = vld [vmem:[#allocation8 + $0x4a] sm:$0x7f]
        %s8285 = scalar_lea.vmem %s15, 96
        %v8286 = vld [vmem:[%s8285] sm:$0xff]
        %v8287 = vld [vmem:[%s8285 + $0x8] sm:$0xff]
        %v8288 = vld [vmem:[%s8285 + $0x10] sm:$0xff]
        %v8289 = vld [vmem:[%s8285 + $0x18] sm:$0xff]
        %v8291 = vsel %vm577, %v8276, 0
        %v8294 = vsel %vm577, %v8277, 0
        %v8297 = vsel %vm577, %v8278, 0
        %v8300 = vsel %vm577, %v8279, 0
        %v8303 = vsel %vm577, %v8280, 0
        %v8306 = vsel %vm577, %v8281, 0
        %v8309 = vsel %vm577, %v8282, 0
        %v8312 = vsel %vm577, %v8283, 0
        %v8315 = vsel %vm577, %v8284, 0
        %8317 = vmatprep.subr.mxu0 0.0
        %8318 = vmatpush1.msra.mxu0 %v8286
        %8319 = vmatprep.subr.mxu0 0.0
        %8320 = vmatpush1.msra.mxu0 %v8287
        %8321 = vmatprep.subr.mxu0 0.0
        %8322 = vmatpush1.msra.mxu0 %v8288
        %8323 = vmatprep.subr.mxu0 0.0
        %8324 = vmatpush1.msra.mxu0 %v8289
        %8325 = vmatprep.subr.mxu0 0.0
        %8326 = vmatpush1.msra.mxu0 0.0
        %8327 = vmatprep.subr.mxu0 0.0
        %8328 = vmatpush1.msra.mxu0 0.0
        %8329 = vmatprep.subr.mxu0 0.0
        %8330 = vmatpush1.msra.mxu0 0.0
        %8331 = vmatprep.subr.mxu0 0.0
        %8332 = vmatpush1.msra.mxu0 0.0
        %8333 = vmatprep.subr.mxu0 0.0
        %8334 = vmatpush1.msra.mxu0 0.0
        %8335 = vmatprep.subr.mxu0 0.0
        %8336 = vmatpush1.msra.mxu0 0.0
        %8337 = vmatprep.subr.mxu0 0.0
        %8338 = vmatpush1.msra.mxu0 0.0
        %8339 = vmatprep.subr.mxu0 0.0
        %8340 = vmatpush1.msra.mxu0 0.0
        %8341 = vmatprep.subr.mxu0 0.0
        %8342 = vmatpush1.msra.mxu0 0.0
        %8343 = vmatprep.subr.mxu0 0.0
        %8344 = vmatpush1.msra.mxu0 0.0
        %8345 = vmatprep.subr.mxu0 0.0
        %8346 = vmatpush1.msra.mxu0 0.0
        %8347 = vmatprep.subr.mxu0 0.0
        %8348 = vmatpush1.msra.mxu0 0.0
        %8349 = vmatprep.subr.mxu0 0.0
        %8350 = vmatpush1.msra.mxu0 0.0
        %8351 = vmatprep.subr.mxu0 0.0
        %8352 = vmatpush1.msra.mxu0 0.0
        %8353 = vmatprep.subr.mxu0 0.0
        %8354 = vmatpush1.msra.mxu0 0.0
        %8355 = vmatprep.subr.mxu0 0.0
        %8356 = vmatpush1.msra.mxu0 0.0
        %8357 = vmatprep.subr.mxu0 0.0
        %8358 = vmatpush1.msra.mxu0 0.0
        %8359 = vmatprep.subr.mxu0 0.0
        %8360 = vmatpush1.msra.mxu0 0.0
        %8361 = vmatprep.subr.mxu0 0.0
        %8362 = vmatpush1.msra.mxu0 0.0
        %8363 = vmatprep.subr.mxu0 0.0
        %8364 = vmatpush1.msra.mxu0 0.0
        %8365 = vmatprep.subr.mxu0 0.0
        %8366 = vmatpush1.msra.mxu0 0.0
        %8367 = vmatprep.subr.mxu0 0.0
        %8368 = vmatpush1.msra.mxu0 0.0
        %8369 = vmatprep.subr.mxu0 0.0
        %8370 = vmatpush1.msra.mxu0 0.0
        %8371 = vmatprep.subr.mxu0 0.0
        %8372 = vmatpush1.msra.mxu0 0.0
        %8373 = vmatprep.subr.mxu0 0.0
        %8374 = vmatpush1.msra.mxu0 0.0
        %8375 = vmatprep.subr.mxu0 0.0
        %8376 = vmatpush1.msra.mxu0 0.0
        %8377 = vmatprep.subr.mxu0 0.0
        %8378 = vmatpush1.msra.mxu0 0.0
        %8379 = vmatprep.subr.mxu0 0.0
        %8380 = vmatpush1.msra.mxu0 0.0
        %8381 = vmatprep.mubr.f32.mxu0 0.0
        %8382 = vmatmul.mubr.f32.gmra.mrb[0].mxu0 %v8291
        %v8383 = vpop.f32.mrb[0].mxu0
        %v8384 = vadd.f32 0.0, %v8383
        %v8385 = vpop.f32.mrb[0].mxu0
        %8386 = vmatprep.mubr.f32.mxu0 0.0
        %8387 = vmatmul.mubr.f32.gmra.mrb[0].mxu0 %v8294
        %v8388 = vpop.f32.mrb[0].mxu0
        %v8389 = vadd.f32 0.0, %v8388
        %v8390 = vpop.f32.mrb[0].mxu0
        %8391 = vmatprep.mubr.f32.mxu0 0.0
        %8392 = vmatmul.mubr.f32.gmra.mrb[0].mxu0 %v8297
        %v8393 = vpop.f32.mrb[0].mxu0
        %v8394 = vadd.f32 0.0, %v8393
        %v8395 = vpop.f32.mrb[0].mxu0
        %8396 = vmatprep.mubr.f32.mxu0 0.0
        %8397 = vmatmul.mubr.f32.gmra.mrb[0].mxu0 %v8300
        %v8398 = vpop.f32.mrb[0].mxu0
        %v8399 = vadd.f32 0.0, %v8398
        %v8400 = vpop.f32.mrb[0].mxu0
        %8401 = vmatprep.mubr.f32.mxu0 0.0
        %8402 = vmatmul.mubr.f32.gmra.mrb[0].mxu0 %v8303
        %v8403 = vpop.f32.mrb[0].mxu0
        %v8404 = vadd.f32 0.0, %v8403
        %v8405 = vpop.f32.mrb[0].mxu0
        %8406 = vmatprep.mubr.f32.mxu0 0.0
        %8407 = vmatmul.mubr.f32.gmra.mrb[0].mxu0 %v8306
        %v8408 = vpop.f32.mrb[0].mxu0
        %v8409 = vadd.f32 0.0, %v8408
        %v8410 = vpop.f32.mrb[0].mxu0
        %8411 = vmatprep.mubr.f32.mxu0 0.0
        %8412 = vmatmul.mubr.f32.gmra.mrb[0].mxu0 %v8309
        %v8413 = vpop.f32.mrb[0].mxu0
        %v8414 = vadd.f32 0.0, %v8413
        %v8415 = vpop.f32.mrb[0].mxu0
        %8416 = vmatprep.mubr.f32.mxu0 0.0
        %8417 = vmatmul.mubr.f32.gmra.mrb[0].mxu0 %v8312
        %v8418 = vpop.f32.mrb[0].mxu0
        %v8419 = vadd.f32 0.0, %v8418
        %v8420 = vpop.f32.mrb[0].mxu0
        %8421 = vmatprep.mubr.f32.mxu0 0.0
        %8422 = vmatmul.mubr.f32.gmra.mrb[0].mxu0 %v8315
        %v8423 = vpop.f32.mrb[0].mxu0
        %v8424 = vadd.f32 0.0, %v8423
        %v8425 = vpop.f32.mrb[0].mxu0
        %8426 = vdwg.mxu0
        %v8427 = vadd.f32 %v8267, %v8384
        %v8428 = vadd.f32 %v8268, %v8389
        %v8429 = vadd.f32 %v8269, %v8394
        %v8430 = vadd.f32 %v8270, %v8399
        %v8431 = vadd.f32 %v8271, %v8404
        %v8432 = vadd.f32 %v8272, %v8409
        %v8433 = vadd.f32 %v8273, %v8414
        %v8434 = vadd.f32 %v8274, %v8419
        %v8435 = vadd.f32 %v8275, %v8424
        %v8436 = vld [vmem:[%s16] sm:$0x1]
        %v8438 = vlaneseq
        %v8439 = vshrl.u32 %v8438, 7
        %v8440 = vsub.s32 0, %v8439
        %v8441 = vrot.slane %v8436, %v8440
        %v8443 = vadd.f32 %v8427, %v8441
        %v8444 = vadd.f32 %v8428, %v8441
        %v8445 = vadd.f32 %v8429, %v8441
        %v8446 = vadd.f32 %v8430, %v8441
        %v8447 = vadd.f32 %v8431, %v8441
        %v8448 = vadd.f32 %v8432, %v8441
        %v8449 = vadd.f32 %v8433, %v8441
        %v8450 = vadd.f32 %v8434, %v8441
        %v8451 = vadd.f32 %v8435, %v8441
        %v8452 = vsub.f32 0.0, %v8443
        %v8453 = vsub.f32 0.0, %v8444
        %v8454 = vsub.f32 0.0, %v8445
        %v8455 = vsub.f32 0.0, %v8446
        %v8456 = vsub.f32 0.0, %v8447
        %v8457 = vsub.f32 0.0, %v8448
        %v8458 = vsub.f32 0.0, %v8449
        %v8459 = vsub.f32 0.0, %v8450
        %v8460 = vsub.f32 0.0, %v8451
        %v8461 = vmul.f32 %v8452, 1.442695
        %v8462 = vpow.pop %v8461
        %v8463 = vmul.f32 %v8453, 1.442695
        %v8464 = vpow.pop %v8463
        %v8465 = vmul.f32 %v8454, 1.442695
        %v8466 = vpow.pop %v8465
        %v8467 = vmul.f32 %v8455, 1.442695
        %v8468 = vpow.pop %v8467
        %v8469 = vmul.f32 %v8456, 1.442695
        %v8470 = vpow.pop %v8469
        %v8471 = vmul.f32 %v8457, 1.442695
        %v8472 = vpow.pop %v8471
        %v8473 = vmul.f32 %v8458, 1.442695
        %v8474 = vpow.pop %v8473
        %v8475 = vmul.f32 %v8459, 1.442695
        %v8476 = vpow.pop %v8475
        %v8477 = vmul.f32 %v8460, 1.442695
        %v8478 = vpow.pop %v8477
        %v8479 = vadd.f32 %v8462, 1.0
        %v8480 = vadd.f32 %v8464, 1.0
        %v8481 = vadd.f32 %v8466, 1.0
        %v8482 = vadd.f32 %v8468, 1.0
        %v8483 = vadd.f32 %v8470, 1.0
        %v8484 = vadd.f32 %v8472, 1.0
        %v8485 = vadd.f32 %v8474, 1.0
        %v8486 = vadd.f32 %v8476, 1.0
        %v8487 = vadd.f32 %v8478, 1.0
        %v8488 = vrcp.pop %v8479
        %v8489 = vrcp.pop %v8480
        %v8490 = vrcp.pop %v8481
        %v8491 = vrcp.pop %v8482
        %v8492 = vrcp.pop %v8483
        %v8493 = vrcp.pop %v8484
        %v8494 = vrcp.pop %v8485
        %v8495 = vrcp.pop %v8486
        %v8496 = vrcp.pop %v8487
        %8497 = vst.msk [vmem:[%s571] sm:$0xff] %vm650, %v8488
        %vm8498 = vcmask 130049
        %8499 = vst.msk [vmem:[%s571 + $0x7] sm:$0xfe] %vm8498, %v8489
        %vm8500 = vcmask 122880
        %8501 = vst.msk [vmem:[%s571 + $0xf] sm:$0x1] %vm8500, %v8490
        %vm8502 = vcmask 130050
        %8503 = vst.msk [vmem:[%s571 + $0xe] sm:$0xfc] %vm8502, %v8490
        %vm8504 = vcmask 123904
        %8505 = vst.msk [vmem:[%s571 + $0x16] sm:$0x3] %vm8504, %v8491
        %vm8506 = vcmask 130051
        %8507 = vst.msk [vmem:[%s571 + $0x15] sm:$0xf8] %vm8506, %v8491
        %vm8508 = vcmask 124928
        %8509 = vst.msk [vmem:[%s571 + $0x1d] sm:$0x7] %vm8508, %v8492
        %vm8510 = vcmask 130052
        %8511 = vst.msk [vmem:[%s571 + $0x1c] sm:$0xf0] %vm8510, %v8492
        %vm8512 = vcmask 125952
        %8513 = vst.msk [vmem:[%s571 + $0x24] sm:$0xf] %vm8512, %v8493
        %vm8514 = vcmask 130053
        %8515 = vst.msk [vmem:[%s571 + $0x23] sm:$0xe0] %vm8514, %v8493
        %vm8516 = vcmask 126976
        %8517 = vst.msk [vmem:[%s571 + $0x2b] sm:$0x1f] %vm8516, %v8494
        %vm8518 = vcmask 130054
        %8519 = vst.msk [vmem:[%s571 + $0x2a] sm:$0xc0] %vm8518, %v8494
        %vm8520 = vcmask 128000
        %8521 = vst.msk [vmem:[%s571 + $0x32] sm:$0x3f] %vm8520, %v8495
        %vm8522 = vcmask 130055
        %8523 = vst.msk [vmem:[%s571 + $0x31] sm:$0x80] %vm8522, %v8495
        %vm8524 = vcmask 129024
        %8525 = vst.msk [vmem:[%s571 + $0x39] sm:$0x7f] %vm8524, %v8496
        %s8526 = sand.u32 %s403, 1
        %s8527 = scalar_lea.sflag [#allocation11], %s8526
        %s8528 = sand.u32 %s403, 1
        %s8529 = smul.addr %s8528, 64
        %s8530 = scalar_lea.vmem [#allocation14], %s8529
        // Predicated region
        $region97: #{autoencoder_forward.1} parent=87 // pred_check
          %p8531 = pneg %p413
        $region98: #{autoencoder_forward.1} parent=87 // pred_check_branch
          %8533 = sbr.rel (%p8531) target = $region100
        $region99: #{autoencoder_forward.1} parent=87 // pred_region
          %s8535 = ssub.s32 1024, 1024
          %8536 = vsyncadd %s8527, %s8535
          %s8537 = smul.addr %s33, 8
          %s8538 = smul.addr %s8537, 128
          %s8539 = scalar_lea.hbm %s17, %s8538
          %s8540 = sshll.u32 %s8530, 4
          %s8541 = int_to_ptr.vmem [resolvable:$true] %s8540
          %8546 = dma.vmem_to_hbm [thread:$0]  %s8541, 1024, %s8539, %s8527, 128, 128, 8
        $region100: #{autoencoder_forward.1} parent=87 // pred_fallthru
          _
      $region88: #{autoencoder_forward.1} parent=5 // pred_fallthru
        _
      %p8547 = scmp.le.s32.totalorder 2, %s28
      // Predicated region
      $region101: #{autoencoder_forward.1} parent=5 // pred_check
        %p8548 = pneg %p8547
      $region102: #{autoencoder_forward.1} parent=5 // pred_check_branch
        %8550 = sbr.rel (%p8548) target = $region104
      $region103: #{autoencoder_forward.1} parent=5 // pred_region
        %s8551 = ssub.s32 %s28, 2
        // Predicated region
        $region105: #{autoencoder_forward.1} parent=103 // pred_check
          %p8552 = pneg %p419
        $region106: #{autoencoder_forward.1} parent=103 // pred_check_branch
          %8554 = sbr.rel (%p8552) target = $region108
        $region107: #{autoencoder_forward.1} parent=103 // pred_region
          %s8555 = sand.u32 %s404, 1
          %s8556 = scalar_lea.sflag [#allocation11], %s8555
          %s8557 = sand.u32 %s404, 1
          %s8558 = smul.addr %s8557, 64
          %s8559 = scalar_lea.vmem [#allocation14], %s8558
          %8560 = dma.done %s8556, 1024
        $region108: #{autoencoder_forward.1} parent=103 // pred_fallthru
          _
      $region104: #{autoencoder_forward.1} parent=5 // pred_fallthru
        _
    $region6: #{autoencoder_forward.1} parent=1 // loop_footer
      %s32 = sadd.s32 1, %s28
    $region7: #{autoencoder_forward.1} parent=1 // loop_footer_branch
      %27 = sbr.rel target = $region3
    $region8: #{autoencoder_forward.1} parent=1 // loop_exit
      _
    %8561 = vsyncpa [#allocation10], 1
    %s8562 = scalar_lea.sflag [#allocation10], 1
    %8563 = vsyncpa %s8562, 1
    %8564 = vsyncpa [#allocation13], 1
    %8565 = vsyncpa [#allocation11], 1
    %s8566 = scalar_lea.sflag [#allocation11], 1
    %8567 = vsyncpa %s8566, 1

</llo_original>
